<compile_context>
chip_gen: v5e
topology: v5e:2x2
jax: 0.10.0
libtpu: 0.0.40
codegen_flags: <defaults>
</compile_context>

<pallas_src>
import functools

import jax
import jax.numpy as jnp
from jax.experimental import pallas as pl
from jax.experimental.pallas import tpu as pltpu


# ---------------------------------------------------------------------------
# helpers
# ---------------------------------------------------------------------------

def _nbytes(x):
    return int(x.size) * x.dtype.itemsize


def _vmem_limit(*xs):
    """Explicit scoped-VMEM budget: 2x (double buffering) + 1 MiB slack,
    clamped to [4 MiB, 48 MiB] (safe on v5e/v6e/v7x)."""
    need = 2 * sum(_nbytes(x) for x in xs) + (1 << 20)
    return int(min(max(need, 4 << 20), 48 << 20))


def _pick_m_tile(m):
    """Largest lane tile in {512,1024,2048,256,128} that divides M and leaves
    at least 2 grid steps (pipelining / megacore); else the whole axis."""
    for c in (512, 1024, 2048, 256, 128):
        if m % c == 0 and m // c >= 2:
            return c
    return m


def _im2col_cm(x):
    """Channel-major im2col for Conv2d(k=4, s=2, p=1).

    x: [Cin, N, H, W] -> patches [Cin*16, N*Ho*Wo], rows ordered (ci, kh, kw),
    columns ordered (n, oy, ox). Pure pad/slice/stack/reshape (XLA)."""
    cin, n, h, w = x.shape
    ho, wo = h // 2, w // 2
    xp = jnp.pad(x, ((0, 0), (0, 0), (1, 1), (1, 1)))
    taps = [xp[:, :, kh:kh + 2 * ho:2, kw:kw + 2 * wo:2]
            for kh in range(4) for kw in range(4)]
    pt = jnp.stack(taps, axis=1)                       # [Cin, 16, N, Ho, Wo]
    return pt.reshape(cin * 16, n * ho * wo)


def _im2col_tail(x):
    """im2col for the fused conv4+MLP tail: one [Cin*16, N] patch matrix per
    output spatial position.  x: [Cin, N, H, W] -> [Ho*Wo, Cin*16, N]."""
    cin, n, h, w = x.shape
    ho, wo = h // 2, w // 2
    xp = jnp.pad(x, ((0, 0), (0, 0), (1, 1), (1, 1)))
    taps = [xp[:, :, kh:kh + 2 * ho:2, kw:kw + 2 * wo:2]
            for kh in range(4) for kw in range(4)]
    pt = jnp.stack(taps, axis=1)                       # [Cin, 16, N, Ho, Wo]
    pt = pt.transpose(3, 4, 0, 1, 2)                   # [Ho, Wo, Cin, 16, N]
    return pt.reshape(ho * wo, cin * 16, n)


# ---------------------------------------------------------------------------
# Pallas kernels
# ---------------------------------------------------------------------------

def _conv_lrelu_kernel(w_ref, p_ref, o_ref):
    # conv1: bf16 GEMM (f32 accumulate) + LeakyReLU(0.2), M-tiled.
    y = jnp.dot(w_ref[...], p_ref[...], preferred_element_type=jnp.float32)
    o_ref[...] = jnp.where(y > 0, y, 0.2 * y).astype(o_ref.dtype)


def _conv_bn_lrelu_kernel(w_ref, p_ref, g_ref, b_ref, o_ref, *, eps):
    # conv2/3: bf16 GEMM + single-pass training-mode BatchNorm (per-channel
    # stats over the M lane axis, f32) + LeakyReLU(0.2).  Cout-tiled.
    y = jnp.dot(w_ref[...], p_ref[...], preferred_element_type=jnp.float32)
    inv_m = 1.0 / y.shape[1]
    s1 = jnp.sum(y, axis=1, keepdims=True)
    s2 = jnp.sum(y * y, axis=1, keepdims=True)
    mean = s1 * inv_m
    var = jnp.maximum(s2 * inv_m - mean * mean, 0.0)   # biased, as torch
    scale = jax.lax.rsqrt(var + eps) * g_ref[...]
    shift = b_ref[...] - mean * scale
    y = y * scale + shift
    o_ref[...] = jnp.where(y > 0, y, 0.2 * y).astype(o_ref.dtype)


def _tail_kernel(p4_ref, a_ref, w4_ref, g4_ref, b4_ref, w1r_ref, b1_ref,
                 w2h_ref, w2a_ref, b2_ref, w3_ref, b3_ref, o_ref, *, eps):
    # Fused conv4 + BN4 + LeakyReLU + flatten + lin1 + LeakyReLU
    #       + [cat(h,a)@W2 as split matmul] + ReLU + lin3.
    # conv4 is one GEMM per output spatial position (p4_ref[i] : [Cin*16, N]),
    # so the torch x.view(N,-1) flatten is absorbed into the per-position
    # lin1 weight slice w1r_ref[i] and everything stays channel-major with the
    # batch N on the lane axis.  All stats / epilogue math in f32.
    n_pos = p4_ref.shape[0]                 # Ho*Wo = 16
    n_b = p4_ref.shape[2]                   # batch on lanes
    ys = [jnp.dot(w4_ref[...], p4_ref[i], preferred_element_type=jnp.float32)
          for i in range(n_pos)]            # each [C4, N] f32

    inv_m = 1.0 / (n_pos * n_b)
    s1 = sum(jnp.sum(y, axis=1, keepdims=True) for y in ys)
    s2 = sum(jnp.sum(y * y, axis=1, keepdims=True) for y in ys)
    mean = s1 * inv_m
    var = jnp.maximum(s2 * inv_m - mean * mean, 0.0)
    scale = jax.lax.rsqrt(var + eps) * g4_ref[...]
    shift = b4_ref[...] - mean * scale

    h = jnp.zeros((w1r_ref.shape[1], n_b), jnp.float32)
    for i in range(n_pos):
        y = ys[i] * scale + shift
        y = jnp.where(y > 0, y, 0.2 * y).astype(jnp.bfloat16)
        h = h + jnp.dot(w1r_ref[i], y, preferred_element_type=jnp.float32)
    h = h + b1_ref[...]
    h = jnp.where(h > 0, h, 0.2 * h).astype(jnp.bfloat16)

    q = (jnp.dot(w2h_ref[...], h, preferred_element_type=jnp.float32)
         + jnp.dot(w2a_ref[...], a_ref[...], preferred_element_type=jnp.float32)
         + b2_ref[...])
    q = jnp.maximum(q, 0.0).astype(jnp.bfloat16)
    o_ref[...] = (jnp.dot(w3_ref[...], q, preferred_element_type=jnp.float32)
                  + b3_ref[...])


# ---------------------------------------------------------------------------
# conv-block wrappers
# ---------------------------------------------------------------------------

def conv_lrelu(x, wmat):
    """Conv2d(4,2,1,bias=False) + LeakyReLU(0.2); M-tiled 'parallel' grid."""
    cin, n, h, w = x.shape
    cout, k = wmat.shape
    ho, wo = h // 2, w // 2
    m = n * ho * wo
    patches = _im2col_cm(x)                           # [K, M] bf16
    mt = _pick_m_tile(m)
    y = pl.pallas_call(
        _conv_lrelu_kernel,
        out_shape=jax.ShapeDtypeStruct((cout, m), jnp.bfloat16),
        grid=(m // mt,),
        in_specs=[pl.BlockSpec((cout, k), lambda i: (0, 0)),
                  pl.BlockSpec((k, mt), lambda i: (0, i))],
        out_specs=pl.BlockSpec((cout, mt), lambda i: (0, i)),
        compiler_params=pltpu.CompilerParams(
            dimension_semantics=("parallel",),
            vmem_limit_bytes=_vmem_limit(wmat, patches),
            allow_input_fusion=[False, True]),
    )(wmat, patches)
    return y.reshape(cout, n, ho, wo)


def conv_bn_lrelu(x, wmat, gamma, beta, eps=1e-5):
    """Conv2d(4,2,1,bias=False) + BatchNorm2d(train) + LeakyReLU(0.2);
    Cout-tiled 'parallel' grid (per-channel stats are block-local)."""
    cin, n, h, w = x.shape
    cout, k = wmat.shape
    ho, wo = h // 2, w // 2
    m = n * ho * wo
    patches = _im2col_cm(x)                           # [K, M] bf16
    tc = cout if (cout <= 256 or cout % 256) else 256
    y = pl.pallas_call(
        functools.partial(_conv_bn_lrelu_kernel, eps=eps),
        out_shape=jax.ShapeDtypeStruct((cout, m), jnp.bfloat16),
        grid=(cout // tc,),
        in_specs=[pl.BlockSpec((tc, k), lambda i: (i, 0)),
                  pl.BlockSpec((k, m), lambda i: (0, 0)),
                  pl.BlockSpec((tc, 1), lambda i: (i, 0)),
                  pl.BlockSpec((tc, 1), lambda i: (i, 0))],
        out_specs=pl.BlockSpec((tc, m), lambda i: (i, 0)),
        compiler_params=pltpu.CompilerParams(
            dimension_semantics=("parallel",),
            vmem_limit_bytes=_vmem_limit(wmat, patches, gamma, beta),
            allow_input_fusion=[False, True, False, False]),
    )(wmat, patches, gamma, beta)
    return y.reshape(cout, n, ho, wo)


def conv4_mlp_tail(x3, a, p, eps=1e-5):
    """Fused conv4 + BN4 + LeakyReLU + flatten + lin1/lin2/lin3 MLP.
    Returns q in channel-major form [gq, N]."""
    n = x3.shape[1]
    p4 = _im2col_tail(x3)                             # [16, Cin*16, N] bf16
    a_cm = a.T.astype(jnp.bfloat16)                   # [nz, N]
    gq = p["lin3_w"].shape[0]
    return pl.pallas_call(
        functools.partial(_tail_kernel, eps=eps),
        out_shape=jax.ShapeDtypeStruct((gq, n), jnp.float32),
        compiler_params=pltpu.CompilerParams(
            vmem_limit_bytes=_vmem_limit(p4, a_cm, p["conv4_w"], p["lin1_wr"]),
            allow_input_fusion=[True, True] + [False] * 10),
    )(p4, a_cm, p["conv4_w"], p["bn4_gamma"], p["bn4_beta"],
      p["lin1_wr"], p["lin1_b"], p["lin2_wh"], p["lin2_wa"], p["lin2_b"],
      p["lin3_w"], p["lin3_b"])


# ---------------------------------------------------------------------------
# params / forward
# ---------------------------------------------------------------------------

def init_params(key, nc, ngf, nz, gc_hidden, gq):
    ks = jax.random.split(key, 7)

    def nrm(k, shape, scale=0.05):
        return scale * jax.random.normal(k, shape, jnp.float32)

    p = {}
    # Conv weights pre-reshaped once to GEMM form [Cout, Cin*4*4], bf16.
    p["conv1_w"] = nrm(ks[0], (ngf, nc, 4, 4)).reshape(ngf, -1).astype(jnp.bfloat16)
    p["conv2_w"] = nrm(ks[1], (ngf * 2, ngf, 4, 4)).reshape(ngf * 2, -1).astype(jnp.bfloat16)
    p["conv3_w"] = nrm(ks[2], (ngf * 4, ngf * 2, 4, 4)).reshape(ngf * 4, -1).astype(jnp.bfloat16)
    p["conv4_w"] = nrm(ks[3], (ngf * 8, ngf * 4, 4, 4)).reshape(ngf * 8, -1).astype(jnp.bfloat16)
    # BN affine params as [Cout, 1] f32 columns (broadcast over the lane axis).
    for i, c in ((2, ngf * 2), (3, ngf * 4), (4, ngf * 8)):
        p[f"bn{i}_gamma"] = jnp.ones((c, 1), jnp.float32)
        p[f"bn{i}_beta"] = jnp.zeros((c, 1), jnp.float32)
    # lin1: [nz, C4*16] in torch flat order (c, h, w); rearranged once to
    # per-spatial-position slices [16, nz, C4] (flatten absorbed into weights).
    c4 = ngf * 8
    lin1_w = nrm(ks[4], (nz, c4 * 16))
    p["lin1_wr"] = lin1_w.reshape(nz, c4, 16).transpose(2, 0, 1).astype(jnp.bfloat16)
    p["lin1_b"] = jnp.zeros((nz, 1), jnp.float32)
    # lin2 split for torch.cat((s, a), 1): W2h acts on h, W2a on a.
    lin2_w = nrm(ks[5], (gc_hidden, nz * 2))
    p["lin2_wh"] = lin2_w[:, :nz].astype(jnp.bfloat16)      # [gch, nz]
    p["lin2_wa"] = lin2_w[:, nz:].astype(jnp.bfloat16)      # [gch, nz]
    p["lin2_b"] = jnp.zeros((gc_hidden, 1), jnp.float32)
    p["lin3_w"] = nrm(ks[6], (gq, gc_hidden)).astype(jnp.bfloat16)
    p["lin3_b"] = jnp.zeros((gq, 1), jnp.float32)
    return p


def generator_critic_forward(p, s, a):
    # One small input transpose+cast into the channel-major bf16 layout.
    x = jnp.transpose(s, (1, 0, 2, 3)).astype(jnp.bfloat16)     # [nc, N, 64, 64]

    x = conv_lrelu(x, p["conv1_w"])                             # [ngf,  N, 32, 32]
    x = conv_bn_lrelu(x, p["conv2_w"], p["bn2_gamma"], p["bn2_beta"])  # [2ngf,N,16,16]
    x = conv_bn_lrelu(x, p["conv3_w"], p["bn3_gamma"], p["bn3_beta"])  # [4ngf,N, 8, 8]

    q_cm = conv4_mlp_tail(x, a, p)                              # [gq, N] f32
    return q_cm.T                                               # [N, gq]


if __name__ == "__main__":
    # lin1 expects ngf*8*4*4 features, which pins the input spatial size to 64.
    nc, ngf, nz, gc_hidden, gq = 3, 8, 16, 32, 4
    key = jax.random.PRNGKey(0)
    kp, ks_, ka = jax.random.split(key, 3)
    params = init_params(kp, nc, ngf, nz, gc_hidden, gq)
    s = jax.random.normal(ks_, (2, nc, 64, 64), jnp.float32)
    a = jax.random.normal(ka, (2, nz), jnp.float32)

    fwd = jax.jit(generator_critic_forward)
    q = fwd(params, s, a)
    jax.block_until_ready(q)
    assert q.shape == (2, gq) and q.dtype == jnp.float32
    print("KERNEL_OK")
</pallas_src>

<mosaic_0001>
module attributes {stable_mosaic.version = 11 : i64} {
  func.func @_conv_lrelu_kernel(%arg0: i32, %arg1: memref<8x48xbf16, #tpu.memory_space<vmem>>, %arg2: memref<48x512xbf16, #tpu.memory_space<vmem>>, %arg3: memref<8x512xbf16, #tpu.memory_space<vmem>>) attributes {dimension_semantics = [#tpu.dimension_semantics<parallel>], iteration_bounds = array<i64: 4>, scalar_prefetch = 0 : i64, scratch_operands = 0 : i64, tpu.core_type = #tpu.core_type<tc>, window_params = [{pipeline_mode = #tpu.pipeline_mode<synchronous>, transform_indices = @transform_0, window_bounds = array<i64: 8, 48>}, {transform_indices = @transform_1, window_bounds = array<i64: 48, 512>}, {transform_indices = @transform_2, window_bounds = array<i64: 8, 512>}]} {
    %c0 = arith.constant 0 : index
    %c0_0 = arith.constant 0 : index
    %0 = vector.load %arg1[%c0, %c0_0] : memref<8x48xbf16, #tpu.memory_space<vmem>>, vector<8x48xbf16>
    %c0_1 = arith.constant 0 : index
    %c0_2 = arith.constant 0 : index
    %1 = vector.load %arg2[%c0_1, %c0_2] : memref<48x512xbf16, #tpu.memory_space<vmem>>, vector<48x512xbf16>
    %cst = arith.constant dense<0.000000e+00> : vector<8x512xf32>
    %2 = tpu.matmul %0, %1, %cst {dimension_numbers = #tpu.dot_dimension_numbers<[1], [0], [0], [1], [0, 0, 1, 1], [], []>} : vector<8x48xbf16>, vector<48x512xbf16>, vector<8x512xf32> -> vector<8x512xf32>
    %cst_3 = arith.constant 0.000000e+00 : f32
    %3 = vector.broadcast %cst_3 : f32 to vector<8x512xf32>
    %4 = arith.cmpf ogt, %2, %3 : vector<8x512xf32>
    %cst_4 = arith.constant 2.000000e-01 : f32
    %5 = vector.broadcast %cst_4 : f32 to vector<8x512xf32>
    %6 = arith.mulf %5, %2 : vector<8x512xf32>
    %7 = arith.select %4, %2, %6 : vector<8x512xi1>, vector<8x512xf32>
    %8 = arith.truncf %7 : vector<8x512xf32> to vector<8x512xbf16>
    %c0_5 = arith.constant 0 : index
    %c0_6 = arith.constant 0 : index
    %9 = vector.load %arg3[%c0_5, %c0_6] : memref<8x512xbf16, #tpu.memory_space<vmem>>, vector<8x512xbf16>
    tpu.vector_store %arg3[%c0_5, %c0_6], %8 {strides = array<i32>} : memref<8x512xbf16, #tpu.memory_space<vmem>>, vector<8x512xbf16>,
    return
  }
  func.func @transform_0(%arg0: i32) -> (i32, i32) {
    %c0_i32 = arith.constant 0 : i32
    %c0_i32_0 = arith.constant 0 : i32
    %c0_i32_1 = arith.constant 0 : i32
    return %c0_i32, %c0_i32_0 : i32, i32
  }
  func.func @transform_1(%arg0: i32) -> (i32, i32) {
    %c0_i32 = arith.constant 0 : i32
    %c0_i32_0 = arith.constant 0 : i32
    return %c0_i32, %arg0 : i32, i32
  }
  func.func @transform_2(%arg0: i32) -> (i32, i32) {
    %c0_i32 = arith.constant 0 : i32
    %c0_i32_0 = arith.constant 0 : i32
    return %c0_i32, %arg0 : i32, i32
  }
}

module attributes {stable_mosaic.version = 11 : i64} {
  func.func @_conv_bn_lrelu_kernel(%arg0: i32, %arg1: memref<16x128xbf16, #tpu.memory_space<vmem>>, %arg2: memref<128x512xbf16, #tpu.memory_space<vmem>>, %arg3: memref<16x1xf32, #tpu.memory_space<vmem>>, %arg4: memref<16x1xf32, #tpu.memory_space<vmem>>, %arg5: memref<16x512xbf16, #tpu.memory_space<vmem>>) attributes {dimension_semantics = [#tpu.dimension_semantics<parallel>], iteration_bounds = array<i64: 1>, scalar_prefetch = 0 : i64, scratch_operands = 0 : i64, tpu.core_type = #tpu.core_type<tc>, window_params = [{transform_indices = @transform_0, window_bounds = array<i64: 16, 128>}, {pipeline_mode = #tpu.pipeline_mode<synchronous>, transform_indices = @transform_1, window_bounds = array<i64: 128, 512>}, {transform_indices = @transform_2, window_bounds = array<i64: 16, 1>}, {transform_indices = @transform_3, window_bounds = array<i64: 16, 1>}, {transform_indices = @transform_4, window_bounds = array<i64: 16, 512>}]} {
    %c0 = arith.constant 0 : index
    %c0_0 = arith.constant 0 : index
    %0 = vector.load %arg1[%c0, %c0_0] : memref<16x128xbf16, #tpu.memory_space<vmem>>, vector<16x128xbf16>
    %c0_1 = arith.constant 0 : index
    %c0_2 = arith.constant 0 : index
    %1 = vector.load %arg2[%c0_1, %c0_2] : memref<128x512xbf16, #tpu.memory_space<vmem>>, vector<128x512xbf16>
    %cst = arith.constant dense<0.000000e+00> : vector<16x512xf32>
    %2 = tpu.matmul %0, %1, %cst {dimension_numbers = #tpu.dot_dimension_numbers<[1], [0], [0], [1], [0, 0, 1, 1], [], []>} : vector<16x128xbf16>, vector<128x512xbf16>, vector<16x512xf32> -> vector<16x512xf32>
    %cst_3 = arith.constant dense<0.000000e+00> : vector<16xf32>
    %3 = vector.multi_reduction <add>, %2, %cst_3 [1] : vector<16x512xf32> to vector<16xf32>
    %4 = vector.shape_cast %3 : vector<16xf32> to vector<16x1xf32>
    %5 = arith.mulf %2, %2 : vector<16x512xf32>
    %cst_4 = arith.constant dense<0.000000e+00> : vector<16xf32>
    %6 = vector.multi_reduction <add>, %5, %cst_4 [1] : vector<16x512xf32> to vector<16xf32>
    %7 = vector.shape_cast %6 : vector<16xf32> to vector<16x1xf32>
    %cst_5 = arith.constant 0.001953125 : f32
    %8 = vector.broadcast %cst_5 : f32 to vector<16x1xf32>
    %9 = arith.mulf %4, %8 : vector<16x1xf32>
    %cst_6 = arith.constant 0.001953125 : f32
    %10 = vector.broadcast %cst_6 : f32 to vector<16x1xf32>
    %11 = arith.mulf %7, %10 : vector<16x1xf32>
    %12 = arith.mulf %9, %9 : vector<16x1xf32>
    %13 = arith.subf %11, %12 : vector<16x1xf32>
    %cst_7 = arith.constant 0.000000e+00 : f32
    %14 = vector.broadcast %cst_7 : f32 to vector<16x1xf32>
    %15 = arith.maximumf %13, %14 : vector<16x1xf32>
    %cst_8 = arith.constant 9.99999974E-6 : f32
    %16 = vector.broadcast %cst_8 : f32 to vector<16x1xf32>
    %17 = arith.addf %15, %16 : vector<16x1xf32>
    %18 = math.rsqrt %17 : vector<16x1xf32>
    %c0_9 = arith.constant 0 : index
    %c0_10 = arith.constant 0 : index
    %19 = vector.load %arg3[%c0_9, %c0_10] : memref<16x1xf32, #tpu.memory_space<vmem>>, vector<16x1xf32>
    %20 = arith.mulf %18, %19 : vector<16x1xf32>
    %c0_11 = arith.constant 0 : index
    %c0_12 = arith.constant 0 : index
    %21 = vector.load %arg4[%c0_11, %c0_12] : memref<16x1xf32, #tpu.memory_space<vmem>>, vector<16x1xf32>
    %22 = arith.mulf %9, %20 : vector<16x1xf32>
    %23 = arith.subf %21, %22 : vector<16x1xf32>
    %24 = vector.broadcast %20 : vector<16x1xf32> to vector<16x512xf32>
    %25 = arith.mulf %2, %24 : vector<16x512xf32>
    %26 = vector.broadcast %23 : vector<16x1xf32> to vector<16x512xf32>
    %27 = arith.addf %25, %26 : vector<16x512xf32>
    %cst_13 = arith.constant 0.000000e+00 : f32
    %28 = vector.broadcast %cst_13 : f32 to vector<16x512xf32>
    %29 = arith.cmpf ogt, %27, %28 : vector<16x512xf32>
    %cst_14 = arith.constant 2.000000e-01 : f32
    %30 = vector.broadcast %cst_14 : f32 to vector<16x512xf32>
    %31 = arith.mulf %30, %27 : vector<16x512xf32>
    %32 = arith.select %29, %27, %31 : vector<16x512xi1>, vector<16x512xf32>
    %33 = arith.truncf %32 : vector<16x512xf32> to vector<16x512xbf16>
    %c0_15 = arith.constant 0 : index
    %c0_16 = arith.constant 0 : index
    %34 = vector.load %arg5[%c0_15, %c0_16] : memref<16x512xbf16, #tpu.memory_space<vmem>>, vector<16x512xbf16>
    tpu.vector_store %arg5[%c0_15, %c0_16], %33 {strides = array<i32>} : memref<16x512xbf16, #tpu.memory_space<vmem>>, vector<16x512xbf16>,
    return
  }
  func.func @transform_0(%arg0: i32) -> (i32, i32) {
    %c0_i32 = arith.constant 0 : i32
    %c0_i32_0 = arith.constant 0 : i32
    return %arg0, %c0_i32 : i32, i32
  }
  func.func @transform_1(%arg0: i32) -> (i32, i32) {
    %c0_i32 = arith.constant 0 : i32
    %c0_i32_0 = arith.constant 0 : i32
    %c0_i32_1 = arith.constant 0 : i32
    return %c0_i32, %c0_i32_0 : i32, i32
  }
  func.func @transform_2(%arg0: i32) -> (i32, i32) {
    %c0_i32 = arith.constant 0 : i32
    %c0_i32_0 = arith.constant 0 : i32
    return %arg0, %c0_i32 : i32, i32
  }
  func.func @transform_3(%arg0: i32) -> (i32, i32) {
    %c0_i32 = arith.constant 0 : i32
    %c0_i32_0 = arith.constant 0 : i32
    return %arg0, %c0_i32 : i32, i32
  }
  func.func @transform_4(%arg0: i32) -> (i32, i32) {
    %c0_i32 = arith.constant 0 : i32
    %c0_i32_0 = arith.constant 0 : i32
    return %arg0, %c0_i32 : i32, i32
  }
}

module attributes {stable_mosaic.version = 11 : i64} {
  func.func @_conv_bn_lrelu_kernel(%arg0: i32, %arg1: memref<32x256xbf16, #tpu.memory_space<vmem>>, %arg2: memref<256x128xbf16, #tpu.memory_space<vmem>>, %arg3: memref<32x1xf32, #tpu.memory_space<vmem>>, %arg4: memref<32x1xf32, #tpu.memory_space<vmem>>, %arg5: memref<32x128xbf16, #tpu.memory_space<vmem>>) attributes {dimension_semantics = [#tpu.dimension_semantics<parallel>], iteration_bounds = array<i64: 1>, scalar_prefetch = 0 : i64, scratch_operands = 0 : i64, tpu.core_type = #tpu.core_type<tc>, window_params = [{transform_indices = @transform_0, window_bounds = array<i64: 32, 256>}, {pipeline_mode = #tpu.pipeline_mode<synchronous>, transform_indices = @transform_1, window_bounds = array<i64: 256, 128>}, {transform_indices = @transform_2, window_bounds = array<i64: 32, 1>}, {transform_indices = @transform_3, window_bounds = array<i64: 32, 1>}, {transform_indices = @transform_4, window_bounds = array<i64: 32, 128>}]} {
    %c0 = arith.constant 0 : index
    %c0_0 = arith.constant 0 : index
    %0 = vector.load %arg1[%c0, %c0_0] : memref<32x256xbf16, #tpu.memory_space<vmem>>, vector<32x256xbf16>
    %c0_1 = arith.constant 0 : index
    %c0_2 = arith.constant 0 : index
    %1 = vector.load %arg2[%c0_1, %c0_2] : memref<256x128xbf16, #tpu.memory_space<vmem>>, vector<256x128xbf16>
    %cst = arith.constant dense<0.000000e+00> : vector<32x128xf32>
    %2 = tpu.matmul %0, %1, %cst {dimension_numbers = #tpu.dot_dimension_numbers<[1], [0], [0], [1], [0, 0, 1, 1], [], []>} : vector<32x256xbf16>, vector<256x128xbf16>, vector<32x128xf32> -> vector<32x128xf32>
    %cst_3 = arith.constant dense<0.000000e+00> : vector<32xf32>
    %3 = vector.multi_reduction <add>, %2, %cst_3 [1] : vector<32x128xf32> to vector<32xf32>
    %4 = vector.shape_cast %3 : vector<32xf32> to vector<32x1xf32>
    %5 = arith.mulf %2, %2 : vector<32x128xf32>
    %cst_4 = arith.constant dense<0.000000e+00> : vector<32xf32>
    %6 = vector.multi_reduction <add>, %5, %cst_4 [1] : vector<32x128xf32> to vector<32xf32>
    %7 = vector.shape_cast %6 : vector<32xf32> to vector<32x1xf32>
    %cst_5 = arith.constant 7.812500e-03 : f32
    %8 = vector.broadcast %cst_5 : f32 to vector<32x1xf32>
    %9 = arith.mulf %4, %8 : vector<32x1xf32>
    %cst_6 = arith.constant 7.812500e-03 : f32
    %10 = vector.broadcast %cst_6 : f32 to vector<32x1xf32>
    %11 = arith.mulf %7, %10 : vector<32x1xf32>
    %12 = arith.mulf %9, %9 : vector<32x1xf32>
    %13 = arith.subf %11, %12 : vector<32x1xf32>
    %cst_7 = arith.constant 0.000000e+00 : f32
    %14 = vector.broadcast %cst_7 : f32 to vector<32x1xf32>
    %15 = arith.maximumf %13, %14 : vector<32x1xf32>
    %cst_8 = arith.constant 9.99999974E-6 : f32
    %16 = vector.broadcast %cst_8 : f32 to vector<32x1xf32>
    %17 = arith.addf %15, %16 : vector<32x1xf32>
    %18 = math.rsqrt %17 : vector<32x1xf32>
    %c0_9 = arith.constant 0 : index
    %c0_10 = arith.constant 0 : index
    %19 = vector.load %arg3[%c0_9, %c0_10] : memref<32x1xf32, #tpu.memory_space<vmem>>, vector<32x1xf32>
    %20 = arith.mulf %18, %19 : vector<32x1xf32>
    %c0_11 = arith.constant 0 : index
    %c0_12 = arith.constant 0 : index
    %21 = vector.load %arg4[%c0_11, %c0_12] : memref<32x1xf32, #tpu.memory_space<vmem>>, vector<32x1xf32>
    %22 = arith.mulf %9, %20 : vector<32x1xf32>
    %23 = arith.subf %21, %22 : vector<32x1xf32>
    %24 = vector.broadcast %20 : vector<32x1xf32> to vector<32x128xf32>
    %25 = arith.mulf %2, %24 : vector<32x128xf32>
    %26 = vector.broadcast %23 : vector<32x1xf32> to vector<32x128xf32>
    %27 = arith.addf %25, %26 : vector<32x128xf32>
    %cst_13 = arith.constant 0.000000e+00 : f32
    %28 = vector.broadcast %cst_13 : f32 to vector<32x128xf32>
    %29 = arith.cmpf ogt, %27, %28 : vector<32x128xf32>
    %cst_14 = arith.constant 2.000000e-01 : f32
    %30 = vector.broadcast %cst_14 : f32 to vector<32x128xf32>
    %31 = arith.mulf %30, %27 : vector<32x128xf32>
    %32 = arith.select %29, %27, %31 : vector<32x128xi1>, vector<32x128xf32>
    %33 = arith.truncf %32 : vector<32x128xf32> to vector<32x128xbf16>
    %c0_15 = arith.constant 0 : index
    %c0_16 = arith.constant 0 : index
    %34 = vector.load %arg5[%c0_15, %c0_16] : memref<32x128xbf16, #tpu.memory_space<vmem>>, vector<32x128xbf16>
    tpu.vector_store %arg5[%c0_15, %c0_16], %33 {strides = array<i32>} : memref<32x128xbf16, #tpu.memory_space<vmem>>, vector<32x128xbf16>,
    return
  }
  func.func @transform_0(%arg0: i32) -> (i32, i32) {
    %c0_i32 = arith.constant 0 : i32
    %c0_i32_0 = arith.constant 0 : i32
    return %arg0, %c0_i32 : i32, i32
  }
  func.func @transform_1(%arg0: i32) -> (i32, i32) {
    %c0_i32 = arith.constant 0 : i32
    %c0_i32_0 = arith.constant 0 : i32
    %c0_i32_1 = arith.constant 0 : i32
    return %c0_i32, %c0_i32_0 : i32, i32
  }
  func.func @transform_2(%arg0: i32) -> (i32, i32) {
    %c0_i32 = arith.constant 0 : i32
    %c0_i32_0 = arith.constant 0 : i32
    return %arg0, %c0_i32 : i32, i32
  }
  func.func @transform_3(%arg0: i32) -> (i32, i32) {
    %c0_i32 = arith.constant 0 : i32
    %c0_i32_0 = arith.constant 0 : i32
    return %arg0, %c0_i32 : i32, i32
  }
  func.func @transform_4(%arg0: i32) -> (i32, i32) {
    %c0_i32 = arith.constant 0 : i32
    %c0_i32_0 = arith.constant 0 : i32
    return %arg0, %c0_i32 : i32, i32
  }
}

module attributes {stable_mosaic.version = 11 : i64} {
  func.func @_tail_kernel(%arg0: memref<16x512x2xbf16, #tpu.memory_space<vmem>>, %arg1: memref<16x2xbf16, #tpu.memory_space<vmem>>, %arg2: memref<64x512xbf16, #tpu.memory_space<vmem>>, %arg3: memref<64x1xf32, #tpu.memory_space<vmem>>, %arg4: memref<64x1xf32, #tpu.memory_space<vmem>>, %arg5: memref<16x16x64xbf16, #tpu.memory_space<vmem>>, %arg6: memref<16x1xf32, #tpu.memory_space<vmem>>, %arg7: memref<32x16xbf16, #tpu.memory_space<vmem>>, %arg8: memref<32x16xbf16, #tpu.memory_space<vmem>>, %arg9: memref<32x1xf32, #tpu.memory_space<vmem>>, %arg10: memref<4x32xbf16, #tpu.memory_space<vmem>>, %arg11: memref<4x1xf32, #tpu.memory_space<vmem>>, %arg12: memref<4x2xf32, #tpu.memory_space<vmem>>) attributes {dimension_semantics = [], scalar_prefetch = 0 : i64, scratch_operands = 0 : i64, tpu.core_type = #tpu.core_type<tc>} {
    %c0 = arith.constant 0 : index
    %c0_0 = arith.constant 0 : index
    %0 = vector.load %arg2[%c0, %c0_0] : memref<64x512xbf16, #tpu.memory_space<vmem>>, vector<64x512xbf16>
    %c0_1 = arith.constant 0 : index
    %c0_2 = arith.constant 0 : index
    %c0_3 = arith.constant 0 : index
    %1 = vector.load %arg0[%c0_1, %c0_2, %c0_3] : memref<16x512x2xbf16, #tpu.memory_space<vmem>>, vector<1x512x2xbf16>
    %2 = vector.shape_cast %1 : vector<1x512x2xbf16> to vector<512x2xbf16>
    %cst = arith.constant dense<0.000000e+00> : vector<64x2xf32>
    %3 = tpu.matmul %0, %2, %cst {dimension_numbers = #tpu.dot_dimension_numbers<[1], [0], [0], [1], [0, 0, 1, 1], [], []>} : vector<64x512xbf16>, vector<512x2xbf16>, vector<64x2xf32> -> vector<64x2xf32>
    %c0_4 = arith.constant 0 : index
    %c0_5 = arith.constant 0 : index
    %4 = vector.load %arg2[%c0_4, %c0_5] : memref<64x512xbf16, #tpu.memory_space<vmem>>, vector<64x512xbf16>
    %c1 = arith.constant 1 : index
    %c0_6 = arith.constant 0 : index
    %c0_7 = arith.constant 0 : index
    %5 = vector.load %arg0[%c1, %c0_6, %c0_7] : memref<16x512x2xbf16, #tpu.memory_space<vmem>>, vector<1x512x2xbf16>
    %6 = vector.shape_cast %5 : vector<1x512x2xbf16> to vector<512x2xbf16>
    %cst_8 = arith.constant dense<0.000000e+00> : vector<64x2xf32>
    %7 = tpu.matmul %4, %6, %cst_8 {dimension_numbers = #tpu.dot_dimension_numbers<[1], [0], [0], [1], [0, 0, 1, 1], [], []>} : vector<64x512xbf16>, vector<512x2xbf16>, vector<64x2xf32> -> vector<64x2xf32>
    %c0_9 = arith.constant 0 : index
    %c0_10 = arith.constant 0 : index
    %8 = vector.load %arg2[%c0_9, %c0_10] : memref<64x512xbf16, #tpu.memory_space<vmem>>, vector<64x512xbf16>
    %c2 = arith.constant 2 : index
    %c0_11 = arith.constant 0 : index
    %c0_12 = arith.constant 0 : index
    %9 = vector.load %arg0[%c2, %c0_11, %c0_12] : memref<16x512x2xbf16, #tpu.memory_space<vmem>>, vector<1x512x2xbf16>
    %10 = vector.shape_cast %9 : vector<1x512x2xbf16> to vector<512x2xbf16>
    %cst_13 = arith.constant dense<0.000000e+00> : vector<64x2xf32>
    %11 = tpu.matmul %8, %10, %cst_13 {dimension_numbers = #tpu.dot_dimension_numbers<[1], [0], [0], [1], [0, 0, 1, 1], [], []>} : vector<64x512xbf16>, vector<512x2xbf16>, vector<64x2xf32> -> vector<64x2xf32>
    %c0_14 = arith.constant 0 : index
    %c0_15 = arith.constant 0 : index
    %12 = vector.load %arg2[%c0_14, %c0_15] : memref<64x512xbf16, #tpu.memory_space<vmem>>, vector<64x512xbf16>
    %c3 = arith.constant 3 : index
    %c0_16 = arith.constant 0 : index
    %c0_17 = arith.constant 0 : index
    %13 = vector.load %arg0[%c3, %c0_16, %c0_17] : memref<16x512x2xbf16, #tpu.memory_space<vmem>>, vector<1x512x2xbf16>
    %14 = vector.shape_cast %13 : vector<1x512x2xbf16> to vector<512x2xbf16>
    %cst_18 = arith.constant dense<0.000000e+00> : vector<64x2xf32>
    %15 = tpu.matmul %12, %14, %cst_18 {dimension_numbers = #tpu.dot_dimension_numbers<[1], [0], [0], [1], [0, 0, 1, 1], [], []>} : vector<64x512xbf16>, vector<512x2xbf16>, vector<64x2xf32> -> vector<64x2xf32>
    %c0_19 = arith.constant 0 : index
    %c0_20 = arith.constant 0 : index
    %16 = vector.load %arg2[%c0_19, %c0_20] : memref<64x512xbf16, #tpu.memory_space<vmem>>, vector<64x512xbf16>
    %c4 = arith.constant 4 : index
    %c0_21 = arith.constant 0 : index
    %c0_22 = arith.constant 0 : index
    %17 = vector.load %arg0[%c4, %c0_21, %c0_22] : memref<16x512x2xbf16, #tpu.memory_space<vmem>>, vector<1x512x2xbf16>
    %18 = vector.shape_cast %17 : vector<1x512x2xbf16> to vector<512x2xbf16>
    %cst_23 = arith.constant dense<0.000000e+00> : vector<64x2xf32>
    %19 = tpu.matmul %16, %18, %cst_23 {dimension_numbers = #tpu.dot_dimension_numbers<[1], [0], [0], [1], [0, 0, 1, 1], [], []>} : vector<64x512xbf16>, vector<512x2xbf16>, vector<64x2xf32> -> vector<64x2xf32>
    %c0_24 = arith.constant 0 : index
    %c0_25 = arith.constant 0 : index
    %20 = vector.load %arg2[%c0_24, %c0_25] : memref<64x512xbf16, #tpu.memory_space<vmem>>, vector<64x512xbf16>
    %c5 = arith.constant 5 : index
    %c0_26 = arith.constant 0 : index
    %c0_27 = arith.constant 0 : index
    %21 = vector.load %arg0[%c5, %c0_26, %c0_27] : memref<16x512x2xbf16, #tpu.memory_space<vmem>>, vector<1x512x2xbf16>
    %22 = vector.shape_cast %21 : vector<1x512x2xbf16> to vector<512x2xbf16>
    %cst_28 = arith.constant dense<0.000000e+00> : vector<64x2xf32>
    %23 = tpu.matmul %20, %22, %cst_28 {dimension_numbers = #tpu.dot_dimension_numbers<[1], [0], [0], [1], [0, 0, 1, 1], [], []>} : vector<64x512xbf16>, vector<512x2xbf16>, vector<64x2xf32> -> vector<64x2xf32>
    %c0_29 = arith.constant 0 : index
    %c0_30 = arith.constant 0 : index
    %24 = vector.load %arg2[%c0_29, %c0_30] : memref<64x512xbf16, #tpu.memory_space<vmem>>, vector<64x512xbf16>
    %c6 = arith.constant 6 : index
    %c0_31 = arith.constant 0 : index
    %c0_32 = arith.constant 0 : index
    %25 = vector.load %arg0[%c6, %c0_31, %c0_32] : memref<16x512x2xbf16, #tpu.memory_space<vmem>>, vector<1x512x2xbf16>
    %26 = vector.shape_cast %25 : vector<1x512x2xbf16> to vector<512x2xbf16>
    %cst_33 = arith.constant dense<0.000000e+00> : vector<64x2xf32>
    %27 = tpu.matmul %24, %26, %cst_33 {dimension_numbers = #tpu.dot_dimension_numbers<[1], [0], [0], [1], [0, 0, 1, 1], [], []>} : vector<64x512xbf16>, vector<512x2xbf16>, vector<64x2xf32> -> vector<64x2xf32>
    %c0_34 = arith.constant 0 : index
    %c0_35 = arith.constant 0 : index
    %28 = vector.load %arg2[%c0_34, %c0_35] : memref<64x512xbf16, #tpu.memory_space<vmem>>, vector<64x512xbf16>
    %c7 = arith.constant 7 : index
    %c0_36 = arith.constant 0 : index
    %c0_37 = arith.constant 0 : index
    %29 = vector.load %arg0[%c7, %c0_36, %c0_37] : memref<16x512x2xbf16, #tpu.memory_space<vmem>>, vector<1x512x2xbf16>
    %30 = vector.shape_cast %29 : vector<1x512x2xbf16> to vector<512x2xbf16>
    %cst_38 = arith.constant dense<0.000000e+00> : vector<64x2xf32>
    %31 = tpu.matmul %28, %30, %cst_38 {dimension_numbers = #tpu.dot_dimension_numbers<[1], [0], [0], [1], [0, 0, 1, 1], [], []>} : vector<64x512xbf16>, vector<512x2xbf16>, vector<64x2xf32> -> vector<64x2xf32>
    %c0_39 = arith.constant 0 : index
    %c0_40 = arith.constant 0 : index
    %32 = vector.load %arg2[%c0_39, %c0_40] : memref<64x512xbf16, #tpu.memory_space<vmem>>, vector<64x512xbf16>
    %c8 = arith.constant 8 : index
    %c0_41 = arith.constant 0 : index
    %c0_42 = arith.constant 0 : index
    %33 = vector.load %arg0[%c8, %c0_41, %c0_42] : memref<16x512x2xbf16, #tpu.memory_space<vmem>>, vector<1x512x2xbf16>
    %34 = vector.shape_cast %33 : vector<1x512x2xbf16> to vector<512x2xbf16>
    %cst_43 = arith.constant dense<0.000000e+00> : vector<64x2xf32>
    %35 = tpu.matmul %32, %34, %cst_43 {dimension_numbers = #tpu.dot_dimension_numbers<[1], [0], [0], [1], [0, 0, 1, 1], [], []>} : vector<64x512xbf16>, vector<512x2xbf16>, vector<64x2xf32> -> vector<64x2xf32>
    %c0_44 = arith.constant 0 : index
    %c0_45 = arith.constant 0 : index
    %36 = vector.load %arg2[%c0_44, %c0_45] : memref<64x512xbf16, #tpu.memory_space<vmem>>, vector<64x512xbf16>
    %c9 = arith.constant 9 : index
    %c0_46 = arith.constant 0 : index
    %c0_47 = arith.constant 0 : index
    %37 = vector.load %arg0[%c9, %c0_46, %c0_47] : memref<16x512x2xbf16, #tpu.memory_space<vmem>>, vector<1x512x2xbf16>
    %38 = vector.shape_cast %37 : vector<1x512x2xbf16> to vector<512x2xbf16>
    %cst_48 = arith.constant dense<0.000000e+00> : vector<64x2xf32>
    %39 = tpu.matmul %36, %38, %cst_48 {dimension_numbers = #tpu.dot_dimension_numbers<[1], [0], [0], [1], [0, 0, 1, 1], [], []>} : vector<64x512xbf16>, vector<512x2xbf16>, vector<64x2xf32> -> vector<64x2xf32>
    %c0_49 = arith.constant 0 : index
    %c0_50 = arith.constant 0 : index
    %40 = vector.load %arg2[%c0_49, %c0_50] : memref<64x512xbf16, #tpu.memory_space<vmem>>, vector<64x512xbf16>
    %c10 = arith.constant 10 : index
    %c0_51 = arith.constant 0 : index
    %c0_52 = arith.constant 0 : index
    %41 = vector.load %arg0[%c10, %c0_51, %c0_52] : memref<16x512x2xbf16, #tpu.memory_space<vmem>>, vector<1x512x2xbf16>
    %42 = vector.shape_cast %41 : vector<1x512x2xbf16> to vector<512x2xbf16>
    %cst_53 = arith.constant dense<0.000000e+00> : vector<64x2xf32>
    %43 = tpu.matmul %40, %42, %cst_53 {dimension_numbers = #tpu.dot_dimension_numbers<[1], [0], [0], [1], [0, 0, 1, 1], [], []>} : vector<64x512xbf16>, vector<512x2xbf16>, vector<64x2xf32> -> vector<64x2xf32>
    %c0_54 = arith.constant 0 : index
    %c0_55 = arith.constant 0 : index
    %44 = vector.load %arg2[%c0_54, %c0_55] : memref<64x512xbf16, #tpu.memory_space<vmem>>, vector<64x512xbf16>
    %c11 = arith.constant 11 : index
    %c0_56 = arith.constant 0 : index
    %c0_57 = arith.constant 0 : index
    %45 = vector.load %arg0[%c11, %c0_56, %c0_57] : memref<16x512x2xbf16, #tpu.memory_space<vmem>>, vector<1x512x2xbf16>
    %46 = vector.shape_cast %45 : vector<1x512x2xbf16> to vector<512x2xbf16>
    %cst_58 = arith.constant dense<0.000000e+00> : vector<64x2xf32>
    %47 = tpu.matmul %44, %46, %cst_58 {dimension_numbers = #tpu.dot_dimension_numbers<[1], [0], [0], [1], [0, 0, 1, 1], [], []>} : vector<64x512xbf16>, vector<512x2xbf16>, vector<64x2xf32> -> vector<64x2xf32>
    %c0_59 = arith.constant 0 : index
    %c0_60 = arith.constant 0 : index
    %48 = vector.load %arg2[%c0_59, %c0_60] : memref<64x512xbf16, #tpu.memory_space<vmem>>, vector<64x512xbf16>
    %c12 = arith.constant 12 : index
    %c0_61 = arith.constant 0 : index
    %c0_62 = arith.constant 0 : index
    %49 = vector.load %arg0[%c12, %c0_61, %c0_62] : memref<16x512x2xbf16, #tpu.memory_space<vmem>>, vector<1x512x2xbf16>
    %50 = vector.shape_cast %49 : vector<1x512x2xbf16> to vector<512x2xbf16>
    %cst_63 = arith.constant dense<0.000000e+00> : vector<64x2xf32>
    %51 = tpu.matmul %48, %50, %cst_63 {dimension_numbers = #tpu.dot_dimension_numbers<[1], [0], [0], [1], [0, 0, 1, 1], [], []>} : vector<64x512xbf16>, vector<512x2xbf16>, vector<64x2xf32> -> vector<64x2xf32>
    %c0_64 = arith.constant 0 : index
    %c0_65 = arith.constant 0 : index
    %52 = vector.load %arg2[%c0_64, %c0_65] : memref<64x512xbf16, #tpu.memory_space<vmem>>, vector<64x512xbf16>
    %c13 = arith.constant 13 : index
    %c0_66 = arith.constant 0 : index
    %c0_67 = arith.constant 0 : index
    %53 = vector.load %arg0[%c13, %c0_66, %c0_67] : memref<16x512x2xbf16, #tpu.memory_space<vmem>>, vector<1x512x2xbf16>
    %54 = vector.shape_cast %53 : vector<1x512x2xbf16> to vector<512x2xbf16>
    %cst_68 = arith.constant dense<0.000000e+00> : vector<64x2xf32>
    %55 = tpu.matmul %52, %54, %cst_68 {dimension_numbers = #tpu.dot_dimension_numbers<[1], [0], [0], [1], [0, 0, 1, 1], [], []>} : vector<64x512xbf16>, vector<512x2xbf16>, vector<64x2xf32> -> vector<64x2xf32>
    %c0_69 = arith.constant 0 : index
    %c0_70 = arith.constant 0 : index
    %56 = vector.load %arg2[%c0_69, %c0_70] : memref<64x512xbf16, #tpu.memory_space<vmem>>, vector<64x512xbf16>
    %c14 = arith.constant 14 : index
    %c0_71 = arith.constant 0 : index
    %c0_72 = arith.constant 0 : index
    %57 = vector.load %arg0[%c14, %c0_71, %c0_72] : memref<16x512x2xbf16, #tpu.memory_space<vmem>>, vector<1x512x2xbf16>
    %58 = vector.shape_cast %57 : vector<1x512x2xbf16> to vector<512x2xbf16>
    %cst_73 = arith.constant dense<0.000000e+00> : vector<64x2xf32>
    %59 = tpu.matmul %56, %58, %cst_73 {dimension_numbers = #tpu.dot_dimension_numbers<[1], [0], [0], [1], [0, 0, 1, 1], [], []>} : vector<64x512xbf16>, vector<512x2xbf16>, vector<64x2xf32> -> vector<64x2xf32>
    %c0_74 = arith.constant 0 : index
    %c0_75 = arith.constant 0 : index
    %60 = vector.load %arg2[%c0_74, %c0_75] : memref<64x512xbf16, #tpu.memory_space<vmem>>, vector<64x512xbf16>
    %c15 = arith.constant 15 : index
    %c0_76 = arith.constant 0 : index
    %c0_77 = arith.constant 0 : index
    %61 = vector.load %arg0[%c15, %c0_76, %c0_77] : memref<16x512x2xbf16, #tpu.memory_space<vmem>>, vector<1x512x2xbf16>
    %62 = vector.shape_cast %61 : vector<1x512x2xbf16> to vector<512x2xbf16>
    %cst_78 = arith.constant dense<0.000000e+00> : vector<64x2xf32>
    %63 = tpu.matmul %60, %62, %cst_78 {dimension_numbers = #tpu.dot_dimension_numbers<[1], [0], [0], [1], [0, 0, 1, 1], [], []>} : vector<64x512xbf16>, vector<512x2xbf16>, vector<64x2xf32> -> vector<64x2xf32>
    %cst_79 = arith.constant dense<0.000000e+00> : vector<64xf32>
    %64 = vector.multi_reduction <add>, %3, %cst_79 [1] : vector<64x2xf32> to vector<64xf32>
    %65 = vector.shape_cast %64 : vector<64xf32> to vector<64x1xf32>
    %cst_80 = arith.constant 0.000000e+00 : f32
    %66 = vector.broadcast %cst_80 : f32 to vector<64x1xf32>
    %67 = arith.addf %66, %65 : vector<64x1xf32>
    %cst_81 = arith.constant dense<0.000000e+00> : vector<64xf32>
    %68 = vector.multi_reduction <add>, %7, %cst_81 [1] : vector<64x2xf32> to vector<64xf32>
    %69 = vector.shape_cast %68 : vector<64xf32> to vector<64x1xf32>
    %70 = arith.addf %67, %69 : vector<64x1xf32>
    %cst_82 = arith.constant dense<0.000000e+00> : vector<64xf32>
    %71 = vector.multi_reduction <add>, %11, %cst_82 [1] : vector<64x2xf32> to vector<64xf32>
    %72 = vector.shape_cast %71 : vector<64xf32> to vector<64x1xf32>
    %73 = arith.addf %70, %72 : vector<64x1xf32>
    %cst_83 = arith.constant dense<0.000000e+00> : vector<64xf32>
    %74 = vector.multi_reduction <add>, %15, %cst_83 [1] : vector<64x2xf32> to vector<64xf32>
    %75 = vector.shape_cast %74 : vector<64xf32> to vector<64x1xf32>
    %76 = arith.addf %73, %75 : vector<64x1xf32>
    %cst_84 = arith.constant dense<0.000000e+00> : vector<64xf32>
    %77 = vector.multi_reduction <add>, %19, %cst_84 [1] : vector<64x2xf32> to vector<64xf32>
    %78 = vector.shape_cast %77 : vector<64xf32> to vector<64x1xf32>
    %79 = arith.addf %76, %78 : vector<64x1xf32>
    %cst_85 = arith.constant dense<0.000000e+00> : vector<64xf32>
    %80 = vector.multi_reduction <add>, %23, %cst_85 [1] : vector<64x2xf32> to vector<64xf32>
    %81 = vector.shape_cast %80 : vector<64xf32> to vector<64x1xf32>
    %82 = arith.addf %79, %81 : vector<64x1xf32>
    %cst_86 = arith.constant dense<0.000000e+00> : vector<64xf32>
    %83 = vector.multi_reduction <add>, %27, %cst_86 [1] : vector<64x2xf32> to vector<64xf32>
    %84 = vector.shape_cast %83 : vector<64xf32> to vector<64x1xf32>
    %85 = arith.addf %82, %84 : vector<64x1xf32>
    %cst_87 = arith.constant dense<0.000000e+00> : vector<64xf32>
    %86 = vector.multi_reduction <add>, %31, %cst_87 [1] : vector<64x2xf32> to vector<64xf32>
    %87 = vector.shape_cast %86 : vector<64xf32> to vector<64x1xf32>
    %88 = arith.addf %85, %87 : vector<64x1xf32>
    %cst_88 = arith.constant dense<0.000000e+00> : vector<64xf32>
    %89 = vector.multi_reduction <add>, %35, %cst_88 [1] : vector<64x2xf32> to vector<64xf32>
    %90 = vector.shape_cast %89 : vector<64xf32> to vector<64x1xf32>
    %91 = arith.addf %88, %90 : vector<64x1xf32>
    %cst_89 = arith.constant dense<0.000000e+00> : vector<64xf32>
    %92 = vector.multi_reduction <add>, %39, %cst_89 [1] : vector<64x2xf32> to vector<64xf32>
    %93 = vector.shape_cast %92 : vector<64xf32> to vector<64x1xf32>
    %94 = arith.addf %91, %93 : vector<64x1xf32>
    %cst_90 = arith.constant dense<0.000000e+00> : vector<64xf32>
    %95 = vector.multi_reduction <add>, %43, %cst_90 [1] : vector<64x2xf32> to vector<64xf32>
    %96 = vector.shape_cast %95 : vector<64xf32> to vector<64x1xf32>
    %97 = arith.addf %94, %96 : vector<64x1xf32>
    %cst_91 = arith.constant dense<0.000000e+00> : vector<64xf32>
    %98 = vector.multi_reduction <add>, %47, %cst_91 [1] : vector<64x2xf32> to vector<64xf32>
    %99 = vector.shape_cast %98 : vector<64xf32> to vector<64x1xf32>
    %100 = arith.addf %97, %99 : vector<64x1xf32>
    %cst_92 = arith.constant dense<0.000000e+00> : vector<64xf32>
    %101 = vector.multi_reduction <add>, %51, %cst_92 [1] : vector<64x2xf32> to vector<64xf32>
    %102 = vector.shape_cast %101 : vector<64xf32> to vector<64x1xf32>
    %103 = arith.addf %100, %102 : vector<64x1xf32>
    %cst_93 = arith.constant dense<0.000000e+00> : vector<64xf32>
    %104 = vector.multi_reduction <add>, %55, %cst_93 [1] : vector<64x2xf32> to vector<64xf32>
    %105 = vector.shape_cast %104 : vector<64xf32> to vector<64x1xf32>
    %106 = arith.addf %103, %105 : vector<64x1xf32>
    %cst_94 = arith.constant dense<0.000000e+00> : vector<64xf32>
    %107 = vector.multi_reduction <add>, %59, %cst_94 [1] : vector<64x2xf32> to vector<64xf32>
    %108 = vector.shape_cast %107 : vector<64xf32> to vector<64x1xf32>
    %109 = arith.addf %106, %108 : vector<64x1xf32>
    %cst_95 = arith.constant dense<0.000000e+00> : vector<64xf32>
    %110 = vector.multi_reduction <add>, %63, %cst_95 [1] : vector<64x2xf32> to vector<64xf32>
    %111 = vector.shape_cast %110 : vector<64xf32> to vector<64x1xf32>
    %112 = arith.addf %109, %111 : vector<64x1xf32>
    %113 = arith.mulf %3, %3 : vector<64x2xf32>
    %cst_96 = arith.constant dense<0.000000e+00> : vector<64xf32>
    %114 = vector.multi_reduction <add>, %113, %cst_96 [1] : vector<64x2xf32> to vector<64xf32>
    %115 = vector.shape_cast %114 : vector<64xf32> to vector<64x1xf32>
    %cst_97 = arith.constant 0.000000e+00 : f32
    %116 = vector.broadcast %cst_97 : f32 to vector<64x1xf32>
    %117 = arith.addf %116, %115 : vector<64x1xf32>
    %118 = arith.mulf %7, %7 : vector<64x2xf32>
    %cst_98 = arith.constant dense<0.000000e+00> : vector<64xf32>
    %119 = vector.multi_reduction <add>, %118, %cst_98 [1] : vector<64x2xf32> to vector<64xf32>
    %120 = vector.shape_cast %119 : vector<64xf32> to vector<64x1xf32>
    %121 = arith.addf %117, %120 : vector<64x1xf32>
    %122 = arith.mulf %11, %11 : vector<64x2xf32>
    %cst_99 = arith.constant dense<0.000000e+00> : vector<64xf32>
    %123 = vector.multi_reduction <add>, %122, %cst_99 [1] : vector<64x2xf32> to vector<64xf32>
    %124 = vector.shape_cast %123 : vector<64xf32> to vector<64x1xf32>
    %125 = arith.addf %121, %124 : vector<64x1xf32>
    %126 = arith.mulf %15, %15 : vector<64x2xf32>
    %cst_100 = arith.constant dense<0.000000e+00> : vector<64xf32>
    %127 = vector.multi_reduction <add>, %126, %cst_100 [1] : vector<64x2xf32> to vector<64xf32>
    %128 = vector.shape_cast %127 : vector<64xf32> to vector<64x1xf32>
    %129 = arith.addf %125, %128 : vector<64x1xf32>
    %130 = arith.mulf %19, %19 : vector<64x2xf32>
    %cst_101 = arith.constant dense<0.000000e+00> : vector<64xf32>
    %131 = vector.multi_reduction <add>, %130, %cst_101 [1] : vector<64x2xf32> to vector<64xf32>
    %132 = vector.shape_cast %131 : vector<64xf32> to vector<64x1xf32>
    %133 = arith.addf %129, %132 : vector<64x1xf32>
    %134 = arith.mulf %23, %23 : vector<64x2xf32>
    %cst_102 = arith.constant dense<0.000000e+00> : vector<64xf32>
    %135 = vector.multi_reduction <add>, %134, %cst_102 [1] : vector<64x2xf32> to vector<64xf32>
    %136 = vector.shape_cast %135 : vector<64xf32> to vector<64x1xf32>
    %137 = arith.addf %133, %136 : vector<64x1xf32>
    %138 = arith.mulf %27, %27 : vector<64x2xf32>
    %cst_103 = arith.constant dense<0.000000e+00> : vector<64xf32>
    %139 = vector.multi_reduction <add>, %138, %cst_103 [1] : vector<64x2xf32> to vector<64xf32>
    %140 = vector.shape_cast %139 : vector<64xf32> to vector<64x1xf32>
    %141 = arith.addf %137, %140 : vector<64x1xf32>
    %142 = arith.mulf %31, %31 : vector<64x2xf32>
    %cst_104 = arith.constant dense<0.000000e+00> : vector<64xf32>
    %143 = vector.multi_reduction <add>, %142, %cst_104 [1] : vector<64x2xf32> to vector<64xf32>
    %144 = vector.shape_cast %143 : vector<64xf32> to vector<64x1xf32>
    %145 = arith.addf %141, %144 : vector<64x1xf32>
    %146 = arith.mulf %35, %35 : vector<64x2xf32>
    %cst_105 = arith.constant dense<0.000000e+00> : vector<64xf32>
    %147 = vector.multi_reduction <add>, %146, %cst_105 [1] : vector<64x2xf32> to vector<64xf32>
    %148 = vector.shape_cast %147 : vector<64xf32> to vector<64x1xf32>
    %149 = arith.addf %145, %148 : vector<64x1xf32>
    %150 = arith.mulf %39, %39 : vector<64x2xf32>
    %cst_106 = arith.constant dense<0.000000e+00> : vector<64xf32>
    %151 = vector.multi_reduction <add>, %150, %cst_106 [1] : vector<64x2xf32> to vector<64xf32>
    %152 = vector.shape_cast %151 : vector<64xf32> to vector<64x1xf32>
    %153 = arith.addf %149, %152 : vector<64x1xf32>
    %154 = arith.mulf %43, %43 : vector<64x2xf32>
    %cst_107 = arith.constant dense<0.000000e+00> : vector<64xf32>
    %155 = vector.multi_reduction <add>, %154, %cst_107 [1] : vector<64x2xf32> to vector<64xf32>
    %156 = vector.shape_cast %155 : vector<64xf32> to vector<64x1xf32>
    %157 = arith.addf %153, %156 : vector<64x1xf32>
    %158 = arith.mulf %47, %47 : vector<64x2xf32>
    %cst_108 = arith.constant dense<0.000000e+00> : vector<64xf32>
    %159 = vector.multi_reduction <add>, %158, %cst_108 [1] : vector<64x2xf32> to vector<64xf32>
    %160 = vector.shape_cast %159 : vector<64xf32> to vector<64x1xf32>
    %161 = arith.addf %157, %160 : vector<64x1xf32>
    %162 = arith.mulf %51, %51 : vector<64x2xf32>
    %cst_109 = arith.constant dense<0.000000e+00> : vector<64xf32>
    %163 = vector.multi_reduction <add>, %162, %cst_109 [1] : vector<64x2xf32> to vector<64xf32>
    %164 = vector.shape_cast %163 : vector<64xf32> to vector<64x1xf32>
    %165 = arith.addf %161, %164 : vector<64x1xf32>
    %166 = arith.mulf %55, %55 : vector<64x2xf32>
    %cst_110 = arith.constant dense<0.000000e+00> : vector<64xf32>
    %167 = vector.multi_reduction <add>, %166, %cst_110 [1] : vector<64x2xf32> to vector<64xf32>
    %168 = vector.shape_cast %167 : vector<64xf32> to vector<64x1xf32>
    %169 = arith.addf %165, %168 : vector<64x1xf32>
    %170 = arith.mulf %59, %59 : vector<64x2xf32>
    %cst_111 = arith.constant dense<0.000000e+00> : vector<64xf32>
    %171 = vector.multi_reduction <add>, %170, %cst_111 [1] : vector<64x2xf32> to vector<64xf32>
    %172 = vector.shape_cast %171 : vector<64xf32> to vector<64x1xf32>
    %173 = arith.addf %169, %172 : vector<64x1xf32>
    %174 = arith.mulf %63, %63 : vector<64x2xf32>
    %cst_112 = arith.constant dense<0.000000e+00> : vector<64xf32>
    %175 = vector.multi_reduction <add>, %174, %cst_112 [1] : vector<64x2xf32> to vector<64xf32>
    %176 = vector.shape_cast %175 : vector<64xf32> to vector<64x1xf32>
    %177 = arith.addf %173, %176 : vector<64x1xf32>
    %cst_113 = arith.constant 3.125000e-02 : f32
    %178 = vector.broadcast %cst_113 : f32 to vector<64x1xf32>
    %179 = arith.mulf %112, %178 : vector<64x1xf32>
    %cst_114 = arith.constant 3.125000e-02 : f32
    %180 = vector.broadcast %cst_114 : f32 to vector<64x1xf32>
    %181 = arith.mulf %177, %180 : vector<64x1xf32>
    %182 = arith.mulf %179, %179 : vector<64x1xf32>
    %183 = arith.subf %181, %182 : vector<64x1xf32>
    %cst_115 = arith.constant 0.000000e+00 : f32
    %184 = vector.broadcast %cst_115 : f32 to vector<64x1xf32>
    %185 = arith.maximumf %183, %184 : vector<64x1xf32>
    %cst_116 = arith.constant 9.99999974E-6 : f32
    %186 = vector.broadcast %cst_116 : f32 to vector<64x1xf32>
    %187 = arith.addf %185, %186 : vector<64x1xf32>
    %188 = math.rsqrt %187 : vector<64x1xf32>
    %c0_117 = arith.constant 0 : index
    %c0_118 = arith.constant 0 : index
    %189 = vector.load %arg3[%c0_117, %c0_118] : memref<64x1xf32, #tpu.memory_space<vmem>>, vector<64x1xf32>
    %190 = arith.mulf %188, %189 : vector<64x1xf32>
    %c0_119 = arith.constant 0 : index
    %c0_120 = arith.constant 0 : index
    %191 = vector.load %arg4[%c0_119, %c0_120] : memref<64x1xf32, #tpu.memory_space<vmem>>, vector<64x1xf32>
    %192 = arith.mulf %179, %190 : vector<64x1xf32>
    %193 = arith.subf %191, %192 : vector<64x1xf32>
    %cst_121 = arith.constant 0.000000e+00 : f32
    %194 = vector.broadcast %cst_121 : f32 to vector<16x2xf32>
    %195 = vector.broadcast %190 : vector<64x1xf32> to vector<64x2xf32>
    %196 = arith.mulf %3, %195 : vector<64x2xf32>
    %197 = vector.broadcast %193 : vector<64x1xf32> to vector<64x2xf32>
    %198 = arith.addf %196, %197 : vector<64x2xf32>
    %cst_122 = arith.constant 0.000000e+00 : f32
    %199 = vector.broadcast %cst_122 : f32 to vector<64x2xf32>
    %200 = arith.cmpf ogt, %198, %199 : vector<64x2xf32>
    %cst_123 = arith.constant 2.000000e-01 : f32
    %201 = vector.broadcast %cst_123 : f32 to vector<64x2xf32>
    %202 = arith.mulf %201, %198 : vector<64x2xf32>
    %203 = arith.select %200, %198, %202 : vector<64x2xi1>, vector<64x2xf32>
    %204 = arith.truncf %203 : vector<64x2xf32> to vector<64x2xbf16>
    %c0_124 = arith.constant 0 : index
    %c0_125 = arith.constant 0 : index
    %c0_126 = arith.constant 0 : index
    %205 = vector.load %arg5[%c0_124, %c0_125, %c0_126] : memref<16x16x64xbf16, #tpu.memory_space<vmem>>, vector<1x16x64xbf16>
    %206 = vector.shape_cast %205 : vector<1x16x64xbf16> to vector<16x64xbf16>
    %cst_127 = arith.constant dense<0.000000e+00> : vector<16x2xf32>
    %207 = tpu.matmul %206, %204, %cst_127 {dimension_numbers = #tpu.dot_dimension_numbers<[1], [0], [0], [1], [0, 0, 1, 1], [], []>} : vector<16x64xbf16>, vector<64x2xbf16>, vector<16x2xf32> -> vector<16x2xf32>
    %208 = arith.addf %194, %207 : vector<16x2xf32>
    %209 = vector.broadcast %190 : vector<64x1xf32> to vector<64x2xf32>
    %210 = arith.mulf %7, %209 : vector<64x2xf32>
    %211 = vector.broadcast %193 : vector<64x1xf32> to vector<64x2xf32>
    %212 = arith.addf %210, %211 : vector<64x2xf32>
    %cst_128 = arith.constant 0.000000e+00 : f32
    %213 = vector.broadcast %cst_128 : f32 to vector<64x2xf32>
    %214 = arith.cmpf ogt, %212, %213 : vector<64x2xf32>
    %cst_129 = arith.constant 2.000000e-01 : f32
    %215 = vector.broadcast %cst_129 : f32 to vector<64x2xf32>
    %216 = arith.mulf %215, %212 : vector<64x2xf32>
    %217 = arith.select %214, %212, %216 : vector<64x2xi1>, vector<64x2xf32>
    %218 = arith.truncf %217 : vector<64x2xf32> to vector<64x2xbf16>
    %c1_130 = arith.constant 1 : index
    %c0_131 = arith.constant 0 : index
    %c0_132 = arith.constant 0 : index
    %219 = vector.load %arg5[%c1_130, %c0_131, %c0_132] : memref<16x16x64xbf16, #tpu.memory_space<vmem>>, vector<1x16x64xbf16>
    %220 = vector.shape_cast %219 : vector<1x16x64xbf16> to vector<16x64xbf16>
    %cst_133 = arith.constant dense<0.000000e+00> : vector<16x2xf32>
    %221 = tpu.matmul %220, %218, %cst_133 {dimension_numbers = #tpu.dot_dimension_numbers<[1], [0], [0], [1], [0, 0, 1, 1], [], []>} : vector<16x64xbf16>, vector<64x2xbf16>, vector<16x2xf32> -> vector<16x2xf32>
    %222 = arith.addf %208, %221 : vector<16x2xf32>
    %223 = vector.broadcast %190 : vector<64x1xf32> to vector<64x2xf32>
    %224 = arith.mulf %11, %223 : vector<64x2xf32>
    %225 = vector.broadcast %193 : vector<64x1xf32> to vector<64x2xf32>
    %226 = arith.addf %224, %225 : vector<64x2xf32>
    %cst_134 = arith.constant 0.000000e+00 : f32
    %227 = vector.broadcast %cst_134 : f32 to vector<64x2xf32>
    %228 = arith.cmpf ogt, %226, %227 : vector<64x2xf32>
    %cst_135 = arith.constant 2.000000e-01 : f32
    %229 = vector.broadcast %cst_135 : f32 to vector<64x2xf32>
    %230 = arith.mulf %229, %226 : vector<64x2xf32>
    %231 = arith.select %228, %226, %230 : vector<64x2xi1>, vector<64x2xf32>
    %232 = arith.truncf %231 : vector<64x2xf32> to vector<64x2xbf16>
    %c2_136 = arith.constant 2 : index
    %c0_137 = arith.constant 0 : index
    %c0_138 = arith.constant 0 : index
    %233 = vector.load %arg5[%c2_136, %c0_137, %c0_138] : memref<16x16x64xbf16, #tpu.memory_space<vmem>>, vector<1x16x64xbf16>
    %234 = vector.shape_cast %233 : vector<1x16x64xbf16> to vector<16x64xbf16>
    %cst_139 = arith.constant dense<0.000000e+00> : vector<16x2xf32>
    %235 = tpu.matmul %234, %232, %cst_139 {dimension_numbers = #tpu.dot_dimension_numbers<[1], [0], [0], [1], [0, 0, 1, 1], [], []>} : vector<16x64xbf16>, vector<64x2xbf16>, vector<16x2xf32> -> vector<16x2xf32>
    %236 = arith.addf %222, %235 : vector<16x2xf32>
    %237 = vector.broadcast %190 : vector<64x1xf32> to vector<64x2xf32>
    %238 = arith.mulf %15, %237 : vector<64x2xf32>
    %239 = vector.broadcast %193 : vector<64x1xf32> to vector<64x2xf32>
    %240 = arith.addf %238, %239 : vector<64x2xf32>
    %cst_140 = arith.constant 0.000000e+00 : f32
    %241 = vector.broadcast %cst_140 : f32 to vector<64x2xf32>
    %242 = arith.cmpf ogt, %240, %241 : vector<64x2xf32>
    %cst_141 = arith.constant 2.000000e-01 : f32
    %243 = vector.broadcast %cst_141 : f32 to vector<64x2xf32>
    %244 = arith.mulf %243, %240 : vector<64x2xf32>
    %245 = arith.select %242, %240, %244 : vector<64x2xi1>, vector<64x2xf32>
    %246 = arith.truncf %245 : vector<64x2xf32> to vector<64x2xbf16>
    %c3_142 = arith.constant 3 : index
    %c0_143 = arith.constant 0 : index
    %c0_144 = arith.constant 0 : index
    %247 = vector.load %arg5[%c3_142, %c0_143, %c0_144] : memref<16x16x64xbf16, #tpu.memory_space<vmem>>, vector<1x16x64xbf16>
    %248 = vector.shape_cast %247 : vector<1x16x64xbf16> to vector<16x64xbf16>
    %cst_145 = arith.constant dense<0.000000e+00> : vector<16x2xf32>
    %249 = tpu.matmul %248, %246, %cst_145 {dimension_numbers = #tpu.dot_dimension_numbers<[1], [0], [0], [1], [0, 0, 1, 1], [], []>} : vector<16x64xbf16>, vector<64x2xbf16>, vector<16x2xf32> -> vector<16x2xf32>
    %250 = arith.addf %236, %249 : vector<16x2xf32>
    %251 = vector.broadcast %190 : vector<64x1xf32> to vector<64x2xf32>
    %252 = arith.mulf %19, %251 : vector<64x2xf32>
    %253 = vector.broadcast %193 : vector<64x1xf32> to vector<64x2xf32>
    %254 = arith.addf %252, %253 : vector<64x2xf32>
    %cst_146 = arith.constant 0.000000e+00 : f32
    %255 = vector.broadcast %cst_146 : f32 to vector<64x2xf32>
    %256 = arith.cmpf ogt, %254, %255 : vector<64x2xf32>
    %cst_147 = arith.constant 2.000000e-01 : f32
    %257 = vector.broadcast %cst_147 : f32 to vector<64x2xf32>
    %258 = arith.mulf %257, %254 : vector<64x2xf32>
    %259 = arith.select %256, %254, %258 : vector<64x2xi1>, vector<64x2xf32>
    %260 = arith.truncf %259 : vector<64x2xf32> to vector<64x2xbf16>
    %c4_148 = arith.constant 4 : index
    %c0_149 = arith.constant 0 : index
    %c0_150 = arith.constant 0 : index
    %261 = vector.load %arg5[%c4_148, %c0_149, %c0_150] : memref<16x16x64xbf16, #tpu.memory_space<vmem>>, vector<1x16x64xbf16>
    %262 = vector.shape_cast %261 : vector<1x16x64xbf16> to vector<16x64xbf16>
    %cst_151 = arith.constant dense<0.000000e+00> : vector<16x2xf32>
    %263 = tpu.matmul %262, %260, %cst_151 {dimension_numbers = #tpu.dot_dimension_numbers<[1], [0], [0], [1], [0, 0, 1, 1], [], []>} : vector<16x64xbf16>, vector<64x2xbf16>, vector<16x2xf32> -> vector<16x2xf32>
    %264 = arith.addf %250, %263 : vector<16x2xf32>
    %265 = vector.broadcast %190 : vector<64x1xf32> to vector<64x2xf32>
    %266 = arith.mulf %23, %265 : vector<64x2xf32>
    %267 = vector.broadcast %193 : vector<64x1xf32> to vector<64x2xf32>
    %268 = arith.addf %266, %267 : vector<64x2xf32>
    %cst_152 = arith.constant 0.000000e+00 : f32
    %269 = vector.broadcast %cst_152 : f32 to vector<64x2xf32>
    %270 = arith.cmpf ogt, %268, %269 : vector<64x2xf32>
    %cst_153 = arith.constant 2.000000e-01 : f32
    %271 = vector.broadcast %cst_153 : f32 to vector<64x2xf32>
    %272 = arith.mulf %271, %268 : vector<64x2xf32>
    %273 = arith.select %270, %268, %272 : vector<64x2xi1>, vector<64x2xf32>
    %274 = arith.truncf %273 : vector<64x2xf32> to vector<64x2xbf16>
    %c5_154 = arith.constant 5 : index
    %c0_155 = arith.constant 0 : index
    %c0_156 = arith.constant 0 : index
    %275 = vector.load %arg5[%c5_154, %c0_155, %c0_156] : memref<16x16x64xbf16, #tpu.memory_space<vmem>>, vector<1x16x64xbf16>
    %276 = vector.shape_cast %275 : vector<1x16x64xbf16> to vector<16x64xbf16>
    %cst_157 = arith.constant dense<0.000000e+00> : vector<16x2xf32>
    %277 = tpu.matmul %276, %274, %cst_157 {dimension_numbers = #tpu.dot_dimension_numbers<[1], [0], [0], [1], [0, 0, 1, 1], [], []>} : vector<16x64xbf16>, vector<64x2xbf16>, vector<16x2xf32> -> vector<16x2xf32>
    %278 = arith.addf %264, %277 : vector<16x2xf32>
    %279 = vector.broadcast %190 : vector<64x1xf32> to vector<64x2xf32>
    %280 = arith.mulf %27, %279 : vector<64x2xf32>
    %281 = vector.broadcast %193 : vector<64x1xf32> to vector<64x2xf32>
    %282 = arith.addf %280, %281 : vector<64x2xf32>
    %cst_158 = arith.constant 0.000000e+00 : f32
    %283 = vector.broadcast %cst_158 : f32 to vector<64x2xf32>
    %284 = arith.cmpf ogt, %282, %283 : vector<64x2xf32>
    %cst_159 = arith.constant 2.000000e-01 : f32
    %285 = vector.broadcast %cst_159 : f32 to vector<64x2xf32>
    %286 = arith.mulf %285, %282 : vector<64x2xf32>
    %287 = arith.select %284, %282, %286 : vector<64x2xi1>, vector<64x2xf32>
    %288 = arith.truncf %287 : vector<64x2xf32> to vector<64x2xbf16>
    %c6_160 = arith.constant 6 : index
    %c0_161 = arith.constant 0 : index
    %c0_162 = arith.constant 0 : index
    %289 = vector.load %arg5[%c6_160, %c0_161, %c0_162] : memref<16x16x64xbf16, #tpu.memory_space<vmem>>, vector<1x16x64xbf16>
    %290 = vector.shape_cast %289 : vector<1x16x64xbf16> to vector<16x64xbf16>
    %cst_163 = arith.constant dense<0.000000e+00> : vector<16x2xf32>
    %291 = tpu.matmul %290, %288, %cst_163 {dimension_numbers = #tpu.dot_dimension_numbers<[1], [0], [0], [1], [0, 0, 1, 1], [], []>} : vector<16x64xbf16>, vector<64x2xbf16>, vector<16x2xf32> -> vector<16x2xf32>
    %292 = arith.addf %278, %291 : vector<16x2xf32>
    %293 = vector.broadcast %190 : vector<64x1xf32> to vector<64x2xf32>
    %294 = arith.mulf %31, %293 : vector<64x2xf32>
    %295 = vector.broadcast %193 : vector<64x1xf32> to vector<64x2xf32>
    %296 = arith.addf %294, %295 : vector<64x2xf32>
    %cst_164 = arith.constant 0.000000e+00 : f32
    %297 = vector.broadcast %cst_164 : f32 to vector<64x2xf32>
    %298 = arith.cmpf ogt, %296, %297 : vector<64x2xf32>
    %cst_165 = arith.constant 2.000000e-01 : f32
    %299 = vector.broadcast %cst_165 : f32 to vector<64x2xf32>
    %300 = arith.mulf %299, %296 : vector<64x2xf32>
    %301 = arith.select %298, %296, %300 : vector<64x2xi1>, vector<64x2xf32>
    %302 = arith.truncf %301 : vector<64x2xf32> to vector<64x2xbf16>
    %c7_166 = arith.constant 7 : index
    %c0_167 = arith.constant 0 : index
    %c0_168 = arith.constant 0 : index
    %303 = vector.load %arg5[%c7_166, %c0_167, %c0_168] : memref<16x16x64xbf16, #tpu.memory_space<vmem>>, vector<1x16x64xbf16>
    %304 = vector.shape_cast %303 : vector<1x16x64xbf16> to vector<16x64xbf16>
    %cst_169 = arith.constant dense<0.000000e+00> : vector<16x2xf32>
    %305 = tpu.matmul %304, %302, %cst_169 {dimension_numbers = #tpu.dot_dimension_numbers<[1], [0], [0], [1], [0, 0, 1, 1], [], []>} : vector<16x64xbf16>, vector<64x2xbf16>, vector<16x2xf32> -> vector<16x2xf32>
    %306 = arith.addf %292, %305 : vector<16x2xf32>
    %307 = vector.broadcast %190 : vector<64x1xf32> to vector<64x2xf32>
    %308 = arith.mulf %35, %307 : vector<64x2xf32>
    %309 = vector.broadcast %193 : vector<64x1xf32> to vector<64x2xf32>
    %310 = arith.addf %308, %309 : vector<64x2xf32>
    %cst_170 = arith.constant 0.000000e+00 : f32
    %311 = vector.broadcast %cst_170 : f32 to vector<64x2xf32>
    %312 = arith.cmpf ogt, %310, %311 : vector<64x2xf32>
    %cst_171 = arith.constant 2.000000e-01 : f32
    %313 = vector.broadcast %cst_171 : f32 to vector<64x2xf32>
    %314 = arith.mulf %313, %310 : vector<64x2xf32>
    %315 = arith.select %312, %310, %314 : vector<64x2xi1>, vector<64x2xf32>
    %316 = arith.truncf %315 : vector<64x2xf32> to vector<64x2xbf16>
    %c8_172 = arith.constant 8 : index
    %c0_173 = arith.constant 0 : index
    %c0_174 = arith.constant 0 : index
    %317 = vector.load %arg5[%c8_172, %c0_173, %c0_174] : memref<16x16x64xbf16, #tpu.memory_space<vmem>>, vector<1x16x64xbf16>
    %318 = vector.shape_cast %317 : vector<1x16x64xbf16> to vector<16x64xbf16>
    %cst_175 = arith.constant dense<0.000000e+00> : vector<16x2xf32>
    %319 = tpu.matmul %318, %316, %cst_175 {dimension_numbers = #tpu.dot_dimension_numbers<[1], [0], [0], [1], [0, 0, 1, 1], [], []>} : vector<16x64xbf16>, vector<64x2xbf16>, vector<16x2xf32> -> vector<16x2xf32>
    %320 = arith.addf %306, %319 : vector<16x2xf32>
    %321 = vector.broadcast %190 : vector<64x1xf32> to vector<64x2xf32>
    %322 = arith.mulf %39, %321 : vector<64x2xf32>
    %323 = vector.broadcast %193 : vector<64x1xf32> to vector<64x2xf32>
    %324 = arith.addf %322, %323 : vector<64x2xf32>
    %cst_176 = arith.constant 0.000000e+00 : f32
    %325 = vector.broadcast %cst_176 : f32 to vector<64x2xf32>
    %326 = arith.cmpf ogt, %324, %325 : vector<64x2xf32>
    %cst_177 = arith.constant 2.000000e-01 : f32
    %327 = vector.broadcast %cst_177 : f32 to vector<64x2xf32>
    %328 = arith.mulf %327, %324 : vector<64x2xf32>
    %329 = arith.select %326, %324, %328 : vector<64x2xi1>, vector<64x2xf32>
    %330 = arith.truncf %329 : vector<64x2xf32> to vector<64x2xbf16>
    %c9_178 = arith.constant 9 : index
    %c0_179 = arith.constant 0 : index
    %c0_180 = arith.constant 0 : index
    %331 = vector.load %arg5[%c9_178, %c0_179, %c0_180] : memref<16x16x64xbf16, #tpu.memory_space<vmem>>, vector<1x16x64xbf16>
    %332 = vector.shape_cast %331 : vector<1x16x64xbf16> to vector<16x64xbf16>
    %cst_181 = arith.constant dense<0.000000e+00> : vector<16x2xf32>
    %333 = tpu.matmul %332, %330, %cst_181 {dimension_numbers = #tpu.dot_dimension_numbers<[1], [0], [0], [1], [0, 0, 1, 1], [], []>} : vector<16x64xbf16>, vector<64x2xbf16>, vector<16x2xf32> -> vector<16x2xf32>
    %334 = arith.addf %320, %333 : vector<16x2xf32>
    %335 = vector.broadcast %190 : vector<64x1xf32> to vector<64x2xf32>
    %336 = arith.mulf %43, %335 : vector<64x2xf32>
    %337 = vector.broadcast %193 : vector<64x1xf32> to vector<64x2xf32>
    %338 = arith.addf %336, %337 : vector<64x2xf32>
    %cst_182 = arith.constant 0.000000e+00 : f32
    %339 = vector.broadcast %cst_182 : f32 to vector<64x2xf32>
    %340 = arith.cmpf ogt, %338, %339 : vector<64x2xf32>
    %cst_183 = arith.constant 2.000000e-01 : f32
    %341 = vector.broadcast %cst_183 : f32 to vector<64x2xf32>
    %342 = arith.mulf %341, %338 : vector<64x2xf32>
    %343 = arith.select %340, %338, %342 : vector<64x2xi1>, vector<64x2xf32>
    %344 = arith.truncf %343 : vector<64x2xf32> to vector<64x2xbf16>
    %c10_184 = arith.constant 10 : index
    %c0_185 = arith.constant 0 : index
    %c0_186 = arith.constant 0 : index
    %345 = vector.load %arg5[%c10_184, %c0_185, %c0_186] : memref<16x16x64xbf16, #tpu.memory_space<vmem>>, vector<1x16x64xbf16>
    %346 = vector.shape_cast %345 : vector<1x16x64xbf16> to vector<16x64xbf16>
    %cst_187 = arith.constant dense<0.000000e+00> : vector<16x2xf32>
    %347 = tpu.matmul %346, %344, %cst_187 {dimension_numbers = #tpu.dot_dimension_numbers<[1], [0], [0], [1], [0, 0, 1, 1], [], []>} : vector<16x64xbf16>, vector<64x2xbf16>, vector<16x2xf32> -> vector<16x2xf32>
    %348 = arith.addf %334, %347 : vector<16x2xf32>
    %349 = vector.broadcast %190 : vector<64x1xf32> to vector<64x2xf32>
    %350 = arith.mulf %47, %349 : vector<64x2xf32>
    %351 = vector.broadcast %193 : vector<64x1xf32> to vector<64x2xf32>
    %352 = arith.addf %350, %351 : vector<64x2xf32>
    %cst_188 = arith.constant 0.000000e+00 : f32
    %353 = vector.broadcast %cst_188 : f32 to vector<64x2xf32>
    %354 = arith.cmpf ogt, %352, %353 : vector<64x2xf32>
    %cst_189 = arith.constant 2.000000e-01 : f32
    %355 = vector.broadcast %cst_189 : f32 to vector<64x2xf32>
    %356 = arith.mulf %355, %352 : vector<64x2xf32>
    %357 = arith.select %354, %352, %356 : vector<64x2xi1>, vector<64x2xf32>
    %358 = arith.truncf %357 : vector<64x2xf32> to vector<64x2xbf16>
    %c11_190 = arith.constant 11 : index
    %c0_191 = arith.constant 0 : index
    %c0_192 = arith.constant 0 : index
    %359 = vector.load %arg5[%c11_190, %c0_191, %c0_192] : memref<16x16x64xbf16, #tpu.memory_space<vmem>>, vector<1x16x64xbf16>
    %360 = vector.shape_cast %359 : vector<1x16x64xbf16> to vector<16x64xbf16>
    %cst_193 = arith.constant dense<0.000000e+00> : vector<16x2xf32>
    %361 = tpu.matmul %360, %358, %cst_193 {dimension_numbers = #tpu.dot_dimension_numbers<[1], [0], [0], [1], [0, 0, 1, 1], [], []>} : vector<16x64xbf16>, vector<64x2xbf16>, vector<16x2xf32> -> vector<16x2xf32>
    %362 = arith.addf %348, %361 : vector<16x2xf32>
    %363 = vector.broadcast %190 : vector<64x1xf32> to vector<64x2xf32>
    %364 = arith.mulf %51, %363 : vector<64x2xf32>
    %365 = vector.broadcast %193 : vector<64x1xf32> to vector<64x2xf32>
    %366 = arith.addf %364, %365 : vector<64x2xf32>
    %cst_194 = arith.constant 0.000000e+00 : f32
    %367 = vector.broadcast %cst_194 : f32 to vector<64x2xf32>
    %368 = arith.cmpf ogt, %366, %367 : vector<64x2xf32>
    %cst_195 = arith.constant 2.000000e-01 : f32
    %369 = vector.broadcast %cst_195 : f32 to vector<64x2xf32>
    %370 = arith.mulf %369, %366 : vector<64x2xf32>
    %371 = arith.select %368, %366, %370 : vector<64x2xi1>, vector<64x2xf32>
    %372 = arith.truncf %371 : vector<64x2xf32> to vector<64x2xbf16>
    %c12_196 = arith.constant 12 : index
    %c0_197 = arith.constant 0 : index
    %c0_198 = arith.constant 0 : index
    %373 = vector.load %arg5[%c12_196, %c0_197, %c0_198] : memref<16x16x64xbf16, #tpu.memory_space<vmem>>, vector<1x16x64xbf16>
    %374 = vector.shape_cast %373 : vector<1x16x64xbf16> to vector<16x64xbf16>
    %cst_199 = arith.constant dense<0.000000e+00> : vector<16x2xf32>
    %375 = tpu.matmul %374, %372, %cst_199 {dimension_numbers = #tpu.dot_dimension_numbers<[1], [0], [0], [1], [0, 0, 1, 1], [], []>} : vector<16x64xbf16>, vector<64x2xbf16>, vector<16x2xf32> -> vector<16x2xf32>
    %376 = arith.addf %362, %375 : vector<16x2xf32>
    %377 = vector.broadcast %190 : vector<64x1xf32> to vector<64x2xf32>
    %378 = arith.mulf %55, %377 : vector<64x2xf32>
    %379 = vector.broadcast %193 : vector<64x1xf32> to vector<64x2xf32>
    %380 = arith.addf %378, %379 : vector<64x2xf32>
    %cst_200 = arith.constant 0.000000e+00 : f32
    %381 = vector.broadcast %cst_200 : f32 to vector<64x2xf32>
    %382 = arith.cmpf ogt, %380, %381 : vector<64x2xf32>
    %cst_201 = arith.constant 2.000000e-01 : f32
    %383 = vector.broadcast %cst_201 : f32 to vector<64x2xf32>
    %384 = arith.mulf %383, %380 : vector<64x2xf32>
    %385 = arith.select %382, %380, %384 : vector<64x2xi1>, vector<64x2xf32>
    %386 = arith.truncf %385 : vector<64x2xf32> to vector<64x2xbf16>
    %c13_202 = arith.constant 13 : index
    %c0_203 = arith.constant 0 : index
    %c0_204 = arith.constant 0 : index
    %387 = vector.load %arg5[%c13_202, %c0_203, %c0_204] : memref<16x16x64xbf16, #tpu.memory_space<vmem>>, vector<1x16x64xbf16>
    %388 = vector.shape_cast %387 : vector<1x16x64xbf16> to vector<16x64xbf16>
    %cst_205 = arith.constant dense<0.000000e+00> : vector<16x2xf32>
    %389 = tpu.matmul %388, %386, %cst_205 {dimension_numbers = #tpu.dot_dimension_numbers<[1], [0], [0], [1], [0, 0, 1, 1], [], []>} : vector<16x64xbf16>, vector<64x2xbf16>, vector<16x2xf32> -> vector<16x2xf32>
    %390 = arith.addf %376, %389 : vector<16x2xf32>
    %391 = vector.broadcast %190 : vector<64x1xf32> to vector<64x2xf32>
    %392 = arith.mulf %59, %391 : vector<64x2xf32>
    %393 = vector.broadcast %193 : vector<64x1xf32> to vector<64x2xf32>
    %394 = arith.addf %392, %393 : vector<64x2xf32>
    %cst_206 = arith.constant 0.000000e+00 : f32
    %395 = vector.broadcast %cst_206 : f32 to vector<64x2xf32>
    %396 = arith.cmpf ogt, %394, %395 : vector<64x2xf32>
    %cst_207 = arith.constant 2.000000e-01 : f32
    %397 = vector.broadcast %cst_207 : f32 to vector<64x2xf32>
    %398 = arith.mulf %397, %394 : vector<64x2xf32>
    %399 = arith.select %396, %394, %398 : vector<64x2xi1>, vector<64x2xf32>
    %400 = arith.truncf %399 : vector<64x2xf32> to vector<64x2xbf16>
    %c14_208 = arith.constant 14 : index
    %c0_209 = arith.constant 0 : index
    %c0_210 = arith.constant 0 : index
    %401 = vector.load %arg5[%c14_208, %c0_209, %c0_210] : memref<16x16x64xbf16, #tpu.memory_space<vmem>>, vector<1x16x64xbf16>
    %402 = vector.shape_cast %401 : vector<1x16x64xbf16> to vector<16x64xbf16>
    %cst_211 = arith.constant dense<0.000000e+00> : vector<16x2xf32>
    %403 = tpu.matmul %402, %400, %cst_211 {dimension_numbers = #tpu.dot_dimension_numbers<[1], [0], [0], [1], [0, 0, 1, 1], [], []>} : vector<16x64xbf16>, vector<64x2xbf16>, vector<16x2xf32> -> vector<16x2xf32>
    %404 = arith.addf %390, %403 : vector<16x2xf32>
    %405 = vector.broadcast %190 : vector<64x1xf32> to vector<64x2xf32>
    %406 = arith.mulf %63, %405 : vector<64x2xf32>
    %407 = vector.broadcast %193 : vector<64x1xf32> to vector<64x2xf32>
    %408 = arith.addf %406, %407 : vector<64x2xf32>
    %cst_212 = arith.constant 0.000000e+00 : f32
    %409 = vector.broadcast %cst_212 : f32 to vector<64x2xf32>
    %410 = arith.cmpf ogt, %408, %409 : vector<64x2xf32>
    %cst_213 = arith.constant 2.000000e-01 : f32
    %411 = vector.broadcast %cst_213 : f32 to vector<64x2xf32>
    %412 = arith.mulf %411, %408 : vector<64x2xf32>
    %413 = arith.select %410, %408, %412 : vector<64x2xi1>, vector<64x2xf32>
    %414 = arith.truncf %413 : vector<64x2xf32> to vector<64x2xbf16>
    %c15_214 = arith.constant 15 : index
    %c0_215 = arith.constant 0 : index
    %c0_216 = arith.constant 0 : index
    %415 = vector.load %arg5[%c15_214, %c0_215, %c0_216] : memref<16x16x64xbf16, #tpu.memory_space<vmem>>, vector<1x16x64xbf16>
    %416 = vector.shape_cast %415 : vector<1x16x64xbf16> to vector<16x64xbf16>
    %cst_217 = arith.constant dense<0.000000e+00> : vector<16x2xf32>
    %417 = tpu.matmul %416, %414, %cst_217 {dimension_numbers = #tpu.dot_dimension_numbers<[1], [0], [0], [1], [0, 0, 1, 1], [], []>} : vector<16x64xbf16>, vector<64x2xbf16>, vector<16x2xf32> -> vector<16x2xf32>
    %418 = arith.addf %404, %417 : vector<16x2xf32>
    %c0_218 = arith.constant 0 : index
    %c0_219 = arith.constant 0 : index
    %419 = vector.load %arg6[%c0_218, %c0_219] : memref<16x1xf32, #tpu.memory_space<vmem>>, vector<16x1xf32>
    %420 = vector.broadcast %419 : vector<16x1xf32> to vector<16x2xf32>
    %421 = arith.addf %418, %420 : vector<16x2xf32>
    %cst_220 = arith.constant 0.000000e+00 : f32
    %422 = vector.broadcast %cst_220 : f32 to vector<16x2xf32>
    %423 = arith.cmpf ogt, %421, %422 : vector<16x2xf32>
    %cst_221 = arith.constant 2.000000e-01 : f32
    %424 = vector.broadcast %cst_221 : f32 to vector<16x2xf32>
    %425 = arith.mulf %424, %421 : vector<16x2xf32>
    %426 = arith.select %423, %421, %425 : vector<16x2xi1>, vector<16x2xf32>
    %427 = arith.truncf %426 : vector<16x2xf32> to vector<16x2xbf16>
    %c0_222 = arith.constant 0 : index
    %c0_223 = arith.constant 0 : index
    %428 = vector.load %arg7[%c0_222, %c0_223] : memref<32x16xbf16, #tpu.memory_space<vmem>>, vector<32x16xbf16>
    %cst_224 = arith.constant dense<0.000000e+00> : vector<32x2xf32>
    %429 = tpu.matmul %428, %427, %cst_224 {dimension_numbers = #tpu.dot_dimension_numbers<[1], [0], [0], [1], [0, 0, 1, 1], [], []>} : vector<32x16xbf16>, vector<16x2xbf16>, vector<32x2xf32> -> vector<32x2xf32>
    %c0_225 = arith.constant 0 : index
    %c0_226 = arith.constant 0 : index
    %430 = vector.load %arg8[%c0_225, %c0_226] : memref<32x16xbf16, #tpu.memory_space<vmem>>, vector<32x16xbf16>
    %c0_227 = arith.constant 0 : index
    %c0_228 = arith.constant 0 : index
    %431 = vector.load %arg1[%c0_227, %c0_228] : memref<16x2xbf16, #tpu.memory_space<vmem>>, vector<16x2xbf16>
    %cst_229 = arith.constant dense<0.000000e+00> : vector<32x2xf32>
    %432 = tpu.matmul %430, %431, %cst_229 {dimension_numbers = #tpu.dot_dimension_numbers<[1], [0], [0], [1], [0, 0, 1, 1], [], []>} : vector<32x16xbf16>, vector<16x2xbf16>, vector<32x2xf32> -> vector<32x2xf32>
    %433 = arith.addf %429, %432 : vector<32x2xf32>
    %c0_230 = arith.constant 0 : index
    %c0_231 = arith.constant 0 : index
    %434 = vector.load %arg9[%c0_230, %c0_231] : memref<32x1xf32, #tpu.memory_space<vmem>>, vector<32x1xf32>
    %435 = vector.broadcast %434 : vector<32x1xf32> to vector<32x2xf32>
    %436 = arith.addf %433, %435 : vector<32x2xf32>
    %cst_232 = arith.constant 0.000000e+00 : f32
    %437 = vector.broadcast %cst_232 : f32 to vector<32x2xf32>
    %438 = arith.maximumf %436, %437 : vector<32x2xf32>
    %439 = arith.truncf %438 : vector<32x2xf32> to vector<32x2xbf16>
    %c0_233 = arith.constant 0 : index
    %c0_234 = arith.constant 0 : index
    %440 = vector.load %arg10[%c0_233, %c0_234] : memref<4x32xbf16, #tpu.memory_space<vmem>>, vector<4x32xbf16>
    %cst_235 = arith.constant dense<0.000000e+00> : vector<4x2xf32>
    %441 = tpu.matmul %440, %439, %cst_235 {dimension_numbers = #tpu.dot_dimension_numbers<[1], [0], [0], [1], [0, 0, 1, 1], [], []>} : vector<4x32xbf16>, vector<32x2xbf16>, vector<4x2xf32> -> vector<4x2xf32>
    %c0_236 = arith.constant 0 : index
    %c0_237 = arith.constant 0 : index
    %442 = vector.load %arg11[%c0_236, %c0_237] : memref<4x1xf32, #tpu.memory_space<vmem>>, vector<4x1xf32>
    %443 = vector.broadcast %442 : vector<4x1xf32> to vector<4x2xf32>
    %444 = arith.addf %441, %443 : vector<4x2xf32>
    %c0_238 = arith.constant 0 : index
    %c0_239 = arith.constant 0 : index
    %445 = vector.load %arg12[%c0_238, %c0_239] : memref<4x2xf32, #tpu.memory_space<vmem>>, vector<4x2xf32>
    tpu.vector_store %arg12[%c0_238, %c0_239], %444 {strides = array<i32>} : memref<4x2xf32, #tpu.memory_space<vmem>>, vector<4x2xf32>,
    return
  }
}

</mosaic_0001>

<llo_original>
// kernel: generator_critic_forward.5
$region0: #{generator_critic_forward.5}
  #allocation0 [shape = 'u32[]', space=smem, size = 0x4, offset = 0x4, fixed_abs, tag = 'smem constant byte address 0x4 - core index']
  #allocation1 [shape = 'u32[72,128]{1,0:T(1,128)}', space=vmem, size = 0x9000, scoped, tag = 'internal scratch']
  %s0 = inlined_call_operand.vmem [shape: bf16[8,48], index: 0, kind: input, shape index: {}]
  %s1 = inlined_call_operand.vmem [shape: bf16[48,2048], index: 1, kind: input, shape index: {}]
  %s2 = inlined_call_operand.vmem [shape: bf16[8,2048], index: 2, kind: output, shape index: {}]
  %s3 = sld [smem:[#allocation0]]
  $region64: #{generator_critic_forward.5} parent=0
    _
  %s5 = ssub.s32 1, %s3
  %s6 = scalar_select 0, %s5, %s3
  $region1: #{generator_critic_forward.5} parent=0
    #allocation2 [shape = 'u8[98304]{0}', space=vmem, size = 0x18000, scoped, tag = 'input window, operand 1']
    loop: start=0, step=1, limit=6
    $region2: #{generator_critic_forward.5} parent=1 // loop_pre_header
      _
    $region3: #{generator_critic_forward.5} parent=1 // loop_header
      %s8 = sphi 0, %s12
      %p9 = scmp.ge.s32.totalorder %s8, 6
      %s16 = sphi 0, %s16
      %s18 = sphi 0, %s16
      %s19 = sphi 0, %s18
      %s33 = sphi 0, %s19
      %s39 = sphi 0, %s41
      %s42 = sphi 0, %s39
      %s43 = sphi 0, %s42
      %s59 = sphi 0, %s43
      %s65 = sphi 0, %s67
      %s68 = sphi 0, %s65
      %s69 = sphi 0, %s68
      %s85 = sphi 0, %s69
    $region4: #{generator_critic_forward.5} parent=1 // loop_header_branch
      %11 = sbr.rel (%p9) target = $region8
    $region5: #{generator_critic_forward.5} parent=1 // loop_body
      %s13 = ssub.s32 %s8, 1
      %s14 = ssub.s32 %s8, 2
      %s15 = sadd.s32 %s8, 1
      %s17 = sadd.s32 %s16, 1
      %p20 = scmp.eq.s32.totalorder %s8, 3
      %p21 = scmp.ne.s32.totalorder %s16, %s18
      %p22 = scmp.eq.s32.totalorder %s8, 0
      %p23 = por %p21, %p22
      %p24 = scmp.ne.s32.totalorder %s16, %s18
      %p25 = scmp.eq.s32.totalorder %s13, 3
      %p26 = por %p24, %p25
      %p27 = scmp.ne.s32.totalorder %s18, %s19
      %p28 = scmp.eq.s32.totalorder %s13, 0
      %p29 = por %p27, %p28
      %p30 = scmp.ne.s32.totalorder %s18, %s19
      %p31 = scmp.eq.s32.totalorder %s14, 3
      %p32 = por %p30, %p31
      %p34 = scmp.ne.s32.totalorder %s19, %s33
      %p35 = scmp.eq.s32.totalorder %s14, 0
      %p36 = por %p34, %p35
      %s37 = ssub.s32 %s8, %s15
      %p38 = scmp.eq.s32.totalorder %s37, 0
      %s40 = sadd.s32 %s39, 1
      %s41 = scalar_select %p38, %s39, %s40
      %p44 = pneg %p38
      %p45 = scmp.eq.s32.totalorder %s8, 3
      %p46 = por %p44, %p45
      %p47 = scmp.ne.s32.totalorder %s39, %s42
      %p48 = scmp.eq.s32.totalorder %s8, 0
      %p49 = por %p47, %p48
      %p50 = scmp.ne.s32.totalorder %s39, %s42
      %p51 = scmp.eq.s32.totalorder %s13, 3
      %p52 = por %p50, %p51
      %p53 = scmp.ne.s32.totalorder %s42, %s43
      %p54 = scmp.eq.s32.totalorder %s13, 0
      %p55 = por %p53, %p54
      %p56 = scmp.ne.s32.totalorder %s42, %s43
      %p57 = scmp.eq.s32.totalorder %s14, 3
      %p58 = por %p56, %p57
      %p60 = scmp.ne.s32.totalorder %s43, %s59
      %p61 = scmp.eq.s32.totalorder %s14, 0
      %p62 = por %p60, %p61
      %s63 = ssub.s32 %s8, %s15
      %p64 = scmp.eq.s32.totalorder %s63, 0
      %s66 = sadd.s32 %s65, 1
      %s67 = scalar_select %p64, %s65, %s66
      %p70 = pneg %p64
      %p71 = scmp.eq.s32.totalorder %s8, 3
      %p72 = por %p70, %p71
      %p73 = scmp.ne.s32.totalorder %s65, %s68
      %p74 = scmp.eq.s32.totalorder %s8, 0
      %p75 = por %p73, %p74
      %p76 = scmp.ne.s32.totalorder %s65, %s68
      %p77 = scmp.eq.s32.totalorder %s13, 3
      %p78 = por %p76, %p77
      %p79 = scmp.ne.s32.totalorder %s68, %s69
      %p80 = scmp.eq.s32.totalorder %s13, 0
      %p81 = por %p79, %p80
      %p82 = scmp.ne.s32.totalorder %s68, %s69
      %p83 = scmp.eq.s32.totalorder %s14, 3
      %p84 = por %p82, %p83
      %p86 = scmp.ne.s32.totalorder %s69, %s85
      %p87 = scmp.eq.s32.totalorder %s14, 0
      %p88 = por %p86, %p87
      %p89 = scmp.le.s32.totalorder 1, %s8
      %p90 = scmp.lt.s32.totalorder %s8, 5
      %p91 = pnand %p89, %p90
      %p92 = pneg %p91
      // Predicated region
      $region9: #{generator_critic_forward.5} parent=5 // pred_check
        _
      $region10: #{generator_critic_forward.5} parent=5 // pred_check_branch
        %94 = sbr.rel (%p91) target = $region12
      $region11: #{generator_critic_forward.5} parent=5 // pred_region
        %s95 = ssub.s32 %s8, 1
        // Predicated region
        $region13: #{generator_critic_forward.5} parent=11 // pred_check
          %p96 = pneg %p29
        $region14: #{generator_critic_forward.5} parent=11 // pred_check_branch
          %98 = sbr.rel (%p96) target = $region16
        $region15: #{generator_critic_forward.5} parent=11 // pred_region
          _
        $region16: #{generator_critic_forward.5} parent=11 // pred_fallthru
          _
      $region12: #{generator_critic_forward.5} parent=5 // pred_fallthru
        _
      %p99 = scmp.lt.s32.totalorder %s8, 4
      // Predicated region
      $region17: #{generator_critic_forward.5} parent=5 // pred_check
        %p100 = pneg %p99
      $region18: #{generator_critic_forward.5} parent=5 // pred_check_branch
        %102 = sbr.rel (%p100) target = $region20
      $region19: #{generator_critic_forward.5} parent=5 // pred_region
        // Predicated region
        $region21: #{generator_critic_forward.5} parent=19 // pred_check
          %p103 = pneg %p49
        $region22: #{generator_critic_forward.5} parent=19 // pred_check_branch
          %105 = sbr.rel (%p103) target = $region24
        $region23: #{generator_critic_forward.5} parent=19 // pred_region
          %s106 = sand.u32 %s39, 1
          %s107 = sand.u32 %s39, 1
          %s108 = smul.addr %s107, 96
          %s109 = scalar_lea.vmem [#allocation2], %s108
          %s110 = smul.u32 4, %s8
          %s111 = smul.addr %s110, 4
          %s112 = scalar_lea.vmem %s1, %s111
          // Predicated region
          $region25: #{generator_critic_forward.5} parent=23 // pred_check
            _
          $region26: #{generator_critic_forward.5} parent=23 // pred_check_branch
            %114 = sbr.rel (0) target = $region28
          $region27: #{generator_critic_forward.5} parent=23 // pred_region
            // Predicated region
            $region29: #{generator_critic_forward.5} parent=27 // pred_check
              _
            $region30: #{generator_critic_forward.5} parent=27 // pred_check_branch
              %116 = sbr.rel (0) target = $region32
            $region31: #{generator_critic_forward.5} parent=27 // pred_region
              loop: start=0, step=1, limit=1
              $region33: #{generator_critic_forward.5} parent=31 // loop_pre_header
                _
              $region34: #{generator_critic_forward.5} parent=31 // loop_header
                %s118 = sphi 0, %s122
                %p119 = scmp.ge.s32.totalorder %s118, 1
                %s123 = sphi %s112, %s112
                %s124 = sphi %s109, %s109
              $region35: #{generator_critic_forward.5} parent=31 // loop_header_branch
                %121 = sbr.rel (%p119) target = $region39
              $region36: #{generator_critic_forward.5} parent=31 // loop_body
                %v125 = vld [vmem:[%s123] sm:$0xff]
                %126 = vst [vmem:[%s124] sm:$0xff] %v125
                %v127 = vld [vmem:[%s123 + $0x8] sm:$0xff]
                %128 = vst [vmem:[%s124 + $0x8] sm:$0xff] %v127
                %v129 = vld [vmem:[%s123 + $0x40] sm:$0xff]
                %130 = vst [vmem:[%s124 + $0x10] sm:$0xff] %v129
                %v131 = vld [vmem:[%s123 + $0x48] sm:$0xff]
                %132 = vst [vmem:[%s124 + $0x18] sm:$0xff] %v131
                %v133 = vld [vmem:[%s123 + $0x80] sm:$0xff]
                %134 = vst [vmem:[%s124 + $0x20] sm:$0xff] %v133
                %v135 = vld [vmem:[%s123 + $0x88] sm:$0xff]
                %136 = vst [vmem:[%s124 + $0x28] sm:$0xff] %v135
                %v137 = vld [vmem:[%s123 + $0xc0] sm:$0xff]
                %138 = vst [vmem:[%s124 + $0x30] sm:$0xff] %v137
                %v139 = vld [vmem:[%s123 + $0xc8] sm:$0xff]
                %140 = vst [vmem:[%s124 + $0x38] sm:$0xff] %v139
                %v141 = vld [vmem:[%s123 + $0x100] sm:$0xff]
                %142 = vst [vmem:[%s124 + $0x40] sm:$0xff] %v141
                %v143 = vld [vmem:[%s123 + $0x108] sm:$0xff]
                %144 = vst [vmem:[%s124 + $0x48] sm:$0xff] %v143
                %v145 = vld [vmem:[%s123 + $0x140] sm:$0xff]
                %146 = vst [vmem:[%s124 + $0x50] sm:$0xff] %v145
                %v147 = vld [vmem:[%s123 + $0x148] sm:$0xff]
                %148 = vst [vmem:[%s124 + $0x58] sm:$0xff] %v147
              $region37: #{generator_critic_forward.5} parent=31 // loop_footer
                %s122 = sadd.s32 1, %s118
              $region38: #{generator_critic_forward.5} parent=31 // loop_footer_branch
                %117 = sbr.rel target = $region34
              $region39: #{generator_critic_forward.5} parent=31 // loop_exit
                _
            $region32: #{generator_critic_forward.5} parent=27 // pred_fallthru
              _
            // Predicated region
            $region40: #{generator_critic_forward.5} parent=27 // pred_check
              _
            $region41: #{generator_critic_forward.5} parent=27 // pred_check_branch
              %150 = sbr.rel target = $region43
            $region42: #{generator_critic_forward.5} parent=27 // pred_region
              _
            $region43: #{generator_critic_forward.5} parent=27 // pred_fallthru
              _
          $region28: #{generator_critic_forward.5} parent=23 // pred_fallthru
            _
          %151 = vnop
        $region24: #{generator_critic_forward.5} parent=19 // pred_fallthru
          _
      $region20: #{generator_critic_forward.5} parent=5 // pred_fallthru
        _
      %p152 = scmp.le.s32.totalorder 1, %s8
      %p153 = scmp.lt.s32.totalorder %s8, 5
      %p154 = pnand %p152, %p153
      %p155 = pneg %p154
      // Predicated region
      $region44: #{generator_critic_forward.5} parent=5 // pred_check
        _
      $region45: #{generator_critic_forward.5} parent=5 // pred_check_branch
        %157 = sbr.rel (%p154) target = $region47
      $region46: #{generator_critic_forward.5} parent=5 // pred_region
        %s158 = ssub.s32 %s8, 1
        %s159 = sand.u32 %s42, 1
        %s160 = sand.u32 %s42, 1
        %s161 = smul.addr %s160, 96
        %s162 = scalar_lea.vmem [#allocation2], %s161
        // Predicated region
        $region48: #{generator_critic_forward.5} parent=46 // pred_check
          %p163 = pneg %p55
        $region49: #{generator_critic_forward.5} parent=46 // pred_check_branch
          %165 = sbr.rel (%p163) target = $region51
        $region50: #{generator_critic_forward.5} parent=46 // pred_region
          _
        $region51: #{generator_critic_forward.5} parent=46 // pred_fallthru
          _
        %p166 = pneg %p29
        %p167 = pneg %p26
        %s168 = sand.u32 %s42, 1
        %s169 = sand.u32 %s42, 1
        %s170 = smul.addr %s169, 96
        %s171 = scalar_lea.vmem [#allocation2], %s170
        %p172 = pneg %p55
        %p173 = pneg %p52
        %p174 = pneg %p81
        %p175 = pneg %p78
        %s176 = smul.u32 4, %s13
        %p177 = scmp.lt.s32.totalorder %s176, 15
        %s178 = scalar_select %p177, %s176, 15
        %s179 = smul.addr %s178, 4
        %s180 = scalar_lea.vmem %s2, %s179
        %s181 = smul.u32 4, %s13
        %s182 = smul.u32 4, %s13
        %p183 = scmp.lt.s32.totalorder %s182, 15
        %s184 = scalar_select %p183, %s182, 15
        %s185 = smul.addr %s184, 4
        %s186 = scalar_lea.vmem %s2, %s185
        %s187 = smul.u32 4, %s13
        %v189 = vld [vmem:[%s0] sm:$0xf]
        %v190 = vld [vmem:[%s162] sm:$0xff]
        %v191 = vld [vmem:[%s162 + $0x8] sm:$0xff]
        %v192 = vld [vmem:[%s162 + $0x10] sm:$0xff]
        %v193 = vld [vmem:[%s162 + $0x18] sm:$0xff]
        %v194 = vld [vmem:[%s162 + $0x20] sm:$0xff]
        %v195 = vld [vmem:[%s162 + $0x28] sm:$0xff]
        %v196 = vld [vmem:[%s162 + $0x30] sm:$0xff]
        %v197 = vld [vmem:[%s162 + $0x38] sm:$0xff]
        %v198 = vld [vmem:[%s162 + $0x40] sm:$0xff]
        %v199 = vld [vmem:[%s162 + $0x48] sm:$0xff]
        %v200 = vld [vmem:[%s162 + $0x50] sm:$0xff]
        %v201 = vld [vmem:[%s162 + $0x58] sm:$0xff]
        %v214 = vunpack.c.l.b16 %v190
        %v215 = vunpack.c.h.b16 %v190
        %v216 = vunpack.c.l.b16 %v191
        %v217 = vunpack.c.h.b16 %v191
        %v218 = vunpack.c.l.b16 %v192
        %v219 = vunpack.c.h.b16 %v192
        %v220 = vunpack.c.l.b16 %v193
        %v221 = vunpack.c.h.b16 %v193
        %v222 = vunpack.c.l.b16 %v194
        %v223 = vunpack.c.h.b16 %v194
        %v224 = vunpack.c.l.b16 %v195
        %v225 = vunpack.c.h.b16 %v195
        %v226 = vunpack.c.l.b16 %v196
        %v227 = vunpack.c.h.b16 %v196
        %v228 = vunpack.c.l.b16 %v197
        %v229 = vunpack.c.h.b16 %v197
        %v230 = vunpack.c.l.b16 %v198
        %v231 = vunpack.c.h.b16 %v198
        %v232 = vunpack.c.l.b16 %v199
        %v233 = vunpack.c.h.b16 %v199
        %v234 = vunpack.c.l.b16 %v200
        %v235 = vunpack.c.h.b16 %v200
        %v236 = vunpack.c.l.b16 %v201
        %v237 = vunpack.c.h.b16 %v201
        %v238 = vpack.c.b16 %v218, %v214
        %v239 = vpack.c.b16 %v219, %v215
        %v240 = vpack.c.b16 %v220, %v216
        %v241 = vpack.c.b16 %v221, %v217
        %v242 = vpack.c.b16 %v226, %v222
        %v243 = vpack.c.b16 %v227, %v223
        %v244 = vpack.c.b16 %v228, %v224
        %v245 = vpack.c.b16 %v229, %v225
        %v246 = vpack.c.b16 %v234, %v230
        %v247 = vpack.c.b16 %v235, %v231
        %v248 = vpack.c.b16 %v236, %v232
        %v249 = vpack.c.b16 %v237, %v233
        %vm262 = vcmask 392192
        %v264 = vsel %vm262, %v189, 0
        %266 = vmatpush.bf16.msra.mxu0 0
        %267 = vmatpush.bf16.msra.mxu0 0
        %268 = vmatpush.bf16.msra.mxu0 0
        %269 = vmatpush.bf16.msra.mxu0 0
        %270 = vmatpush.bf16.msra.mxu0 0
        %271 = vmatpush.bf16.msra.mxu0 %v246
        %272 = vmatpush.bf16.msra.mxu0 %v242
        %273 = vmatpush.bf16.msra.mxu0 %v238
        %274 = vmatmul.bf16.gmra.mxu0 %v264
        %v275 = vpop.f32.mrf.mxu0
        %v276 = vadd.f32 0.0, %v275
        %v277 = vpop.f32.mrf.mxu0
        %278 = vdwg.mxu0
        %279 = vmatpush.bf16.msra.mxu0 0
        %280 = vmatpush.bf16.msra.mxu0 0
        %281 = vmatpush.bf16.msra.mxu0 0
        %282 = vmatpush.bf16.msra.mxu0 0
        %283 = vmatpush.bf16.msra.mxu0 0
        %284 = vmatpush.bf16.msra.mxu0 %v247
        %285 = vmatpush.bf16.msra.mxu0 %v243
        %286 = vmatpush.bf16.msra.mxu0 %v239
        %287 = vmatmul.bf16.gmra.mxu0 %v264
        %v288 = vpop.f32.mrf.mxu0
        %v289 = vadd.f32 0.0, %v288
        %v290 = vpop.f32.mrf.mxu0
        %291 = vdwg.mxu0
        %292 = vmatpush.bf16.msra.mxu0 0
        %293 = vmatpush.bf16.msra.mxu0 0
        %294 = vmatpush.bf16.msra.mxu0 0
        %295 = vmatpush.bf16.msra.mxu0 0
        %296 = vmatpush.bf16.msra.mxu0 0
        %297 = vmatpush.bf16.msra.mxu0 %v248
        %298 = vmatpush.bf16.msra.mxu0 %v244
        %299 = vmatpush.bf16.msra.mxu0 %v240
        %300 = vmatmul.bf16.gmra.mxu0 %v264
        %v301 = vpop.f32.mrf.mxu0
        %v302 = vadd.f32 0.0, %v301
        %v303 = vpop.f32.mrf.mxu0
        %304 = vdwg.mxu0
        %305 = vmatpush.bf16.msra.mxu0 0
        %306 = vmatpush.bf16.msra.mxu0 0
        %307 = vmatpush.bf16.msra.mxu0 0
        %308 = vmatpush.bf16.msra.mxu0 0
        %309 = vmatpush.bf16.msra.mxu0 0
        %310 = vmatpush.bf16.msra.mxu0 %v249
        %311 = vmatpush.bf16.msra.mxu0 %v245
        %312 = vmatpush.bf16.msra.mxu0 %v241
        %313 = vmatmul.bf16.gmra.mxu0 %v264
        %v314 = vpop.f32.mrf.mxu0
        %v315 = vadd.f32 0.0, %v314
        %v316 = vpop.f32.mrf.mxu0
        %317 = vdwg.mxu0
        %vm318 = vcmp.gt.f32.partialorder %v276, 0.0
        %vm319 = vcmp.gt.f32.partialorder %v289, 0.0
        %vm320 = vcmp.gt.f32.partialorder %v302, 0.0
        %vm321 = vcmp.gt.f32.partialorder %v315, 0.0
        %v322 = vmul.f32 %v276, 0.2
        %v323 = vmul.f32 %v289, 0.2
        %v324 = vmul.f32 %v302, 0.2
        %v325 = vmul.f32 %v315, 0.2
        %v326 = vsel %vm318, %v276, %v322
        %v327 = vsel %vm319, %v289, %v323
        %v328 = vsel %vm320, %v302, %v324
        %v329 = vsel %vm321, %v315, %v325
        %v330 = vpack.c.bf16 %v327, %v326
        %v331 = vpack.c.bf16 %v329, %v328
        %332 = vst [vmem:[%s186] sm:$0xff] %v330
        %333 = vst [vmem:[%s186 + $0x8] sm:$0xff] %v331
        %s334 = smul.u32 4, %s13
        %p335 = scmp.lt.s32.totalorder %s334, 15
        %s336 = scalar_select %p335, %s334, 15
        %s337 = smul.addr %s336, 4
        %s338 = scalar_lea.vmem %s2, %s337
        // Predicated region
        $region52: #{generator_critic_forward.5} parent=46 // pred_check
          %p339 = pneg %p78
        $region53: #{generator_critic_forward.5} parent=46 // pred_check_branch
          %341 = sbr.rel (%p339) target = $region55
        $region54: #{generator_critic_forward.5} parent=46 // pred_region
          %s342 = smul.u32 4, %s13
        $region55: #{generator_critic_forward.5} parent=46 // pred_fallthru
          _
      $region47: #{generator_critic_forward.5} parent=5 // pred_fallthru
        _
      %p343 = scmp.le.s32.totalorder 2, %s8
      // Predicated region
      $region56: #{generator_critic_forward.5} parent=5 // pred_check
        %p344 = pneg %p343
      $region57: #{generator_critic_forward.5} parent=5 // pred_check_branch
        %346 = sbr.rel (%p344) target = $region59
      $region58: #{generator_critic_forward.5} parent=5 // pred_region
        %s347 = ssub.s32 %s8, 2
        // Predicated region
        $region60: #{generator_critic_forward.5} parent=58 // pred_check
          %p348 = pneg %p84
        $region61: #{generator_critic_forward.5} parent=58 // pred_check_branch
          %350 = sbr.rel (%p348) target = $region63
        $region62: #{generator_critic_forward.5} parent=58 // pred_region
          %s351 = smul.u32 4, %s14
          %p352 = scmp.lt.s32.totalorder %s351, 15
          %s353 = scalar_select %p352, %s351, 15
          %s354 = smul.addr %s353, 4
          %s355 = scalar_lea.vmem %s2, %s354
        $region63: #{generator_critic_forward.5} parent=58 // pred_fallthru
          _
      $region59: #{generator_critic_forward.5} parent=5 // pred_fallthru
        _
    $region6: #{generator_critic_forward.5} parent=1 // loop_footer
      %s12 = sadd.s32 1, %s8
    $region7: #{generator_critic_forward.5} parent=1 // loop_footer_branch
      %7 = sbr.rel target = $region3
    $region8: #{generator_critic_forward.5} parent=1 // loop_exit
      _

// kernel: generator_critic_forward.6
$region0: #{generator_critic_forward.6}
  #allocation0 [shape = 'u32[]', space=smem, size = 0x4, offset = 0x4, fixed_abs, tag = 'smem constant byte address 0x4 - core index']
  #allocation1 [shape = 'u32[72,128]{1,0:T(1,128)}', space=vmem, size = 0x9000, scoped, tag = 'internal scratch']
  %s0 = inlined_call_operand.vmem [shape: bf16[16,128], index: 0, kind: input, shape index: {}]
  %s1 = inlined_call_operand.vmem [shape: bf16[128,512], index: 1, kind: input, shape index: {}]
  %s2 = inlined_call_operand.vmem [shape: f32[16,1], index: 2, kind: input, shape index: {}]
  %s3 = inlined_call_operand.vmem [shape: f32[16,1], index: 3, kind: input, shape index: {}]
  %s4 = inlined_call_operand.vmem [shape: bf16[16,512], index: 4, kind: output, shape index: {}]
  %s5 = sld [smem:[#allocation0]]
  $region26: #{generator_critic_forward.6} parent=0
    _
  %s7 = ssub.s32 1, %s5
  %s8 = scalar_select 0, %s7, %s5
  // Predicated region
  $region2: #{generator_critic_forward.6} parent=0 // pred_check
    _
  $region3: #{generator_critic_forward.6} parent=0 // pred_check_branch
    %10 = sbr.rel (0) target = $region5
  $region4: #{generator_critic_forward.6} parent=0 // pred_region
    _
  $region5: #{generator_critic_forward.6} parent=0 // pred_fallthru
    _
  // Predicated region
  $region6: #{generator_critic_forward.6} parent=0 // pred_check
    _
  $region7: #{generator_critic_forward.6} parent=0 // pred_check_branch
    %12 = sbr.rel (0) target = $region9
  $region8: #{generator_critic_forward.6} parent=0 // pred_region
    _
  $region9: #{generator_critic_forward.6} parent=0 // pred_fallthru
    _
  // Predicated region
  $region10: #{generator_critic_forward.6} parent=0 // pred_check
    _
  $region11: #{generator_critic_forward.6} parent=0 // pred_check_branch
    %14 = sbr.rel (0) target = $region13
  $region12: #{generator_critic_forward.6} parent=0 // pred_region
    _
  $region13: #{generator_critic_forward.6} parent=0 // pred_fallthru
    _
  // Predicated region
  $region14: #{generator_critic_forward.6} parent=0 // pred_check
    _
  $region15: #{generator_critic_forward.6} parent=0 // pred_check_branch
    %16 = sbr.rel (0) target = $region17
  $region16: #{generator_critic_forward.6} parent=0 // pred_region
    _
  $region17: #{generator_critic_forward.6} parent=0 // pred_fallthru
    _
  %v17 = vld [vmem:[%s0] sm:$0xf]
  %v18 = vld [vmem:[%s0 + $0x4] sm:$0xf]
  %v19 = vld [vmem:[%s1] sm:$0xff]
  %v20 = vld [vmem:[%s1 + $0x8] sm:$0xff]
  %v21 = vld [vmem:[%s1 + $0x10] sm:$0xff]
  %v22 = vld [vmem:[%s1 + $0x18] sm:$0xff]
  %v23 = vld [vmem:[%s1 + $0x20] sm:$0xff]
  %v24 = vld [vmem:[%s1 + $0x28] sm:$0xff]
  %v25 = vld [vmem:[%s1 + $0x30] sm:$0xff]
  %v26 = vld [vmem:[%s1 + $0x38] sm:$0xff]
  %v27 = vld [vmem:[%s1 + $0x40] sm:$0xff]
  %v28 = vld [vmem:[%s1 + $0x48] sm:$0xff]
  %v29 = vld [vmem:[%s1 + $0x50] sm:$0xff]
  %v30 = vld [vmem:[%s1 + $0x58] sm:$0xff]
  %v31 = vld [vmem:[%s1 + $0x60] sm:$0xff]
  %v32 = vld [vmem:[%s1 + $0x68] sm:$0xff]
  %v33 = vld [vmem:[%s1 + $0x70] sm:$0xff]
  %v34 = vld [vmem:[%s1 + $0x78] sm:$0xff]
  %v35 = vld [vmem:[%s1 + $0x80] sm:$0xff]
  %v36 = vld [vmem:[%s1 + $0x88] sm:$0xff]
  %v37 = vld [vmem:[%s1 + $0x90] sm:$0xff]
  %v38 = vld [vmem:[%s1 + $0x98] sm:$0xff]
  %v39 = vld [vmem:[%s1 + $0xa0] sm:$0xff]
  %v40 = vld [vmem:[%s1 + $0xa8] sm:$0xff]
  %v41 = vld [vmem:[%s1 + $0xb0] sm:$0xff]
  %v42 = vld [vmem:[%s1 + $0xb8] sm:$0xff]
  %v43 = vld [vmem:[%s1 + $0xc0] sm:$0xff]
  %v44 = vld [vmem:[%s1 + $0xc8] sm:$0xff]
  %v45 = vld [vmem:[%s1 + $0xd0] sm:$0xff]
  %v46 = vld [vmem:[%s1 + $0xd8] sm:$0xff]
  %v47 = vld [vmem:[%s1 + $0xe0] sm:$0xff]
  %v48 = vld [vmem:[%s1 + $0xe8] sm:$0xff]
  %v49 = vld [vmem:[%s1 + $0xf0] sm:$0xff]
  %v50 = vld [vmem:[%s1 + $0xf8] sm:$0xff]
  %v53 = vunpack.c.l.b16 %v17
  %v54 = vunpack.c.l.b16 %v18
  %v55 = vpack.c.b16 %v54, %v53
  %v89 = vunpack.c.l.b16 %v19
  %v90 = vunpack.c.h.b16 %v19
  %v91 = vunpack.c.l.b16 %v20
  %v92 = vunpack.c.h.b16 %v20
  %v93 = vunpack.c.l.b16 %v21
  %v94 = vunpack.c.h.b16 %v21
  %v95 = vunpack.c.l.b16 %v22
  %v96 = vunpack.c.h.b16 %v22
  %v97 = vunpack.c.l.b16 %v23
  %v98 = vunpack.c.h.b16 %v23
  %v99 = vunpack.c.l.b16 %v24
  %v100 = vunpack.c.h.b16 %v24
  %v101 = vunpack.c.l.b16 %v25
  %v102 = vunpack.c.h.b16 %v25
  %v103 = vunpack.c.l.b16 %v26
  %v104 = vunpack.c.h.b16 %v26
  %v105 = vunpack.c.l.b16 %v27
  %v106 = vunpack.c.h.b16 %v27
  %v107 = vunpack.c.l.b16 %v28
  %v108 = vunpack.c.h.b16 %v28
  %v109 = vunpack.c.l.b16 %v29
  %v110 = vunpack.c.h.b16 %v29
  %v111 = vunpack.c.l.b16 %v30
  %v112 = vunpack.c.h.b16 %v30
  %v113 = vunpack.c.l.b16 %v31
  %v114 = vunpack.c.h.b16 %v31
  %v115 = vunpack.c.l.b16 %v32
  %v116 = vunpack.c.h.b16 %v32
  %v117 = vunpack.c.l.b16 %v33
  %v118 = vunpack.c.h.b16 %v33
  %v119 = vunpack.c.l.b16 %v34
  %v120 = vunpack.c.h.b16 %v34
  %v121 = vunpack.c.l.b16 %v35
  %v122 = vunpack.c.h.b16 %v35
  %v123 = vunpack.c.l.b16 %v36
  %v124 = vunpack.c.h.b16 %v36
  %v125 = vunpack.c.l.b16 %v37
  %v126 = vunpack.c.h.b16 %v37
  %v127 = vunpack.c.l.b16 %v38
  %v128 = vunpack.c.h.b16 %v38
  %v129 = vunpack.c.l.b16 %v39
  %v130 = vunpack.c.h.b16 %v39
  %v131 = vunpack.c.l.b16 %v40
  %v132 = vunpack.c.h.b16 %v40
  %v133 = vunpack.c.l.b16 %v41
  %v134 = vunpack.c.h.b16 %v41
  %v135 = vunpack.c.l.b16 %v42
  %v136 = vunpack.c.h.b16 %v42
  %v137 = vunpack.c.l.b16 %v43
  %v138 = vunpack.c.h.b16 %v43
  %v139 = vunpack.c.l.b16 %v44
  %v140 = vunpack.c.h.b16 %v44
  %v141 = vunpack.c.l.b16 %v45
  %v142 = vunpack.c.h.b16 %v45
  %v143 = vunpack.c.l.b16 %v46
  %v144 = vunpack.c.h.b16 %v46
  %v145 = vunpack.c.l.b16 %v47
  %v146 = vunpack.c.h.b16 %v47
  %v147 = vunpack.c.l.b16 %v48
  %v148 = vunpack.c.h.b16 %v48
  %v149 = vunpack.c.l.b16 %v49
  %v150 = vunpack.c.h.b16 %v49
  %v151 = vunpack.c.l.b16 %v50
  %v152 = vunpack.c.h.b16 %v50
  %v153 = vpack.c.b16 %v93, %v89
  %v154 = vpack.c.b16 %v94, %v90
  %v155 = vpack.c.b16 %v95, %v91
  %v156 = vpack.c.b16 %v96, %v92
  %v157 = vpack.c.b16 %v101, %v97
  %v158 = vpack.c.b16 %v102, %v98
  %v159 = vpack.c.b16 %v103, %v99
  %v160 = vpack.c.b16 %v104, %v100
  %v161 = vpack.c.b16 %v109, %v105
  %v162 = vpack.c.b16 %v110, %v106
  %v163 = vpack.c.b16 %v111, %v107
  %v164 = vpack.c.b16 %v112, %v108
  %v165 = vpack.c.b16 %v117, %v113
  %v166 = vpack.c.b16 %v118, %v114
  %v167 = vpack.c.b16 %v119, %v115
  %v168 = vpack.c.b16 %v120, %v116
  %v169 = vpack.c.b16 %v125, %v121
  %v170 = vpack.c.b16 %v126, %v122
  %v171 = vpack.c.b16 %v127, %v123
  %v172 = vpack.c.b16 %v128, %v124
  %v173 = vpack.c.b16 %v133, %v129
  %v174 = vpack.c.b16 %v134, %v130
  %v175 = vpack.c.b16 %v135, %v131
  %v176 = vpack.c.b16 %v136, %v132
  %v177 = vpack.c.b16 %v141, %v137
  %v178 = vpack.c.b16 %v142, %v138
  %v179 = vpack.c.b16 %v143, %v139
  %v180 = vpack.c.b16 %v144, %v140
  %v181 = vpack.c.b16 %v149, %v145
  %v182 = vpack.c.b16 %v150, %v146
  %v183 = vpack.c.b16 %v151, %v147
  %v184 = vpack.c.b16 %v152, %v148
  %217 = vmatpush.bf16.msra.mxu0 %v181
  %218 = vmatpush.bf16.msra.mxu0 %v177
  %219 = vmatpush.bf16.msra.mxu0 %v173
  %220 = vmatpush.bf16.msra.mxu0 %v169
  %221 = vmatpush.bf16.msra.mxu0 %v165
  %222 = vmatpush.bf16.msra.mxu0 %v161
  %223 = vmatpush.bf16.msra.mxu0 %v157
  %224 = vmatpush.bf16.msra.mxu0 %v153
  %225 = vmatmul.bf16.gmra.mxu0 %v55
  %v226 = vpop.f32.mrf.mxu0
  %v227 = vadd.f32 0.0, %v226
  %v228 = vpop.f32.mrf.mxu0
  %v229 = vadd.f32 0.0, %v228
  %230 = vdwg.mxu0
  %231 = vmatpush.bf16.msra.mxu0 %v182
  %232 = vmatpush.bf16.msra.mxu0 %v178
  %233 = vmatpush.bf16.msra.mxu0 %v174
  %234 = vmatpush.bf16.msra.mxu0 %v170
  %235 = vmatpush.bf16.msra.mxu0 %v166
  %236 = vmatpush.bf16.msra.mxu0 %v162
  %237 = vmatpush.bf16.msra.mxu0 %v158
  %238 = vmatpush.bf16.msra.mxu0 %v154
  %239 = vmatmul.bf16.gmra.mxu0 %v55
  %v240 = vpop.f32.mrf.mxu0
  %v241 = vadd.f32 0.0, %v240
  %v242 = vpop.f32.mrf.mxu0
  %v243 = vadd.f32 0.0, %v242
  %244 = vdwg.mxu0
  %245 = vmatpush.bf16.msra.mxu0 %v183
  %246 = vmatpush.bf16.msra.mxu0 %v179
  %247 = vmatpush.bf16.msra.mxu0 %v175
  %248 = vmatpush.bf16.msra.mxu0 %v171
  %249 = vmatpush.bf16.msra.mxu0 %v167
  %250 = vmatpush.bf16.msra.mxu0 %v163
  %251 = vmatpush.bf16.msra.mxu0 %v159
  %252 = vmatpush.bf16.msra.mxu0 %v155
  %253 = vmatmul.bf16.gmra.mxu0 %v55
  %v254 = vpop.f32.mrf.mxu0
  %v255 = vadd.f32 0.0, %v254
  %v256 = vpop.f32.mrf.mxu0
  %v257 = vadd.f32 0.0, %v256
  %258 = vdwg.mxu0
  %259 = vmatpush.bf16.msra.mxu0 %v184
  %260 = vmatpush.bf16.msra.mxu0 %v180
  %261 = vmatpush.bf16.msra.mxu0 %v176
  %262 = vmatpush.bf16.msra.mxu0 %v172
  %263 = vmatpush.bf16.msra.mxu0 %v168
  %264 = vmatpush.bf16.msra.mxu0 %v164
  %265 = vmatpush.bf16.msra.mxu0 %v160
  %266 = vmatpush.bf16.msra.mxu0 %v156
  %267 = vmatmul.bf16.gmra.mxu0 %v55
  %v268 = vpop.f32.mrf.mxu0
  %v269 = vadd.f32 0.0, %v268
  %v270 = vpop.f32.mrf.mxu0
  %v271 = vadd.f32 0.0, %v270
  %272 = vdwg.mxu0
  %v273 = vadd.f32 %v227, %v241
  %v274 = vadd.f32 %v273, %v255
  %v275 = vadd.f32 %v274, %v269
  %276 = vadd.xlane.f32.xlu0 %v275
  %v277 = vpop.xlane.xlu0 %276
  %v278 = vadd.f32 %v229, %v243
  %v279 = vadd.f32 %v278, %v257
  %v280 = vadd.f32 %v279, %v271
  %281 = vadd.xlane.f32.xlu0 %v280
  %v282 = vpop.xlane.xlu0 %281
  %v283 = vmul.f32 %v227, %v227
  %v284 = vmul.f32 %v241, %v241
  %v285 = vmul.f32 %v255, %v255
  %v286 = vmul.f32 %v269, %v269
  %v287 = vmul.f32 %v229, %v229
  %v288 = vmul.f32 %v243, %v243
  %v289 = vmul.f32 %v257, %v257
  %v290 = vmul.f32 %v271, %v271
  %v291 = vadd.f32 %v283, %v284
  %v292 = vadd.f32 %v291, %v285
  %v293 = vadd.f32 %v292, %v286
  %294 = vadd.xlane.f32.xlu0 %v293
  %v295 = vpop.xlane.xlu0 %294
  %v296 = vadd.f32 %v287, %v288
  %v297 = vadd.f32 %v296, %v289
  %v298 = vadd.f32 %v297, %v290
  %299 = vadd.xlane.f32.xlu0 %v298
  %v300 = vpop.xlane.xlu0 %299
  %v301 = vmul.f32 %v277, 0.001953125
  %v302 = vmul.f32 %v282, 0.001953125
  %v303 = vmul.f32 %v295, 0.001953125
  %v304 = vmul.f32 %v300, 0.001953125
  %v305 = vmul.f32 %v301, %v301
  %v306 = vmul.f32 %v302, %v302
  %v307 = vsub.f32 %v303, %v305
  %v308 = vsub.f32 %v304, %v306
  %v309 = vmax.f32 %v307, 0.0
  %v310 = vmax.f32 %v308, 0.0
  %v311 = vadd.f32 %v309, 1e-05
  %v312 = vadd.f32 %v310, 1e-05
  %v313 = vrsqrt.pop %v311
  %v314 = vmul.f32 %v313, %v311
  %v315 = vmul.f32 %v314, %v313
  %v316 = vmul.f32 0.5, %v315
  %v317 = vsub.f32 1.5, %v316
  %v318 = vmul.f32 %v313, %v317
  %vm319 = vweird.f32 %v311
  %vm320 = vweird.f32 %v313
  %vm321 = vmor %vm319, %vm320
  %v322 = vsel %vm321, %v313, %v318
  %v323 = vrsqrt.pop %v312
  %v324 = vmul.f32 %v323, %v312
  %v325 = vmul.f32 %v324, %v323
  %v326 = vmul.f32 0.5, %v325
  %v327 = vsub.f32 1.5, %v326
  %v328 = vmul.f32 %v323, %v327
  %vm329 = vweird.f32 %v312
  %vm330 = vweird.f32 %v323
  %vm331 = vmor %vm329, %vm330
  %v332 = vsel %vm331, %v323, %v328
  %v333 = vld [vmem:[%s2] sm:$0xff]
  %v334 = vld [vmem:[%s2 + $0x8] sm:$0xff]
  %v335 = vmul.f32 %v322, %v333
  %v336 = vmul.f32 %v332, %v334
  %v337 = vld [vmem:[%s3] sm:$0xff]
  %v338 = vld [vmem:[%s3 + $0x8] sm:$0xff]
  %v339 = vmul.f32 %v301, %v335
  %v340 = vmul.f32 %v302, %v336
  %v341 = vsub.f32 %v337, %v339
  %v342 = vsub.f32 %v338, %v340
  %344 = vset.pattern.permute.xlu0 0
  %345 = vperm.xlu0 %344, %v335
  %v346 = vpop.permute.xlu0 %345
  %349 = vset.pattern.permute.xlu0 0
  %350 = vperm.xlu0 %349, %v336
  %v351 = vpop.permute.xlu0 %350
  %v353 = vmul.f32 %v227, %v346
  %v354 = vmul.f32 %v241, %v346
  %v355 = vmul.f32 %v255, %v346
  %v356 = vmul.f32 %v269, %v346
  %v357 = vmul.f32 %v229, %v351
  %v358 = vmul.f32 %v243, %v351
  %v359 = vmul.f32 %v257, %v351
  %v360 = vmul.f32 %v271, %v351
  %362 = vset.pattern.permute.xlu0 0
  %363 = vperm.xlu0 %362, %v341
  %v364 = vpop.permute.xlu0 %363
  %367 = vset.pattern.permute.xlu0 0
  %368 = vperm.xlu0 %367, %v342
  %v369 = vpop.permute.xlu0 %368
  %v371 = vadd.f32 %v353, %v364
  %v372 = vadd.f32 %v354, %v364
  %v373 = vadd.f32 %v355, %v364
  %v374 = vadd.f32 %v356, %v364
  %v375 = vadd.f32 %v357, %v369
  %v376 = vadd.f32 %v358, %v369
  %v377 = vadd.f32 %v359, %v369
  %v378 = vadd.f32 %v360, %v369
  %vm379 = vcmp.gt.f32.partialorder %v371, 0.0
  %vm380 = vcmp.gt.f32.partialorder %v372, 0.0
  %vm381 = vcmp.gt.f32.partialorder %v373, 0.0
  %vm382 = vcmp.gt.f32.partialorder %v374, 0.0
  %vm383 = vcmp.gt.f32.partialorder %v375, 0.0
  %vm384 = vcmp.gt.f32.partialorder %v376, 0.0
  %vm385 = vcmp.gt.f32.partialorder %v377, 0.0
  %vm386 = vcmp.gt.f32.partialorder %v378, 0.0
  %v387 = vmul.f32 %v371, 0.2
  %v388 = vmul.f32 %v372, 0.2
  %v389 = vmul.f32 %v373, 0.2
  %v390 = vmul.f32 %v374, 0.2
  %v391 = vmul.f32 %v375, 0.2
  %v392 = vmul.f32 %v376, 0.2
  %v393 = vmul.f32 %v377, 0.2
  %v394 = vmul.f32 %v378, 0.2
  %v395 = vsel %vm379, %v371, %v387
  %v396 = vsel %vm380, %v372, %v388
  %v397 = vsel %vm381, %v373, %v389
  %v398 = vsel %vm382, %v374, %v390
  %v399 = vsel %vm383, %v375, %v391
  %v400 = vsel %vm384, %v376, %v392
  %v401 = vsel %vm385, %v377, %v393
  %v402 = vsel %vm386, %v378, %v394
  %v403 = vpack.c.bf16 %v396, %v395
  %v404 = vpack.c.bf16 %v398, %v397
  %v405 = vpack.c.bf16 %v400, %v399
  %v406 = vpack.c.bf16 %v402, %v401
  %407 = vst [vmem:[%s4] sm:$0xff] %v403
  %408 = vst [vmem:[%s4 + $0x8] sm:$0xff] %v404
  %409 = vst [vmem:[%s4 + $0x10] sm:$0xff] %v405
  %410 = vst [vmem:[%s4 + $0x18] sm:$0xff] %v406
  // Predicated region
  $region18: #{generator_critic_forward.6} parent=0 // pred_check
    _
  $region19: #{generator_critic_forward.6} parent=0 // pred_check_branch
    %412 = sbr.rel (0) target = $region21
  $region20: #{generator_critic_forward.6} parent=0 // pred_region
    _
  $region21: #{generator_critic_forward.6} parent=0 // pred_fallthru
    _
  // Predicated region
  $region22: #{generator_critic_forward.6} parent=0 // pred_check
    _
  $region23: #{generator_critic_forward.6} parent=0 // pred_check_branch
    %414 = sbr.rel (0) target = $region25
  $region24: #{generator_critic_forward.6} parent=0 // pred_region
    _
  $region25: #{generator_critic_forward.6} parent=0 // pred_fallthru
    _

// kernel: generator_critic_forward.7
$region0: #{generator_critic_forward.7}
  #allocation0 [shape = 'u32[]', space=smem, size = 0x4, offset = 0x4, fixed_abs, tag = 'smem constant byte address 0x4 - core index']
  #allocation1 [shape = 'u32[72,128]{1,0:T(1,128)}', space=vmem, size = 0x9000, scoped, tag = 'internal scratch']
  %s0 = inlined_call_operand.vmem [shape: bf16[32,256], index: 0, kind: input, shape index: {}]
  %s1 = inlined_call_operand.vmem [shape: bf16[256,128], index: 1, kind: input, shape index: {}]
  %s2 = inlined_call_operand.vmem [shape: f32[32,1], index: 2, kind: input, shape index: {}]
  %s3 = inlined_call_operand.vmem [shape: f32[32,1], index: 3, kind: input, shape index: {}]
  %s4 = inlined_call_operand.vmem [shape: bf16[32,128], index: 4, kind: output, shape index: {}]
  %s5 = sld [smem:[#allocation0]]
  $region26: #{generator_critic_forward.7} parent=0
    _
  %s7 = ssub.s32 1, %s5
  %s8 = scalar_select 0, %s7, %s5
  // Predicated region
  $region2: #{generator_critic_forward.7} parent=0 // pred_check
    _
  $region3: #{generator_critic_forward.7} parent=0 // pred_check_branch
    %10 = sbr.rel (0) target = $region5
  $region4: #{generator_critic_forward.7} parent=0 // pred_region
    _
  $region5: #{generator_critic_forward.7} parent=0 // pred_fallthru
    _
  // Predicated region
  $region6: #{generator_critic_forward.7} parent=0 // pred_check
    _
  $region7: #{generator_critic_forward.7} parent=0 // pred_check_branch
    %12 = sbr.rel (0) target = $region9
  $region8: #{generator_critic_forward.7} parent=0 // pred_region
    _
  $region9: #{generator_critic_forward.7} parent=0 // pred_fallthru
    _
  // Predicated region
  $region10: #{generator_critic_forward.7} parent=0 // pred_check
    _
  $region11: #{generator_critic_forward.7} parent=0 // pred_check_branch
    %14 = sbr.rel (0) target = $region13
  $region12: #{generator_critic_forward.7} parent=0 // pred_region
    _
  $region13: #{generator_critic_forward.7} parent=0 // pred_fallthru
    _
  // Predicated region
  $region14: #{generator_critic_forward.7} parent=0 // pred_check
    _
  $region15: #{generator_critic_forward.7} parent=0 // pred_check_branch
    %16 = sbr.rel (0) target = $region17
  $region16: #{generator_critic_forward.7} parent=0 // pred_region
    _
  $region17: #{generator_critic_forward.7} parent=0 // pred_fallthru
    _
  %v17 = vld [vmem:[%s0] sm:$0xff]
  %v18 = vld [vmem:[%s0 + $0x8] sm:$0xff]
  %v19 = vld [vmem:[%s0 + $0x10] sm:$0xff]
  %v20 = vld [vmem:[%s0 + $0x18] sm:$0xff]
  %v21 = vld [vmem:[%s1] sm:$0xf]
  %v22 = vld [vmem:[%s1 + $0x4] sm:$0xf]
  %v23 = vld [vmem:[%s1 + $0x8] sm:$0xf]
  %v24 = vld [vmem:[%s1 + $0xc] sm:$0xf]
  %v25 = vld [vmem:[%s1 + $0x10] sm:$0xf]
  %v26 = vld [vmem:[%s1 + $0x14] sm:$0xf]
  %v27 = vld [vmem:[%s1 + $0x18] sm:$0xf]
  %v28 = vld [vmem:[%s1 + $0x1c] sm:$0xf]
  %v29 = vld [vmem:[%s1 + $0x20] sm:$0xf]
  %v30 = vld [vmem:[%s1 + $0x24] sm:$0xf]
  %v31 = vld [vmem:[%s1 + $0x28] sm:$0xf]
  %v32 = vld [vmem:[%s1 + $0x2c] sm:$0xf]
  %v33 = vld [vmem:[%s1 + $0x30] sm:$0xf]
  %v34 = vld [vmem:[%s1 + $0x34] sm:$0xf]
  %v35 = vld [vmem:[%s1 + $0x38] sm:$0xf]
  %v36 = vld [vmem:[%s1 + $0x3c] sm:$0xf]
  %v37 = vld [vmem:[%s1 + $0x40] sm:$0xf]
  %v38 = vld [vmem:[%s1 + $0x44] sm:$0xf]
  %v39 = vld [vmem:[%s1 + $0x48] sm:$0xf]
  %v40 = vld [vmem:[%s1 + $0x4c] sm:$0xf]
  %v41 = vld [vmem:[%s1 + $0x50] sm:$0xf]
  %v42 = vld [vmem:[%s1 + $0x54] sm:$0xf]
  %v43 = vld [vmem:[%s1 + $0x58] sm:$0xf]
  %v44 = vld [vmem:[%s1 + $0x5c] sm:$0xf]
  %v45 = vld [vmem:[%s1 + $0x60] sm:$0xf]
  %v46 = vld [vmem:[%s1 + $0x64] sm:$0xf]
  %v47 = vld [vmem:[%s1 + $0x68] sm:$0xf]
  %v48 = vld [vmem:[%s1 + $0x6c] sm:$0xf]
  %v49 = vld [vmem:[%s1 + $0x70] sm:$0xf]
  %v50 = vld [vmem:[%s1 + $0x74] sm:$0xf]
  %v51 = vld [vmem:[%s1 + $0x78] sm:$0xf]
  %v52 = vld [vmem:[%s1 + $0x7c] sm:$0xf]
  %v57 = vunpack.c.l.b16 %v17
  %v58 = vunpack.c.h.b16 %v17
  %v59 = vunpack.c.l.b16 %v18
  %v60 = vunpack.c.h.b16 %v18
  %v61 = vunpack.c.l.b16 %v19
  %v62 = vunpack.c.h.b16 %v19
  %v63 = vunpack.c.l.b16 %v20
  %v64 = vunpack.c.h.b16 %v20
  %v65 = vpack.c.b16 %v59, %v57
  %v66 = vpack.c.b16 %v60, %v58
  %v67 = vpack.c.b16 %v63, %v61
  %v68 = vpack.c.b16 %v64, %v62
  %v105 = vunpack.c.l.b16 %v21
  %v106 = vunpack.c.l.b16 %v22
  %v107 = vunpack.c.l.b16 %v23
  %v108 = vunpack.c.l.b16 %v24
  %v109 = vunpack.c.l.b16 %v25
  %v110 = vunpack.c.l.b16 %v26
  %v111 = vunpack.c.l.b16 %v27
  %v112 = vunpack.c.l.b16 %v28
  %v113 = vunpack.c.l.b16 %v29
  %v114 = vunpack.c.l.b16 %v30
  %v115 = vunpack.c.l.b16 %v31
  %v116 = vunpack.c.l.b16 %v32
  %v117 = vunpack.c.l.b16 %v33
  %v118 = vunpack.c.l.b16 %v34
  %v119 = vunpack.c.l.b16 %v35
  %v120 = vunpack.c.l.b16 %v36
  %v121 = vunpack.c.l.b16 %v37
  %v122 = vunpack.c.l.b16 %v38
  %v123 = vunpack.c.l.b16 %v39
  %v124 = vunpack.c.l.b16 %v40
  %v125 = vunpack.c.l.b16 %v41
  %v126 = vunpack.c.l.b16 %v42
  %v127 = vunpack.c.l.b16 %v43
  %v128 = vunpack.c.l.b16 %v44
  %v129 = vunpack.c.l.b16 %v45
  %v130 = vunpack.c.l.b16 %v46
  %v131 = vunpack.c.l.b16 %v47
  %v132 = vunpack.c.l.b16 %v48
  %v133 = vunpack.c.l.b16 %v49
  %v134 = vunpack.c.l.b16 %v50
  %v135 = vunpack.c.l.b16 %v51
  %v136 = vunpack.c.l.b16 %v52
  %v137 = vpack.c.b16 %v106, %v105
  %v138 = vpack.c.b16 %v108, %v107
  %v139 = vpack.c.b16 %v110, %v109
  %v140 = vpack.c.b16 %v112, %v111
  %v141 = vpack.c.b16 %v114, %v113
  %v142 = vpack.c.b16 %v116, %v115
  %v143 = vpack.c.b16 %v118, %v117
  %v144 = vpack.c.b16 %v120, %v119
  %v145 = vpack.c.b16 %v122, %v121
  %v146 = vpack.c.b16 %v124, %v123
  %v147 = vpack.c.b16 %v126, %v125
  %v148 = vpack.c.b16 %v128, %v127
  %v149 = vpack.c.b16 %v130, %v129
  %v150 = vpack.c.b16 %v132, %v131
  %v151 = vpack.c.b16 %v134, %v133
  %v152 = vpack.c.b16 %v136, %v135
  %169 = vmatpush.bf16.msra.mxu0 %v144
  %170 = vmatpush.bf16.msra.mxu0 %v143
  %171 = vmatpush.bf16.msra.mxu0 %v142
  %172 = vmatpush.bf16.msra.mxu0 %v141
  %173 = vmatpush.bf16.msra.mxu0 %v140
  %174 = vmatpush.bf16.msra.mxu0 %v139
  %175 = vmatpush.bf16.msra.mxu0 %v138
  %176 = vmatpush.bf16.msra.mxu0 %v137
  %177 = vmatmul.bf16.gmra.mxu0 %v65
  %v178 = vpop.f32.mrf.mxu0
  %v179 = vadd.f32 0.0, %v178
  %v180 = vpop.f32.mrf.mxu0
  %v181 = vadd.f32 0.0, %v180
  %182 = vmatmul.bf16.gmra.mxu0 %v67
  %v183 = vpop.f32.mrf.mxu0
  %v184 = vadd.f32 0.0, %v183
  %v185 = vpop.f32.mrf.mxu0
  %v186 = vadd.f32 0.0, %v185
  %187 = vdwg.mxu0
  %188 = vmatpush.bf16.msra.mxu0 %v152
  %189 = vmatpush.bf16.msra.mxu0 %v151
  %190 = vmatpush.bf16.msra.mxu0 %v150
  %191 = vmatpush.bf16.msra.mxu0 %v149
  %192 = vmatpush.bf16.msra.mxu0 %v148
  %193 = vmatpush.bf16.msra.mxu0 %v147
  %194 = vmatpush.bf16.msra.mxu0 %v146
  %195 = vmatpush.bf16.msra.mxu0 %v145
  %196 = vmatmul.bf16.gmra.mxu0 %v66
  %v197 = vpop.f32.mrf.mxu0
  %v198 = vadd.f32 %v179, %v197
  %v199 = vpop.f32.mrf.mxu0
  %v200 = vadd.f32 %v181, %v199
  %201 = vmatmul.bf16.gmra.mxu0 %v68
  %v202 = vpop.f32.mrf.mxu0
  %v203 = vadd.f32 %v184, %v202
  %v204 = vpop.f32.mrf.mxu0
  %v205 = vadd.f32 %v186, %v204
  %206 = vdwg.mxu0
  %207 = vadd.xlane.f32.xlu0 %v198
  %v208 = vpop.xlane.xlu0 %207
  %209 = vadd.xlane.f32.xlu0 %v200
  %v210 = vpop.xlane.xlu0 %209
  %211 = vadd.xlane.f32.xlu0 %v203
  %v212 = vpop.xlane.xlu0 %211
  %213 = vadd.xlane.f32.xlu0 %v205
  %v214 = vpop.xlane.xlu0 %213
  %v215 = vmul.f32 %v198, %v198
  %v216 = vmul.f32 %v200, %v200
  %v217 = vmul.f32 %v203, %v203
  %v218 = vmul.f32 %v205, %v205
  %219 = vadd.xlane.f32.xlu0 %v215
  %v220 = vpop.xlane.xlu0 %219
  %221 = vadd.xlane.f32.xlu0 %v216
  %v222 = vpop.xlane.xlu0 %221
  %223 = vadd.xlane.f32.xlu0 %v217
  %v224 = vpop.xlane.xlu0 %223
  %225 = vadd.xlane.f32.xlu0 %v218
  %v226 = vpop.xlane.xlu0 %225
  %v227 = vmul.f32 %v208, 0.0078125
  %v228 = vmul.f32 %v210, 0.0078125
  %v229 = vmul.f32 %v212, 0.0078125
  %v230 = vmul.f32 %v214, 0.0078125
  %v231 = vmul.f32 %v220, 0.0078125
  %v232 = vmul.f32 %v222, 0.0078125
  %v233 = vmul.f32 %v224, 0.0078125
  %v234 = vmul.f32 %v226, 0.0078125
  %v235 = vmul.f32 %v227, %v227
  %v236 = vmul.f32 %v228, %v228
  %v237 = vmul.f32 %v229, %v229
  %v238 = vmul.f32 %v230, %v230
  %v239 = vsub.f32 %v231, %v235
  %v240 = vsub.f32 %v232, %v236
  %v241 = vsub.f32 %v233, %v237
  %v242 = vsub.f32 %v234, %v238
  %v243 = vmax.f32 %v239, 0.0
  %v244 = vmax.f32 %v240, 0.0
  %v245 = vmax.f32 %v241, 0.0
  %v246 = vmax.f32 %v242, 0.0
  %v247 = vadd.f32 %v243, 1e-05
  %v248 = vadd.f32 %v244, 1e-05
  %v249 = vadd.f32 %v245, 1e-05
  %v250 = vadd.f32 %v246, 1e-05
  %v251 = vrsqrt.pop %v247
  %v252 = vmul.f32 %v251, %v247
  %v253 = vmul.f32 %v252, %v251
  %v254 = vmul.f32 0.5, %v253
  %v255 = vsub.f32 1.5, %v254
  %v256 = vmul.f32 %v251, %v255
  %vm257 = vweird.f32 %v247
  %vm258 = vweird.f32 %v251
  %vm259 = vmor %vm257, %vm258
  %v260 = vsel %vm259, %v251, %v256
  %v261 = vrsqrt.pop %v248
  %v262 = vmul.f32 %v261, %v248
  %v263 = vmul.f32 %v262, %v261
  %v264 = vmul.f32 0.5, %v263
  %v265 = vsub.f32 1.5, %v264
  %v266 = vmul.f32 %v261, %v265
  %vm267 = vweird.f32 %v248
  %vm268 = vweird.f32 %v261
  %vm269 = vmor %vm267, %vm268
  %v270 = vsel %vm269, %v261, %v266
  %v271 = vrsqrt.pop %v249
  %v272 = vmul.f32 %v271, %v249
  %v273 = vmul.f32 %v272, %v271
  %v274 = vmul.f32 0.5, %v273
  %v275 = vsub.f32 1.5, %v274
  %v276 = vmul.f32 %v271, %v275
  %vm277 = vweird.f32 %v249
  %vm278 = vweird.f32 %v271
  %vm279 = vmor %vm277, %vm278
  %v280 = vsel %vm279, %v271, %v276
  %v281 = vrsqrt.pop %v250
  %v282 = vmul.f32 %v281, %v250
  %v283 = vmul.f32 %v282, %v281
  %v284 = vmul.f32 0.5, %v283
  %v285 = vsub.f32 1.5, %v284
  %v286 = vmul.f32 %v281, %v285
  %vm287 = vweird.f32 %v250
  %vm288 = vweird.f32 %v281
  %vm289 = vmor %vm287, %vm288
  %v290 = vsel %vm289, %v281, %v286
  %v291 = vld [vmem:[%s2] sm:$0xff]
  %v292 = vld [vmem:[%s2 + $0x8] sm:$0xff]
  %v293 = vld [vmem:[%s2 + $0x10] sm:$0xff]
  %v294 = vld [vmem:[%s2 + $0x18] sm:$0xff]
  %v295 = vmul.f32 %v260, %v291
  %v296 = vmul.f32 %v270, %v292
  %v297 = vmul.f32 %v280, %v293
  %v298 = vmul.f32 %v290, %v294
  %v299 = vld [vmem:[%s3] sm:$0xff]
  %v300 = vld [vmem:[%s3 + $0x8] sm:$0xff]
  %v301 = vld [vmem:[%s3 + $0x10] sm:$0xff]
  %v302 = vld [vmem:[%s3 + $0x18] sm:$0xff]
  %v303 = vmul.f32 %v227, %v295
  %v304 = vmul.f32 %v228, %v296
  %v305 = vmul.f32 %v229, %v297
  %v306 = vmul.f32 %v230, %v298
  %v307 = vsub.f32 %v299, %v303
  %v308 = vsub.f32 %v300, %v304
  %v309 = vsub.f32 %v301, %v305
  %v310 = vsub.f32 %v302, %v306
  %312 = vset.pattern.permute.xlu0 0
  %313 = vperm.xlu0 %312, %v295
  %v314 = vpop.permute.xlu0 %313
  %317 = vset.pattern.permute.xlu0 0
  %318 = vperm.xlu0 %317, %v296
  %v319 = vpop.permute.xlu0 %318
  %322 = vset.pattern.permute.xlu0 0
  %323 = vperm.xlu0 %322, %v297
  %v324 = vpop.permute.xlu0 %323
  %327 = vset.pattern.permute.xlu0 0
  %328 = vperm.xlu0 %327, %v298
  %v329 = vpop.permute.xlu0 %328
  %v331 = vmul.f32 %v198, %v314
  %v332 = vmul.f32 %v200, %v319
  %v333 = vmul.f32 %v203, %v324
  %v334 = vmul.f32 %v205, %v329
  %336 = vset.pattern.permute.xlu0 0
  %337 = vperm.xlu0 %336, %v307
  %v338 = vpop.permute.xlu0 %337
  %341 = vset.pattern.permute.xlu0 0
  %342 = vperm.xlu0 %341, %v308
  %v343 = vpop.permute.xlu0 %342
  %346 = vset.pattern.permute.xlu0 0
  %347 = vperm.xlu0 %346, %v309
  %v348 = vpop.permute.xlu0 %347
  %351 = vset.pattern.permute.xlu0 0
  %352 = vperm.xlu0 %351, %v310
  %v353 = vpop.permute.xlu0 %352
  %v355 = vadd.f32 %v331, %v338
  %v356 = vadd.f32 %v332, %v343
  %v357 = vadd.f32 %v333, %v348
  %v358 = vadd.f32 %v334, %v353
  %vm359 = vcmp.gt.f32.partialorder %v355, 0.0
  %vm360 = vcmp.gt.f32.partialorder %v356, 0.0
  %vm361 = vcmp.gt.f32.partialorder %v357, 0.0
  %vm362 = vcmp.gt.f32.partialorder %v358, 0.0
  %v363 = vmul.f32 %v355, 0.2
  %v364 = vmul.f32 %v356, 0.2
  %v365 = vmul.f32 %v357, 0.2
  %v366 = vmul.f32 %v358, 0.2
  %v367 = vsel %vm359, %v355, %v363
  %v368 = vsel %vm360, %v356, %v364
  %v369 = vsel %vm361, %v357, %v365
  %v370 = vsel %vm362, %v358, %v366
  %v371 = vpack.c.bf16 %v367, %v367
  %v372 = vpack.c.bf16 %v368, %v368
  %v373 = vpack.c.bf16 %v369, %v369
  %v374 = vpack.c.bf16 %v370, %v370
  %375 = vst [vmem:[%s4] sm:$0xf] %v371
  %376 = vst [vmem:[%s4 + $0x4] sm:$0xf] %v372
  %377 = vst [vmem:[%s4 + $0x8] sm:$0xf] %v373
  %378 = vst [vmem:[%s4 + $0xc] sm:$0xf] %v374
  // Predicated region
  $region18: #{generator_critic_forward.7} parent=0 // pred_check
    _
  $region19: #{generator_critic_forward.7} parent=0 // pred_check_branch
    %380 = sbr.rel (0) target = $region21
  $region20: #{generator_critic_forward.7} parent=0 // pred_region
    _
  $region21: #{generator_critic_forward.7} parent=0 // pred_fallthru
    _
  // Predicated region
  $region22: #{generator_critic_forward.7} parent=0 // pred_check
    _
  $region23: #{generator_critic_forward.7} parent=0 // pred_check_branch
    %382 = sbr.rel (0) target = $region25
  $region24: #{generator_critic_forward.7} parent=0 // pred_region
    _
  $region25: #{generator_critic_forward.7} parent=0 // pred_fallthru
    _

// kernel: generator_critic_forward.8
$region0: #{generator_critic_forward.8}
  #allocation0 [shape = 'u32[]', space=smem, size = 0x4, offset = 0x4, fixed_abs, tag = 'smem constant byte address 0x4 - core index']
  #allocation1 [shape = 'u32[72,128]{1,0:T(1,128)}', space=vmem, size = 0x9000, scoped, tag = 'internal scratch']
  %s0 = inlined_call_operand.vmem [shape: bf16[16,512,2], index: 0, kind: input, shape index: {}]
  %s1 = inlined_call_operand.vmem [shape: bf16[64,512], index: 1, kind: input, shape index: {}]
  %s2 = inlined_call_operand.vmem [shape: f32[64,1], index: 2, kind: input, shape index: {}]
  %s3 = inlined_call_operand.vmem [shape: f32[64,1], index: 3, kind: input, shape index: {}]
  %s4 = inlined_call_operand.vmem [shape: bf16[16,16,64], index: 4, kind: input, shape index: {}]
  %s5 = inlined_call_operand.vmem [shape: f32[16,1], index: 5, kind: input, shape index: {}]
  %s6 = inlined_call_operand.vmem [shape: bf16[32,16], index: 6, kind: input, shape index: {}]
  %s7 = inlined_call_operand.vmem [shape: bf16[32,16], index: 7, kind: input, shape index: {}]
  %s8 = inlined_call_operand.vmem [shape: f32[32,1], index: 8, kind: input, shape index: {}]
  %s9 = inlined_call_operand.vmem [shape: bf16[4,32], index: 9, kind: input, shape index: {}]
  %s10 = inlined_call_operand.vmem [shape: f32[4,1], index: 10, kind: input, shape index: {}]
  %s11 = inlined_call_operand.vmem [shape: bf16[2,16], index: 11, kind: input, shape index: {}]
  %s12 = inlined_call_operand.vmem [shape: f32[4,2], index: 12, kind: output, shape index: {}]
  %s13 = sld [smem:[#allocation0]]
  $region58: #{generator_critic_forward.8} parent=0
    _
  %s15 = ssub.s32 1, %s13
  %s16 = scalar_select 0, %s15, %s13
  $region1: #{generator_critic_forward.8} parent=0
    #allocation2 [shape = 'u8[4096]{0}', space=vmem, size = 0x1000, dematerialized = true, scoped, tag = 'FusionAdapter Buffer %fusion.1 = bf16[16,2]{1,0:T(8,128)(2,1)} fusion(%param_11.1), kind=kLoop, calls=%fused_computation.66.clone, metadata={op_name="jit(generator_critic_forward)/convert_element_type" stack_frame_id=50}']
    // Predicated region
    $region2: #{generator_critic_forward.8} parent=1 // pred_check
      _
    $region3: #{generator_critic_forward.8} parent=1 // pred_check_branch
      %18 = sbr.rel (0) target = $region5
    $region4: #{generator_critic_forward.8} parent=1 // pred_region
      _
    $region5: #{generator_critic_forward.8} parent=1 // pred_fallthru
      _
    // Predicated region
    $region6: #{generator_critic_forward.8} parent=1 // pred_check
      _
    $region7: #{generator_critic_forward.8} parent=1 // pred_check_branch
      %20 = sbr.rel (0) target = $region9
    $region8: #{generator_critic_forward.8} parent=1 // pred_region
      _
    $region9: #{generator_critic_forward.8} parent=1 // pred_fallthru
      _
    // Predicated region
    $region10: #{generator_critic_forward.8} parent=1 // pred_check
      _
    $region11: #{generator_critic_forward.8} parent=1 // pred_check_branch
      %22 = sbr.rel (0) target = $region13
    $region12: #{generator_critic_forward.8} parent=1 // pred_region
      _
    $region13: #{generator_critic_forward.8} parent=1 // pred_fallthru
      _
    // Predicated region
    $region14: #{generator_critic_forward.8} parent=1 // pred_check
      _
    $region15: #{generator_critic_forward.8} parent=1 // pred_check_branch
      %24 = sbr.rel (0) target = $region17
    $region16: #{generator_critic_forward.8} parent=1 // pred_region
      _
    $region17: #{generator_critic_forward.8} parent=1 // pred_fallthru
      _
    // Predicated region
    $region18: #{generator_critic_forward.8} parent=1 // pred_check
      _
    $region19: #{generator_critic_forward.8} parent=1 // pred_check_branch
      %26 = sbr.rel (0) target = $region21
    $region20: #{generator_critic_forward.8} parent=1 // pred_region
      _
    $region21: #{generator_critic_forward.8} parent=1 // pred_fallthru
      _
    // Predicated region
    $region22: #{generator_critic_forward.8} parent=1 // pred_check
      _
    $region23: #{generator_critic_forward.8} parent=1 // pred_check_branch
      %28 = sbr.rel (0) target = $region25
    $region24: #{generator_critic_forward.8} parent=1 // pred_region
      _
    $region25: #{generator_critic_forward.8} parent=1 // pred_fallthru
      _
    // Predicated region
    $region26: #{generator_critic_forward.8} parent=1 // pred_check
      _
    $region27: #{generator_critic_forward.8} parent=1 // pred_check_branch
      %30 = sbr.rel (0) target = $region29
    $region28: #{generator_critic_forward.8} parent=1 // pred_region
      _
    $region29: #{generator_critic_forward.8} parent=1 // pred_fallthru
      _
    // Predicated region
    $region30: #{generator_critic_forward.8} parent=1 // pred_check
      _
    $region31: #{generator_critic_forward.8} parent=1 // pred_check_branch
      %32 = sbr.rel (0) target = $region33
    $region32: #{generator_critic_forward.8} parent=1 // pred_region
      _
    $region33: #{generator_critic_forward.8} parent=1 // pred_fallthru
      _
    // Predicated region
    $region34: #{generator_critic_forward.8} parent=1 // pred_check
      _
    $region35: #{generator_critic_forward.8} parent=1 // pred_check_branch
      %34 = sbr.rel (0) target = $region37
    $region36: #{generator_critic_forward.8} parent=1 // pred_region
      _
    $region37: #{generator_critic_forward.8} parent=1 // pred_fallthru
      _
    // Predicated region
    $region38: #{generator_critic_forward.8} parent=1 // pred_check
      _
    $region39: #{generator_critic_forward.8} parent=1 // pred_check_branch
      %36 = sbr.rel (0) target = $region41
    $region40: #{generator_critic_forward.8} parent=1 // pred_region
      _
    $region41: #{generator_critic_forward.8} parent=1 // pred_fallthru
      _
    // Predicated region
    $region42: #{generator_critic_forward.8} parent=1 // pred_check
      _
    $region43: #{generator_critic_forward.8} parent=1 // pred_check_branch
      %38 = sbr.rel (0) target = $region45
    $region44: #{generator_critic_forward.8} parent=1 // pred_region
      _
    $region45: #{generator_critic_forward.8} parent=1 // pred_fallthru
      _
    // Predicated region
    $region46: #{generator_critic_forward.8} parent=1 // pred_check
      _
    $region47: #{generator_critic_forward.8} parent=1 // pred_check_branch
      %40 = sbr.rel (0) target = $region49
    $region48: #{generator_critic_forward.8} parent=1 // pred_region
      _
    $region49: #{generator_critic_forward.8} parent=1 // pred_fallthru
      _
    %v41 = vld [vmem:[%s11] sm:$0xf]
    %v42 = vunpack.c.l.bf16 %v41
    %v43 = vunpack.c.h.bf16 %v41
    %v44 = vpack.c.bf16 0.0, %v42
    %s46 = ssub.s32 16, 1
    %47 = vst [vmem:[#allocation2] sm:%s46] %v44
    %s48 = scalar_lea.vmem %s11, 4
    %v49 = vld [vmem:[%s48] sm:$0xf]
    %v50 = vunpack.c.l.bf16 %v49
    %v51 = vunpack.c.h.bf16 %v49
    %s52 = scalar_lea.vmem [#allocation2], 4
    %v53 = vpack.c.bf16 0.0, %v50
    %s55 = ssub.s32 16, 1
    %56 = vst [vmem:[%s52] sm:%s55] %v53
    %v58 = vld [vmem:[%s1] sm:$0xff]
    %v59 = vld [vmem:[%s1 + $0x8] sm:$0xff]
    %v60 = vld [vmem:[%s1 + $0x10] sm:$0xff]
    %v61 = vld [vmem:[%s1 + $0x18] sm:$0xff]
    %v62 = vld [vmem:[%s1 + $0x20] sm:$0xff]
    %v63 = vld [vmem:[%s1 + $0x28] sm:$0xff]
    %v64 = vld [vmem:[%s1 + $0x30] sm:$0xff]
    %v65 = vld [vmem:[%s1 + $0x38] sm:$0xff]
    %v66 = vld [vmem:[%s1 + $0x40] sm:$0xff]
    %v67 = vld [vmem:[%s1 + $0x48] sm:$0xff]
    %v68 = vld [vmem:[%s1 + $0x50] sm:$0xff]
    %v69 = vld [vmem:[%s1 + $0x58] sm:$0xff]
    %v70 = vld [vmem:[%s1 + $0x60] sm:$0xff]
    %v71 = vld [vmem:[%s1 + $0x68] sm:$0xff]
    %v72 = vld [vmem:[%s1 + $0x70] sm:$0xff]
    %v73 = vld [vmem:[%s1 + $0x78] sm:$0xff]
    %v74 = vld [vmem:[%s0] sm:$0xf]
    %v75 = vld [vmem:[%s0 + $0x4] sm:$0xf]
    %v76 = vld [vmem:[%s0 + $0x8] sm:$0xf]
    %v77 = vld [vmem:[%s0 + $0xc] sm:$0xf]
    %v78 = vld [vmem:[%s0 + $0x10] sm:$0xf]
    %v79 = vld [vmem:[%s0 + $0x14] sm:$0xf]
    %v80 = vld [vmem:[%s0 + $0x18] sm:$0xf]
    %v81 = vld [vmem:[%s0 + $0x1c] sm:$0xf]
    %v82 = vld [vmem:[%s0 + $0x20] sm:$0xf]
    %v83 = vld [vmem:[%s0 + $0x24] sm:$0xf]
    %v84 = vld [vmem:[%s0 + $0x28] sm:$0xf]
    %v85 = vld [vmem:[%s0 + $0x2c] sm:$0xf]
    %v86 = vld [vmem:[%s0 + $0x30] sm:$0xf]
    %v87 = vld [vmem:[%s0 + $0x34] sm:$0xf]
    %v88 = vld [vmem:[%s0 + $0x38] sm:$0xf]
    %v89 = vld [vmem:[%s0 + $0x3c] sm:$0xf]
    %v90 = vld [vmem:[%s0 + $0x40] sm:$0xf]
    %v91 = vld [vmem:[%s0 + $0x44] sm:$0xf]
    %v92 = vld [vmem:[%s0 + $0x48] sm:$0xf]
    %v93 = vld [vmem:[%s0 + $0x4c] sm:$0xf]
    %v94 = vld [vmem:[%s0 + $0x50] sm:$0xf]
    %v95 = vld [vmem:[%s0 + $0x54] sm:$0xf]
    %v96 = vld [vmem:[%s0 + $0x58] sm:$0xf]
    %v97 = vld [vmem:[%s0 + $0x5c] sm:$0xf]
    %v98 = vld [vmem:[%s0 + $0x60] sm:$0xf]
    %v99 = vld [vmem:[%s0 + $0x64] sm:$0xf]
    %v100 = vld [vmem:[%s0 + $0x68] sm:$0xf]
    %v101 = vld [vmem:[%s0 + $0x6c] sm:$0xf]
    %v102 = vld [vmem:[%s0 + $0x70] sm:$0xf]
    %v103 = vld [vmem:[%s0 + $0x74] sm:$0xf]
    %v104 = vld [vmem:[%s0 + $0x78] sm:$0xf]
    %v105 = vld [vmem:[%s0 + $0x7c] sm:$0xf]
    %v106 = vld [vmem:[%s0 + $0x80] sm:$0xf]
    %v107 = vld [vmem:[%s0 + $0x84] sm:$0xf]
    %v108 = vld [vmem:[%s0 + $0x88] sm:$0xf]
    %v109 = vld [vmem:[%s0 + $0x8c] sm:$0xf]
    %v110 = vld [vmem:[%s0 + $0x90] sm:$0xf]
    %v111 = vld [vmem:[%s0 + $0x94] sm:$0xf]
    %v112 = vld [vmem:[%s0 + $0x98] sm:$0xf]
    %v113 = vld [vmem:[%s0 + $0x9c] sm:$0xf]
    %v114 = vld [vmem:[%s0 + $0xa0] sm:$0xf]
    %v115 = vld [vmem:[%s0 + $0xa4] sm:$0xf]
    %v116 = vld [vmem:[%s0 + $0xa8] sm:$0xf]
    %v117 = vld [vmem:[%s0 + $0xac] sm:$0xf]
    %v118 = vld [vmem:[%s0 + $0xb0] sm:$0xf]
    %v119 = vld [vmem:[%s0 + $0xb4] sm:$0xf]
    %v120 = vld [vmem:[%s0 + $0xb8] sm:$0xf]
    %v121 = vld [vmem:[%s0 + $0xbc] sm:$0xf]
    %v122 = vld [vmem:[%s0 + $0xc0] sm:$0xf]
    %v123 = vld [vmem:[%s0 + $0xc4] sm:$0xf]
    %v124 = vld [vmem:[%s0 + $0xc8] sm:$0xf]
    %v125 = vld [vmem:[%s0 + $0xcc] sm:$0xf]
    %v126 = vld [vmem:[%s0 + $0xd0] sm:$0xf]
    %v127 = vld [vmem:[%s0 + $0xd4] sm:$0xf]
    %v128 = vld [vmem:[%s0 + $0xd8] sm:$0xf]
    %v129 = vld [vmem:[%s0 + $0xdc] sm:$0xf]
    %v130 = vld [vmem:[%s0 + $0xe0] sm:$0xf]
    %v131 = vld [vmem:[%s0 + $0xe4] sm:$0xf]
    %v132 = vld [vmem:[%s0 + $0xe8] sm:$0xf]
    %v133 = vld [vmem:[%s0 + $0xec] sm:$0xf]
    %v134 = vld [vmem:[%s0 + $0xf0] sm:$0xf]
    %v135 = vld [vmem:[%s0 + $0xf4] sm:$0xf]
    %v136 = vld [vmem:[%s0 + $0xf8] sm:$0xf]
    %v137 = vld [vmem:[%s0 + $0xfc] sm:$0xf]
    %v154 = vunpack.c.l.b16 %v58
    %v155 = vunpack.c.h.b16 %v58
    %v156 = vunpack.c.l.b16 %v59
    %v157 = vunpack.c.h.b16 %v59
    %v158 = vunpack.c.l.b16 %v60
    %v159 = vunpack.c.h.b16 %v60
    %v160 = vunpack.c.l.b16 %v61
    %v161 = vunpack.c.h.b16 %v61
    %v162 = vunpack.c.l.b16 %v62
    %v163 = vunpack.c.h.b16 %v62
    %v164 = vunpack.c.l.b16 %v63
    %v165 = vunpack.c.h.b16 %v63
    %v166 = vunpack.c.l.b16 %v64
    %v167 = vunpack.c.h.b16 %v64
    %v168 = vunpack.c.l.b16 %v65
    %v169 = vunpack.c.h.b16 %v65
    %v170 = vunpack.c.l.b16 %v66
    %v171 = vunpack.c.h.b16 %v66
    %v172 = vunpack.c.l.b16 %v67
    %v173 = vunpack.c.h.b16 %v67
    %v174 = vunpack.c.l.b16 %v68
    %v175 = vunpack.c.h.b16 %v68
    %v176 = vunpack.c.l.b16 %v69
    %v177 = vunpack.c.h.b16 %v69
    %v178 = vunpack.c.l.b16 %v70
    %v179 = vunpack.c.h.b16 %v70
    %v180 = vunpack.c.l.b16 %v71
    %v181 = vunpack.c.h.b16 %v71
    %v182 = vunpack.c.l.b16 %v72
    %v183 = vunpack.c.h.b16 %v72
    %v184 = vunpack.c.l.b16 %v73
    %v185 = vunpack.c.h.b16 %v73
    %v186 = vpack.c.b16 %v158, %v154
    %v187 = vpack.c.b16 %v159, %v155
    %v188 = vpack.c.b16 %v160, %v156
    %v189 = vpack.c.b16 %v161, %v157
    %v190 = vpack.c.b16 %v166, %v162
    %v191 = vpack.c.b16 %v167, %v163
    %v192 = vpack.c.b16 %v168, %v164
    %v193 = vpack.c.b16 %v169, %v165
    %v194 = vpack.c.b16 %v174, %v170
    %v195 = vpack.c.b16 %v175, %v171
    %v196 = vpack.c.b16 %v176, %v172
    %v197 = vpack.c.b16 %v177, %v173
    %v198 = vpack.c.b16 %v182, %v178
    %v199 = vpack.c.b16 %v183, %v179
    %v200 = vpack.c.b16 %v184, %v180
    %v201 = vpack.c.b16 %v185, %v181
    %v282 = vunpack.c.l.b16 %v74
    %v283 = vunpack.c.l.b16 %v75
    %v284 = vunpack.c.l.b16 %v76
    %v285 = vunpack.c.l.b16 %v77
    %v286 = vunpack.c.l.b16 %v78
    %v287 = vunpack.c.l.b16 %v79
    %v288 = vunpack.c.l.b16 %v80
    %v289 = vunpack.c.l.b16 %v81
    %v290 = vunpack.c.l.b16 %v82
    %v291 = vunpack.c.l.b16 %v83
    %v292 = vunpack.c.l.b16 %v84
    %v293 = vunpack.c.l.b16 %v85
    %v294 = vunpack.c.l.b16 %v86
    %v295 = vunpack.c.l.b16 %v87
    %v296 = vunpack.c.l.b16 %v88
    %v297 = vunpack.c.l.b16 %v89
    %v298 = vunpack.c.l.b16 %v90
    %v299 = vunpack.c.l.b16 %v91
    %v300 = vunpack.c.l.b16 %v92
    %v301 = vunpack.c.l.b16 %v93
    %v302 = vunpack.c.l.b16 %v94
    %v303 = vunpack.c.l.b16 %v95
    %v304 = vunpack.c.l.b16 %v96
    %v305 = vunpack.c.l.b16 %v97
    %v306 = vunpack.c.l.b16 %v98
    %v307 = vunpack.c.l.b16 %v99
    %v308 = vunpack.c.l.b16 %v100
    %v309 = vunpack.c.l.b16 %v101
    %v310 = vunpack.c.l.b16 %v102
    %v311 = vunpack.c.l.b16 %v103
    %v312 = vunpack.c.l.b16 %v104
    %v313 = vunpack.c.l.b16 %v105
    %v314 = vunpack.c.l.b16 %v106
    %v315 = vunpack.c.l.b16 %v107
    %v316 = vunpack.c.l.b16 %v108
    %v317 = vunpack.c.l.b16 %v109
    %v318 = vunpack.c.l.b16 %v110
    %v319 = vunpack.c.l.b16 %v111
    %v320 = vunpack.c.l.b16 %v112
    %v321 = vunpack.c.l.b16 %v113
    %v322 = vunpack.c.l.b16 %v114
    %v323 = vunpack.c.l.b16 %v115
    %v324 = vunpack.c.l.b16 %v116
    %v325 = vunpack.c.l.b16 %v117
    %v326 = vunpack.c.l.b16 %v118
    %v327 = vunpack.c.l.b16 %v119
    %v328 = vunpack.c.l.b16 %v120
    %v329 = vunpack.c.l.b16 %v121
    %v330 = vunpack.c.l.b16 %v122
    %v331 = vunpack.c.l.b16 %v123
    %v332 = vunpack.c.l.b16 %v124
    %v333 = vunpack.c.l.b16 %v125
    %v334 = vunpack.c.l.b16 %v126
    %v335 = vunpack.c.l.b16 %v127
    %v336 = vunpack.c.l.b16 %v128
    %v337 = vunpack.c.l.b16 %v129
    %v338 = vunpack.c.l.b16 %v130
    %v339 = vunpack.c.l.b16 %v131
    %v340 = vunpack.c.l.b16 %v132
    %v341 = vunpack.c.l.b16 %v133
    %v342 = vunpack.c.l.b16 %v134
    %v343 = vunpack.c.l.b16 %v135
    %v344 = vunpack.c.l.b16 %v136
    %v345 = vunpack.c.l.b16 %v137
    %v346 = vpack.c.b16 %v283, %v282
    %v347 = vpack.c.b16 %v285, %v284
    %v348 = vpack.c.b16 %v287, %v286
    %v349 = vpack.c.b16 %v289, %v288
    %v350 = vpack.c.b16 %v291, %v290
    %v351 = vpack.c.b16 %v293, %v292
    %v352 = vpack.c.b16 %v295, %v294
    %v353 = vpack.c.b16 %v297, %v296
    %v354 = vpack.c.b16 %v299, %v298
    %v355 = vpack.c.b16 %v301, %v300
    %v356 = vpack.c.b16 %v303, %v302
    %v357 = vpack.c.b16 %v305, %v304
    %v358 = vpack.c.b16 %v307, %v306
    %v359 = vpack.c.b16 %v309, %v308
    %v360 = vpack.c.b16 %v311, %v310
    %v361 = vpack.c.b16 %v313, %v312
    %v362 = vpack.c.b16 %v315, %v314
    %v363 = vpack.c.b16 %v317, %v316
    %v364 = vpack.c.b16 %v319, %v318
    %v365 = vpack.c.b16 %v321, %v320
    %v366 = vpack.c.b16 %v323, %v322
    %v367 = vpack.c.b16 %v325, %v324
    %v368 = vpack.c.b16 %v327, %v326
    %v369 = vpack.c.b16 %v329, %v328
    %v370 = vpack.c.b16 %v331, %v330
    %v371 = vpack.c.b16 %v333, %v332
    %v372 = vpack.c.b16 %v335, %v334
    %v373 = vpack.c.b16 %v337, %v336
    %v374 = vpack.c.b16 %v339, %v338
    %v375 = vpack.c.b16 %v341, %v340
    %v376 = vpack.c.b16 %v343, %v342
    %v377 = vpack.c.b16 %v345, %v344
    %410 = vmatpush.bf16.msra.mxu0 %v353
    %411 = vmatpush.bf16.msra.mxu0 %v352
    %412 = vmatpush.bf16.msra.mxu0 %v351
    %413 = vmatpush.bf16.msra.mxu0 %v350
    %414 = vmatpush.bf16.msra.mxu0 %v349
    %415 = vmatpush.bf16.msra.mxu0 %v348
    %416 = vmatpush.bf16.msra.mxu0 %v347
    %417 = vmatpush.bf16.msra.mxu0 %v346
    %418 = vmatmul.bf16.gmra.mxu0 %v186
    %v419 = vpop.f32.mrf.mxu0
    %v420 = vadd.f32 0.0, %v419
    %v421 = vpop.f32.mrf.mxu0
    %v422 = vadd.f32 0.0, %v421
    %423 = vmatmul.bf16.gmra.mxu0 %v190
    %v424 = vpop.f32.mrf.mxu0
    %v425 = vadd.f32 0.0, %v424
    %v426 = vpop.f32.mrf.mxu0
    %v427 = vadd.f32 0.0, %v426
    %428 = vmatmul.bf16.gmra.mxu0 %v194
    %v429 = vpop.f32.mrf.mxu0
    %v430 = vadd.f32 0.0, %v429
    %v431 = vpop.f32.mrf.mxu0
    %v432 = vadd.f32 0.0, %v431
    %433 = vmatmul.bf16.gmra.mxu0 %v198
    %v434 = vpop.f32.mrf.mxu0
    %v435 = vadd.f32 0.0, %v434
    %v436 = vpop.f32.mrf.mxu0
    %v437 = vadd.f32 0.0, %v436
    %438 = vdwg.mxu0
    %439 = vmatpush.bf16.msra.mxu0 %v361
    %440 = vmatpush.bf16.msra.mxu0 %v360
    %441 = vmatpush.bf16.msra.mxu0 %v359
    %442 = vmatpush.bf16.msra.mxu0 %v358
    %443 = vmatpush.bf16.msra.mxu0 %v357
    %444 = vmatpush.bf16.msra.mxu0 %v356
    %445 = vmatpush.bf16.msra.mxu0 %v355
    %446 = vmatpush.bf16.msra.mxu0 %v354
    %447 = vmatmul.bf16.gmra.mxu0 %v187
    %v448 = vpop.f32.mrf.mxu0
    %v449 = vadd.f32 %v420, %v448
    %v450 = vpop.f32.mrf.mxu0
    %v451 = vadd.f32 %v422, %v450
    %452 = vmatmul.bf16.gmra.mxu0 %v191
    %v453 = vpop.f32.mrf.mxu0
    %v454 = vadd.f32 %v425, %v453
    %v455 = vpop.f32.mrf.mxu0
    %v456 = vadd.f32 %v427, %v455
    %457 = vmatmul.bf16.gmra.mxu0 %v195
    %v458 = vpop.f32.mrf.mxu0
    %v459 = vadd.f32 %v430, %v458
    %v460 = vpop.f32.mrf.mxu0
    %v461 = vadd.f32 %v432, %v460
    %462 = vmatmul.bf16.gmra.mxu0 %v199
    %v463 = vpop.f32.mrf.mxu0
    %v464 = vadd.f32 %v435, %v463
    %v465 = vpop.f32.mrf.mxu0
    %v466 = vadd.f32 %v437, %v465
    %467 = vdwg.mxu0
    %468 = vmatpush.bf16.msra.mxu0 %v369
    %469 = vmatpush.bf16.msra.mxu0 %v368
    %470 = vmatpush.bf16.msra.mxu0 %v367
    %471 = vmatpush.bf16.msra.mxu0 %v366
    %472 = vmatpush.bf16.msra.mxu0 %v365
    %473 = vmatpush.bf16.msra.mxu0 %v364
    %474 = vmatpush.bf16.msra.mxu0 %v363
    %475 = vmatpush.bf16.msra.mxu0 %v362
    %476 = vmatmul.bf16.gmra.mxu0 %v188
    %v477 = vpop.f32.mrf.mxu0
    %v478 = vadd.f32 %v449, %v477
    %v479 = vpop.f32.mrf.mxu0
    %v480 = vadd.f32 %v451, %v479
    %481 = vmatmul.bf16.gmra.mxu0 %v192
    %v482 = vpop.f32.mrf.mxu0
    %v483 = vadd.f32 %v454, %v482
    %v484 = vpop.f32.mrf.mxu0
    %v485 = vadd.f32 %v456, %v484
    %486 = vmatmul.bf16.gmra.mxu0 %v196
    %v487 = vpop.f32.mrf.mxu0
    %v488 = vadd.f32 %v459, %v487
    %v489 = vpop.f32.mrf.mxu0
    %v490 = vadd.f32 %v461, %v489
    %491 = vmatmul.bf16.gmra.mxu0 %v200
    %v492 = vpop.f32.mrf.mxu0
    %v493 = vadd.f32 %v464, %v492
    %v494 = vpop.f32.mrf.mxu0
    %v495 = vadd.f32 %v466, %v494
    %496 = vdwg.mxu0
    %497 = vmatpush.bf16.msra.mxu0 %v377
    %498 = vmatpush.bf16.msra.mxu0 %v376
    %499 = vmatpush.bf16.msra.mxu0 %v375
    %500 = vmatpush.bf16.msra.mxu0 %v374
    %501 = vmatpush.bf16.msra.mxu0 %v373
    %502 = vmatpush.bf16.msra.mxu0 %v372
    %503 = vmatpush.bf16.msra.mxu0 %v371
    %504 = vmatpush.bf16.msra.mxu0 %v370
    %505 = vmatmul.bf16.gmra.mxu0 %v189
    %v506 = vpop.f32.mrf.mxu0
    %v507 = vadd.f32 %v478, %v506
    %v508 = vpop.f32.mrf.mxu0
    %v509 = vadd.f32 %v480, %v508
    %510 = vmatmul.bf16.gmra.mxu0 %v193
    %v511 = vpop.f32.mrf.mxu0
    %v512 = vadd.f32 %v483, %v511
    %v513 = vpop.f32.mrf.mxu0
    %v514 = vadd.f32 %v485, %v513
    %515 = vmatmul.bf16.gmra.mxu0 %v197
    %v516 = vpop.f32.mrf.mxu0
    %v517 = vadd.f32 %v488, %v516
    %v518 = vpop.f32.mrf.mxu0
    %v519 = vadd.f32 %v490, %v518
    %520 = vmatmul.bf16.gmra.mxu0 %v201
    %v521 = vpop.f32.mrf.mxu0
    %v522 = vadd.f32 %v493, %v521
    %v523 = vpop.f32.mrf.mxu0
    %v524 = vadd.f32 %v495, %v523
    %525 = vdwg.mxu0
    %s526 = scalar_lea.vmem %s0, 256
    %v527 = vld [vmem:[%s526] sm:$0xf]
    %v528 = vld [vmem:[%s526 + $0x4] sm:$0xf]
    %v529 = vld [vmem:[%s526 + $0x8] sm:$0xf]
    %v530 = vld [vmem:[%s526 + $0xc] sm:$0xf]
    %v531 = vld [vmem:[%s526 + $0x10] sm:$0xf]
    %v532 = vld [vmem:[%s526 + $0x14] sm:$0xf]
    %v533 = vld [vmem:[%s526 + $0x18] sm:$0xf]
    %v534 = vld [vmem:[%s526 + $0x1c] sm:$0xf]
    %v535 = vld [vmem:[%s526 + $0x20] sm:$0xf]
    %v536 = vld [vmem:[%s526 + $0x24] sm:$0xf]
    %v537 = vld [vmem:[%s526 + $0x28] sm:$0xf]
    %v538 = vld [vmem:[%s526 + $0x2c] sm:$0xf]
    %v539 = vld [vmem:[%s526 + $0x30] sm:$0xf]
    %v540 = vld [vmem:[%s526 + $0x34] sm:$0xf]
    %v541 = vld [vmem:[%s526 + $0x38] sm:$0xf]
    %v542 = vld [vmem:[%s526 + $0x3c] sm:$0xf]
    %v543 = vld [vmem:[%s526 + $0x40] sm:$0xf]
    %v544 = vld [vmem:[%s526 + $0x44] sm:$0xf]
    %v545 = vld [vmem:[%s526 + $0x48] sm:$0xf]
    %v546 = vld [vmem:[%s526 + $0x4c] sm:$0xf]
    %v547 = vld [vmem:[%s526 + $0x50] sm:$0xf]
    %v548 = vld [vmem:[%s526 + $0x54] sm:$0xf]
    %v549 = vld [vmem:[%s526 + $0x58] sm:$0xf]
    %v550 = vld [vmem:[%s526 + $0x5c] sm:$0xf]
    %v551 = vld [vmem:[%s526 + $0x60] sm:$0xf]
    %v552 = vld [vmem:[%s526 + $0x64] sm:$0xf]
    %v553 = vld [vmem:[%s526 + $0x68] sm:$0xf]
    %v554 = vld [vmem:[%s526 + $0x6c] sm:$0xf]
    %v555 = vld [vmem:[%s526 + $0x70] sm:$0xf]
    %v556 = vld [vmem:[%s526 + $0x74] sm:$0xf]
    %v557 = vld [vmem:[%s526 + $0x78] sm:$0xf]
    %v558 = vld [vmem:[%s526 + $0x7c] sm:$0xf]
    %v559 = vld [vmem:[%s526 + $0x80] sm:$0xf]
    %v560 = vld [vmem:[%s526 + $0x84] sm:$0xf]
    %v561 = vld [vmem:[%s526 + $0x88] sm:$0xf]
    %v562 = vld [vmem:[%s526 + $0x8c] sm:$0xf]
    %v563 = vld [vmem:[%s526 + $0x90] sm:$0xf]
    %v564 = vld [vmem:[%s526 + $0x94] sm:$0xf]
    %v565 = vld [vmem:[%s526 + $0x98] sm:$0xf]
    %v566 = vld [vmem:[%s526 + $0x9c] sm:$0xf]
    %v567 = vld [vmem:[%s526 + $0xa0] sm:$0xf]
    %v568 = vld [vmem:[%s526 + $0xa4] sm:$0xf]
    %v569 = vld [vmem:[%s526 + $0xa8] sm:$0xf]
    %v570 = vld [vmem:[%s526 + $0xac] sm:$0xf]
    %v571 = vld [vmem:[%s526 + $0xb0] sm:$0xf]
    %v572 = vld [vmem:[%s526 + $0xb4] sm:$0xf]
    %v573 = vld [vmem:[%s526 + $0xb8] sm:$0xf]
    %v574 = vld [vmem:[%s526 + $0xbc] sm:$0xf]
    %v575 = vld [vmem:[%s526 + $0xc0] sm:$0xf]
    %v576 = vld [vmem:[%s526 + $0xc4] sm:$0xf]
    %v577 = vld [vmem:[%s526 + $0xc8] sm:$0xf]
    %v578 = vld [vmem:[%s526 + $0xcc] sm:$0xf]
    %v579 = vld [vmem:[%s526 + $0xd0] sm:$0xf]
    %v580 = vld [vmem:[%s526 + $0xd4] sm:$0xf]
    %v581 = vld [vmem:[%s526 + $0xd8] sm:$0xf]
    %v582 = vld [vmem:[%s526 + $0xdc] sm:$0xf]
    %v583 = vld [vmem:[%s526 + $0xe0] sm:$0xf]
    %v584 = vld [vmem:[%s526 + $0xe4] sm:$0xf]
    %v585 = vld [vmem:[%s526 + $0xe8] sm:$0xf]
    %v586 = vld [vmem:[%s526 + $0xec] sm:$0xf]
    %v587 = vld [vmem:[%s526 + $0xf0] sm:$0xf]
    %v588 = vld [vmem:[%s526 + $0xf4] sm:$0xf]
    %v589 = vld [vmem:[%s526 + $0xf8] sm:$0xf]
    %v590 = vld [vmem:[%s526 + $0xfc] sm:$0xf]
    %v655 = vunpack.c.l.b16 %v527
    %v656 = vunpack.c.l.b16 %v528
    %v657 = vunpack.c.l.b16 %v529
    %v658 = vunpack.c.l.b16 %v530
    %v659 = vunpack.c.l.b16 %v531
    %v660 = vunpack.c.l.b16 %v532
    %v661 = vunpack.c.l.b16 %v533
    %v662 = vunpack.c.l.b16 %v534
    %v663 = vunpack.c.l.b16 %v535
    %v664 = vunpack.c.l.b16 %v536
    %v665 = vunpack.c.l.b16 %v537
    %v666 = vunpack.c.l.b16 %v538
    %v667 = vunpack.c.l.b16 %v539
    %v668 = vunpack.c.l.b16 %v540
    %v669 = vunpack.c.l.b16 %v541
    %v670 = vunpack.c.l.b16 %v542
    %v671 = vunpack.c.l.b16 %v543
    %v672 = vunpack.c.l.b16 %v544
    %v673 = vunpack.c.l.b16 %v545
    %v674 = vunpack.c.l.b16 %v546
    %v675 = vunpack.c.l.b16 %v547
    %v676 = vunpack.c.l.b16 %v548
    %v677 = vunpack.c.l.b16 %v549
    %v678 = vunpack.c.l.b16 %v550
    %v679 = vunpack.c.l.b16 %v551
    %v680 = vunpack.c.l.b16 %v552
    %v681 = vunpack.c.l.b16 %v553
    %v682 = vunpack.c.l.b16 %v554
    %v683 = vunpack.c.l.b16 %v555
    %v684 = vunpack.c.l.b16 %v556
    %v685 = vunpack.c.l.b16 %v557
    %v686 = vunpack.c.l.b16 %v558
    %v687 = vunpack.c.l.b16 %v559
    %v688 = vunpack.c.l.b16 %v560
    %v689 = vunpack.c.l.b16 %v561
    %v690 = vunpack.c.l.b16 %v562
    %v691 = vunpack.c.l.b16 %v563
    %v692 = vunpack.c.l.b16 %v564
    %v693 = vunpack.c.l.b16 %v565
    %v694 = vunpack.c.l.b16 %v566
    %v695 = vunpack.c.l.b16 %v567
    %v696 = vunpack.c.l.b16 %v568
    %v697 = vunpack.c.l.b16 %v569
    %v698 = vunpack.c.l.b16 %v570
    %v699 = vunpack.c.l.b16 %v571
    %v700 = vunpack.c.l.b16 %v572
    %v701 = vunpack.c.l.b16 %v573
    %v702 = vunpack.c.l.b16 %v574
    %v703 = vunpack.c.l.b16 %v575
    %v704 = vunpack.c.l.b16 %v576
    %v705 = vunpack.c.l.b16 %v577
    %v706 = vunpack.c.l.b16 %v578
    %v707 = vunpack.c.l.b16 %v579
    %v708 = vunpack.c.l.b16 %v580
    %v709 = vunpack.c.l.b16 %v581
    %v710 = vunpack.c.l.b16 %v582
    %v711 = vunpack.c.l.b16 %v583
    %v712 = vunpack.c.l.b16 %v584
    %v713 = vunpack.c.l.b16 %v585
    %v714 = vunpack.c.l.b16 %v586
    %v715 = vunpack.c.l.b16 %v587
    %v716 = vunpack.c.l.b16 %v588
    %v717 = vunpack.c.l.b16 %v589
    %v718 = vunpack.c.l.b16 %v590
    %v719 = vpack.c.b16 %v656, %v655
    %v720 = vpack.c.b16 %v658, %v657
    %v721 = vpack.c.b16 %v660, %v659
    %v722 = vpack.c.b16 %v662, %v661
    %v723 = vpack.c.b16 %v664, %v663
    %v724 = vpack.c.b16 %v666, %v665
    %v725 = vpack.c.b16 %v668, %v667
    %v726 = vpack.c.b16 %v670, %v669
    %v727 = vpack.c.b16 %v672, %v671
    %v728 = vpack.c.b16 %v674, %v673
    %v729 = vpack.c.b16 %v676, %v675
    %v730 = vpack.c.b16 %v678, %v677
    %v731 = vpack.c.b16 %v680, %v679
    %v732 = vpack.c.b16 %v682, %v681
    %v733 = vpack.c.b16 %v684, %v683
    %v734 = vpack.c.b16 %v686, %v685
    %v735 = vpack.c.b16 %v688, %v687
    %v736 = vpack.c.b16 %v690, %v689
    %v737 = vpack.c.b16 %v692, %v691
    %v738 = vpack.c.b16 %v694, %v693
    %v739 = vpack.c.b16 %v696, %v695
    %v740 = vpack.c.b16 %v698, %v697
    %v741 = vpack.c.b16 %v700, %v699
    %v742 = vpack.c.b16 %v702, %v701
    %v743 = vpack.c.b16 %v704, %v703
    %v744 = vpack.c.b16 %v706, %v705
    %v745 = vpack.c.b16 %v708, %v707
    %v746 = vpack.c.b16 %v710, %v709
    %v747 = vpack.c.b16 %v712, %v711
    %v748 = vpack.c.b16 %v714, %v713
    %v749 = vpack.c.b16 %v716, %v715
    %v750 = vpack.c.b16 %v718, %v717
    %783 = vmatpush.bf16.msra.mxu0 %v726
    %784 = vmatpush.bf16.msra.mxu0 %v725
    %785 = vmatpush.bf16.msra.mxu0 %v724
    %786 = vmatpush.bf16.msra.mxu0 %v723
    %787 = vmatpush.bf16.msra.mxu0 %v722
    %788 = vmatpush.bf16.msra.mxu0 %v721
    %789 = vmatpush.bf16.msra.mxu0 %v720
    %790 = vmatpush.bf16.msra.mxu0 %v719
    %791 = vmatmul.bf16.gmra.mxu0 %v186
    %v792 = vpop.f32.mrf.mxu0
    %v793 = vadd.f32 0.0, %v792
    %v794 = vpop.f32.mrf.mxu0
    %v795 = vadd.f32 0.0, %v794
    %796 = vmatmul.bf16.gmra.mxu0 %v190
    %v797 = vpop.f32.mrf.mxu0
    %v798 = vadd.f32 0.0, %v797
    %v799 = vpop.f32.mrf.mxu0
    %v800 = vadd.f32 0.0, %v799
    %801 = vmatmul.bf16.gmra.mxu0 %v194
    %v802 = vpop.f32.mrf.mxu0
    %v803 = vadd.f32 0.0, %v802
    %v804 = vpop.f32.mrf.mxu0
    %v805 = vadd.f32 0.0, %v804
    %806 = vmatmul.bf16.gmra.mxu0 %v198
    %v807 = vpop.f32.mrf.mxu0
    %v808 = vadd.f32 0.0, %v807
    %v809 = vpop.f32.mrf.mxu0
    %v810 = vadd.f32 0.0, %v809
    %811 = vdwg.mxu0
    %812 = vmatpush.bf16.msra.mxu0 %v734
    %813 = vmatpush.bf16.msra.mxu0 %v733
    %814 = vmatpush.bf16.msra.mxu0 %v732
    %815 = vmatpush.bf16.msra.mxu0 %v731
    %816 = vmatpush.bf16.msra.mxu0 %v730
    %817 = vmatpush.bf16.msra.mxu0 %v729
    %818 = vmatpush.bf16.msra.mxu0 %v728
    %819 = vmatpush.bf16.msra.mxu0 %v727
    %820 = vmatmul.bf16.gmra.mxu0 %v187
    %v821 = vpop.f32.mrf.mxu0
    %v822 = vadd.f32 %v793, %v821
    %v823 = vpop.f32.mrf.mxu0
    %v824 = vadd.f32 %v795, %v823
    %825 = vmatmul.bf16.gmra.mxu0 %v191
    %v826 = vpop.f32.mrf.mxu0
    %v827 = vadd.f32 %v798, %v826
    %v828 = vpop.f32.mrf.mxu0
    %v829 = vadd.f32 %v800, %v828
    %830 = vmatmul.bf16.gmra.mxu0 %v195
    %v831 = vpop.f32.mrf.mxu0
    %v832 = vadd.f32 %v803, %v831
    %v833 = vpop.f32.mrf.mxu0
    %v834 = vadd.f32 %v805, %v833
    %835 = vmatmul.bf16.gmra.mxu0 %v199
    %v836 = vpop.f32.mrf.mxu0
    %v837 = vadd.f32 %v808, %v836
    %v838 = vpop.f32.mrf.mxu0
    %v839 = vadd.f32 %v810, %v838
    %840 = vdwg.mxu0
    %841 = vmatpush.bf16.msra.mxu0 %v742
    %842 = vmatpush.bf16.msra.mxu0 %v741
    %843 = vmatpush.bf16.msra.mxu0 %v740
    %844 = vmatpush.bf16.msra.mxu0 %v739
    %845 = vmatpush.bf16.msra.mxu0 %v738
    %846 = vmatpush.bf16.msra.mxu0 %v737
    %847 = vmatpush.bf16.msra.mxu0 %v736
    %848 = vmatpush.bf16.msra.mxu0 %v735
    %849 = vmatmul.bf16.gmra.mxu0 %v188
    %v850 = vpop.f32.mrf.mxu0
    %v851 = vadd.f32 %v822, %v850
    %v852 = vpop.f32.mrf.mxu0
    %v853 = vadd.f32 %v824, %v852
    %854 = vmatmul.bf16.gmra.mxu0 %v192
    %v855 = vpop.f32.mrf.mxu0
    %v856 = vadd.f32 %v827, %v855
    %v857 = vpop.f32.mrf.mxu0
    %v858 = vadd.f32 %v829, %v857
    %859 = vmatmul.bf16.gmra.mxu0 %v196
    %v860 = vpop.f32.mrf.mxu0
    %v861 = vadd.f32 %v832, %v860
    %v862 = vpop.f32.mrf.mxu0
    %v863 = vadd.f32 %v834, %v862
    %864 = vmatmul.bf16.gmra.mxu0 %v200
    %v865 = vpop.f32.mrf.mxu0
    %v866 = vadd.f32 %v837, %v865
    %v867 = vpop.f32.mrf.mxu0
    %v868 = vadd.f32 %v839, %v867
    %869 = vdwg.mxu0
    %870 = vmatpush.bf16.msra.mxu0 %v750
    %871 = vmatpush.bf16.msra.mxu0 %v749
    %872 = vmatpush.bf16.msra.mxu0 %v748
    %873 = vmatpush.bf16.msra.mxu0 %v747
    %874 = vmatpush.bf16.msra.mxu0 %v746
    %875 = vmatpush.bf16.msra.mxu0 %v745
    %876 = vmatpush.bf16.msra.mxu0 %v744
    %877 = vmatpush.bf16.msra.mxu0 %v743
    %878 = vmatmul.bf16.gmra.mxu0 %v189
    %v879 = vpop.f32.mrf.mxu0
    %v880 = vadd.f32 %v851, %v879
    %v881 = vpop.f32.mrf.mxu0
    %v882 = vadd.f32 %v853, %v881
    %883 = vmatmul.bf16.gmra.mxu0 %v193
    %v884 = vpop.f32.mrf.mxu0
    %v885 = vadd.f32 %v856, %v884
    %v886 = vpop.f32.mrf.mxu0
    %v887 = vadd.f32 %v858, %v886
    %888 = vmatmul.bf16.gmra.mxu0 %v197
    %v889 = vpop.f32.mrf.mxu0
    %v890 = vadd.f32 %v861, %v889
    %v891 = vpop.f32.mrf.mxu0
    %v892 = vadd.f32 %v863, %v891
    %893 = vmatmul.bf16.gmra.mxu0 %v201
    %v894 = vpop.f32.mrf.mxu0
    %v895 = vadd.f32 %v866, %v894
    %v896 = vpop.f32.mrf.mxu0
    %v897 = vadd.f32 %v868, %v896
    %898 = vdwg.mxu0
    %s899 = scalar_lea.vmem %s0, 512
    %v900 = vld [vmem:[%s899] sm:$0xf]
    %v901 = vld [vmem:[%s899 + $0x4] sm:$0xf]
    %v902 = vld [vmem:[%s899 + $0x8] sm:$0xf]
    %v903 = vld [vmem:[%s899 + $0xc] sm:$0xf]
    %v904 = vld [vmem:[%s899 + $0x10] sm:$0xf]
    %v905 = vld [vmem:[%s899 + $0x14] sm:$0xf]
    %v906 = vld [vmem:[%s899 + $0x18] sm:$0xf]
    %v907 = vld [vmem:[%s899 + $0x1c] sm:$0xf]
    %v908 = vld [vmem:[%s899 + $0x20] sm:$0xf]
    %v909 = vld [vmem:[%s899 + $0x24] sm:$0xf]
    %v910 = vld [vmem:[%s899 + $0x28] sm:$0xf]
    %v911 = vld [vmem:[%s899 + $0x2c] sm:$0xf]
    %v912 = vld [vmem:[%s899 + $0x30] sm:$0xf]
    %v913 = vld [vmem:[%s899 + $0x34] sm:$0xf]
    %v914 = vld [vmem:[%s899 + $0x38] sm:$0xf]
    %v915 = vld [vmem:[%s899 + $0x3c] sm:$0xf]
    %v916 = vld [vmem:[%s899 + $0x40] sm:$0xf]
    %v917 = vld [vmem:[%s899 + $0x44] sm:$0xf]
    %v918 = vld [vmem:[%s899 + $0x48] sm:$0xf]
    %v919 = vld [vmem:[%s899 + $0x4c] sm:$0xf]
    %v920 = vld [vmem:[%s899 + $0x50] sm:$0xf]
    %v921 = vld [vmem:[%s899 + $0x54] sm:$0xf]
    %v922 = vld [vmem:[%s899 + $0x58] sm:$0xf]
    %v923 = vld [vmem:[%s899 + $0x5c] sm:$0xf]
    %v924 = vld [vmem:[%s899 + $0x60] sm:$0xf]
    %v925 = vld [vmem:[%s899 + $0x64] sm:$0xf]
    %v926 = vld [vmem:[%s899 + $0x68] sm:$0xf]
    %v927 = vld [vmem:[%s899 + $0x6c] sm:$0xf]
    %v928 = vld [vmem:[%s899 + $0x70] sm:$0xf]
    %v929 = vld [vmem:[%s899 + $0x74] sm:$0xf]
    %v930 = vld [vmem:[%s899 + $0x78] sm:$0xf]
    %v931 = vld [vmem:[%s899 + $0x7c] sm:$0xf]
    %v932 = vld [vmem:[%s899 + $0x80] sm:$0xf]
    %v933 = vld [vmem:[%s899 + $0x84] sm:$0xf]
    %v934 = vld [vmem:[%s899 + $0x88] sm:$0xf]
    %v935 = vld [vmem:[%s899 + $0x8c] sm:$0xf]
    %v936 = vld [vmem:[%s899 + $0x90] sm:$0xf]
    %v937 = vld [vmem:[%s899 + $0x94] sm:$0xf]
    %v938 = vld [vmem:[%s899 + $0x98] sm:$0xf]
    %v939 = vld [vmem:[%s899 + $0x9c] sm:$0xf]
    %v940 = vld [vmem:[%s899 + $0xa0] sm:$0xf]
    %v941 = vld [vmem:[%s899 + $0xa4] sm:$0xf]
    %v942 = vld [vmem:[%s899 + $0xa8] sm:$0xf]
    %v943 = vld [vmem:[%s899 + $0xac] sm:$0xf]
    %v944 = vld [vmem:[%s899 + $0xb0] sm:$0xf]
    %v945 = vld [vmem:[%s899 + $0xb4] sm:$0xf]
    %v946 = vld [vmem:[%s899 + $0xb8] sm:$0xf]
    %v947 = vld [vmem:[%s899 + $0xbc] sm:$0xf]
    %v948 = vld [vmem:[%s899 + $0xc0] sm:$0xf]
    %v949 = vld [vmem:[%s899 + $0xc4] sm:$0xf]
    %v950 = vld [vmem:[%s899 + $0xc8] sm:$0xf]
    %v951 = vld [vmem:[%s899 + $0xcc] sm:$0xf]
    %v952 = vld [vmem:[%s899 + $0xd0] sm:$0xf]
    %v953 = vld [vmem:[%s899 + $0xd4] sm:$0xf]
    %v954 = vld [vmem:[%s899 + $0xd8] sm:$0xf]
    %v955 = vld [vmem:[%s899 + $0xdc] sm:$0xf]
    %v956 = vld [vmem:[%s899 + $0xe0] sm:$0xf]
    %v957 = vld [vmem:[%s899 + $0xe4] sm:$0xf]
    %v958 = vld [vmem:[%s899 + $0xe8] sm:$0xf]
    %v959 = vld [vmem:[%s899 + $0xec] sm:$0xf]
    %v960 = vld [vmem:[%s899 + $0xf0] sm:$0xf]
    %v961 = vld [vmem:[%s899 + $0xf4] sm:$0xf]
    %v962 = vld [vmem:[%s899 + $0xf8] sm:$0xf]
    %v963 = vld [vmem:[%s899 + $0xfc] sm:$0xf]
    %v1028 = vunpack.c.l.b16 %v900
    %v1029 = vunpack.c.l.b16 %v901
    %v1030 = vunpack.c.l.b16 %v902
    %v1031 = vunpack.c.l.b16 %v903
    %v1032 = vunpack.c.l.b16 %v904
    %v1033 = vunpack.c.l.b16 %v905
    %v1034 = vunpack.c.l.b16 %v906
    %v1035 = vunpack.c.l.b16 %v907
    %v1036 = vunpack.c.l.b16 %v908
    %v1037 = vunpack.c.l.b16 %v909
    %v1038 = vunpack.c.l.b16 %v910
    %v1039 = vunpack.c.l.b16 %v911
    %v1040 = vunpack.c.l.b16 %v912
    %v1041 = vunpack.c.l.b16 %v913
    %v1042 = vunpack.c.l.b16 %v914
    %v1043 = vunpack.c.l.b16 %v915
    %v1044 = vunpack.c.l.b16 %v916
    %v1045 = vunpack.c.l.b16 %v917
    %v1046 = vunpack.c.l.b16 %v918
    %v1047 = vunpack.c.l.b16 %v919
    %v1048 = vunpack.c.l.b16 %v920
    %v1049 = vunpack.c.l.b16 %v921
    %v1050 = vunpack.c.l.b16 %v922
    %v1051 = vunpack.c.l.b16 %v923
    %v1052 = vunpack.c.l.b16 %v924
    %v1053 = vunpack.c.l.b16 %v925
    %v1054 = vunpack.c.l.b16 %v926
    %v1055 = vunpack.c.l.b16 %v927
    %v1056 = vunpack.c.l.b16 %v928
    %v1057 = vunpack.c.l.b16 %v929
    %v1058 = vunpack.c.l.b16 %v930
    %v1059 = vunpack.c.l.b16 %v931
    %v1060 = vunpack.c.l.b16 %v932
    %v1061 = vunpack.c.l.b16 %v933
    %v1062 = vunpack.c.l.b16 %v934
    %v1063 = vunpack.c.l.b16 %v935
    %v1064 = vunpack.c.l.b16 %v936
    %v1065 = vunpack.c.l.b16 %v937
    %v1066 = vunpack.c.l.b16 %v938
    %v1067 = vunpack.c.l.b16 %v939
    %v1068 = vunpack.c.l.b16 %v940
    %v1069 = vunpack.c.l.b16 %v941
    %v1070 = vunpack.c.l.b16 %v942
    %v1071 = vunpack.c.l.b16 %v943
    %v1072 = vunpack.c.l.b16 %v944
    %v1073 = vunpack.c.l.b16 %v945
    %v1074 = vunpack.c.l.b16 %v946
    %v1075 = vunpack.c.l.b16 %v947
    %v1076 = vunpack.c.l.b16 %v948
    %v1077 = vunpack.c.l.b16 %v949
    %v1078 = vunpack.c.l.b16 %v950
    %v1079 = vunpack.c.l.b16 %v951
    %v1080 = vunpack.c.l.b16 %v952
    %v1081 = vunpack.c.l.b16 %v953
    %v1082 = vunpack.c.l.b16 %v954
    %v1083 = vunpack.c.l.b16 %v955
    %v1084 = vunpack.c.l.b16 %v956
    %v1085 = vunpack.c.l.b16 %v957
    %v1086 = vunpack.c.l.b16 %v958
    %v1087 = vunpack.c.l.b16 %v959
    %v1088 = vunpack.c.l.b16 %v960
    %v1089 = vunpack.c.l.b16 %v961
    %v1090 = vunpack.c.l.b16 %v962
    %v1091 = vunpack.c.l.b16 %v963
    %v1092 = vpack.c.b16 %v1029, %v1028
    %v1093 = vpack.c.b16 %v1031, %v1030
    %v1094 = vpack.c.b16 %v1033, %v1032
    %v1095 = vpack.c.b16 %v1035, %v1034
    %v1096 = vpack.c.b16 %v1037, %v1036
    %v1097 = vpack.c.b16 %v1039, %v1038
    %v1098 = vpack.c.b16 %v1041, %v1040
    %v1099 = vpack.c.b16 %v1043, %v1042
    %v1100 = vpack.c.b16 %v1045, %v1044
    %v1101 = vpack.c.b16 %v1047, %v1046
    %v1102 = vpack.c.b16 %v1049, %v1048
    %v1103 = vpack.c.b16 %v1051, %v1050
    %v1104 = vpack.c.b16 %v1053, %v1052
    %v1105 = vpack.c.b16 %v1055, %v1054
    %v1106 = vpack.c.b16 %v1057, %v1056
    %v1107 = vpack.c.b16 %v1059, %v1058
    %v1108 = vpack.c.b16 %v1061, %v1060
    %v1109 = vpack.c.b16 %v1063, %v1062
    %v1110 = vpack.c.b16 %v1065, %v1064
    %v1111 = vpack.c.b16 %v1067, %v1066
    %v1112 = vpack.c.b16 %v1069, %v1068
    %v1113 = vpack.c.b16 %v1071, %v1070
    %v1114 = vpack.c.b16 %v1073, %v1072
    %v1115 = vpack.c.b16 %v1075, %v1074
    %v1116 = vpack.c.b16 %v1077, %v1076
    %v1117 = vpack.c.b16 %v1079, %v1078
    %v1118 = vpack.c.b16 %v1081, %v1080
    %v1119 = vpack.c.b16 %v1083, %v1082
    %v1120 = vpack.c.b16 %v1085, %v1084
    %v1121 = vpack.c.b16 %v1087, %v1086
    %v1122 = vpack.c.b16 %v1089, %v1088
    %v1123 = vpack.c.b16 %v1091, %v1090
    %1156 = vmatpush.bf16.msra.mxu0 %v1099
    %1157 = vmatpush.bf16.msra.mxu0 %v1098
    %1158 = vmatpush.bf16.msra.mxu0 %v1097
    %1159 = vmatpush.bf16.msra.mxu0 %v1096
    %1160 = vmatpush.bf16.msra.mxu0 %v1095
    %1161 = vmatpush.bf16.msra.mxu0 %v1094
    %1162 = vmatpush.bf16.msra.mxu0 %v1093
    %1163 = vmatpush.bf16.msra.mxu0 %v1092
    %1164 = vmatmul.bf16.gmra.mxu0 %v186
    %v1165 = vpop.f32.mrf.mxu0
    %v1166 = vadd.f32 0.0, %v1165
    %v1167 = vpop.f32.mrf.mxu0
    %v1168 = vadd.f32 0.0, %v1167
    %1169 = vmatmul.bf16.gmra.mxu0 %v190
    %v1170 = vpop.f32.mrf.mxu0
    %v1171 = vadd.f32 0.0, %v1170
    %v1172 = vpop.f32.mrf.mxu0
    %v1173 = vadd.f32 0.0, %v1172
    %1174 = vmatmul.bf16.gmra.mxu0 %v194
    %v1175 = vpop.f32.mrf.mxu0
    %v1176 = vadd.f32 0.0, %v1175
    %v1177 = vpop.f32.mrf.mxu0
    %v1178 = vadd.f32 0.0, %v1177
    %1179 = vmatmul.bf16.gmra.mxu0 %v198
    %v1180 = vpop.f32.mrf.mxu0
    %v1181 = vadd.f32 0.0, %v1180
    %v1182 = vpop.f32.mrf.mxu0
    %v1183 = vadd.f32 0.0, %v1182
    %1184 = vdwg.mxu0
    %1185 = vmatpush.bf16.msra.mxu0 %v1107
    %1186 = vmatpush.bf16.msra.mxu0 %v1106
    %1187 = vmatpush.bf16.msra.mxu0 %v1105
    %1188 = vmatpush.bf16.msra.mxu0 %v1104
    %1189 = vmatpush.bf16.msra.mxu0 %v1103
    %1190 = vmatpush.bf16.msra.mxu0 %v1102
    %1191 = vmatpush.bf16.msra.mxu0 %v1101
    %1192 = vmatpush.bf16.msra.mxu0 %v1100
    %1193 = vmatmul.bf16.gmra.mxu0 %v187
    %v1194 = vpop.f32.mrf.mxu0
    %v1195 = vadd.f32 %v1166, %v1194
    %v1196 = vpop.f32.mrf.mxu0
    %v1197 = vadd.f32 %v1168, %v1196
    %1198 = vmatmul.bf16.gmra.mxu0 %v191
    %v1199 = vpop.f32.mrf.mxu0
    %v1200 = vadd.f32 %v1171, %v1199
    %v1201 = vpop.f32.mrf.mxu0
    %v1202 = vadd.f32 %v1173, %v1201
    %1203 = vmatmul.bf16.gmra.mxu0 %v195
    %v1204 = vpop.f32.mrf.mxu0
    %v1205 = vadd.f32 %v1176, %v1204
    %v1206 = vpop.f32.mrf.mxu0
    %v1207 = vadd.f32 %v1178, %v1206
    %1208 = vmatmul.bf16.gmra.mxu0 %v199
    %v1209 = vpop.f32.mrf.mxu0
    %v1210 = vadd.f32 %v1181, %v1209
    %v1211 = vpop.f32.mrf.mxu0
    %v1212 = vadd.f32 %v1183, %v1211
    %1213 = vdwg.mxu0
    %1214 = vmatpush.bf16.msra.mxu0 %v1115
    %1215 = vmatpush.bf16.msra.mxu0 %v1114
    %1216 = vmatpush.bf16.msra.mxu0 %v1113
    %1217 = vmatpush.bf16.msra.mxu0 %v1112
    %1218 = vmatpush.bf16.msra.mxu0 %v1111
    %1219 = vmatpush.bf16.msra.mxu0 %v1110
    %1220 = vmatpush.bf16.msra.mxu0 %v1109
    %1221 = vmatpush.bf16.msra.mxu0 %v1108
    %1222 = vmatmul.bf16.gmra.mxu0 %v188
    %v1223 = vpop.f32.mrf.mxu0
    %v1224 = vadd.f32 %v1195, %v1223
    %v1225 = vpop.f32.mrf.mxu0
    %v1226 = vadd.f32 %v1197, %v1225
    %1227 = vmatmul.bf16.gmra.mxu0 %v192
    %v1228 = vpop.f32.mrf.mxu0
    %v1229 = vadd.f32 %v1200, %v1228
    %v1230 = vpop.f32.mrf.mxu0
    %v1231 = vadd.f32 %v1202, %v1230
    %1232 = vmatmul.bf16.gmra.mxu0 %v196
    %v1233 = vpop.f32.mrf.mxu0
    %v1234 = vadd.f32 %v1205, %v1233
    %v1235 = vpop.f32.mrf.mxu0
    %v1236 = vadd.f32 %v1207, %v1235
    %1237 = vmatmul.bf16.gmra.mxu0 %v200
    %v1238 = vpop.f32.mrf.mxu0
    %v1239 = vadd.f32 %v1210, %v1238
    %v1240 = vpop.f32.mrf.mxu0
    %v1241 = vadd.f32 %v1212, %v1240
    %1242 = vdwg.mxu0
    %1243 = vmatpush.bf16.msra.mxu0 %v1123
    %1244 = vmatpush.bf16.msra.mxu0 %v1122
    %1245 = vmatpush.bf16.msra.mxu0 %v1121
    %1246 = vmatpush.bf16.msra.mxu0 %v1120
    %1247 = vmatpush.bf16.msra.mxu0 %v1119
    %1248 = vmatpush.bf16.msra.mxu0 %v1118
    %1249 = vmatpush.bf16.msra.mxu0 %v1117
    %1250 = vmatpush.bf16.msra.mxu0 %v1116
    %1251 = vmatmul.bf16.gmra.mxu0 %v189
    %v1252 = vpop.f32.mrf.mxu0
    %v1253 = vadd.f32 %v1224, %v1252
    %v1254 = vpop.f32.mrf.mxu0
    %v1255 = vadd.f32 %v1226, %v1254
    %1256 = vmatmul.bf16.gmra.mxu0 %v193
    %v1257 = vpop.f32.mrf.mxu0
    %v1258 = vadd.f32 %v1229, %v1257
    %v1259 = vpop.f32.mrf.mxu0
    %v1260 = vadd.f32 %v1231, %v1259
    %1261 = vmatmul.bf16.gmra.mxu0 %v197
    %v1262 = vpop.f32.mrf.mxu0
    %v1263 = vadd.f32 %v1234, %v1262
    %v1264 = vpop.f32.mrf.mxu0
    %v1265 = vadd.f32 %v1236, %v1264
    %1266 = vmatmul.bf16.gmra.mxu0 %v201
    %v1267 = vpop.f32.mrf.mxu0
    %v1268 = vadd.f32 %v1239, %v1267
    %v1269 = vpop.f32.mrf.mxu0
    %v1270 = vadd.f32 %v1241, %v1269
    %1271 = vdwg.mxu0
    %s1272 = scalar_lea.vmem %s0, 768
    %v1273 = vld [vmem:[%s1272] sm:$0xf]
    %v1274 = vld [vmem:[%s1272 + $0x4] sm:$0xf]
    %v1275 = vld [vmem:[%s1272 + $0x8] sm:$0xf]
    %v1276 = vld [vmem:[%s1272 + $0xc] sm:$0xf]
    %v1277 = vld [vmem:[%s1272 + $0x10] sm:$0xf]
    %v1278 = vld [vmem:[%s1272 + $0x14] sm:$0xf]
    %v1279 = vld [vmem:[%s1272 + $0x18] sm:$0xf]
    %v1280 = vld [vmem:[%s1272 + $0x1c] sm:$0xf]
    %v1281 = vld [vmem:[%s1272 + $0x20] sm:$0xf]
    %v1282 = vld [vmem:[%s1272 + $0x24] sm:$0xf]
    %v1283 = vld [vmem:[%s1272 + $0x28] sm:$0xf]
    %v1284 = vld [vmem:[%s1272 + $0x2c] sm:$0xf]
    %v1285 = vld [vmem:[%s1272 + $0x30] sm:$0xf]
    %v1286 = vld [vmem:[%s1272 + $0x34] sm:$0xf]
    %v1287 = vld [vmem:[%s1272 + $0x38] sm:$0xf]
    %v1288 = vld [vmem:[%s1272 + $0x3c] sm:$0xf]
    %v1289 = vld [vmem:[%s1272 + $0x40] sm:$0xf]
    %v1290 = vld [vmem:[%s1272 + $0x44] sm:$0xf]
    %v1291 = vld [vmem:[%s1272 + $0x48] sm:$0xf]
    %v1292 = vld [vmem:[%s1272 + $0x4c] sm:$0xf]
    %v1293 = vld [vmem:[%s1272 + $0x50] sm:$0xf]
    %v1294 = vld [vmem:[%s1272 + $0x54] sm:$0xf]
    %v1295 = vld [vmem:[%s1272 + $0x58] sm:$0xf]
    %v1296 = vld [vmem:[%s1272 + $0x5c] sm:$0xf]
    %v1297 = vld [vmem:[%s1272 + $0x60] sm:$0xf]
    %v1298 = vld [vmem:[%s1272 + $0x64] sm:$0xf]
    %v1299 = vld [vmem:[%s1272 + $0x68] sm:$0xf]
    %v1300 = vld [vmem:[%s1272 + $0x6c] sm:$0xf]
    %v1301 = vld [vmem:[%s1272 + $0x70] sm:$0xf]
    %v1302 = vld [vmem:[%s1272 + $0x74] sm:$0xf]
    %v1303 = vld [vmem:[%s1272 + $0x78] sm:$0xf]
    %v1304 = vld [vmem:[%s1272 + $0x7c] sm:$0xf]
    %v1305 = vld [vmem:[%s1272 + $0x80] sm:$0xf]
    %v1306 = vld [vmem:[%s1272 + $0x84] sm:$0xf]
    %v1307 = vld [vmem:[%s1272 + $0x88] sm:$0xf]
    %v1308 = vld [vmem:[%s1272 + $0x8c] sm:$0xf]
    %v1309 = vld [vmem:[%s1272 + $0x90] sm:$0xf]
    %v1310 = vld [vmem:[%s1272 + $0x94] sm:$0xf]
    %v1311 = vld [vmem:[%s1272 + $0x98] sm:$0xf]
    %v1312 = vld [vmem:[%s1272 + $0x9c] sm:$0xf]
    %v1313 = vld [vmem:[%s1272 + $0xa0] sm:$0xf]
    %v1314 = vld [vmem:[%s1272 + $0xa4] sm:$0xf]
    %v1315 = vld [vmem:[%s1272 + $0xa8] sm:$0xf]
    %v1316 = vld [vmem:[%s1272 + $0xac] sm:$0xf]
    %v1317 = vld [vmem:[%s1272 + $0xb0] sm:$0xf]
    %v1318 = vld [vmem:[%s1272 + $0xb4] sm:$0xf]
    %v1319 = vld [vmem:[%s1272 + $0xb8] sm:$0xf]
    %v1320 = vld [vmem:[%s1272 + $0xbc] sm:$0xf]
    %v1321 = vld [vmem:[%s1272 + $0xc0] sm:$0xf]
    %v1322 = vld [vmem:[%s1272 + $0xc4] sm:$0xf]
    %v1323 = vld [vmem:[%s1272 + $0xc8] sm:$0xf]
    %v1324 = vld [vmem:[%s1272 + $0xcc] sm:$0xf]
    %v1325 = vld [vmem:[%s1272 + $0xd0] sm:$0xf]
    %v1326 = vld [vmem:[%s1272 + $0xd4] sm:$0xf]
    %v1327 = vld [vmem:[%s1272 + $0xd8] sm:$0xf]
    %v1328 = vld [vmem:[%s1272 + $0xdc] sm:$0xf]
    %v1329 = vld [vmem:[%s1272 + $0xe0] sm:$0xf]
    %v1330 = vld [vmem:[%s1272 + $0xe4] sm:$0xf]
    %v1331 = vld [vmem:[%s1272 + $0xe8] sm:$0xf]
    %v1332 = vld [vmem:[%s1272 + $0xec] sm:$0xf]
    %v1333 = vld [vmem:[%s1272 + $0xf0] sm:$0xf]
    %v1334 = vld [vmem:[%s1272 + $0xf4] sm:$0xf]
    %v1335 = vld [vmem:[%s1272 + $0xf8] sm:$0xf]
    %v1336 = vld [vmem:[%s1272 + $0xfc] sm:$0xf]
    %v1401 = vunpack.c.l.b16 %v1273
    %v1402 = vunpack.c.l.b16 %v1274
    %v1403 = vunpack.c.l.b16 %v1275
    %v1404 = vunpack.c.l.b16 %v1276
    %v1405 = vunpack.c.l.b16 %v1277
    %v1406 = vunpack.c.l.b16 %v1278
    %v1407 = vunpack.c.l.b16 %v1279
    %v1408 = vunpack.c.l.b16 %v1280
    %v1409 = vunpack.c.l.b16 %v1281
    %v1410 = vunpack.c.l.b16 %v1282
    %v1411 = vunpack.c.l.b16 %v1283
    %v1412 = vunpack.c.l.b16 %v1284
    %v1413 = vunpack.c.l.b16 %v1285
    %v1414 = vunpack.c.l.b16 %v1286
    %v1415 = vunpack.c.l.b16 %v1287
    %v1416 = vunpack.c.l.b16 %v1288
    %v1417 = vunpack.c.l.b16 %v1289
    %v1418 = vunpack.c.l.b16 %v1290
    %v1419 = vunpack.c.l.b16 %v1291
    %v1420 = vunpack.c.l.b16 %v1292
    %v1421 = vunpack.c.l.b16 %v1293
    %v1422 = vunpack.c.l.b16 %v1294
    %v1423 = vunpack.c.l.b16 %v1295
    %v1424 = vunpack.c.l.b16 %v1296
    %v1425 = vunpack.c.l.b16 %v1297
    %v1426 = vunpack.c.l.b16 %v1298
    %v1427 = vunpack.c.l.b16 %v1299
    %v1428 = vunpack.c.l.b16 %v1300
    %v1429 = vunpack.c.l.b16 %v1301
    %v1430 = vunpack.c.l.b16 %v1302
    %v1431 = vunpack.c.l.b16 %v1303
    %v1432 = vunpack.c.l.b16 %v1304
    %v1433 = vunpack.c.l.b16 %v1305
    %v1434 = vunpack.c.l.b16 %v1306
    %v1435 = vunpack.c.l.b16 %v1307
    %v1436 = vunpack.c.l.b16 %v1308
    %v1437 = vunpack.c.l.b16 %v1309
    %v1438 = vunpack.c.l.b16 %v1310
    %v1439 = vunpack.c.l.b16 %v1311
    %v1440 = vunpack.c.l.b16 %v1312
    %v1441 = vunpack.c.l.b16 %v1313
    %v1442 = vunpack.c.l.b16 %v1314
    %v1443 = vunpack.c.l.b16 %v1315
    %v1444 = vunpack.c.l.b16 %v1316
    %v1445 = vunpack.c.l.b16 %v1317
    %v1446 = vunpack.c.l.b16 %v1318
    %v1447 = vunpack.c.l.b16 %v1319
    %v1448 = vunpack.c.l.b16 %v1320
    %v1449 = vunpack.c.l.b16 %v1321
    %v1450 = vunpack.c.l.b16 %v1322
    %v1451 = vunpack.c.l.b16 %v1323
    %v1452 = vunpack.c.l.b16 %v1324
    %v1453 = vunpack.c.l.b16 %v1325
    %v1454 = vunpack.c.l.b16 %v1326
    %v1455 = vunpack.c.l.b16 %v1327
    %v1456 = vunpack.c.l.b16 %v1328
    %v1457 = vunpack.c.l.b16 %v1329
    %v1458 = vunpack.c.l.b16 %v1330
    %v1459 = vunpack.c.l.b16 %v1331
    %v1460 = vunpack.c.l.b16 %v1332
    %v1461 = vunpack.c.l.b16 %v1333
    %v1462 = vunpack.c.l.b16 %v1334
    %v1463 = vunpack.c.l.b16 %v1335
    %v1464 = vunpack.c.l.b16 %v1336
    %v1465 = vpack.c.b16 %v1402, %v1401
    %v1466 = vpack.c.b16 %v1404, %v1403
    %v1467 = vpack.c.b16 %v1406, %v1405
    %v1468 = vpack.c.b16 %v1408, %v1407
    %v1469 = vpack.c.b16 %v1410, %v1409
    %v1470 = vpack.c.b16 %v1412, %v1411
    %v1471 = vpack.c.b16 %v1414, %v1413
    %v1472 = vpack.c.b16 %v1416, %v1415
    %v1473 = vpack.c.b16 %v1418, %v1417
    %v1474 = vpack.c.b16 %v1420, %v1419
    %v1475 = vpack.c.b16 %v1422, %v1421
    %v1476 = vpack.c.b16 %v1424, %v1423
    %v1477 = vpack.c.b16 %v1426, %v1425
    %v1478 = vpack.c.b16 %v1428, %v1427
    %v1479 = vpack.c.b16 %v1430, %v1429
    %v1480 = vpack.c.b16 %v1432, %v1431
    %v1481 = vpack.c.b16 %v1434, %v1433
    %v1482 = vpack.c.b16 %v1436, %v1435
    %v1483 = vpack.c.b16 %v1438, %v1437
    %v1484 = vpack.c.b16 %v1440, %v1439
    %v1485 = vpack.c.b16 %v1442, %v1441
    %v1486 = vpack.c.b16 %v1444, %v1443
    %v1487 = vpack.c.b16 %v1446, %v1445
    %v1488 = vpack.c.b16 %v1448, %v1447
    %v1489 = vpack.c.b16 %v1450, %v1449
    %v1490 = vpack.c.b16 %v1452, %v1451
    %v1491 = vpack.c.b16 %v1454, %v1453
    %v1492 = vpack.c.b16 %v1456, %v1455
    %v1493 = vpack.c.b16 %v1458, %v1457
    %v1494 = vpack.c.b16 %v1460, %v1459
    %v1495 = vpack.c.b16 %v1462, %v1461
    %v1496 = vpack.c.b16 %v1464, %v1463
    %1529 = vmatpush.bf16.msra.mxu0 %v1472
    %1530 = vmatpush.bf16.msra.mxu0 %v1471
    %1531 = vmatpush.bf16.msra.mxu0 %v1470
    %1532 = vmatpush.bf16.msra.mxu0 %v1469
    %1533 = vmatpush.bf16.msra.mxu0 %v1468
    %1534 = vmatpush.bf16.msra.mxu0 %v1467
    %1535 = vmatpush.bf16.msra.mxu0 %v1466
    %1536 = vmatpush.bf16.msra.mxu0 %v1465
    %1537 = vmatmul.bf16.gmra.mxu0 %v186
    %v1538 = vpop.f32.mrf.mxu0
    %v1539 = vadd.f32 0.0, %v1538
    %v1540 = vpop.f32.mrf.mxu0
    %v1541 = vadd.f32 0.0, %v1540
    %1542 = vmatmul.bf16.gmra.mxu0 %v190
    %v1543 = vpop.f32.mrf.mxu0
    %v1544 = vadd.f32 0.0, %v1543
    %v1545 = vpop.f32.mrf.mxu0
    %v1546 = vadd.f32 0.0, %v1545
    %1547 = vmatmul.bf16.gmra.mxu0 %v194
    %v1548 = vpop.f32.mrf.mxu0
    %v1549 = vadd.f32 0.0, %v1548
    %v1550 = vpop.f32.mrf.mxu0
    %v1551 = vadd.f32 0.0, %v1550
    %1552 = vmatmul.bf16.gmra.mxu0 %v198
    %v1553 = vpop.f32.mrf.mxu0
    %v1554 = vadd.f32 0.0, %v1553
    %v1555 = vpop.f32.mrf.mxu0
    %v1556 = vadd.f32 0.0, %v1555
    %1557 = vdwg.mxu0
    %1558 = vmatpush.bf16.msra.mxu0 %v1480
    %1559 = vmatpush.bf16.msra.mxu0 %v1479
    %1560 = vmatpush.bf16.msra.mxu0 %v1478
    %1561 = vmatpush.bf16.msra.mxu0 %v1477
    %1562 = vmatpush.bf16.msra.mxu0 %v1476
    %1563 = vmatpush.bf16.msra.mxu0 %v1475
    %1564 = vmatpush.bf16.msra.mxu0 %v1474
    %1565 = vmatpush.bf16.msra.mxu0 %v1473
    %1566 = vmatmul.bf16.gmra.mxu0 %v187
    %v1567 = vpop.f32.mrf.mxu0
    %v1568 = vadd.f32 %v1539, %v1567
    %v1569 = vpop.f32.mrf.mxu0
    %v1570 = vadd.f32 %v1541, %v1569
    %1571 = vmatmul.bf16.gmra.mxu0 %v191
    %v1572 = vpop.f32.mrf.mxu0
    %v1573 = vadd.f32 %v1544, %v1572
    %v1574 = vpop.f32.mrf.mxu0
    %v1575 = vadd.f32 %v1546, %v1574
    %1576 = vmatmul.bf16.gmra.mxu0 %v195
    %v1577 = vpop.f32.mrf.mxu0
    %v1578 = vadd.f32 %v1549, %v1577
    %v1579 = vpop.f32.mrf.mxu0
    %v1580 = vadd.f32 %v1551, %v1579
    %1581 = vmatmul.bf16.gmra.mxu0 %v199
    %v1582 = vpop.f32.mrf.mxu0
    %v1583 = vadd.f32 %v1554, %v1582
    %v1584 = vpop.f32.mrf.mxu0
    %v1585 = vadd.f32 %v1556, %v1584
    %1586 = vdwg.mxu0
    %1587 = vmatpush.bf16.msra.mxu0 %v1488
    %1588 = vmatpush.bf16.msra.mxu0 %v1487
    %1589 = vmatpush.bf16.msra.mxu0 %v1486
    %1590 = vmatpush.bf16.msra.mxu0 %v1485
    %1591 = vmatpush.bf16.msra.mxu0 %v1484
    %1592 = vmatpush.bf16.msra.mxu0 %v1483
    %1593 = vmatpush.bf16.msra.mxu0 %v1482
    %1594 = vmatpush.bf16.msra.mxu0 %v1481
    %1595 = vmatmul.bf16.gmra.mxu0 %v188
    %v1596 = vpop.f32.mrf.mxu0
    %v1597 = vadd.f32 %v1568, %v1596
    %v1598 = vpop.f32.mrf.mxu0
    %v1599 = vadd.f32 %v1570, %v1598
    %1600 = vmatmul.bf16.gmra.mxu0 %v192
    %v1601 = vpop.f32.mrf.mxu0
    %v1602 = vadd.f32 %v1573, %v1601
    %v1603 = vpop.f32.mrf.mxu0
    %v1604 = vadd.f32 %v1575, %v1603
    %1605 = vmatmul.bf16.gmra.mxu0 %v196
    %v1606 = vpop.f32.mrf.mxu0
    %v1607 = vadd.f32 %v1578, %v1606
    %v1608 = vpop.f32.mrf.mxu0
    %v1609 = vadd.f32 %v1580, %v1608
    %1610 = vmatmul.bf16.gmra.mxu0 %v200
    %v1611 = vpop.f32.mrf.mxu0
    %v1612 = vadd.f32 %v1583, %v1611
    %v1613 = vpop.f32.mrf.mxu0
    %v1614 = vadd.f32 %v1585, %v1613
    %1615 = vdwg.mxu0
    %1616 = vmatpush.bf16.msra.mxu0 %v1496
    %1617 = vmatpush.bf16.msra.mxu0 %v1495
    %1618 = vmatpush.bf16.msra.mxu0 %v1494
    %1619 = vmatpush.bf16.msra.mxu0 %v1493
    %1620 = vmatpush.bf16.msra.mxu0 %v1492
    %1621 = vmatpush.bf16.msra.mxu0 %v1491
    %1622 = vmatpush.bf16.msra.mxu0 %v1490
    %1623 = vmatpush.bf16.msra.mxu0 %v1489
    %1624 = vmatmul.bf16.gmra.mxu0 %v189
    %v1625 = vpop.f32.mrf.mxu0
    %v1626 = vadd.f32 %v1597, %v1625
    %v1627 = vpop.f32.mrf.mxu0
    %v1628 = vadd.f32 %v1599, %v1627
    %1629 = vmatmul.bf16.gmra.mxu0 %v193
    %v1630 = vpop.f32.mrf.mxu0
    %v1631 = vadd.f32 %v1602, %v1630
    %v1632 = vpop.f32.mrf.mxu0
    %v1633 = vadd.f32 %v1604, %v1632
    %1634 = vmatmul.bf16.gmra.mxu0 %v197
    %v1635 = vpop.f32.mrf.mxu0
    %v1636 = vadd.f32 %v1607, %v1635
    %v1637 = vpop.f32.mrf.mxu0
    %v1638 = vadd.f32 %v1609, %v1637
    %1639 = vmatmul.bf16.gmra.mxu0 %v201
    %v1640 = vpop.f32.mrf.mxu0
    %v1641 = vadd.f32 %v1612, %v1640
    %v1642 = vpop.f32.mrf.mxu0
    %v1643 = vadd.f32 %v1614, %v1642
    %1644 = vdwg.mxu0
    %s1645 = scalar_lea.vmem %s0, 1024
    %v1646 = vld [vmem:[%s1645] sm:$0xf]
    %v1647 = vld [vmem:[%s1645 + $0x4] sm:$0xf]
    %v1648 = vld [vmem:[%s1645 + $0x8] sm:$0xf]
    %v1649 = vld [vmem:[%s1645 + $0xc] sm:$0xf]
    %v1650 = vld [vmem:[%s1645 + $0x10] sm:$0xf]
    %v1651 = vld [vmem:[%s1645 + $0x14] sm:$0xf]
    %v1652 = vld [vmem:[%s1645 + $0x18] sm:$0xf]
    %v1653 = vld [vmem:[%s1645 + $0x1c] sm:$0xf]
    %v1654 = vld [vmem:[%s1645 + $0x20] sm:$0xf]
    %v1655 = vld [vmem:[%s1645 + $0x24] sm:$0xf]
    %v1656 = vld [vmem:[%s1645 + $0x28] sm:$0xf]
    %v1657 = vld [vmem:[%s1645 + $0x2c] sm:$0xf]
    %v1658 = vld [vmem:[%s1645 + $0x30] sm:$0xf]
    %v1659 = vld [vmem:[%s1645 + $0x34] sm:$0xf]
    %v1660 = vld [vmem:[%s1645 + $0x38] sm:$0xf]
    %v1661 = vld [vmem:[%s1645 + $0x3c] sm:$0xf]
    %v1662 = vld [vmem:[%s1645 + $0x40] sm:$0xf]
    %v1663 = vld [vmem:[%s1645 + $0x44] sm:$0xf]
    %v1664 = vld [vmem:[%s1645 + $0x48] sm:$0xf]
    %v1665 = vld [vmem:[%s1645 + $0x4c] sm:$0xf]
    %v1666 = vld [vmem:[%s1645 + $0x50] sm:$0xf]
    %v1667 = vld [vmem:[%s1645 + $0x54] sm:$0xf]
    %v1668 = vld [vmem:[%s1645 + $0x58] sm:$0xf]
    %v1669 = vld [vmem:[%s1645 + $0x5c] sm:$0xf]
    %v1670 = vld [vmem:[%s1645 + $0x60] sm:$0xf]
    %v1671 = vld [vmem:[%s1645 + $0x64] sm:$0xf]
    %v1672 = vld [vmem:[%s1645 + $0x68] sm:$0xf]
    %v1673 = vld [vmem:[%s1645 + $0x6c] sm:$0xf]
    %v1674 = vld [vmem:[%s1645 + $0x70] sm:$0xf]
    %v1675 = vld [vmem:[%s1645 + $0x74] sm:$0xf]
    %v1676 = vld [vmem:[%s1645 + $0x78] sm:$0xf]
    %v1677 = vld [vmem:[%s1645 + $0x7c] sm:$0xf]
    %v1678 = vld [vmem:[%s1645 + $0x80] sm:$0xf]
    %v1679 = vld [vmem:[%s1645 + $0x84] sm:$0xf]
    %v1680 = vld [vmem:[%s1645 + $0x88] sm:$0xf]
    %v1681 = vld [vmem:[%s1645 + $0x8c] sm:$0xf]
    %v1682 = vld [vmem:[%s1645 + $0x90] sm:$0xf]
    %v1683 = vld [vmem:[%s1645 + $0x94] sm:$0xf]
    %v1684 = vld [vmem:[%s1645 + $0x98] sm:$0xf]
    %v1685 = vld [vmem:[%s1645 + $0x9c] sm:$0xf]
    %v1686 = vld [vmem:[%s1645 + $0xa0] sm:$0xf]
    %v1687 = vld [vmem:[%s1645 + $0xa4] sm:$0xf]
    %v1688 = vld [vmem:[%s1645 + $0xa8] sm:$0xf]
    %v1689 = vld [vmem:[%s1645 + $0xac] sm:$0xf]
    %v1690 = vld [vmem:[%s1645 + $0xb0] sm:$0xf]
    %v1691 = vld [vmem:[%s1645 + $0xb4] sm:$0xf]
    %v1692 = vld [vmem:[%s1645 + $0xb8] sm:$0xf]
    %v1693 = vld [vmem:[%s1645 + $0xbc] sm:$0xf]
    %v1694 = vld [vmem:[%s1645 + $0xc0] sm:$0xf]
    %v1695 = vld [vmem:[%s1645 + $0xc4] sm:$0xf]
    %v1696 = vld [vmem:[%s1645 + $0xc8] sm:$0xf]
    %v1697 = vld [vmem:[%s1645 + $0xcc] sm:$0xf]
    %v1698 = vld [vmem:[%s1645 + $0xd0] sm:$0xf]
    %v1699 = vld [vmem:[%s1645 + $0xd4] sm:$0xf]
    %v1700 = vld [vmem:[%s1645 + $0xd8] sm:$0xf]
    %v1701 = vld [vmem:[%s1645 + $0xdc] sm:$0xf]
    %v1702 = vld [vmem:[%s1645 + $0xe0] sm:$0xf]
    %v1703 = vld [vmem:[%s1645 + $0xe4] sm:$0xf]
    %v1704 = vld [vmem:[%s1645 + $0xe8] sm:$0xf]
    %v1705 = vld [vmem:[%s1645 + $0xec] sm:$0xf]
    %v1706 = vld [vmem:[%s1645 + $0xf0] sm:$0xf]
    %v1707 = vld [vmem:[%s1645 + $0xf4] sm:$0xf]
    %v1708 = vld [vmem:[%s1645 + $0xf8] sm:$0xf]
    %v1709 = vld [vmem:[%s1645 + $0xfc] sm:$0xf]
    %v1774 = vunpack.c.l.b16 %v1646
    %v1775 = vunpack.c.l.b16 %v1647
    %v1776 = vunpack.c.l.b16 %v1648
    %v1777 = vunpack.c.l.b16 %v1649
    %v1778 = vunpack.c.l.b16 %v1650
    %v1779 = vunpack.c.l.b16 %v1651
    %v1780 = vunpack.c.l.b16 %v1652
    %v1781 = vunpack.c.l.b16 %v1653
    %v1782 = vunpack.c.l.b16 %v1654
    %v1783 = vunpack.c.l.b16 %v1655
    %v1784 = vunpack.c.l.b16 %v1656
    %v1785 = vunpack.c.l.b16 %v1657
    %v1786 = vunpack.c.l.b16 %v1658
    %v1787 = vunpack.c.l.b16 %v1659
    %v1788 = vunpack.c.l.b16 %v1660
    %v1789 = vunpack.c.l.b16 %v1661
    %v1790 = vunpack.c.l.b16 %v1662
    %v1791 = vunpack.c.l.b16 %v1663
    %v1792 = vunpack.c.l.b16 %v1664
    %v1793 = vunpack.c.l.b16 %v1665
    %v1794 = vunpack.c.l.b16 %v1666
    %v1795 = vunpack.c.l.b16 %v1667
    %v1796 = vunpack.c.l.b16 %v1668
    %v1797 = vunpack.c.l.b16 %v1669
    %v1798 = vunpack.c.l.b16 %v1670
    %v1799 = vunpack.c.l.b16 %v1671
    %v1800 = vunpack.c.l.b16 %v1672
    %v1801 = vunpack.c.l.b16 %v1673
    %v1802 = vunpack.c.l.b16 %v1674
    %v1803 = vunpack.c.l.b16 %v1675
    %v1804 = vunpack.c.l.b16 %v1676
    %v1805 = vunpack.c.l.b16 %v1677
    %v1806 = vunpack.c.l.b16 %v1678
    %v1807 = vunpack.c.l.b16 %v1679
    %v1808 = vunpack.c.l.b16 %v1680
    %v1809 = vunpack.c.l.b16 %v1681
    %v1810 = vunpack.c.l.b16 %v1682
    %v1811 = vunpack.c.l.b16 %v1683
    %v1812 = vunpack.c.l.b16 %v1684
    %v1813 = vunpack.c.l.b16 %v1685
    %v1814 = vunpack.c.l.b16 %v1686
    %v1815 = vunpack.c.l.b16 %v1687
    %v1816 = vunpack.c.l.b16 %v1688
    %v1817 = vunpack.c.l.b16 %v1689
    %v1818 = vunpack.c.l.b16 %v1690
    %v1819 = vunpack.c.l.b16 %v1691
    %v1820 = vunpack.c.l.b16 %v1692
    %v1821 = vunpack.c.l.b16 %v1693
    %v1822 = vunpack.c.l.b16 %v1694
    %v1823 = vunpack.c.l.b16 %v1695
    %v1824 = vunpack.c.l.b16 %v1696
    %v1825 = vunpack.c.l.b16 %v1697
    %v1826 = vunpack.c.l.b16 %v1698
    %v1827 = vunpack.c.l.b16 %v1699
    %v1828 = vunpack.c.l.b16 %v1700
    %v1829 = vunpack.c.l.b16 %v1701
    %v1830 = vunpack.c.l.b16 %v1702
    %v1831 = vunpack.c.l.b16 %v1703
    %v1832 = vunpack.c.l.b16 %v1704
    %v1833 = vunpack.c.l.b16 %v1705
    %v1834 = vunpack.c.l.b16 %v1706
    %v1835 = vunpack.c.l.b16 %v1707
    %v1836 = vunpack.c.l.b16 %v1708
    %v1837 = vunpack.c.l.b16 %v1709
    %v1838 = vpack.c.b16 %v1775, %v1774
    %v1839 = vpack.c.b16 %v1777, %v1776
    %v1840 = vpack.c.b16 %v1779, %v1778
    %v1841 = vpack.c.b16 %v1781, %v1780
    %v1842 = vpack.c.b16 %v1783, %v1782
    %v1843 = vpack.c.b16 %v1785, %v1784
    %v1844 = vpack.c.b16 %v1787, %v1786
    %v1845 = vpack.c.b16 %v1789, %v1788
    %v1846 = vpack.c.b16 %v1791, %v1790
    %v1847 = vpack.c.b16 %v1793, %v1792
    %v1848 = vpack.c.b16 %v1795, %v1794
    %v1849 = vpack.c.b16 %v1797, %v1796
    %v1850 = vpack.c.b16 %v1799, %v1798
    %v1851 = vpack.c.b16 %v1801, %v1800
    %v1852 = vpack.c.b16 %v1803, %v1802
    %v1853 = vpack.c.b16 %v1805, %v1804
    %v1854 = vpack.c.b16 %v1807, %v1806
    %v1855 = vpack.c.b16 %v1809, %v1808
    %v1856 = vpack.c.b16 %v1811, %v1810
    %v1857 = vpack.c.b16 %v1813, %v1812
    %v1858 = vpack.c.b16 %v1815, %v1814
    %v1859 = vpack.c.b16 %v1817, %v1816
    %v1860 = vpack.c.b16 %v1819, %v1818
    %v1861 = vpack.c.b16 %v1821, %v1820
    %v1862 = vpack.c.b16 %v1823, %v1822
    %v1863 = vpack.c.b16 %v1825, %v1824
    %v1864 = vpack.c.b16 %v1827, %v1826
    %v1865 = vpack.c.b16 %v1829, %v1828
    %v1866 = vpack.c.b16 %v1831, %v1830
    %v1867 = vpack.c.b16 %v1833, %v1832
    %v1868 = vpack.c.b16 %v1835, %v1834
    %v1869 = vpack.c.b16 %v1837, %v1836
    %1902 = vmatpush.bf16.msra.mxu0 %v1845
    %1903 = vmatpush.bf16.msra.mxu0 %v1844
    %1904 = vmatpush.bf16.msra.mxu0 %v1843
    %1905 = vmatpush.bf16.msra.mxu0 %v1842
    %1906 = vmatpush.bf16.msra.mxu0 %v1841
    %1907 = vmatpush.bf16.msra.mxu0 %v1840
    %1908 = vmatpush.bf16.msra.mxu0 %v1839
    %1909 = vmatpush.bf16.msra.mxu0 %v1838
    %1910 = vmatmul.bf16.gmra.mxu0 %v186
    %v1911 = vpop.f32.mrf.mxu0
    %v1912 = vadd.f32 0.0, %v1911
    %v1913 = vpop.f32.mrf.mxu0
    %v1914 = vadd.f32 0.0, %v1913
    %1915 = vmatmul.bf16.gmra.mxu0 %v190
    %v1916 = vpop.f32.mrf.mxu0
    %v1917 = vadd.f32 0.0, %v1916
    %v1918 = vpop.f32.mrf.mxu0
    %v1919 = vadd.f32 0.0, %v1918
    %1920 = vmatmul.bf16.gmra.mxu0 %v194
    %v1921 = vpop.f32.mrf.mxu0
    %v1922 = vadd.f32 0.0, %v1921
    %v1923 = vpop.f32.mrf.mxu0
    %v1924 = vadd.f32 0.0, %v1923
    %1925 = vmatmul.bf16.gmra.mxu0 %v198
    %v1926 = vpop.f32.mrf.mxu0
    %v1927 = vadd.f32 0.0, %v1926
    %v1928 = vpop.f32.mrf.mxu0
    %v1929 = vadd.f32 0.0, %v1928
    %1930 = vdwg.mxu0
    %1931 = vmatpush.bf16.msra.mxu0 %v1853
    %1932 = vmatpush.bf16.msra.mxu0 %v1852
    %1933 = vmatpush.bf16.msra.mxu0 %v1851
    %1934 = vmatpush.bf16.msra.mxu0 %v1850
    %1935 = vmatpush.bf16.msra.mxu0 %v1849
    %1936 = vmatpush.bf16.msra.mxu0 %v1848
    %1937 = vmatpush.bf16.msra.mxu0 %v1847
    %1938 = vmatpush.bf16.msra.mxu0 %v1846
    %1939 = vmatmul.bf16.gmra.mxu0 %v187
    %v1940 = vpop.f32.mrf.mxu0
    %v1941 = vadd.f32 %v1912, %v1940
    %v1942 = vpop.f32.mrf.mxu0
    %v1943 = vadd.f32 %v1914, %v1942
    %1944 = vmatmul.bf16.gmra.mxu0 %v191
    %v1945 = vpop.f32.mrf.mxu0
    %v1946 = vadd.f32 %v1917, %v1945
    %v1947 = vpop.f32.mrf.mxu0
    %v1948 = vadd.f32 %v1919, %v1947
    %1949 = vmatmul.bf16.gmra.mxu0 %v195
    %v1950 = vpop.f32.mrf.mxu0
    %v1951 = vadd.f32 %v1922, %v1950
    %v1952 = vpop.f32.mrf.mxu0
    %v1953 = vadd.f32 %v1924, %v1952
    %1954 = vmatmul.bf16.gmra.mxu0 %v199
    %v1955 = vpop.f32.mrf.mxu0
    %v1956 = vadd.f32 %v1927, %v1955
    %v1957 = vpop.f32.mrf.mxu0
    %v1958 = vadd.f32 %v1929, %v1957
    %1959 = vdwg.mxu0
    %1960 = vmatpush.bf16.msra.mxu0 %v1861
    %1961 = vmatpush.bf16.msra.mxu0 %v1860
    %1962 = vmatpush.bf16.msra.mxu0 %v1859
    %1963 = vmatpush.bf16.msra.mxu0 %v1858
    %1964 = vmatpush.bf16.msra.mxu0 %v1857
    %1965 = vmatpush.bf16.msra.mxu0 %v1856
    %1966 = vmatpush.bf16.msra.mxu0 %v1855
    %1967 = vmatpush.bf16.msra.mxu0 %v1854
    %1968 = vmatmul.bf16.gmra.mxu0 %v188
    %v1969 = vpop.f32.mrf.mxu0
    %v1970 = vadd.f32 %v1941, %v1969
    %v1971 = vpop.f32.mrf.mxu0
    %v1972 = vadd.f32 %v1943, %v1971
    %1973 = vmatmul.bf16.gmra.mxu0 %v192
    %v1974 = vpop.f32.mrf.mxu0
    %v1975 = vadd.f32 %v1946, %v1974
    %v1976 = vpop.f32.mrf.mxu0
    %v1977 = vadd.f32 %v1948, %v1976
    %1978 = vmatmul.bf16.gmra.mxu0 %v196
    %v1979 = vpop.f32.mrf.mxu0
    %v1980 = vadd.f32 %v1951, %v1979
    %v1981 = vpop.f32.mrf.mxu0
    %v1982 = vadd.f32 %v1953, %v1981
    %1983 = vmatmul.bf16.gmra.mxu0 %v200
    %v1984 = vpop.f32.mrf.mxu0
    %v1985 = vadd.f32 %v1956, %v1984
    %v1986 = vpop.f32.mrf.mxu0
    %v1987 = vadd.f32 %v1958, %v1986
    %1988 = vdwg.mxu0
    %1989 = vmatpush.bf16.msra.mxu0 %v1869
    %1990 = vmatpush.bf16.msra.mxu0 %v1868
    %1991 = vmatpush.bf16.msra.mxu0 %v1867
    %1992 = vmatpush.bf16.msra.mxu0 %v1866
    %1993 = vmatpush.bf16.msra.mxu0 %v1865
    %1994 = vmatpush.bf16.msra.mxu0 %v1864
    %1995 = vmatpush.bf16.msra.mxu0 %v1863
    %1996 = vmatpush.bf16.msra.mxu0 %v1862
    %1997 = vmatmul.bf16.gmra.mxu0 %v189
    %v1998 = vpop.f32.mrf.mxu0
    %v1999 = vadd.f32 %v1970, %v1998
    %v2000 = vpop.f32.mrf.mxu0
    %v2001 = vadd.f32 %v1972, %v2000
    %2002 = vmatmul.bf16.gmra.mxu0 %v193
    %v2003 = vpop.f32.mrf.mxu0
    %v2004 = vadd.f32 %v1975, %v2003
    %v2005 = vpop.f32.mrf.mxu0
    %v2006 = vadd.f32 %v1977, %v2005
    %2007 = vmatmul.bf16.gmra.mxu0 %v197
    %v2008 = vpop.f32.mrf.mxu0
    %v2009 = vadd.f32 %v1980, %v2008
    %v2010 = vpop.f32.mrf.mxu0
    %v2011 = vadd.f32 %v1982, %v2010
    %2012 = vmatmul.bf16.gmra.mxu0 %v201
    %v2013 = vpop.f32.mrf.mxu0
    %v2014 = vadd.f32 %v1985, %v2013
    %v2015 = vpop.f32.mrf.mxu0
    %v2016 = vadd.f32 %v1987, %v2015
    %2017 = vdwg.mxu0
    %s2018 = scalar_lea.vmem %s0, 1280
    %v2019 = vld [vmem:[%s2018] sm:$0xf]
    %v2020 = vld [vmem:[%s2018 + $0x4] sm:$0xf]
    %v2021 = vld [vmem:[%s2018 + $0x8] sm:$0xf]
    %v2022 = vld [vmem:[%s2018 + $0xc] sm:$0xf]
    %v2023 = vld [vmem:[%s2018 + $0x10] sm:$0xf]
    %v2024 = vld [vmem:[%s2018 + $0x14] sm:$0xf]
    %v2025 = vld [vmem:[%s2018 + $0x18] sm:$0xf]
    %v2026 = vld [vmem:[%s2018 + $0x1c] sm:$0xf]
    %v2027 = vld [vmem:[%s2018 + $0x20] sm:$0xf]
    %v2028 = vld [vmem:[%s2018 + $0x24] sm:$0xf]
    %v2029 = vld [vmem:[%s2018 + $0x28] sm:$0xf]
    %v2030 = vld [vmem:[%s2018 + $0x2c] sm:$0xf]
    %v2031 = vld [vmem:[%s2018 + $0x30] sm:$0xf]
    %v2032 = vld [vmem:[%s2018 + $0x34] sm:$0xf]
    %v2033 = vld [vmem:[%s2018 + $0x38] sm:$0xf]
    %v2034 = vld [vmem:[%s2018 + $0x3c] sm:$0xf]
    %v2035 = vld [vmem:[%s2018 + $0x40] sm:$0xf]
    %v2036 = vld [vmem:[%s2018 + $0x44] sm:$0xf]
    %v2037 = vld [vmem:[%s2018 + $0x48] sm:$0xf]
    %v2038 = vld [vmem:[%s2018 + $0x4c] sm:$0xf]
    %v2039 = vld [vmem:[%s2018 + $0x50] sm:$0xf]
    %v2040 = vld [vmem:[%s2018 + $0x54] sm:$0xf]
    %v2041 = vld [vmem:[%s2018 + $0x58] sm:$0xf]
    %v2042 = vld [vmem:[%s2018 + $0x5c] sm:$0xf]
    %v2043 = vld [vmem:[%s2018 + $0x60] sm:$0xf]
    %v2044 = vld [vmem:[%s2018 + $0x64] sm:$0xf]
    %v2045 = vld [vmem:[%s2018 + $0x68] sm:$0xf]
    %v2046 = vld [vmem:[%s2018 + $0x6c] sm:$0xf]
    %v2047 = vld [vmem:[%s2018 + $0x70] sm:$0xf]
    %v2048 = vld [vmem:[%s2018 + $0x74] sm:$0xf]
    %v2049 = vld [vmem:[%s2018 + $0x78] sm:$0xf]
    %v2050 = vld [vmem:[%s2018 + $0x7c] sm:$0xf]
    %v2051 = vld [vmem:[%s2018 + $0x80] sm:$0xf]
    %v2052 = vld [vmem:[%s2018 + $0x84] sm:$0xf]
    %v2053 = vld [vmem:[%s2018 + $0x88] sm:$0xf]
    %v2054 = vld [vmem:[%s2018 + $0x8c] sm:$0xf]
    %v2055 = vld [vmem:[%s2018 + $0x90] sm:$0xf]
    %v2056 = vld [vmem:[%s2018 + $0x94] sm:$0xf]
    %v2057 = vld [vmem:[%s2018 + $0x98] sm:$0xf]
    %v2058 = vld [vmem:[%s2018 + $0x9c] sm:$0xf]
    %v2059 = vld [vmem:[%s2018 + $0xa0] sm:$0xf]
    %v2060 = vld [vmem:[%s2018 + $0xa4] sm:$0xf]
    %v2061 = vld [vmem:[%s2018 + $0xa8] sm:$0xf]
    %v2062 = vld [vmem:[%s2018 + $0xac] sm:$0xf]
    %v2063 = vld [vmem:[%s2018 + $0xb0] sm:$0xf]
    %v2064 = vld [vmem:[%s2018 + $0xb4] sm:$0xf]
    %v2065 = vld [vmem:[%s2018 + $0xb8] sm:$0xf]
    %v2066 = vld [vmem:[%s2018 + $0xbc] sm:$0xf]
    %v2067 = vld [vmem:[%s2018 + $0xc0] sm:$0xf]
    %v2068 = vld [vmem:[%s2018 + $0xc4] sm:$0xf]
    %v2069 = vld [vmem:[%s2018 + $0xc8] sm:$0xf]
    %v2070 = vld [vmem:[%s2018 + $0xcc] sm:$0xf]
    %v2071 = vld [vmem:[%s2018 + $0xd0] sm:$0xf]
    %v2072 = vld [vmem:[%s2018 + $0xd4] sm:$0xf]
    %v2073 = vld [vmem:[%s2018 + $0xd8] sm:$0xf]
    %v2074 = vld [vmem:[%s2018 + $0xdc] sm:$0xf]
    %v2075 = vld [vmem:[%s2018 + $0xe0] sm:$0xf]
    %v2076 = vld [vmem:[%s2018 + $0xe4] sm:$0xf]
    %v2077 = vld [vmem:[%s2018 + $0xe8] sm:$0xf]
    %v2078 = vld [vmem:[%s2018 + $0xec] sm:$0xf]
    %v2079 = vld [vmem:[%s2018 + $0xf0] sm:$0xf]
    %v2080 = vld [vmem:[%s2018 + $0xf4] sm:$0xf]
    %v2081 = vld [vmem:[%s2018 + $0xf8] sm:$0xf]
    %v2082 = vld [vmem:[%s2018 + $0xfc] sm:$0xf]
    %v2147 = vunpack.c.l.b16 %v2019
    %v2148 = vunpack.c.l.b16 %v2020
    %v2149 = vunpack.c.l.b16 %v2021
    %v2150 = vunpack.c.l.b16 %v2022
    %v2151 = vunpack.c.l.b16 %v2023
    %v2152 = vunpack.c.l.b16 %v2024
    %v2153 = vunpack.c.l.b16 %v2025
    %v2154 = vunpack.c.l.b16 %v2026
    %v2155 = vunpack.c.l.b16 %v2027
    %v2156 = vunpack.c.l.b16 %v2028
    %v2157 = vunpack.c.l.b16 %v2029
    %v2158 = vunpack.c.l.b16 %v2030
    %v2159 = vunpack.c.l.b16 %v2031
    %v2160 = vunpack.c.l.b16 %v2032
    %v2161 = vunpack.c.l.b16 %v2033
    %v2162 = vunpack.c.l.b16 %v2034
    %v2163 = vunpack.c.l.b16 %v2035
    %v2164 = vunpack.c.l.b16 %v2036
    %v2165 = vunpack.c.l.b16 %v2037
    %v2166 = vunpack.c.l.b16 %v2038
    %v2167 = vunpack.c.l.b16 %v2039
    %v2168 = vunpack.c.l.b16 %v2040
    %v2169 = vunpack.c.l.b16 %v2041
    %v2170 = vunpack.c.l.b16 %v2042
    %v2171 = vunpack.c.l.b16 %v2043
    %v2172 = vunpack.c.l.b16 %v2044
    %v2173 = vunpack.c.l.b16 %v2045
    %v2174 = vunpack.c.l.b16 %v2046
    %v2175 = vunpack.c.l.b16 %v2047
    %v2176 = vunpack.c.l.b16 %v2048
    %v2177 = vunpack.c.l.b16 %v2049
    %v2178 = vunpack.c.l.b16 %v2050
    %v2179 = vunpack.c.l.b16 %v2051
    %v2180 = vunpack.c.l.b16 %v2052
    %v2181 = vunpack.c.l.b16 %v2053
    %v2182 = vunpack.c.l.b16 %v2054
    %v2183 = vunpack.c.l.b16 %v2055
    %v2184 = vunpack.c.l.b16 %v2056
    %v2185 = vunpack.c.l.b16 %v2057
    %v2186 = vunpack.c.l.b16 %v2058
    %v2187 = vunpack.c.l.b16 %v2059
    %v2188 = vunpack.c.l.b16 %v2060
    %v2189 = vunpack.c.l.b16 %v2061
    %v2190 = vunpack.c.l.b16 %v2062
    %v2191 = vunpack.c.l.b16 %v2063
    %v2192 = vunpack.c.l.b16 %v2064
    %v2193 = vunpack.c.l.b16 %v2065
    %v2194 = vunpack.c.l.b16 %v2066
    %v2195 = vunpack.c.l.b16 %v2067
    %v2196 = vunpack.c.l.b16 %v2068
    %v2197 = vunpack.c.l.b16 %v2069
    %v2198 = vunpack.c.l.b16 %v2070
    %v2199 = vunpack.c.l.b16 %v2071
    %v2200 = vunpack.c.l.b16 %v2072
    %v2201 = vunpack.c.l.b16 %v2073
    %v2202 = vunpack.c.l.b16 %v2074
    %v2203 = vunpack.c.l.b16 %v2075
    %v2204 = vunpack.c.l.b16 %v2076
    %v2205 = vunpack.c.l.b16 %v2077
    %v2206 = vunpack.c.l.b16 %v2078
    %v2207 = vunpack.c.l.b16 %v2079
    %v2208 = vunpack.c.l.b16 %v2080
    %v2209 = vunpack.c.l.b16 %v2081
    %v2210 = vunpack.c.l.b16 %v2082
    %v2211 = vpack.c.b16 %v2148, %v2147
    %v2212 = vpack.c.b16 %v2150, %v2149
    %v2213 = vpack.c.b16 %v2152, %v2151
    %v2214 = vpack.c.b16 %v2154, %v2153
    %v2215 = vpack.c.b16 %v2156, %v2155
    %v2216 = vpack.c.b16 %v2158, %v2157
    %v2217 = vpack.c.b16 %v2160, %v2159
    %v2218 = vpack.c.b16 %v2162, %v2161
    %v2219 = vpack.c.b16 %v2164, %v2163
    %v2220 = vpack.c.b16 %v2166, %v2165
    %v2221 = vpack.c.b16 %v2168, %v2167
    %v2222 = vpack.c.b16 %v2170, %v2169
    %v2223 = vpack.c.b16 %v2172, %v2171
    %v2224 = vpack.c.b16 %v2174, %v2173
    %v2225 = vpack.c.b16 %v2176, %v2175
    %v2226 = vpack.c.b16 %v2178, %v2177
    %v2227 = vpack.c.b16 %v2180, %v2179
    %v2228 = vpack.c.b16 %v2182, %v2181
    %v2229 = vpack.c.b16 %v2184, %v2183
    %v2230 = vpack.c.b16 %v2186, %v2185
    %v2231 = vpack.c.b16 %v2188, %v2187
    %v2232 = vpack.c.b16 %v2190, %v2189
    %v2233 = vpack.c.b16 %v2192, %v2191
    %v2234 = vpack.c.b16 %v2194, %v2193
    %v2235 = vpack.c.b16 %v2196, %v2195
    %v2236 = vpack.c.b16 %v2198, %v2197
    %v2237 = vpack.c.b16 %v2200, %v2199
    %v2238 = vpack.c.b16 %v2202, %v2201
    %v2239 = vpack.c.b16 %v2204, %v2203
    %v2240 = vpack.c.b16 %v2206, %v2205
    %v2241 = vpack.c.b16 %v2208, %v2207
    %v2242 = vpack.c.b16 %v2210, %v2209
    %2275 = vmatpush.bf16.msra.mxu0 %v2218
    %2276 = vmatpush.bf16.msra.mxu0 %v2217
    %2277 = vmatpush.bf16.msra.mxu0 %v2216
    %2278 = vmatpush.bf16.msra.mxu0 %v2215
    %2279 = vmatpush.bf16.msra.mxu0 %v2214
    %2280 = vmatpush.bf16.msra.mxu0 %v2213
    %2281 = vmatpush.bf16.msra.mxu0 %v2212
    %2282 = vmatpush.bf16.msra.mxu0 %v2211
    %2283 = vmatmul.bf16.gmra.mxu0 %v186
    %v2284 = vpop.f32.mrf.mxu0
    %v2285 = vadd.f32 0.0, %v2284
    %v2286 = vpop.f32.mrf.mxu0
    %v2287 = vadd.f32 0.0, %v2286
    %2288 = vmatmul.bf16.gmra.mxu0 %v190
    %v2289 = vpop.f32.mrf.mxu0
    %v2290 = vadd.f32 0.0, %v2289
    %v2291 = vpop.f32.mrf.mxu0
    %v2292 = vadd.f32 0.0, %v2291
    %2293 = vmatmul.bf16.gmra.mxu0 %v194
    %v2294 = vpop.f32.mrf.mxu0
    %v2295 = vadd.f32 0.0, %v2294
    %v2296 = vpop.f32.mrf.mxu0
    %v2297 = vadd.f32 0.0, %v2296
    %2298 = vmatmul.bf16.gmra.mxu0 %v198
    %v2299 = vpop.f32.mrf.mxu0
    %v2300 = vadd.f32 0.0, %v2299
    %v2301 = vpop.f32.mrf.mxu0
    %v2302 = vadd.f32 0.0, %v2301
    %2303 = vdwg.mxu0
    %2304 = vmatpush.bf16.msra.mxu0 %v2226
    %2305 = vmatpush.bf16.msra.mxu0 %v2225
    %2306 = vmatpush.bf16.msra.mxu0 %v2224
    %2307 = vmatpush.bf16.msra.mxu0 %v2223
    %2308 = vmatpush.bf16.msra.mxu0 %v2222
    %2309 = vmatpush.bf16.msra.mxu0 %v2221
    %2310 = vmatpush.bf16.msra.mxu0 %v2220
    %2311 = vmatpush.bf16.msra.mxu0 %v2219
    %2312 = vmatmul.bf16.gmra.mxu0 %v187
    %v2313 = vpop.f32.mrf.mxu0
    %v2314 = vadd.f32 %v2285, %v2313
    %v2315 = vpop.f32.mrf.mxu0
    %v2316 = vadd.f32 %v2287, %v2315
    %2317 = vmatmul.bf16.gmra.mxu0 %v191
    %v2318 = vpop.f32.mrf.mxu0
    %v2319 = vadd.f32 %v2290, %v2318
    %v2320 = vpop.f32.mrf.mxu0
    %v2321 = vadd.f32 %v2292, %v2320
    %2322 = vmatmul.bf16.gmra.mxu0 %v195
    %v2323 = vpop.f32.mrf.mxu0
    %v2324 = vadd.f32 %v2295, %v2323
    %v2325 = vpop.f32.mrf.mxu0
    %v2326 = vadd.f32 %v2297, %v2325
    %2327 = vmatmul.bf16.gmra.mxu0 %v199
    %v2328 = vpop.f32.mrf.mxu0
    %v2329 = vadd.f32 %v2300, %v2328
    %v2330 = vpop.f32.mrf.mxu0
    %v2331 = vadd.f32 %v2302, %v2330
    %2332 = vdwg.mxu0
    %2333 = vmatpush.bf16.msra.mxu0 %v2234
    %2334 = vmatpush.bf16.msra.mxu0 %v2233
    %2335 = vmatpush.bf16.msra.mxu0 %v2232
    %2336 = vmatpush.bf16.msra.mxu0 %v2231
    %2337 = vmatpush.bf16.msra.mxu0 %v2230
    %2338 = vmatpush.bf16.msra.mxu0 %v2229
    %2339 = vmatpush.bf16.msra.mxu0 %v2228
    %2340 = vmatpush.bf16.msra.mxu0 %v2227
    %2341 = vmatmul.bf16.gmra.mxu0 %v188
    %v2342 = vpop.f32.mrf.mxu0
    %v2343 = vadd.f32 %v2314, %v2342
    %v2344 = vpop.f32.mrf.mxu0
    %v2345 = vadd.f32 %v2316, %v2344
    %2346 = vmatmul.bf16.gmra.mxu0 %v192
    %v2347 = vpop.f32.mrf.mxu0
    %v2348 = vadd.f32 %v2319, %v2347
    %v2349 = vpop.f32.mrf.mxu0
    %v2350 = vadd.f32 %v2321, %v2349
    %2351 = vmatmul.bf16.gmra.mxu0 %v196
    %v2352 = vpop.f32.mrf.mxu0
    %v2353 = vadd.f32 %v2324, %v2352
    %v2354 = vpop.f32.mrf.mxu0
    %v2355 = vadd.f32 %v2326, %v2354
    %2356 = vmatmul.bf16.gmra.mxu0 %v200
    %v2357 = vpop.f32.mrf.mxu0
    %v2358 = vadd.f32 %v2329, %v2357
    %v2359 = vpop.f32.mrf.mxu0
    %v2360 = vadd.f32 %v2331, %v2359
    %2361 = vdwg.mxu0
    %2362 = vmatpush.bf16.msra.mxu0 %v2242
    %2363 = vmatpush.bf16.msra.mxu0 %v2241
    %2364 = vmatpush.bf16.msra.mxu0 %v2240
    %2365 = vmatpush.bf16.msra.mxu0 %v2239
    %2366 = vmatpush.bf16.msra.mxu0 %v2238
    %2367 = vmatpush.bf16.msra.mxu0 %v2237
    %2368 = vmatpush.bf16.msra.mxu0 %v2236
    %2369 = vmatpush.bf16.msra.mxu0 %v2235
    %2370 = vmatmul.bf16.gmra.mxu0 %v189
    %v2371 = vpop.f32.mrf.mxu0
    %v2372 = vadd.f32 %v2343, %v2371
    %v2373 = vpop.f32.mrf.mxu0
    %v2374 = vadd.f32 %v2345, %v2373
    %2375 = vmatmul.bf16.gmra.mxu0 %v193
    %v2376 = vpop.f32.mrf.mxu0
    %v2377 = vadd.f32 %v2348, %v2376
    %v2378 = vpop.f32.mrf.mxu0
    %v2379 = vadd.f32 %v2350, %v2378
    %2380 = vmatmul.bf16.gmra.mxu0 %v197
    %v2381 = vpop.f32.mrf.mxu0
    %v2382 = vadd.f32 %v2353, %v2381
    %v2383 = vpop.f32.mrf.mxu0
    %v2384 = vadd.f32 %v2355, %v2383
    %2385 = vmatmul.bf16.gmra.mxu0 %v201
    %v2386 = vpop.f32.mrf.mxu0
    %v2387 = vadd.f32 %v2358, %v2386
    %v2388 = vpop.f32.mrf.mxu0
    %v2389 = vadd.f32 %v2360, %v2388
    %2390 = vdwg.mxu0
    %s2391 = scalar_lea.vmem %s0, 1536
    %v2392 = vld [vmem:[%s2391] sm:$0xf]
    %v2393 = vld [vmem:[%s2391 + $0x4] sm:$0xf]
    %v2394 = vld [vmem:[%s2391 + $0x8] sm:$0xf]
    %v2395 = vld [vmem:[%s2391 + $0xc] sm:$0xf]
    %v2396 = vld [vmem:[%s2391 + $0x10] sm:$0xf]
    %v2397 = vld [vmem:[%s2391 + $0x14] sm:$0xf]
    %v2398 = vld [vmem:[%s2391 + $0x18] sm:$0xf]
    %v2399 = vld [vmem:[%s2391 + $0x1c] sm:$0xf]
    %v2400 = vld [vmem:[%s2391 + $0x20] sm:$0xf]
    %v2401 = vld [vmem:[%s2391 + $0x24] sm:$0xf]
    %v2402 = vld [vmem:[%s2391 + $0x28] sm:$0xf]
    %v2403 = vld [vmem:[%s2391 + $0x2c] sm:$0xf]
    %v2404 = vld [vmem:[%s2391 + $0x30] sm:$0xf]
    %v2405 = vld [vmem:[%s2391 + $0x34] sm:$0xf]
    %v2406 = vld [vmem:[%s2391 + $0x38] sm:$0xf]
    %v2407 = vld [vmem:[%s2391 + $0x3c] sm:$0xf]
    %v2408 = vld [vmem:[%s2391 + $0x40] sm:$0xf]
    %v2409 = vld [vmem:[%s2391 + $0x44] sm:$0xf]
    %v2410 = vld [vmem:[%s2391 + $0x48] sm:$0xf]
    %v2411 = vld [vmem:[%s2391 + $0x4c] sm:$0xf]
    %v2412 = vld [vmem:[%s2391 + $0x50] sm:$0xf]
    %v2413 = vld [vmem:[%s2391 + $0x54] sm:$0xf]
    %v2414 = vld [vmem:[%s2391 + $0x58] sm:$0xf]
    %v2415 = vld [vmem:[%s2391 + $0x5c] sm:$0xf]
    %v2416 = vld [vmem:[%s2391 + $0x60] sm:$0xf]
    %v2417 = vld [vmem:[%s2391 + $0x64] sm:$0xf]
    %v2418 = vld [vmem:[%s2391 + $0x68] sm:$0xf]
    %v2419 = vld [vmem:[%s2391 + $0x6c] sm:$0xf]
    %v2420 = vld [vmem:[%s2391 + $0x70] sm:$0xf]
    %v2421 = vld [vmem:[%s2391 + $0x74] sm:$0xf]
    %v2422 = vld [vmem:[%s2391 + $0x78] sm:$0xf]
    %v2423 = vld [vmem:[%s2391 + $0x7c] sm:$0xf]
    %v2424 = vld [vmem:[%s2391 + $0x80] sm:$0xf]
    %v2425 = vld [vmem:[%s2391 + $0x84] sm:$0xf]
    %v2426 = vld [vmem:[%s2391 + $0x88] sm:$0xf]
    %v2427 = vld [vmem:[%s2391 + $0x8c] sm:$0xf]
    %v2428 = vld [vmem:[%s2391 + $0x90] sm:$0xf]
    %v2429 = vld [vmem:[%s2391 + $0x94] sm:$0xf]
    %v2430 = vld [vmem:[%s2391 + $0x98] sm:$0xf]
    %v2431 = vld [vmem:[%s2391 + $0x9c] sm:$0xf]
    %v2432 = vld [vmem:[%s2391 + $0xa0] sm:$0xf]
    %v2433 = vld [vmem:[%s2391 + $0xa4] sm:$0xf]
    %v2434 = vld [vmem:[%s2391 + $0xa8] sm:$0xf]
    %v2435 = vld [vmem:[%s2391 + $0xac] sm:$0xf]
    %v2436 = vld [vmem:[%s2391 + $0xb0] sm:$0xf]
    %v2437 = vld [vmem:[%s2391 + $0xb4] sm:$0xf]
    %v2438 = vld [vmem:[%s2391 + $0xb8] sm:$0xf]
    %v2439 = vld [vmem:[%s2391 + $0xbc] sm:$0xf]
    %v2440 = vld [vmem:[%s2391 + $0xc0] sm:$0xf]
    %v2441 = vld [vmem:[%s2391 + $0xc4] sm:$0xf]
    %v2442 = vld [vmem:[%s2391 + $0xc8] sm:$0xf]
    %v2443 = vld [vmem:[%s2391 + $0xcc] sm:$0xf]
    %v2444 = vld [vmem:[%s2391 + $0xd0] sm:$0xf]
    %v2445 = vld [vmem:[%s2391 + $0xd4] sm:$0xf]
    %v2446 = vld [vmem:[%s2391 + $0xd8] sm:$0xf]
    %v2447 = vld [vmem:[%s2391 + $0xdc] sm:$0xf]
    %v2448 = vld [vmem:[%s2391 + $0xe0] sm:$0xf]
    %v2449 = vld [vmem:[%s2391 + $0xe4] sm:$0xf]
    %v2450 = vld [vmem:[%s2391 + $0xe8] sm:$0xf]
    %v2451 = vld [vmem:[%s2391 + $0xec] sm:$0xf]
    %v2452 = vld [vmem:[%s2391 + $0xf0] sm:$0xf]
    %v2453 = vld [vmem:[%s2391 + $0xf4] sm:$0xf]
    %v2454 = vld [vmem:[%s2391 + $0xf8] sm:$0xf]
    %v2455 = vld [vmem:[%s2391 + $0xfc] sm:$0xf]
    %v2520 = vunpack.c.l.b16 %v2392
    %v2521 = vunpack.c.l.b16 %v2393
    %v2522 = vunpack.c.l.b16 %v2394
    %v2523 = vunpack.c.l.b16 %v2395
    %v2524 = vunpack.c.l.b16 %v2396
    %v2525 = vunpack.c.l.b16 %v2397
    %v2526 = vunpack.c.l.b16 %v2398
    %v2527 = vunpack.c.l.b16 %v2399
    %v2528 = vunpack.c.l.b16 %v2400
    %v2529 = vunpack.c.l.b16 %v2401
    %v2530 = vunpack.c.l.b16 %v2402
    %v2531 = vunpack.c.l.b16 %v2403
    %v2532 = vunpack.c.l.b16 %v2404
    %v2533 = vunpack.c.l.b16 %v2405
    %v2534 = vunpack.c.l.b16 %v2406
    %v2535 = vunpack.c.l.b16 %v2407
    %v2536 = vunpack.c.l.b16 %v2408
    %v2537 = vunpack.c.l.b16 %v2409
    %v2538 = vunpack.c.l.b16 %v2410
    %v2539 = vunpack.c.l.b16 %v2411
    %v2540 = vunpack.c.l.b16 %v2412
    %v2541 = vunpack.c.l.b16 %v2413
    %v2542 = vunpack.c.l.b16 %v2414
    %v2543 = vunpack.c.l.b16 %v2415
    %v2544 = vunpack.c.l.b16 %v2416
    %v2545 = vunpack.c.l.b16 %v2417
    %v2546 = vunpack.c.l.b16 %v2418
    %v2547 = vunpack.c.l.b16 %v2419
    %v2548 = vunpack.c.l.b16 %v2420
    %v2549 = vunpack.c.l.b16 %v2421
    %v2550 = vunpack.c.l.b16 %v2422
    %v2551 = vunpack.c.l.b16 %v2423
    %v2552 = vunpack.c.l.b16 %v2424
    %v2553 = vunpack.c.l.b16 %v2425
    %v2554 = vunpack.c.l.b16 %v2426
    %v2555 = vunpack.c.l.b16 %v2427
    %v2556 = vunpack.c.l.b16 %v2428
    %v2557 = vunpack.c.l.b16 %v2429
    %v2558 = vunpack.c.l.b16 %v2430
    %v2559 = vunpack.c.l.b16 %v2431
    %v2560 = vunpack.c.l.b16 %v2432
    %v2561 = vunpack.c.l.b16 %v2433
    %v2562 = vunpack.c.l.b16 %v2434
    %v2563 = vunpack.c.l.b16 %v2435
    %v2564 = vunpack.c.l.b16 %v2436
    %v2565 = vunpack.c.l.b16 %v2437
    %v2566 = vunpack.c.l.b16 %v2438
    %v2567 = vunpack.c.l.b16 %v2439
    %v2568 = vunpack.c.l.b16 %v2440
    %v2569 = vunpack.c.l.b16 %v2441
    %v2570 = vunpack.c.l.b16 %v2442
    %v2571 = vunpack.c.l.b16 %v2443
    %v2572 = vunpack.c.l.b16 %v2444
    %v2573 = vunpack.c.l.b16 %v2445
    %v2574 = vunpack.c.l.b16 %v2446
    %v2575 = vunpack.c.l.b16 %v2447
    %v2576 = vunpack.c.l.b16 %v2448
    %v2577 = vunpack.c.l.b16 %v2449
    %v2578 = vunpack.c.l.b16 %v2450
    %v2579 = vunpack.c.l.b16 %v2451
    %v2580 = vunpack.c.l.b16 %v2452
    %v2581 = vunpack.c.l.b16 %v2453
    %v2582 = vunpack.c.l.b16 %v2454
    %v2583 = vunpack.c.l.b16 %v2455
    %v2584 = vpack.c.b16 %v2521, %v2520
    %v2585 = vpack.c.b16 %v2523, %v2522
    %v2586 = vpack.c.b16 %v2525, %v2524
    %v2587 = vpack.c.b16 %v2527, %v2526
    %v2588 = vpack.c.b16 %v2529, %v2528
    %v2589 = vpack.c.b16 %v2531, %v2530
    %v2590 = vpack.c.b16 %v2533, %v2532
    %v2591 = vpack.c.b16 %v2535, %v2534
    %v2592 = vpack.c.b16 %v2537, %v2536
    %v2593 = vpack.c.b16 %v2539, %v2538
    %v2594 = vpack.c.b16 %v2541, %v2540
    %v2595 = vpack.c.b16 %v2543, %v2542
    %v2596 = vpack.c.b16 %v2545, %v2544
    %v2597 = vpack.c.b16 %v2547, %v2546
    %v2598 = vpack.c.b16 %v2549, %v2548
    %v2599 = vpack.c.b16 %v2551, %v2550
    %v2600 = vpack.c.b16 %v2553, %v2552
    %v2601 = vpack.c.b16 %v2555, %v2554
    %v2602 = vpack.c.b16 %v2557, %v2556
    %v2603 = vpack.c.b16 %v2559, %v2558
    %v2604 = vpack.c.b16 %v2561, %v2560
    %v2605 = vpack.c.b16 %v2563, %v2562
    %v2606 = vpack.c.b16 %v2565, %v2564
    %v2607 = vpack.c.b16 %v2567, %v2566
    %v2608 = vpack.c.b16 %v2569, %v2568
    %v2609 = vpack.c.b16 %v2571, %v2570
    %v2610 = vpack.c.b16 %v2573, %v2572
    %v2611 = vpack.c.b16 %v2575, %v2574
    %v2612 = vpack.c.b16 %v2577, %v2576
    %v2613 = vpack.c.b16 %v2579, %v2578
    %v2614 = vpack.c.b16 %v2581, %v2580
    %v2615 = vpack.c.b16 %v2583, %v2582
    %2648 = vmatpush.bf16.msra.mxu0 %v2591
    %2649 = vmatpush.bf16.msra.mxu0 %v2590
    %2650 = vmatpush.bf16.msra.mxu0 %v2589
    %2651 = vmatpush.bf16.msra.mxu0 %v2588
    %2652 = vmatpush.bf16.msra.mxu0 %v2587
    %2653 = vmatpush.bf16.msra.mxu0 %v2586
    %2654 = vmatpush.bf16.msra.mxu0 %v2585
    %2655 = vmatpush.bf16.msra.mxu0 %v2584
    %2656 = vmatmul.bf16.gmra.mxu0 %v186
    %v2657 = vpop.f32.mrf.mxu0
    %v2658 = vadd.f32 0.0, %v2657
    %v2659 = vpop.f32.mrf.mxu0
    %v2660 = vadd.f32 0.0, %v2659
    %2661 = vmatmul.bf16.gmra.mxu0 %v190
    %v2662 = vpop.f32.mrf.mxu0
    %v2663 = vadd.f32 0.0, %v2662
    %v2664 = vpop.f32.mrf.mxu0
    %v2665 = vadd.f32 0.0, %v2664
    %2666 = vmatmul.bf16.gmra.mxu0 %v194
    %v2667 = vpop.f32.mrf.mxu0
    %v2668 = vadd.f32 0.0, %v2667
    %v2669 = vpop.f32.mrf.mxu0
    %v2670 = vadd.f32 0.0, %v2669
    %2671 = vmatmul.bf16.gmra.mxu0 %v198
    %v2672 = vpop.f32.mrf.mxu0
    %v2673 = vadd.f32 0.0, %v2672
    %v2674 = vpop.f32.mrf.mxu0
    %v2675 = vadd.f32 0.0, %v2674
    %2676 = vdwg.mxu0
    %2677 = vmatpush.bf16.msra.mxu0 %v2599
    %2678 = vmatpush.bf16.msra.mxu0 %v2598
    %2679 = vmatpush.bf16.msra.mxu0 %v2597
    %2680 = vmatpush.bf16.msra.mxu0 %v2596
    %2681 = vmatpush.bf16.msra.mxu0 %v2595
    %2682 = vmatpush.bf16.msra.mxu0 %v2594
    %2683 = vmatpush.bf16.msra.mxu0 %v2593
    %2684 = vmatpush.bf16.msra.mxu0 %v2592
    %2685 = vmatmul.bf16.gmra.mxu0 %v187
    %v2686 = vpop.f32.mrf.mxu0
    %v2687 = vadd.f32 %v2658, %v2686
    %v2688 = vpop.f32.mrf.mxu0
    %v2689 = vadd.f32 %v2660, %v2688
    %2690 = vmatmul.bf16.gmra.mxu0 %v191
    %v2691 = vpop.f32.mrf.mxu0
    %v2692 = vadd.f32 %v2663, %v2691
    %v2693 = vpop.f32.mrf.mxu0
    %v2694 = vadd.f32 %v2665, %v2693
    %2695 = vmatmul.bf16.gmra.mxu0 %v195
    %v2696 = vpop.f32.mrf.mxu0
    %v2697 = vadd.f32 %v2668, %v2696
    %v2698 = vpop.f32.mrf.mxu0
    %v2699 = vadd.f32 %v2670, %v2698
    %2700 = vmatmul.bf16.gmra.mxu0 %v199
    %v2701 = vpop.f32.mrf.mxu0
    %v2702 = vadd.f32 %v2673, %v2701
    %v2703 = vpop.f32.mrf.mxu0
    %v2704 = vadd.f32 %v2675, %v2703
    %2705 = vdwg.mxu0
    %2706 = vmatpush.bf16.msra.mxu0 %v2607
    %2707 = vmatpush.bf16.msra.mxu0 %v2606
    %2708 = vmatpush.bf16.msra.mxu0 %v2605
    %2709 = vmatpush.bf16.msra.mxu0 %v2604
    %2710 = vmatpush.bf16.msra.mxu0 %v2603
    %2711 = vmatpush.bf16.msra.mxu0 %v2602
    %2712 = vmatpush.bf16.msra.mxu0 %v2601
    %2713 = vmatpush.bf16.msra.mxu0 %v2600
    %2714 = vmatmul.bf16.gmra.mxu0 %v188
    %v2715 = vpop.f32.mrf.mxu0
    %v2716 = vadd.f32 %v2687, %v2715
    %v2717 = vpop.f32.mrf.mxu0
    %v2718 = vadd.f32 %v2689, %v2717
    %2719 = vmatmul.bf16.gmra.mxu0 %v192
    %v2720 = vpop.f32.mrf.mxu0
    %v2721 = vadd.f32 %v2692, %v2720
    %v2722 = vpop.f32.mrf.mxu0
    %v2723 = vadd.f32 %v2694, %v2722
    %2724 = vmatmul.bf16.gmra.mxu0 %v196
    %v2725 = vpop.f32.mrf.mxu0
    %v2726 = vadd.f32 %v2697, %v2725
    %v2727 = vpop.f32.mrf.mxu0
    %v2728 = vadd.f32 %v2699, %v2727
    %2729 = vmatmul.bf16.gmra.mxu0 %v200
    %v2730 = vpop.f32.mrf.mxu0
    %v2731 = vadd.f32 %v2702, %v2730
    %v2732 = vpop.f32.mrf.mxu0
    %v2733 = vadd.f32 %v2704, %v2732
    %2734 = vdwg.mxu0
    %2735 = vmatpush.bf16.msra.mxu0 %v2615
    %2736 = vmatpush.bf16.msra.mxu0 %v2614
    %2737 = vmatpush.bf16.msra.mxu0 %v2613
    %2738 = vmatpush.bf16.msra.mxu0 %v2612
    %2739 = vmatpush.bf16.msra.mxu0 %v2611
    %2740 = vmatpush.bf16.msra.mxu0 %v2610
    %2741 = vmatpush.bf16.msra.mxu0 %v2609
    %2742 = vmatpush.bf16.msra.mxu0 %v2608
    %2743 = vmatmul.bf16.gmra.mxu0 %v189
    %v2744 = vpop.f32.mrf.mxu0
    %v2745 = vadd.f32 %v2716, %v2744
    %v2746 = vpop.f32.mrf.mxu0
    %v2747 = vadd.f32 %v2718, %v2746
    %2748 = vmatmul.bf16.gmra.mxu0 %v193
    %v2749 = vpop.f32.mrf.mxu0
    %v2750 = vadd.f32 %v2721, %v2749
    %v2751 = vpop.f32.mrf.mxu0
    %v2752 = vadd.f32 %v2723, %v2751
    %2753 = vmatmul.bf16.gmra.mxu0 %v197
    %v2754 = vpop.f32.mrf.mxu0
    %v2755 = vadd.f32 %v2726, %v2754
    %v2756 = vpop.f32.mrf.mxu0
    %v2757 = vadd.f32 %v2728, %v2756
    %2758 = vmatmul.bf16.gmra.mxu0 %v201
    %v2759 = vpop.f32.mrf.mxu0
    %v2760 = vadd.f32 %v2731, %v2759
    %v2761 = vpop.f32.mrf.mxu0
    %v2762 = vadd.f32 %v2733, %v2761
    %2763 = vdwg.mxu0
    %s2764 = scalar_lea.vmem %s0, 1792
    %v2765 = vld [vmem:[%s2764] sm:$0xf]
    %v2766 = vld [vmem:[%s2764 + $0x4] sm:$0xf]
    %v2767 = vld [vmem:[%s2764 + $0x8] sm:$0xf]
    %v2768 = vld [vmem:[%s2764 + $0xc] sm:$0xf]
    %v2769 = vld [vmem:[%s2764 + $0x10] sm:$0xf]
    %v2770 = vld [vmem:[%s2764 + $0x14] sm:$0xf]
    %v2771 = vld [vmem:[%s2764 + $0x18] sm:$0xf]
    %v2772 = vld [vmem:[%s2764 + $0x1c] sm:$0xf]
    %v2773 = vld [vmem:[%s2764 + $0x20] sm:$0xf]
    %v2774 = vld [vmem:[%s2764 + $0x24] sm:$0xf]
    %v2775 = vld [vmem:[%s2764 + $0x28] sm:$0xf]
    %v2776 = vld [vmem:[%s2764 + $0x2c] sm:$0xf]
    %v2777 = vld [vmem:[%s2764 + $0x30] sm:$0xf]
    %v2778 = vld [vmem:[%s2764 + $0x34] sm:$0xf]
    %v2779 = vld [vmem:[%s2764 + $0x38] sm:$0xf]
    %v2780 = vld [vmem:[%s2764 + $0x3c] sm:$0xf]
    %v2781 = vld [vmem:[%s2764 + $0x40] sm:$0xf]
    %v2782 = vld [vmem:[%s2764 + $0x44] sm:$0xf]
    %v2783 = vld [vmem:[%s2764 + $0x48] sm:$0xf]
    %v2784 = vld [vmem:[%s2764 + $0x4c] sm:$0xf]
    %v2785 = vld [vmem:[%s2764 + $0x50] sm:$0xf]
    %v2786 = vld [vmem:[%s2764 + $0x54] sm:$0xf]
    %v2787 = vld [vmem:[%s2764 + $0x58] sm:$0xf]
    %v2788 = vld [vmem:[%s2764 + $0x5c] sm:$0xf]
    %v2789 = vld [vmem:[%s2764 + $0x60] sm:$0xf]
    %v2790 = vld [vmem:[%s2764 + $0x64] sm:$0xf]
    %v2791 = vld [vmem:[%s2764 + $0x68] sm:$0xf]
    %v2792 = vld [vmem:[%s2764 + $0x6c] sm:$0xf]
    %v2793 = vld [vmem:[%s2764 + $0x70] sm:$0xf]
    %v2794 = vld [vmem:[%s2764 + $0x74] sm:$0xf]
    %v2795 = vld [vmem:[%s2764 + $0x78] sm:$0xf]
    %v2796 = vld [vmem:[%s2764 + $0x7c] sm:$0xf]
    %v2797 = vld [vmem:[%s2764 + $0x80] sm:$0xf]
    %v2798 = vld [vmem:[%s2764 + $0x84] sm:$0xf]
    %v2799 = vld [vmem:[%s2764 + $0x88] sm:$0xf]
    %v2800 = vld [vmem:[%s2764 + $0x8c] sm:$0xf]
    %v2801 = vld [vmem:[%s2764 + $0x90] sm:$0xf]
    %v2802 = vld [vmem:[%s2764 + $0x94] sm:$0xf]
    %v2803 = vld [vmem:[%s2764 + $0x98] sm:$0xf]
    %v2804 = vld [vmem:[%s2764 + $0x9c] sm:$0xf]
    %v2805 = vld [vmem:[%s2764 + $0xa0] sm:$0xf]
    %v2806 = vld [vmem:[%s2764 + $0xa4] sm:$0xf]
    %v2807 = vld [vmem:[%s2764 + $0xa8] sm:$0xf]
    %v2808 = vld [vmem:[%s2764 + $0xac] sm:$0xf]
    %v2809 = vld [vmem:[%s2764 + $0xb0] sm:$0xf]
    %v2810 = vld [vmem:[%s2764 + $0xb4] sm:$0xf]
    %v2811 = vld [vmem:[%s2764 + $0xb8] sm:$0xf]
    %v2812 = vld [vmem:[%s2764 + $0xbc] sm:$0xf]
    %v2813 = vld [vmem:[%s2764 + $0xc0] sm:$0xf]
    %v2814 = vld [vmem:[%s2764 + $0xc4] sm:$0xf]
    %v2815 = vld [vmem:[%s2764 + $0xc8] sm:$0xf]
    %v2816 = vld [vmem:[%s2764 + $0xcc] sm:$0xf]
    %v2817 = vld [vmem:[%s2764 + $0xd0] sm:$0xf]
    %v2818 = vld [vmem:[%s2764 + $0xd4] sm:$0xf]
    %v2819 = vld [vmem:[%s2764 + $0xd8] sm:$0xf]
    %v2820 = vld [vmem:[%s2764 + $0xdc] sm:$0xf]
    %v2821 = vld [vmem:[%s2764 + $0xe0] sm:$0xf]
    %v2822 = vld [vmem:[%s2764 + $0xe4] sm:$0xf]
    %v2823 = vld [vmem:[%s2764 + $0xe8] sm:$0xf]
    %v2824 = vld [vmem:[%s2764 + $0xec] sm:$0xf]
    %v2825 = vld [vmem:[%s2764 + $0xf0] sm:$0xf]
    %v2826 = vld [vmem:[%s2764 + $0xf4] sm:$0xf]
    %v2827 = vld [vmem:[%s2764 + $0xf8] sm:$0xf]
    %v2828 = vld [vmem:[%s2764 + $0xfc] sm:$0xf]
    %v2893 = vunpack.c.l.b16 %v2765
    %v2894 = vunpack.c.l.b16 %v2766
    %v2895 = vunpack.c.l.b16 %v2767
    %v2896 = vunpack.c.l.b16 %v2768
    %v2897 = vunpack.c.l.b16 %v2769
    %v2898 = vunpack.c.l.b16 %v2770
    %v2899 = vunpack.c.l.b16 %v2771
    %v2900 = vunpack.c.l.b16 %v2772
    %v2901 = vunpack.c.l.b16 %v2773
    %v2902 = vunpack.c.l.b16 %v2774
    %v2903 = vunpack.c.l.b16 %v2775
    %v2904 = vunpack.c.l.b16 %v2776
    %v2905 = vunpack.c.l.b16 %v2777
    %v2906 = vunpack.c.l.b16 %v2778
    %v2907 = vunpack.c.l.b16 %v2779
    %v2908 = vunpack.c.l.b16 %v2780
    %v2909 = vunpack.c.l.b16 %v2781
    %v2910 = vunpack.c.l.b16 %v2782
    %v2911 = vunpack.c.l.b16 %v2783
    %v2912 = vunpack.c.l.b16 %v2784
    %v2913 = vunpack.c.l.b16 %v2785
    %v2914 = vunpack.c.l.b16 %v2786
    %v2915 = vunpack.c.l.b16 %v2787
    %v2916 = vunpack.c.l.b16 %v2788
    %v2917 = vunpack.c.l.b16 %v2789
    %v2918 = vunpack.c.l.b16 %v2790
    %v2919 = vunpack.c.l.b16 %v2791
    %v2920 = vunpack.c.l.b16 %v2792
    %v2921 = vunpack.c.l.b16 %v2793
    %v2922 = vunpack.c.l.b16 %v2794
    %v2923 = vunpack.c.l.b16 %v2795
    %v2924 = vunpack.c.l.b16 %v2796
    %v2925 = vunpack.c.l.b16 %v2797
    %v2926 = vunpack.c.l.b16 %v2798
    %v2927 = vunpack.c.l.b16 %v2799
    %v2928 = vunpack.c.l.b16 %v2800
    %v2929 = vunpack.c.l.b16 %v2801
    %v2930 = vunpack.c.l.b16 %v2802
    %v2931 = vunpack.c.l.b16 %v2803
    %v2932 = vunpack.c.l.b16 %v2804
    %v2933 = vunpack.c.l.b16 %v2805
    %v2934 = vunpack.c.l.b16 %v2806
    %v2935 = vunpack.c.l.b16 %v2807
    %v2936 = vunpack.c.l.b16 %v2808
    %v2937 = vunpack.c.l.b16 %v2809
    %v2938 = vunpack.c.l.b16 %v2810
    %v2939 = vunpack.c.l.b16 %v2811
    %v2940 = vunpack.c.l.b16 %v2812
    %v2941 = vunpack.c.l.b16 %v2813
    %v2942 = vunpack.c.l.b16 %v2814
    %v2943 = vunpack.c.l.b16 %v2815
    %v2944 = vunpack.c.l.b16 %v2816
    %v2945 = vunpack.c.l.b16 %v2817
    %v2946 = vunpack.c.l.b16 %v2818
    %v2947 = vunpack.c.l.b16 %v2819
    %v2948 = vunpack.c.l.b16 %v2820
    %v2949 = vunpack.c.l.b16 %v2821
    %v2950 = vunpack.c.l.b16 %v2822
    %v2951 = vunpack.c.l.b16 %v2823
    %v2952 = vunpack.c.l.b16 %v2824
    %v2953 = vunpack.c.l.b16 %v2825
    %v2954 = vunpack.c.l.b16 %v2826
    %v2955 = vunpack.c.l.b16 %v2827
    %v2956 = vunpack.c.l.b16 %v2828
    %v2957 = vpack.c.b16 %v2894, %v2893
    %v2958 = vpack.c.b16 %v2896, %v2895
    %v2959 = vpack.c.b16 %v2898, %v2897
    %v2960 = vpack.c.b16 %v2900, %v2899
    %v2961 = vpack.c.b16 %v2902, %v2901
    %v2962 = vpack.c.b16 %v2904, %v2903
    %v2963 = vpack.c.b16 %v2906, %v2905
    %v2964 = vpack.c.b16 %v2908, %v2907
    %v2965 = vpack.c.b16 %v2910, %v2909
    %v2966 = vpack.c.b16 %v2912, %v2911
    %v2967 = vpack.c.b16 %v2914, %v2913
    %v2968 = vpack.c.b16 %v2916, %v2915
    %v2969 = vpack.c.b16 %v2918, %v2917
    %v2970 = vpack.c.b16 %v2920, %v2919
    %v2971 = vpack.c.b16 %v2922, %v2921
    %v2972 = vpack.c.b16 %v2924, %v2923
    %v2973 = vpack.c.b16 %v2926, %v2925
    %v2974 = vpack.c.b16 %v2928, %v2927
    %v2975 = vpack.c.b16 %v2930, %v2929
    %v2976 = vpack.c.b16 %v2932, %v2931
    %v2977 = vpack.c.b16 %v2934, %v2933
    %v2978 = vpack.c.b16 %v2936, %v2935
    %v2979 = vpack.c.b16 %v2938, %v2937
    %v2980 = vpack.c.b16 %v2940, %v2939
    %v2981 = vpack.c.b16 %v2942, %v2941
    %v2982 = vpack.c.b16 %v2944, %v2943
    %v2983 = vpack.c.b16 %v2946, %v2945
    %v2984 = vpack.c.b16 %v2948, %v2947
    %v2985 = vpack.c.b16 %v2950, %v2949
    %v2986 = vpack.c.b16 %v2952, %v2951
    %v2987 = vpack.c.b16 %v2954, %v2953
    %v2988 = vpack.c.b16 %v2956, %v2955
    %3021 = vmatpush.bf16.msra.mxu0 %v2964
    %3022 = vmatpush.bf16.msra.mxu0 %v2963
    %3023 = vmatpush.bf16.msra.mxu0 %v2962
    %3024 = vmatpush.bf16.msra.mxu0 %v2961
    %3025 = vmatpush.bf16.msra.mxu0 %v2960
    %3026 = vmatpush.bf16.msra.mxu0 %v2959
    %3027 = vmatpush.bf16.msra.mxu0 %v2958
    %3028 = vmatpush.bf16.msra.mxu0 %v2957
    %3029 = vmatmul.bf16.gmra.mxu0 %v186
    %v3030 = vpop.f32.mrf.mxu0
    %v3031 = vadd.f32 0.0, %v3030
    %v3032 = vpop.f32.mrf.mxu0
    %v3033 = vadd.f32 0.0, %v3032
    %3034 = vmatmul.bf16.gmra.mxu0 %v190
    %v3035 = vpop.f32.mrf.mxu0
    %v3036 = vadd.f32 0.0, %v3035
    %v3037 = vpop.f32.mrf.mxu0
    %v3038 = vadd.f32 0.0, %v3037
    %3039 = vmatmul.bf16.gmra.mxu0 %v194
    %v3040 = vpop.f32.mrf.mxu0
    %v3041 = vadd.f32 0.0, %v3040
    %v3042 = vpop.f32.mrf.mxu0
    %v3043 = vadd.f32 0.0, %v3042
    %3044 = vmatmul.bf16.gmra.mxu0 %v198
    %v3045 = vpop.f32.mrf.mxu0
    %v3046 = vadd.f32 0.0, %v3045
    %v3047 = vpop.f32.mrf.mxu0
    %v3048 = vadd.f32 0.0, %v3047
    %3049 = vdwg.mxu0
    %3050 = vmatpush.bf16.msra.mxu0 %v2972
    %3051 = vmatpush.bf16.msra.mxu0 %v2971
    %3052 = vmatpush.bf16.msra.mxu0 %v2970
    %3053 = vmatpush.bf16.msra.mxu0 %v2969
    %3054 = vmatpush.bf16.msra.mxu0 %v2968
    %3055 = vmatpush.bf16.msra.mxu0 %v2967
    %3056 = vmatpush.bf16.msra.mxu0 %v2966
    %3057 = vmatpush.bf16.msra.mxu0 %v2965
    %3058 = vmatmul.bf16.gmra.mxu0 %v187
    %v3059 = vpop.f32.mrf.mxu0
    %v3060 = vadd.f32 %v3031, %v3059
    %v3061 = vpop.f32.mrf.mxu0
    %v3062 = vadd.f32 %v3033, %v3061
    %3063 = vmatmul.bf16.gmra.mxu0 %v191
    %v3064 = vpop.f32.mrf.mxu0
    %v3065 = vadd.f32 %v3036, %v3064
    %v3066 = vpop.f32.mrf.mxu0
    %v3067 = vadd.f32 %v3038, %v3066
    %3068 = vmatmul.bf16.gmra.mxu0 %v195
    %v3069 = vpop.f32.mrf.mxu0
    %v3070 = vadd.f32 %v3041, %v3069
    %v3071 = vpop.f32.mrf.mxu0
    %v3072 = vadd.f32 %v3043, %v3071
    %3073 = vmatmul.bf16.gmra.mxu0 %v199
    %v3074 = vpop.f32.mrf.mxu0
    %v3075 = vadd.f32 %v3046, %v3074
    %v3076 = vpop.f32.mrf.mxu0
    %v3077 = vadd.f32 %v3048, %v3076
    %3078 = vdwg.mxu0
    %3079 = vmatpush.bf16.msra.mxu0 %v2980
    %3080 = vmatpush.bf16.msra.mxu0 %v2979
    %3081 = vmatpush.bf16.msra.mxu0 %v2978
    %3082 = vmatpush.bf16.msra.mxu0 %v2977
    %3083 = vmatpush.bf16.msra.mxu0 %v2976
    %3084 = vmatpush.bf16.msra.mxu0 %v2975
    %3085 = vmatpush.bf16.msra.mxu0 %v2974
    %3086 = vmatpush.bf16.msra.mxu0 %v2973
    %3087 = vmatmul.bf16.gmra.mxu0 %v188
    %v3088 = vpop.f32.mrf.mxu0
    %v3089 = vadd.f32 %v3060, %v3088
    %v3090 = vpop.f32.mrf.mxu0
    %v3091 = vadd.f32 %v3062, %v3090
    %3092 = vmatmul.bf16.gmra.mxu0 %v192
    %v3093 = vpop.f32.mrf.mxu0
    %v3094 = vadd.f32 %v3065, %v3093
    %v3095 = vpop.f32.mrf.mxu0
    %v3096 = vadd.f32 %v3067, %v3095
    %3097 = vmatmul.bf16.gmra.mxu0 %v196
    %v3098 = vpop.f32.mrf.mxu0
    %v3099 = vadd.f32 %v3070, %v3098
    %v3100 = vpop.f32.mrf.mxu0
    %v3101 = vadd.f32 %v3072, %v3100
    %3102 = vmatmul.bf16.gmra.mxu0 %v200
    %v3103 = vpop.f32.mrf.mxu0
    %v3104 = vadd.f32 %v3075, %v3103
    %v3105 = vpop.f32.mrf.mxu0
    %v3106 = vadd.f32 %v3077, %v3105
    %3107 = vdwg.mxu0
    %3108 = vmatpush.bf16.msra.mxu0 %v2988
    %3109 = vmatpush.bf16.msra.mxu0 %v2987
    %3110 = vmatpush.bf16.msra.mxu0 %v2986
    %3111 = vmatpush.bf16.msra.mxu0 %v2985
    %3112 = vmatpush.bf16.msra.mxu0 %v2984
    %3113 = vmatpush.bf16.msra.mxu0 %v2983
    %3114 = vmatpush.bf16.msra.mxu0 %v2982
    %3115 = vmatpush.bf16.msra.mxu0 %v2981
    %3116 = vmatmul.bf16.gmra.mxu0 %v189
    %v3117 = vpop.f32.mrf.mxu0
    %v3118 = vadd.f32 %v3089, %v3117
    %v3119 = vpop.f32.mrf.mxu0
    %v3120 = vadd.f32 %v3091, %v3119
    %3121 = vmatmul.bf16.gmra.mxu0 %v193
    %v3122 = vpop.f32.mrf.mxu0
    %v3123 = vadd.f32 %v3094, %v3122
    %v3124 = vpop.f32.mrf.mxu0
    %v3125 = vadd.f32 %v3096, %v3124
    %3126 = vmatmul.bf16.gmra.mxu0 %v197
    %v3127 = vpop.f32.mrf.mxu0
    %v3128 = vadd.f32 %v3099, %v3127
    %v3129 = vpop.f32.mrf.mxu0
    %v3130 = vadd.f32 %v3101, %v3129
    %3131 = vmatmul.bf16.gmra.mxu0 %v201
    %v3132 = vpop.f32.mrf.mxu0
    %v3133 = vadd.f32 %v3104, %v3132
    %v3134 = vpop.f32.mrf.mxu0
    %v3135 = vadd.f32 %v3106, %v3134
    %3136 = vdwg.mxu0
    %s3137 = scalar_lea.vmem %s0, 2048
    %v3138 = vld [vmem:[%s3137] sm:$0xf]
    %v3139 = vld [vmem:[%s3137 + $0x4] sm:$0xf]
    %v3140 = vld [vmem:[%s3137 + $0x8] sm:$0xf]
    %v3141 = vld [vmem:[%s3137 + $0xc] sm:$0xf]
    %v3142 = vld [vmem:[%s3137 + $0x10] sm:$0xf]
    %v3143 = vld [vmem:[%s3137 + $0x14] sm:$0xf]
    %v3144 = vld [vmem:[%s3137 + $0x18] sm:$0xf]
    %v3145 = vld [vmem:[%s3137 + $0x1c] sm:$0xf]
    %v3146 = vld [vmem:[%s3137 + $0x20] sm:$0xf]
    %v3147 = vld [vmem:[%s3137 + $0x24] sm:$0xf]
    %v3148 = vld [vmem:[%s3137 + $0x28] sm:$0xf]
    %v3149 = vld [vmem:[%s3137 + $0x2c] sm:$0xf]
    %v3150 = vld [vmem:[%s3137 + $0x30] sm:$0xf]
    %v3151 = vld [vmem:[%s3137 + $0x34] sm:$0xf]
    %v3152 = vld [vmem:[%s3137 + $0x38] sm:$0xf]
    %v3153 = vld [vmem:[%s3137 + $0x3c] sm:$0xf]
    %v3154 = vld [vmem:[%s3137 + $0x40] sm:$0xf]
    %v3155 = vld [vmem:[%s3137 + $0x44] sm:$0xf]
    %v3156 = vld [vmem:[%s3137 + $0x48] sm:$0xf]
    %v3157 = vld [vmem:[%s3137 + $0x4c] sm:$0xf]
    %v3158 = vld [vmem:[%s3137 + $0x50] sm:$0xf]
    %v3159 = vld [vmem:[%s3137 + $0x54] sm:$0xf]
    %v3160 = vld [vmem:[%s3137 + $0x58] sm:$0xf]
    %v3161 = vld [vmem:[%s3137 + $0x5c] sm:$0xf]
    %v3162 = vld [vmem:[%s3137 + $0x60] sm:$0xf]
    %v3163 = vld [vmem:[%s3137 + $0x64] sm:$0xf]
    %v3164 = vld [vmem:[%s3137 + $0x68] sm:$0xf]
    %v3165 = vld [vmem:[%s3137 + $0x6c] sm:$0xf]
    %v3166 = vld [vmem:[%s3137 + $0x70] sm:$0xf]
    %v3167 = vld [vmem:[%s3137 + $0x74] sm:$0xf]
    %v3168 = vld [vmem:[%s3137 + $0x78] sm:$0xf]
    %v3169 = vld [vmem:[%s3137 + $0x7c] sm:$0xf]
    %v3170 = vld [vmem:[%s3137 + $0x80] sm:$0xf]
    %v3171 = vld [vmem:[%s3137 + $0x84] sm:$0xf]
    %v3172 = vld [vmem:[%s3137 + $0x88] sm:$0xf]
    %v3173 = vld [vmem:[%s3137 + $0x8c] sm:$0xf]
    %v3174 = vld [vmem:[%s3137 + $0x90] sm:$0xf]
    %v3175 = vld [vmem:[%s3137 + $0x94] sm:$0xf]
    %v3176 = vld [vmem:[%s3137 + $0x98] sm:$0xf]
    %v3177 = vld [vmem:[%s3137 + $0x9c] sm:$0xf]
    %v3178 = vld [vmem:[%s3137 + $0xa0] sm:$0xf]
    %v3179 = vld [vmem:[%s3137 + $0xa4] sm:$0xf]
    %v3180 = vld [vmem:[%s3137 + $0xa8] sm:$0xf]
    %v3181 = vld [vmem:[%s3137 + $0xac] sm:$0xf]
    %v3182 = vld [vmem:[%s3137 + $0xb0] sm:$0xf]
    %v3183 = vld [vmem:[%s3137 + $0xb4] sm:$0xf]
    %v3184 = vld [vmem:[%s3137 + $0xb8] sm:$0xf]
    %v3185 = vld [vmem:[%s3137 + $0xbc] sm:$0xf]
    %v3186 = vld [vmem:[%s3137 + $0xc0] sm:$0xf]
    %v3187 = vld [vmem:[%s3137 + $0xc4] sm:$0xf]
    %v3188 = vld [vmem:[%s3137 + $0xc8] sm:$0xf]
    %v3189 = vld [vmem:[%s3137 + $0xcc] sm:$0xf]
    %v3190 = vld [vmem:[%s3137 + $0xd0] sm:$0xf]
    %v3191 = vld [vmem:[%s3137 + $0xd4] sm:$0xf]
    %v3192 = vld [vmem:[%s3137 + $0xd8] sm:$0xf]
    %v3193 = vld [vmem:[%s3137 + $0xdc] sm:$0xf]
    %v3194 = vld [vmem:[%s3137 + $0xe0] sm:$0xf]
    %v3195 = vld [vmem:[%s3137 + $0xe4] sm:$0xf]
    %v3196 = vld [vmem:[%s3137 + $0xe8] sm:$0xf]
    %v3197 = vld [vmem:[%s3137 + $0xec] sm:$0xf]
    %v3198 = vld [vmem:[%s3137 + $0xf0] sm:$0xf]
    %v3199 = vld [vmem:[%s3137 + $0xf4] sm:$0xf]
    %v3200 = vld [vmem:[%s3137 + $0xf8] sm:$0xf]
    %v3201 = vld [vmem:[%s3137 + $0xfc] sm:$0xf]
    %v3266 = vunpack.c.l.b16 %v3138
    %v3267 = vunpack.c.l.b16 %v3139
    %v3268 = vunpack.c.l.b16 %v3140
    %v3269 = vunpack.c.l.b16 %v3141
    %v3270 = vunpack.c.l.b16 %v3142
    %v3271 = vunpack.c.l.b16 %v3143
    %v3272 = vunpack.c.l.b16 %v3144
    %v3273 = vunpack.c.l.b16 %v3145
    %v3274 = vunpack.c.l.b16 %v3146
    %v3275 = vunpack.c.l.b16 %v3147
    %v3276 = vunpack.c.l.b16 %v3148
    %v3277 = vunpack.c.l.b16 %v3149
    %v3278 = vunpack.c.l.b16 %v3150
    %v3279 = vunpack.c.l.b16 %v3151
    %v3280 = vunpack.c.l.b16 %v3152
    %v3281 = vunpack.c.l.b16 %v3153
    %v3282 = vunpack.c.l.b16 %v3154
    %v3283 = vunpack.c.l.b16 %v3155
    %v3284 = vunpack.c.l.b16 %v3156
    %v3285 = vunpack.c.l.b16 %v3157
    %v3286 = vunpack.c.l.b16 %v3158
    %v3287 = vunpack.c.l.b16 %v3159
    %v3288 = vunpack.c.l.b16 %v3160
    %v3289 = vunpack.c.l.b16 %v3161
    %v3290 = vunpack.c.l.b16 %v3162
    %v3291 = vunpack.c.l.b16 %v3163
    %v3292 = vunpack.c.l.b16 %v3164
    %v3293 = vunpack.c.l.b16 %v3165
    %v3294 = vunpack.c.l.b16 %v3166
    %v3295 = vunpack.c.l.b16 %v3167
    %v3296 = vunpack.c.l.b16 %v3168
    %v3297 = vunpack.c.l.b16 %v3169
    %v3298 = vunpack.c.l.b16 %v3170
    %v3299 = vunpack.c.l.b16 %v3171
    %v3300 = vunpack.c.l.b16 %v3172
    %v3301 = vunpack.c.l.b16 %v3173
    %v3302 = vunpack.c.l.b16 %v3174
    %v3303 = vunpack.c.l.b16 %v3175
    %v3304 = vunpack.c.l.b16 %v3176
    %v3305 = vunpack.c.l.b16 %v3177
    %v3306 = vunpack.c.l.b16 %v3178
    %v3307 = vunpack.c.l.b16 %v3179
    %v3308 = vunpack.c.l.b16 %v3180
    %v3309 = vunpack.c.l.b16 %v3181
    %v3310 = vunpack.c.l.b16 %v3182
    %v3311 = vunpack.c.l.b16 %v3183
    %v3312 = vunpack.c.l.b16 %v3184
    %v3313 = vunpack.c.l.b16 %v3185
    %v3314 = vunpack.c.l.b16 %v3186
    %v3315 = vunpack.c.l.b16 %v3187
    %v3316 = vunpack.c.l.b16 %v3188
    %v3317 = vunpack.c.l.b16 %v3189
    %v3318 = vunpack.c.l.b16 %v3190
    %v3319 = vunpack.c.l.b16 %v3191
    %v3320 = vunpack.c.l.b16 %v3192
    %v3321 = vunpack.c.l.b16 %v3193
    %v3322 = vunpack.c.l.b16 %v3194
    %v3323 = vunpack.c.l.b16 %v3195
    %v3324 = vunpack.c.l.b16 %v3196
    %v3325 = vunpack.c.l.b16 %v3197
    %v3326 = vunpack.c.l.b16 %v3198
    %v3327 = vunpack.c.l.b16 %v3199
    %v3328 = vunpack.c.l.b16 %v3200
    %v3329 = vunpack.c.l.b16 %v3201
    %v3330 = vpack.c.b16 %v3267, %v3266
    %v3331 = vpack.c.b16 %v3269, %v3268
    %v3332 = vpack.c.b16 %v3271, %v3270
    %v3333 = vpack.c.b16 %v3273, %v3272
    %v3334 = vpack.c.b16 %v3275, %v3274
    %v3335 = vpack.c.b16 %v3277, %v3276
    %v3336 = vpack.c.b16 %v3279, %v3278
    %v3337 = vpack.c.b16 %v3281, %v3280
    %v3338 = vpack.c.b16 %v3283, %v3282
    %v3339 = vpack.c.b16 %v3285, %v3284
    %v3340 = vpack.c.b16 %v3287, %v3286
    %v3341 = vpack.c.b16 %v3289, %v3288
    %v3342 = vpack.c.b16 %v3291, %v3290
    %v3343 = vpack.c.b16 %v3293, %v3292
    %v3344 = vpack.c.b16 %v3295, %v3294
    %v3345 = vpack.c.b16 %v3297, %v3296
    %v3346 = vpack.c.b16 %v3299, %v3298
    %v3347 = vpack.c.b16 %v3301, %v3300
    %v3348 = vpack.c.b16 %v3303, %v3302
    %v3349 = vpack.c.b16 %v3305, %v3304
    %v3350 = vpack.c.b16 %v3307, %v3306
    %v3351 = vpack.c.b16 %v3309, %v3308
    %v3352 = vpack.c.b16 %v3311, %v3310
    %v3353 = vpack.c.b16 %v3313, %v3312
    %v3354 = vpack.c.b16 %v3315, %v3314
    %v3355 = vpack.c.b16 %v3317, %v3316
    %v3356 = vpack.c.b16 %v3319, %v3318
    %v3357 = vpack.c.b16 %v3321, %v3320
    %v3358 = vpack.c.b16 %v3323, %v3322
    %v3359 = vpack.c.b16 %v3325, %v3324
    %v3360 = vpack.c.b16 %v3327, %v3326
    %v3361 = vpack.c.b16 %v3329, %v3328
    %3394 = vmatpush.bf16.msra.mxu0 %v3337
    %3395 = vmatpush.bf16.msra.mxu0 %v3336
    %3396 = vmatpush.bf16.msra.mxu0 %v3335
    %3397 = vmatpush.bf16.msra.mxu0 %v3334
    %3398 = vmatpush.bf16.msra.mxu0 %v3333
    %3399 = vmatpush.bf16.msra.mxu0 %v3332
    %3400 = vmatpush.bf16.msra.mxu0 %v3331
    %3401 = vmatpush.bf16.msra.mxu0 %v3330
    %3402 = vmatmul.bf16.gmra.mxu0 %v186
    %v3403 = vpop.f32.mrf.mxu0
    %v3404 = vadd.f32 0.0, %v3403
    %v3405 = vpop.f32.mrf.mxu0
    %v3406 = vadd.f32 0.0, %v3405
    %3407 = vmatmul.bf16.gmra.mxu0 %v190
    %v3408 = vpop.f32.mrf.mxu0
    %v3409 = vadd.f32 0.0, %v3408
    %v3410 = vpop.f32.mrf.mxu0
    %v3411 = vadd.f32 0.0, %v3410
    %3412 = vmatmul.bf16.gmra.mxu0 %v194
    %v3413 = vpop.f32.mrf.mxu0
    %v3414 = vadd.f32 0.0, %v3413
    %v3415 = vpop.f32.mrf.mxu0
    %v3416 = vadd.f32 0.0, %v3415
    %3417 = vmatmul.bf16.gmra.mxu0 %v198
    %v3418 = vpop.f32.mrf.mxu0
    %v3419 = vadd.f32 0.0, %v3418
    %v3420 = vpop.f32.mrf.mxu0
    %v3421 = vadd.f32 0.0, %v3420
    %3422 = vdwg.mxu0
    %3423 = vmatpush.bf16.msra.mxu0 %v3345
    %3424 = vmatpush.bf16.msra.mxu0 %v3344
    %3425 = vmatpush.bf16.msra.mxu0 %v3343
    %3426 = vmatpush.bf16.msra.mxu0 %v3342
    %3427 = vmatpush.bf16.msra.mxu0 %v3341
    %3428 = vmatpush.bf16.msra.mxu0 %v3340
    %3429 = vmatpush.bf16.msra.mxu0 %v3339
    %3430 = vmatpush.bf16.msra.mxu0 %v3338
    %3431 = vmatmul.bf16.gmra.mxu0 %v187
    %v3432 = vpop.f32.mrf.mxu0
    %v3433 = vadd.f32 %v3404, %v3432
    %v3434 = vpop.f32.mrf.mxu0
    %v3435 = vadd.f32 %v3406, %v3434
    %3436 = vmatmul.bf16.gmra.mxu0 %v191
    %v3437 = vpop.f32.mrf.mxu0
    %v3438 = vadd.f32 %v3409, %v3437
    %v3439 = vpop.f32.mrf.mxu0
    %v3440 = vadd.f32 %v3411, %v3439
    %3441 = vmatmul.bf16.gmra.mxu0 %v195
    %v3442 = vpop.f32.mrf.mxu0
    %v3443 = vadd.f32 %v3414, %v3442
    %v3444 = vpop.f32.mrf.mxu0
    %v3445 = vadd.f32 %v3416, %v3444
    %3446 = vmatmul.bf16.gmra.mxu0 %v199
    %v3447 = vpop.f32.mrf.mxu0
    %v3448 = vadd.f32 %v3419, %v3447
    %v3449 = vpop.f32.mrf.mxu0
    %v3450 = vadd.f32 %v3421, %v3449
    %3451 = vdwg.mxu0
    %3452 = vmatpush.bf16.msra.mxu0 %v3353
    %3453 = vmatpush.bf16.msra.mxu0 %v3352
    %3454 = vmatpush.bf16.msra.mxu0 %v3351
    %3455 = vmatpush.bf16.msra.mxu0 %v3350
    %3456 = vmatpush.bf16.msra.mxu0 %v3349
    %3457 = vmatpush.bf16.msra.mxu0 %v3348
    %3458 = vmatpush.bf16.msra.mxu0 %v3347
    %3459 = vmatpush.bf16.msra.mxu0 %v3346
    %3460 = vmatmul.bf16.gmra.mxu0 %v188
    %v3461 = vpop.f32.mrf.mxu0
    %v3462 = vadd.f32 %v3433, %v3461
    %v3463 = vpop.f32.mrf.mxu0
    %v3464 = vadd.f32 %v3435, %v3463
    %3465 = vmatmul.bf16.gmra.mxu0 %v192
    %v3466 = vpop.f32.mrf.mxu0
    %v3467 = vadd.f32 %v3438, %v3466
    %v3468 = vpop.f32.mrf.mxu0
    %v3469 = vadd.f32 %v3440, %v3468
    %3470 = vmatmul.bf16.gmra.mxu0 %v196
    %v3471 = vpop.f32.mrf.mxu0
    %v3472 = vadd.f32 %v3443, %v3471
    %v3473 = vpop.f32.mrf.mxu0
    %v3474 = vadd.f32 %v3445, %v3473
    %3475 = vmatmul.bf16.gmra.mxu0 %v200
    %v3476 = vpop.f32.mrf.mxu0
    %v3477 = vadd.f32 %v3448, %v3476
    %v3478 = vpop.f32.mrf.mxu0
    %v3479 = vadd.f32 %v3450, %v3478
    %3480 = vdwg.mxu0
    %3481 = vmatpush.bf16.msra.mxu0 %v3361
    %3482 = vmatpush.bf16.msra.mxu0 %v3360
    %3483 = vmatpush.bf16.msra.mxu0 %v3359
    %3484 = vmatpush.bf16.msra.mxu0 %v3358
    %3485 = vmatpush.bf16.msra.mxu0 %v3357
    %3486 = vmatpush.bf16.msra.mxu0 %v3356
    %3487 = vmatpush.bf16.msra.mxu0 %v3355
    %3488 = vmatpush.bf16.msra.mxu0 %v3354
    %3489 = vmatmul.bf16.gmra.mxu0 %v189
    %v3490 = vpop.f32.mrf.mxu0
    %v3491 = vadd.f32 %v3462, %v3490
    %v3492 = vpop.f32.mrf.mxu0
    %v3493 = vadd.f32 %v3464, %v3492
    %3494 = vmatmul.bf16.gmra.mxu0 %v193
    %v3495 = vpop.f32.mrf.mxu0
    %v3496 = vadd.f32 %v3467, %v3495
    %v3497 = vpop.f32.mrf.mxu0
    %v3498 = vadd.f32 %v3469, %v3497
    %3499 = vmatmul.bf16.gmra.mxu0 %v197
    %v3500 = vpop.f32.mrf.mxu0
    %v3501 = vadd.f32 %v3472, %v3500
    %v3502 = vpop.f32.mrf.mxu0
    %v3503 = vadd.f32 %v3474, %v3502
    %3504 = vmatmul.bf16.gmra.mxu0 %v201
    %v3505 = vpop.f32.mrf.mxu0
    %v3506 = vadd.f32 %v3477, %v3505
    %v3507 = vpop.f32.mrf.mxu0
    %v3508 = vadd.f32 %v3479, %v3507
    %3509 = vdwg.mxu0
    %s3510 = scalar_lea.vmem %s0, 2304
    %v3511 = vld [vmem:[%s3510] sm:$0xf]
    %v3512 = vld [vmem:[%s3510 + $0x4] sm:$0xf]
    %v3513 = vld [vmem:[%s3510 + $0x8] sm:$0xf]
    %v3514 = vld [vmem:[%s3510 + $0xc] sm:$0xf]
    %v3515 = vld [vmem:[%s3510 + $0x10] sm:$0xf]
    %v3516 = vld [vmem:[%s3510 + $0x14] sm:$0xf]
    %v3517 = vld [vmem:[%s3510 + $0x18] sm:$0xf]
    %v3518 = vld [vmem:[%s3510 + $0x1c] sm:$0xf]
    %v3519 = vld [vmem:[%s3510 + $0x20] sm:$0xf]
    %v3520 = vld [vmem:[%s3510 + $0x24] sm:$0xf]
    %v3521 = vld [vmem:[%s3510 + $0x28] sm:$0xf]
    %v3522 = vld [vmem:[%s3510 + $0x2c] sm:$0xf]
    %v3523 = vld [vmem:[%s3510 + $0x30] sm:$0xf]
    %v3524 = vld [vmem:[%s3510 + $0x34] sm:$0xf]
    %v3525 = vld [vmem:[%s3510 + $0x38] sm:$0xf]
    %v3526 = vld [vmem:[%s3510 + $0x3c] sm:$0xf]
    %v3527 = vld [vmem:[%s3510 + $0x40] sm:$0xf]
    %v3528 = vld [vmem:[%s3510 + $0x44] sm:$0xf]
    %v3529 = vld [vmem:[%s3510 + $0x48] sm:$0xf]
    %v3530 = vld [vmem:[%s3510 + $0x4c] sm:$0xf]
    %v3531 = vld [vmem:[%s3510 + $0x50] sm:$0xf]
    %v3532 = vld [vmem:[%s3510 + $0x54] sm:$0xf]
    %v3533 = vld [vmem:[%s3510 + $0x58] sm:$0xf]
    %v3534 = vld [vmem:[%s3510 + $0x5c] sm:$0xf]
    %v3535 = vld [vmem:[%s3510 + $0x60] sm:$0xf]
    %v3536 = vld [vmem:[%s3510 + $0x64] sm:$0xf]
    %v3537 = vld [vmem:[%s3510 + $0x68] sm:$0xf]
    %v3538 = vld [vmem:[%s3510 + $0x6c] sm:$0xf]
    %v3539 = vld [vmem:[%s3510 + $0x70] sm:$0xf]
    %v3540 = vld [vmem:[%s3510 + $0x74] sm:$0xf]
    %v3541 = vld [vmem:[%s3510 + $0x78] sm:$0xf]
    %v3542 = vld [vmem:[%s3510 + $0x7c] sm:$0xf]
    %v3543 = vld [vmem:[%s3510 + $0x80] sm:$0xf]
    %v3544 = vld [vmem:[%s3510 + $0x84] sm:$0xf]
    %v3545 = vld [vmem:[%s3510 + $0x88] sm:$0xf]
    %v3546 = vld [vmem:[%s3510 + $0x8c] sm:$0xf]
    %v3547 = vld [vmem:[%s3510 + $0x90] sm:$0xf]
    %v3548 = vld [vmem:[%s3510 + $0x94] sm:$0xf]
    %v3549 = vld [vmem:[%s3510 + $0x98] sm:$0xf]
    %v3550 = vld [vmem:[%s3510 + $0x9c] sm:$0xf]
    %v3551 = vld [vmem:[%s3510 + $0xa0] sm:$0xf]
    %v3552 = vld [vmem:[%s3510 + $0xa4] sm:$0xf]
    %v3553 = vld [vmem:[%s3510 + $0xa8] sm:$0xf]
    %v3554 = vld [vmem:[%s3510 + $0xac] sm:$0xf]
    %v3555 = vld [vmem:[%s3510 + $0xb0] sm:$0xf]
    %v3556 = vld [vmem:[%s3510 + $0xb4] sm:$0xf]
    %v3557 = vld [vmem:[%s3510 + $0xb8] sm:$0xf]
    %v3558 = vld [vmem:[%s3510 + $0xbc] sm:$0xf]
    %v3559 = vld [vmem:[%s3510 + $0xc0] sm:$0xf]
    %v3560 = vld [vmem:[%s3510 + $0xc4] sm:$0xf]
    %v3561 = vld [vmem:[%s3510 + $0xc8] sm:$0xf]
    %v3562 = vld [vmem:[%s3510 + $0xcc] sm:$0xf]
    %v3563 = vld [vmem:[%s3510 + $0xd0] sm:$0xf]
    %v3564 = vld [vmem:[%s3510 + $0xd4] sm:$0xf]
    %v3565 = vld [vmem:[%s3510 + $0xd8] sm:$0xf]
    %v3566 = vld [vmem:[%s3510 + $0xdc] sm:$0xf]
    %v3567 = vld [vmem:[%s3510 + $0xe0] sm:$0xf]
    %v3568 = vld [vmem:[%s3510 + $0xe4] sm:$0xf]
    %v3569 = vld [vmem:[%s3510 + $0xe8] sm:$0xf]
    %v3570 = vld [vmem:[%s3510 + $0xec] sm:$0xf]
    %v3571 = vld [vmem:[%s3510 + $0xf0] sm:$0xf]
    %v3572 = vld [vmem:[%s3510 + $0xf4] sm:$0xf]
    %v3573 = vld [vmem:[%s3510 + $0xf8] sm:$0xf]
    %v3574 = vld [vmem:[%s3510 + $0xfc] sm:$0xf]
    %v3639 = vunpack.c.l.b16 %v3511
    %v3640 = vunpack.c.l.b16 %v3512
    %v3641 = vunpack.c.l.b16 %v3513
    %v3642 = vunpack.c.l.b16 %v3514
    %v3643 = vunpack.c.l.b16 %v3515
    %v3644 = vunpack.c.l.b16 %v3516
    %v3645 = vunpack.c.l.b16 %v3517
    %v3646 = vunpack.c.l.b16 %v3518
    %v3647 = vunpack.c.l.b16 %v3519
    %v3648 = vunpack.c.l.b16 %v3520
    %v3649 = vunpack.c.l.b16 %v3521
    %v3650 = vunpack.c.l.b16 %v3522
    %v3651 = vunpack.c.l.b16 %v3523
    %v3652 = vunpack.c.l.b16 %v3524
    %v3653 = vunpack.c.l.b16 %v3525
    %v3654 = vunpack.c.l.b16 %v3526
    %v3655 = vunpack.c.l.b16 %v3527
    %v3656 = vunpack.c.l.b16 %v3528
    %v3657 = vunpack.c.l.b16 %v3529
    %v3658 = vunpack.c.l.b16 %v3530
    %v3659 = vunpack.c.l.b16 %v3531
    %v3660 = vunpack.c.l.b16 %v3532
    %v3661 = vunpack.c.l.b16 %v3533
    %v3662 = vunpack.c.l.b16 %v3534
    %v3663 = vunpack.c.l.b16 %v3535
    %v3664 = vunpack.c.l.b16 %v3536
    %v3665 = vunpack.c.l.b16 %v3537
    %v3666 = vunpack.c.l.b16 %v3538
    %v3667 = vunpack.c.l.b16 %v3539
    %v3668 = vunpack.c.l.b16 %v3540
    %v3669 = vunpack.c.l.b16 %v3541
    %v3670 = vunpack.c.l.b16 %v3542
    %v3671 = vunpack.c.l.b16 %v3543
    %v3672 = vunpack.c.l.b16 %v3544
    %v3673 = vunpack.c.l.b16 %v3545
    %v3674 = vunpack.c.l.b16 %v3546
    %v3675 = vunpack.c.l.b16 %v3547
    %v3676 = vunpack.c.l.b16 %v3548
    %v3677 = vunpack.c.l.b16 %v3549
    %v3678 = vunpack.c.l.b16 %v3550
    %v3679 = vunpack.c.l.b16 %v3551
    %v3680 = vunpack.c.l.b16 %v3552
    %v3681 = vunpack.c.l.b16 %v3553
    %v3682 = vunpack.c.l.b16 %v3554
    %v3683 = vunpack.c.l.b16 %v3555
    %v3684 = vunpack.c.l.b16 %v3556
    %v3685 = vunpack.c.l.b16 %v3557
    %v3686 = vunpack.c.l.b16 %v3558
    %v3687 = vunpack.c.l.b16 %v3559
    %v3688 = vunpack.c.l.b16 %v3560
    %v3689 = vunpack.c.l.b16 %v3561
    %v3690 = vunpack.c.l.b16 %v3562
    %v3691 = vunpack.c.l.b16 %v3563
    %v3692 = vunpack.c.l.b16 %v3564
    %v3693 = vunpack.c.l.b16 %v3565
    %v3694 = vunpack.c.l.b16 %v3566
    %v3695 = vunpack.c.l.b16 %v3567
    %v3696 = vunpack.c.l.b16 %v3568
    %v3697 = vunpack.c.l.b16 %v3569
    %v3698 = vunpack.c.l.b16 %v3570
    %v3699 = vunpack.c.l.b16 %v3571
    %v3700 = vunpack.c.l.b16 %v3572
    %v3701 = vunpack.c.l.b16 %v3573
    %v3702 = vunpack.c.l.b16 %v3574
    %v3703 = vpack.c.b16 %v3640, %v3639
    %v3704 = vpack.c.b16 %v3642, %v3641
    %v3705 = vpack.c.b16 %v3644, %v3643
    %v3706 = vpack.c.b16 %v3646, %v3645
    %v3707 = vpack.c.b16 %v3648, %v3647
    %v3708 = vpack.c.b16 %v3650, %v3649
    %v3709 = vpack.c.b16 %v3652, %v3651
    %v3710 = vpack.c.b16 %v3654, %v3653
    %v3711 = vpack.c.b16 %v3656, %v3655
    %v3712 = vpack.c.b16 %v3658, %v3657
    %v3713 = vpack.c.b16 %v3660, %v3659
    %v3714 = vpack.c.b16 %v3662, %v3661
    %v3715 = vpack.c.b16 %v3664, %v3663
    %v3716 = vpack.c.b16 %v3666, %v3665
    %v3717 = vpack.c.b16 %v3668, %v3667
    %v3718 = vpack.c.b16 %v3670, %v3669
    %v3719 = vpack.c.b16 %v3672, %v3671
    %v3720 = vpack.c.b16 %v3674, %v3673
    %v3721 = vpack.c.b16 %v3676, %v3675
    %v3722 = vpack.c.b16 %v3678, %v3677
    %v3723 = vpack.c.b16 %v3680, %v3679
    %v3724 = vpack.c.b16 %v3682, %v3681
    %v3725 = vpack.c.b16 %v3684, %v3683
    %v3726 = vpack.c.b16 %v3686, %v3685
    %v3727 = vpack.c.b16 %v3688, %v3687
    %v3728 = vpack.c.b16 %v3690, %v3689
    %v3729 = vpack.c.b16 %v3692, %v3691
    %v3730 = vpack.c.b16 %v3694, %v3693
    %v3731 = vpack.c.b16 %v3696, %v3695
    %v3732 = vpack.c.b16 %v3698, %v3697
    %v3733 = vpack.c.b16 %v3700, %v3699
    %v3734 = vpack.c.b16 %v3702, %v3701
    %3767 = vmatpush.bf16.msra.mxu0 %v3710
    %3768 = vmatpush.bf16.msra.mxu0 %v3709
    %3769 = vmatpush.bf16.msra.mxu0 %v3708
    %3770 = vmatpush.bf16.msra.mxu0 %v3707
    %3771 = vmatpush.bf16.msra.mxu0 %v3706
    %3772 = vmatpush.bf16.msra.mxu0 %v3705
    %3773 = vmatpush.bf16.msra.mxu0 %v3704
    %3774 = vmatpush.bf16.msra.mxu0 %v3703
    %3775 = vmatmul.bf16.gmra.mxu0 %v186
    %v3776 = vpop.f32.mrf.mxu0
    %v3777 = vadd.f32 0.0, %v3776
    %v3778 = vpop.f32.mrf.mxu0
    %v3779 = vadd.f32 0.0, %v3778
    %3780 = vmatmul.bf16.gmra.mxu0 %v190
    %v3781 = vpop.f32.mrf.mxu0
    %v3782 = vadd.f32 0.0, %v3781
    %v3783 = vpop.f32.mrf.mxu0
    %v3784 = vadd.f32 0.0, %v3783
    %3785 = vmatmul.bf16.gmra.mxu0 %v194
    %v3786 = vpop.f32.mrf.mxu0
    %v3787 = vadd.f32 0.0, %v3786
    %v3788 = vpop.f32.mrf.mxu0
    %v3789 = vadd.f32 0.0, %v3788
    %3790 = vmatmul.bf16.gmra.mxu0 %v198
    %v3791 = vpop.f32.mrf.mxu0
    %v3792 = vadd.f32 0.0, %v3791
    %v3793 = vpop.f32.mrf.mxu0
    %v3794 = vadd.f32 0.0, %v3793
    %3795 = vdwg.mxu0
    %3796 = vmatpush.bf16.msra.mxu0 %v3718
    %3797 = vmatpush.bf16.msra.mxu0 %v3717
    %3798 = vmatpush.bf16.msra.mxu0 %v3716
    %3799 = vmatpush.bf16.msra.mxu0 %v3715
    %3800 = vmatpush.bf16.msra.mxu0 %v3714
    %3801 = vmatpush.bf16.msra.mxu0 %v3713
    %3802 = vmatpush.bf16.msra.mxu0 %v3712
    %3803 = vmatpush.bf16.msra.mxu0 %v3711
    %3804 = vmatmul.bf16.gmra.mxu0 %v187
    %v3805 = vpop.f32.mrf.mxu0
    %v3806 = vadd.f32 %v3777, %v3805
    %v3807 = vpop.f32.mrf.mxu0
    %v3808 = vadd.f32 %v3779, %v3807
    %3809 = vmatmul.bf16.gmra.mxu0 %v191
    %v3810 = vpop.f32.mrf.mxu0
    %v3811 = vadd.f32 %v3782, %v3810
    %v3812 = vpop.f32.mrf.mxu0
    %v3813 = vadd.f32 %v3784, %v3812
    %3814 = vmatmul.bf16.gmra.mxu0 %v195
    %v3815 = vpop.f32.mrf.mxu0
    %v3816 = vadd.f32 %v3787, %v3815
    %v3817 = vpop.f32.mrf.mxu0
    %v3818 = vadd.f32 %v3789, %v3817
    %3819 = vmatmul.bf16.gmra.mxu0 %v199
    %v3820 = vpop.f32.mrf.mxu0
    %v3821 = vadd.f32 %v3792, %v3820
    %v3822 = vpop.f32.mrf.mxu0
    %v3823 = vadd.f32 %v3794, %v3822
    %3824 = vdwg.mxu0
    %3825 = vmatpush.bf16.msra.mxu0 %v3726
    %3826 = vmatpush.bf16.msra.mxu0 %v3725
    %3827 = vmatpush.bf16.msra.mxu0 %v3724
    %3828 = vmatpush.bf16.msra.mxu0 %v3723
    %3829 = vmatpush.bf16.msra.mxu0 %v3722
    %3830 = vmatpush.bf16.msra.mxu0 %v3721
    %3831 = vmatpush.bf16.msra.mxu0 %v3720
    %3832 = vmatpush.bf16.msra.mxu0 %v3719
    %3833 = vmatmul.bf16.gmra.mxu0 %v188
    %v3834 = vpop.f32.mrf.mxu0
    %v3835 = vadd.f32 %v3806, %v3834
    %v3836 = vpop.f32.mrf.mxu0
    %v3837 = vadd.f32 %v3808, %v3836
    %3838 = vmatmul.bf16.gmra.mxu0 %v192
    %v3839 = vpop.f32.mrf.mxu0
    %v3840 = vadd.f32 %v3811, %v3839
    %v3841 = vpop.f32.mrf.mxu0
    %v3842 = vadd.f32 %v3813, %v3841
    %3843 = vmatmul.bf16.gmra.mxu0 %v196
    %v3844 = vpop.f32.mrf.mxu0
    %v3845 = vadd.f32 %v3816, %v3844
    %v3846 = vpop.f32.mrf.mxu0
    %v3847 = vadd.f32 %v3818, %v3846
    %3848 = vmatmul.bf16.gmra.mxu0 %v200
    %v3849 = vpop.f32.mrf.mxu0
    %v3850 = vadd.f32 %v3821, %v3849
    %v3851 = vpop.f32.mrf.mxu0
    %v3852 = vadd.f32 %v3823, %v3851
    %3853 = vdwg.mxu0
    %3854 = vmatpush.bf16.msra.mxu0 %v3734
    %3855 = vmatpush.bf16.msra.mxu0 %v3733
    %3856 = vmatpush.bf16.msra.mxu0 %v3732
    %3857 = vmatpush.bf16.msra.mxu0 %v3731
    %3858 = vmatpush.bf16.msra.mxu0 %v3730
    %3859 = vmatpush.bf16.msra.mxu0 %v3729
    %3860 = vmatpush.bf16.msra.mxu0 %v3728
    %3861 = vmatpush.bf16.msra.mxu0 %v3727
    %3862 = vmatmul.bf16.gmra.mxu0 %v189
    %v3863 = vpop.f32.mrf.mxu0
    %v3864 = vadd.f32 %v3835, %v3863
    %v3865 = vpop.f32.mrf.mxu0
    %v3866 = vadd.f32 %v3837, %v3865
    %3867 = vmatmul.bf16.gmra.mxu0 %v193
    %v3868 = vpop.f32.mrf.mxu0
    %v3869 = vadd.f32 %v3840, %v3868
    %v3870 = vpop.f32.mrf.mxu0
    %v3871 = vadd.f32 %v3842, %v3870
    %3872 = vmatmul.bf16.gmra.mxu0 %v197
    %v3873 = vpop.f32.mrf.mxu0
    %v3874 = vadd.f32 %v3845, %v3873
    %v3875 = vpop.f32.mrf.mxu0
    %v3876 = vadd.f32 %v3847, %v3875
    %3877 = vmatmul.bf16.gmra.mxu0 %v201
    %v3878 = vpop.f32.mrf.mxu0
    %v3879 = vadd.f32 %v3850, %v3878
    %v3880 = vpop.f32.mrf.mxu0
    %v3881 = vadd.f32 %v3852, %v3880
    %3882 = vdwg.mxu0
    %s3883 = scalar_lea.vmem %s0, 2560
    %v3884 = vld [vmem:[%s3883] sm:$0xf]
    %v3885 = vld [vmem:[%s3883 + $0x4] sm:$0xf]
    %v3886 = vld [vmem:[%s3883 + $0x8] sm:$0xf]
    %v3887 = vld [vmem:[%s3883 + $0xc] sm:$0xf]
    %v3888 = vld [vmem:[%s3883 + $0x10] sm:$0xf]
    %v3889 = vld [vmem:[%s3883 + $0x14] sm:$0xf]
    %v3890 = vld [vmem:[%s3883 + $0x18] sm:$0xf]
    %v3891 = vld [vmem:[%s3883 + $0x1c] sm:$0xf]
    %v3892 = vld [vmem:[%s3883 + $0x20] sm:$0xf]
    %v3893 = vld [vmem:[%s3883 + $0x24] sm:$0xf]
    %v3894 = vld [vmem:[%s3883 + $0x28] sm:$0xf]
    %v3895 = vld [vmem:[%s3883 + $0x2c] sm:$0xf]
    %v3896 = vld [vmem:[%s3883 + $0x30] sm:$0xf]
    %v3897 = vld [vmem:[%s3883 + $0x34] sm:$0xf]
    %v3898 = vld [vmem:[%s3883 + $0x38] sm:$0xf]
    %v3899 = vld [vmem:[%s3883 + $0x3c] sm:$0xf]
    %v3900 = vld [vmem:[%s3883 + $0x40] sm:$0xf]
    %v3901 = vld [vmem:[%s3883 + $0x44] sm:$0xf]
    %v3902 = vld [vmem:[%s3883 + $0x48] sm:$0xf]
    %v3903 = vld [vmem:[%s3883 + $0x4c] sm:$0xf]
    %v3904 = vld [vmem:[%s3883 + $0x50] sm:$0xf]
    %v3905 = vld [vmem:[%s3883 + $0x54] sm:$0xf]
    %v3906 = vld [vmem:[%s3883 + $0x58] sm:$0xf]
    %v3907 = vld [vmem:[%s3883 + $0x5c] sm:$0xf]
    %v3908 = vld [vmem:[%s3883 + $0x60] sm:$0xf]
    %v3909 = vld [vmem:[%s3883 + $0x64] sm:$0xf]
    %v3910 = vld [vmem:[%s3883 + $0x68] sm:$0xf]
    %v3911 = vld [vmem:[%s3883 + $0x6c] sm:$0xf]
    %v3912 = vld [vmem:[%s3883 + $0x70] sm:$0xf]
    %v3913 = vld [vmem:[%s3883 + $0x74] sm:$0xf]
    %v3914 = vld [vmem:[%s3883 + $0x78] sm:$0xf]
    %v3915 = vld [vmem:[%s3883 + $0x7c] sm:$0xf]
    %v3916 = vld [vmem:[%s3883 + $0x80] sm:$0xf]
    %v3917 = vld [vmem:[%s3883 + $0x84] sm:$0xf]
    %v3918 = vld [vmem:[%s3883 + $0x88] sm:$0xf]
    %v3919 = vld [vmem:[%s3883 + $0x8c] sm:$0xf]
    %v3920 = vld [vmem:[%s3883 + $0x90] sm:$0xf]
    %v3921 = vld [vmem:[%s3883 + $0x94] sm:$0xf]
    %v3922 = vld [vmem:[%s3883 + $0x98] sm:$0xf]
    %v3923 = vld [vmem:[%s3883 + $0x9c] sm:$0xf]
    %v3924 = vld [vmem:[%s3883 + $0xa0] sm:$0xf]
    %v3925 = vld [vmem:[%s3883 + $0xa4] sm:$0xf]
    %v3926 = vld [vmem:[%s3883 + $0xa8] sm:$0xf]
    %v3927 = vld [vmem:[%s3883 + $0xac] sm:$0xf]
    %v3928 = vld [vmem:[%s3883 + $0xb0] sm:$0xf]
    %v3929 = vld [vmem:[%s3883 + $0xb4] sm:$0xf]
    %v3930 = vld [vmem:[%s3883 + $0xb8] sm:$0xf]
    %v3931 = vld [vmem:[%s3883 + $0xbc] sm:$0xf]
    %v3932 = vld [vmem:[%s3883 + $0xc0] sm:$0xf]
    %v3933 = vld [vmem:[%s3883 + $0xc4] sm:$0xf]
    %v3934 = vld [vmem:[%s3883 + $0xc8] sm:$0xf]
    %v3935 = vld [vmem:[%s3883 + $0xcc] sm:$0xf]
    %v3936 = vld [vmem:[%s3883 + $0xd0] sm:$0xf]
    %v3937 = vld [vmem:[%s3883 + $0xd4] sm:$0xf]
    %v3938 = vld [vmem:[%s3883 + $0xd8] sm:$0xf]
    %v3939 = vld [vmem:[%s3883 + $0xdc] sm:$0xf]
    %v3940 = vld [vmem:[%s3883 + $0xe0] sm:$0xf]
    %v3941 = vld [vmem:[%s3883 + $0xe4] sm:$0xf]
    %v3942 = vld [vmem:[%s3883 + $0xe8] sm:$0xf]
    %v3943 = vld [vmem:[%s3883 + $0xec] sm:$0xf]
    %v3944 = vld [vmem:[%s3883 + $0xf0] sm:$0xf]
    %v3945 = vld [vmem:[%s3883 + $0xf4] sm:$0xf]
    %v3946 = vld [vmem:[%s3883 + $0xf8] sm:$0xf]
    %v3947 = vld [vmem:[%s3883 + $0xfc] sm:$0xf]
    %v4012 = vunpack.c.l.b16 %v3884
    %v4013 = vunpack.c.l.b16 %v3885
    %v4014 = vunpack.c.l.b16 %v3886
    %v4015 = vunpack.c.l.b16 %v3887
    %v4016 = vunpack.c.l.b16 %v3888
    %v4017 = vunpack.c.l.b16 %v3889
    %v4018 = vunpack.c.l.b16 %v3890
    %v4019 = vunpack.c.l.b16 %v3891
    %v4020 = vunpack.c.l.b16 %v3892
    %v4021 = vunpack.c.l.b16 %v3893
    %v4022 = vunpack.c.l.b16 %v3894
    %v4023 = vunpack.c.l.b16 %v3895
    %v4024 = vunpack.c.l.b16 %v3896
    %v4025 = vunpack.c.l.b16 %v3897
    %v4026 = vunpack.c.l.b16 %v3898
    %v4027 = vunpack.c.l.b16 %v3899
    %v4028 = vunpack.c.l.b16 %v3900
    %v4029 = vunpack.c.l.b16 %v3901
    %v4030 = vunpack.c.l.b16 %v3902
    %v4031 = vunpack.c.l.b16 %v3903
    %v4032 = vunpack.c.l.b16 %v3904
    %v4033 = vunpack.c.l.b16 %v3905
    %v4034 = vunpack.c.l.b16 %v3906
    %v4035 = vunpack.c.l.b16 %v3907
    %v4036 = vunpack.c.l.b16 %v3908
    %v4037 = vunpack.c.l.b16 %v3909
    %v4038 = vunpack.c.l.b16 %v3910
    %v4039 = vunpack.c.l.b16 %v3911
    %v4040 = vunpack.c.l.b16 %v3912
    %v4041 = vunpack.c.l.b16 %v3913
    %v4042 = vunpack.c.l.b16 %v3914
    %v4043 = vunpack.c.l.b16 %v3915
    %v4044 = vunpack.c.l.b16 %v3916
    %v4045 = vunpack.c.l.b16 %v3917
    %v4046 = vunpack.c.l.b16 %v3918
    %v4047 = vunpack.c.l.b16 %v3919
    %v4048 = vunpack.c.l.b16 %v3920
    %v4049 = vunpack.c.l.b16 %v3921
    %v4050 = vunpack.c.l.b16 %v3922
    %v4051 = vunpack.c.l.b16 %v3923
    %v4052 = vunpack.c.l.b16 %v3924
    %v4053 = vunpack.c.l.b16 %v3925
    %v4054 = vunpack.c.l.b16 %v3926
    %v4055 = vunpack.c.l.b16 %v3927
    %v4056 = vunpack.c.l.b16 %v3928
    %v4057 = vunpack.c.l.b16 %v3929
    %v4058 = vunpack.c.l.b16 %v3930
    %v4059 = vunpack.c.l.b16 %v3931
    %v4060 = vunpack.c.l.b16 %v3932
    %v4061 = vunpack.c.l.b16 %v3933
    %v4062 = vunpack.c.l.b16 %v3934
    %v4063 = vunpack.c.l.b16 %v3935
    %v4064 = vunpack.c.l.b16 %v3936
    %v4065 = vunpack.c.l.b16 %v3937
    %v4066 = vunpack.c.l.b16 %v3938
    %v4067 = vunpack.c.l.b16 %v3939
    %v4068 = vunpack.c.l.b16 %v3940
    %v4069 = vunpack.c.l.b16 %v3941
    %v4070 = vunpack.c.l.b16 %v3942
    %v4071 = vunpack.c.l.b16 %v3943
    %v4072 = vunpack.c.l.b16 %v3944
    %v4073 = vunpack.c.l.b16 %v3945
    %v4074 = vunpack.c.l.b16 %v3946
    %v4075 = vunpack.c.l.b16 %v3947
    %v4076 = vpack.c.b16 %v4013, %v4012
    %v4077 = vpack.c.b16 %v4015, %v4014
    %v4078 = vpack.c.b16 %v4017, %v4016
    %v4079 = vpack.c.b16 %v4019, %v4018
    %v4080 = vpack.c.b16 %v4021, %v4020
    %v4081 = vpack.c.b16 %v4023, %v4022
    %v4082 = vpack.c.b16 %v4025, %v4024
    %v4083 = vpack.c.b16 %v4027, %v4026
    %v4084 = vpack.c.b16 %v4029, %v4028
    %v4085 = vpack.c.b16 %v4031, %v4030
    %v4086 = vpack.c.b16 %v4033, %v4032
    %v4087 = vpack.c.b16 %v4035, %v4034
    %v4088 = vpack.c.b16 %v4037, %v4036
    %v4089 = vpack.c.b16 %v4039, %v4038
    %v4090 = vpack.c.b16 %v4041, %v4040
    %v4091 = vpack.c.b16 %v4043, %v4042
    %v4092 = vpack.c.b16 %v4045, %v4044
    %v4093 = vpack.c.b16 %v4047, %v4046
    %v4094 = vpack.c.b16 %v4049, %v4048
    %v4095 = vpack.c.b16 %v4051, %v4050
    %v4096 = vpack.c.b16 %v4053, %v4052
    %v4097 = vpack.c.b16 %v4055, %v4054
    %v4098 = vpack.c.b16 %v4057, %v4056
    %v4099 = vpack.c.b16 %v4059, %v4058
    %v4100 = vpack.c.b16 %v4061, %v4060
    %v4101 = vpack.c.b16 %v4063, %v4062
    %v4102 = vpack.c.b16 %v4065, %v4064
    %v4103 = vpack.c.b16 %v4067, %v4066
    %v4104 = vpack.c.b16 %v4069, %v4068
    %v4105 = vpack.c.b16 %v4071, %v4070
    %v4106 = vpack.c.b16 %v4073, %v4072
    %v4107 = vpack.c.b16 %v4075, %v4074
    %4140 = vmatpush.bf16.msra.mxu0 %v4083
    %4141 = vmatpush.bf16.msra.mxu0 %v4082
    %4142 = vmatpush.bf16.msra.mxu0 %v4081
    %4143 = vmatpush.bf16.msra.mxu0 %v4080
    %4144 = vmatpush.bf16.msra.mxu0 %v4079
    %4145 = vmatpush.bf16.msra.mxu0 %v4078
    %4146 = vmatpush.bf16.msra.mxu0 %v4077
    %4147 = vmatpush.bf16.msra.mxu0 %v4076
    %4148 = vmatmul.bf16.gmra.mxu0 %v186
    %v4149 = vpop.f32.mrf.mxu0
    %v4150 = vadd.f32 0.0, %v4149
    %v4151 = vpop.f32.mrf.mxu0
    %v4152 = vadd.f32 0.0, %v4151
    %4153 = vmatmul.bf16.gmra.mxu0 %v190
    %v4154 = vpop.f32.mrf.mxu0
    %v4155 = vadd.f32 0.0, %v4154
    %v4156 = vpop.f32.mrf.mxu0
    %v4157 = vadd.f32 0.0, %v4156
    %4158 = vmatmul.bf16.gmra.mxu0 %v194
    %v4159 = vpop.f32.mrf.mxu0
    %v4160 = vadd.f32 0.0, %v4159
    %v4161 = vpop.f32.mrf.mxu0
    %v4162 = vadd.f32 0.0, %v4161
    %4163 = vmatmul.bf16.gmra.mxu0 %v198
    %v4164 = vpop.f32.mrf.mxu0
    %v4165 = vadd.f32 0.0, %v4164
    %v4166 = vpop.f32.mrf.mxu0
    %v4167 = vadd.f32 0.0, %v4166
    %4168 = vdwg.mxu0
    %4169 = vmatpush.bf16.msra.mxu0 %v4091
    %4170 = vmatpush.bf16.msra.mxu0 %v4090
    %4171 = vmatpush.bf16.msra.mxu0 %v4089
    %4172 = vmatpush.bf16.msra.mxu0 %v4088
    %4173 = vmatpush.bf16.msra.mxu0 %v4087
    %4174 = vmatpush.bf16.msra.mxu0 %v4086
    %4175 = vmatpush.bf16.msra.mxu0 %v4085
    %4176 = vmatpush.bf16.msra.mxu0 %v4084
    %4177 = vmatmul.bf16.gmra.mxu0 %v187
    %v4178 = vpop.f32.mrf.mxu0
    %v4179 = vadd.f32 %v4150, %v4178
    %v4180 = vpop.f32.mrf.mxu0
    %v4181 = vadd.f32 %v4152, %v4180
    %4182 = vmatmul.bf16.gmra.mxu0 %v191
    %v4183 = vpop.f32.mrf.mxu0
    %v4184 = vadd.f32 %v4155, %v4183
    %v4185 = vpop.f32.mrf.mxu0
    %v4186 = vadd.f32 %v4157, %v4185
    %4187 = vmatmul.bf16.gmra.mxu0 %v195
    %v4188 = vpop.f32.mrf.mxu0
    %v4189 = vadd.f32 %v4160, %v4188
    %v4190 = vpop.f32.mrf.mxu0
    %v4191 = vadd.f32 %v4162, %v4190
    %4192 = vmatmul.bf16.gmra.mxu0 %v199
    %v4193 = vpop.f32.mrf.mxu0
    %v4194 = vadd.f32 %v4165, %v4193
    %v4195 = vpop.f32.mrf.mxu0
    %v4196 = vadd.f32 %v4167, %v4195
    %4197 = vdwg.mxu0
    %4198 = vmatpush.bf16.msra.mxu0 %v4099
    %4199 = vmatpush.bf16.msra.mxu0 %v4098
    %4200 = vmatpush.bf16.msra.mxu0 %v4097
    %4201 = vmatpush.bf16.msra.mxu0 %v4096
    %4202 = vmatpush.bf16.msra.mxu0 %v4095
    %4203 = vmatpush.bf16.msra.mxu0 %v4094
    %4204 = vmatpush.bf16.msra.mxu0 %v4093
    %4205 = vmatpush.bf16.msra.mxu0 %v4092
    %4206 = vmatmul.bf16.gmra.mxu0 %v188
    %v4207 = vpop.f32.mrf.mxu0
    %v4208 = vadd.f32 %v4179, %v4207
    %v4209 = vpop.f32.mrf.mxu0
    %v4210 = vadd.f32 %v4181, %v4209
    %4211 = vmatmul.bf16.gmra.mxu0 %v192
    %v4212 = vpop.f32.mrf.mxu0
    %v4213 = vadd.f32 %v4184, %v4212
    %v4214 = vpop.f32.mrf.mxu0
    %v4215 = vadd.f32 %v4186, %v4214
    %4216 = vmatmul.bf16.gmra.mxu0 %v196
    %v4217 = vpop.f32.mrf.mxu0
    %v4218 = vadd.f32 %v4189, %v4217
    %v4219 = vpop.f32.mrf.mxu0
    %v4220 = vadd.f32 %v4191, %v4219
    %4221 = vmatmul.bf16.gmra.mxu0 %v200
    %v4222 = vpop.f32.mrf.mxu0
    %v4223 = vadd.f32 %v4194, %v4222
    %v4224 = vpop.f32.mrf.mxu0
    %v4225 = vadd.f32 %v4196, %v4224
    %4226 = vdwg.mxu0
    %4227 = vmatpush.bf16.msra.mxu0 %v4107
    %4228 = vmatpush.bf16.msra.mxu0 %v4106
    %4229 = vmatpush.bf16.msra.mxu0 %v4105
    %4230 = vmatpush.bf16.msra.mxu0 %v4104
    %4231 = vmatpush.bf16.msra.mxu0 %v4103
    %4232 = vmatpush.bf16.msra.mxu0 %v4102
    %4233 = vmatpush.bf16.msra.mxu0 %v4101
    %4234 = vmatpush.bf16.msra.mxu0 %v4100
    %4235 = vmatmul.bf16.gmra.mxu0 %v189
    %v4236 = vpop.f32.mrf.mxu0
    %v4237 = vadd.f32 %v4208, %v4236
    %v4238 = vpop.f32.mrf.mxu0
    %v4239 = vadd.f32 %v4210, %v4238
    %4240 = vmatmul.bf16.gmra.mxu0 %v193
    %v4241 = vpop.f32.mrf.mxu0
    %v4242 = vadd.f32 %v4213, %v4241
    %v4243 = vpop.f32.mrf.mxu0
    %v4244 = vadd.f32 %v4215, %v4243
    %4245 = vmatmul.bf16.gmra.mxu0 %v197
    %v4246 = vpop.f32.mrf.mxu0
    %v4247 = vadd.f32 %v4218, %v4246
    %v4248 = vpop.f32.mrf.mxu0
    %v4249 = vadd.f32 %v4220, %v4248
    %4250 = vmatmul.bf16.gmra.mxu0 %v201
    %v4251 = vpop.f32.mrf.mxu0
    %v4252 = vadd.f32 %v4223, %v4251
    %v4253 = vpop.f32.mrf.mxu0
    %v4254 = vadd.f32 %v4225, %v4253
    %4255 = vdwg.mxu0
    %s4256 = scalar_lea.vmem %s0, 2816
    %v4257 = vld [vmem:[%s4256] sm:$0xf]
    %v4258 = vld [vmem:[%s4256 + $0x4] sm:$0xf]
    %v4259 = vld [vmem:[%s4256 + $0x8] sm:$0xf]
    %v4260 = vld [vmem:[%s4256 + $0xc] sm:$0xf]
    %v4261 = vld [vmem:[%s4256 + $0x10] sm:$0xf]
    %v4262 = vld [vmem:[%s4256 + $0x14] sm:$0xf]
    %v4263 = vld [vmem:[%s4256 + $0x18] sm:$0xf]
    %v4264 = vld [vmem:[%s4256 + $0x1c] sm:$0xf]
    %v4265 = vld [vmem:[%s4256 + $0x20] sm:$0xf]
    %v4266 = vld [vmem:[%s4256 + $0x24] sm:$0xf]
    %v4267 = vld [vmem:[%s4256 + $0x28] sm:$0xf]
    %v4268 = vld [vmem:[%s4256 + $0x2c] sm:$0xf]
    %v4269 = vld [vmem:[%s4256 + $0x30] sm:$0xf]
    %v4270 = vld [vmem:[%s4256 + $0x34] sm:$0xf]
    %v4271 = vld [vmem:[%s4256 + $0x38] sm:$0xf]
    %v4272 = vld [vmem:[%s4256 + $0x3c] sm:$0xf]
    %v4273 = vld [vmem:[%s4256 + $0x40] sm:$0xf]
    %v4274 = vld [vmem:[%s4256 + $0x44] sm:$0xf]
    %v4275 = vld [vmem:[%s4256 + $0x48] sm:$0xf]
    %v4276 = vld [vmem:[%s4256 + $0x4c] sm:$0xf]
    %v4277 = vld [vmem:[%s4256 + $0x50] sm:$0xf]
    %v4278 = vld [vmem:[%s4256 + $0x54] sm:$0xf]
    %v4279 = vld [vmem:[%s4256 + $0x58] sm:$0xf]
    %v4280 = vld [vmem:[%s4256 + $0x5c] sm:$0xf]
    %v4281 = vld [vmem:[%s4256 + $0x60] sm:$0xf]
    %v4282 = vld [vmem:[%s4256 + $0x64] sm:$0xf]
    %v4283 = vld [vmem:[%s4256 + $0x68] sm:$0xf]
    %v4284 = vld [vmem:[%s4256 + $0x6c] sm:$0xf]
    %v4285 = vld [vmem:[%s4256 + $0x70] sm:$0xf]
    %v4286 = vld [vmem:[%s4256 + $0x74] sm:$0xf]
    %v4287 = vld [vmem:[%s4256 + $0x78] sm:$0xf]
    %v4288 = vld [vmem:[%s4256 + $0x7c] sm:$0xf]
    %v4289 = vld [vmem:[%s4256 + $0x80] sm:$0xf]
    %v4290 = vld [vmem:[%s4256 + $0x84] sm:$0xf]
    %v4291 = vld [vmem:[%s4256 + $0x88] sm:$0xf]
    %v4292 = vld [vmem:[%s4256 + $0x8c] sm:$0xf]
    %v4293 = vld [vmem:[%s4256 + $0x90] sm:$0xf]
    %v4294 = vld [vmem:[%s4256 + $0x94] sm:$0xf]
    %v4295 = vld [vmem:[%s4256 + $0x98] sm:$0xf]
    %v4296 = vld [vmem:[%s4256 + $0x9c] sm:$0xf]
    %v4297 = vld [vmem:[%s4256 + $0xa0] sm:$0xf]
    %v4298 = vld [vmem:[%s4256 + $0xa4] sm:$0xf]
    %v4299 = vld [vmem:[%s4256 + $0xa8] sm:$0xf]
    %v4300 = vld [vmem:[%s4256 + $0xac] sm:$0xf]
    %v4301 = vld [vmem:[%s4256 + $0xb0] sm:$0xf]
    %v4302 = vld [vmem:[%s4256 + $0xb4] sm:$0xf]
    %v4303 = vld [vmem:[%s4256 + $0xb8] sm:$0xf]
    %v4304 = vld [vmem:[%s4256 + $0xbc] sm:$0xf]
    %v4305 = vld [vmem:[%s4256 + $0xc0] sm:$0xf]
    %v4306 = vld [vmem:[%s4256 + $0xc4] sm:$0xf]
    %v4307 = vld [vmem:[%s4256 + $0xc8] sm:$0xf]
    %v4308 = vld [vmem:[%s4256 + $0xcc] sm:$0xf]
    %v4309 = vld [vmem:[%s4256 + $0xd0] sm:$0xf]
    %v4310 = vld [vmem:[%s4256 + $0xd4] sm:$0xf]
    %v4311 = vld [vmem:[%s4256 + $0xd8] sm:$0xf]
    %v4312 = vld [vmem:[%s4256 + $0xdc] sm:$0xf]
    %v4313 = vld [vmem:[%s4256 + $0xe0] sm:$0xf]
    %v4314 = vld [vmem:[%s4256 + $0xe4] sm:$0xf]
    %v4315 = vld [vmem:[%s4256 + $0xe8] sm:$0xf]
    %v4316 = vld [vmem:[%s4256 + $0xec] sm:$0xf]
    %v4317 = vld [vmem:[%s4256 + $0xf0] sm:$0xf]
    %v4318 = vld [vmem:[%s4256 + $0xf4] sm:$0xf]
    %v4319 = vld [vmem:[%s4256 + $0xf8] sm:$0xf]
    %v4320 = vld [vmem:[%s4256 + $0xfc] sm:$0xf]
    %v4385 = vunpack.c.l.b16 %v4257
    %v4386 = vunpack.c.l.b16 %v4258
    %v4387 = vunpack.c.l.b16 %v4259
    %v4388 = vunpack.c.l.b16 %v4260
    %v4389 = vunpack.c.l.b16 %v4261
    %v4390 = vunpack.c.l.b16 %v4262
    %v4391 = vunpack.c.l.b16 %v4263
    %v4392 = vunpack.c.l.b16 %v4264
    %v4393 = vunpack.c.l.b16 %v4265
    %v4394 = vunpack.c.l.b16 %v4266
    %v4395 = vunpack.c.l.b16 %v4267
    %v4396 = vunpack.c.l.b16 %v4268
    %v4397 = vunpack.c.l.b16 %v4269
    %v4398 = vunpack.c.l.b16 %v4270
    %v4399 = vunpack.c.l.b16 %v4271
    %v4400 = vunpack.c.l.b16 %v4272
    %v4401 = vunpack.c.l.b16 %v4273
    %v4402 = vunpack.c.l.b16 %v4274
    %v4403 = vunpack.c.l.b16 %v4275
    %v4404 = vunpack.c.l.b16 %v4276
    %v4405 = vunpack.c.l.b16 %v4277
    %v4406 = vunpack.c.l.b16 %v4278
    %v4407 = vunpack.c.l.b16 %v4279
    %v4408 = vunpack.c.l.b16 %v4280
    %v4409 = vunpack.c.l.b16 %v4281
    %v4410 = vunpack.c.l.b16 %v4282
    %v4411 = vunpack.c.l.b16 %v4283
    %v4412 = vunpack.c.l.b16 %v4284
    %v4413 = vunpack.c.l.b16 %v4285
    %v4414 = vunpack.c.l.b16 %v4286
    %v4415 = vunpack.c.l.b16 %v4287
    %v4416 = vunpack.c.l.b16 %v4288
    %v4417 = vunpack.c.l.b16 %v4289
    %v4418 = vunpack.c.l.b16 %v4290
    %v4419 = vunpack.c.l.b16 %v4291
    %v4420 = vunpack.c.l.b16 %v4292
    %v4421 = vunpack.c.l.b16 %v4293
    %v4422 = vunpack.c.l.b16 %v4294
    %v4423 = vunpack.c.l.b16 %v4295
    %v4424 = vunpack.c.l.b16 %v4296
    %v4425 = vunpack.c.l.b16 %v4297
    %v4426 = vunpack.c.l.b16 %v4298
    %v4427 = vunpack.c.l.b16 %v4299
    %v4428 = vunpack.c.l.b16 %v4300
    %v4429 = vunpack.c.l.b16 %v4301
    %v4430 = vunpack.c.l.b16 %v4302
    %v4431 = vunpack.c.l.b16 %v4303
    %v4432 = vunpack.c.l.b16 %v4304
    %v4433 = vunpack.c.l.b16 %v4305
    %v4434 = vunpack.c.l.b16 %v4306
    %v4435 = vunpack.c.l.b16 %v4307
    %v4436 = vunpack.c.l.b16 %v4308
    %v4437 = vunpack.c.l.b16 %v4309
    %v4438 = vunpack.c.l.b16 %v4310
    %v4439 = vunpack.c.l.b16 %v4311
    %v4440 = vunpack.c.l.b16 %v4312
    %v4441 = vunpack.c.l.b16 %v4313
    %v4442 = vunpack.c.l.b16 %v4314
    %v4443 = vunpack.c.l.b16 %v4315
    %v4444 = vunpack.c.l.b16 %v4316
    %v4445 = vunpack.c.l.b16 %v4317
    %v4446 = vunpack.c.l.b16 %v4318
    %v4447 = vunpack.c.l.b16 %v4319
    %v4448 = vunpack.c.l.b16 %v4320
    %v4449 = vpack.c.b16 %v4386, %v4385
    %v4450 = vpack.c.b16 %v4388, %v4387
    %v4451 = vpack.c.b16 %v4390, %v4389
    %v4452 = vpack.c.b16 %v4392, %v4391
    %v4453 = vpack.c.b16 %v4394, %v4393
    %v4454 = vpack.c.b16 %v4396, %v4395
    %v4455 = vpack.c.b16 %v4398, %v4397
    %v4456 = vpack.c.b16 %v4400, %v4399
    %v4457 = vpack.c.b16 %v4402, %v4401
    %v4458 = vpack.c.b16 %v4404, %v4403
    %v4459 = vpack.c.b16 %v4406, %v4405
    %v4460 = vpack.c.b16 %v4408, %v4407
    %v4461 = vpack.c.b16 %v4410, %v4409
    %v4462 = vpack.c.b16 %v4412, %v4411
    %v4463 = vpack.c.b16 %v4414, %v4413
    %v4464 = vpack.c.b16 %v4416, %v4415
    %v4465 = vpack.c.b16 %v4418, %v4417
    %v4466 = vpack.c.b16 %v4420, %v4419
    %v4467 = vpack.c.b16 %v4422, %v4421
    %v4468 = vpack.c.b16 %v4424, %v4423
    %v4469 = vpack.c.b16 %v4426, %v4425
    %v4470 = vpack.c.b16 %v4428, %v4427
    %v4471 = vpack.c.b16 %v4430, %v4429
    %v4472 = vpack.c.b16 %v4432, %v4431
    %v4473 = vpack.c.b16 %v4434, %v4433
    %v4474 = vpack.c.b16 %v4436, %v4435
    %v4475 = vpack.c.b16 %v4438, %v4437
    %v4476 = vpack.c.b16 %v4440, %v4439
    %v4477 = vpack.c.b16 %v4442, %v4441
    %v4478 = vpack.c.b16 %v4444, %v4443
    %v4479 = vpack.c.b16 %v4446, %v4445
    %v4480 = vpack.c.b16 %v4448, %v4447
    %4513 = vmatpush.bf16.msra.mxu0 %v4456
    %4514 = vmatpush.bf16.msra.mxu0 %v4455
    %4515 = vmatpush.bf16.msra.mxu0 %v4454
    %4516 = vmatpush.bf16.msra.mxu0 %v4453
    %4517 = vmatpush.bf16.msra.mxu0 %v4452
    %4518 = vmatpush.bf16.msra.mxu0 %v4451
    %4519 = vmatpush.bf16.msra.mxu0 %v4450
    %4520 = vmatpush.bf16.msra.mxu0 %v4449
    %4521 = vmatmul.bf16.gmra.mxu0 %v186
    %v4522 = vpop.f32.mrf.mxu0
    %v4523 = vadd.f32 0.0, %v4522
    %v4524 = vpop.f32.mrf.mxu0
    %v4525 = vadd.f32 0.0, %v4524
    %4526 = vmatmul.bf16.gmra.mxu0 %v190
    %v4527 = vpop.f32.mrf.mxu0
    %v4528 = vadd.f32 0.0, %v4527
    %v4529 = vpop.f32.mrf.mxu0
    %v4530 = vadd.f32 0.0, %v4529
    %4531 = vmatmul.bf16.gmra.mxu0 %v194
    %v4532 = vpop.f32.mrf.mxu0
    %v4533 = vadd.f32 0.0, %v4532
    %v4534 = vpop.f32.mrf.mxu0
    %v4535 = vadd.f32 0.0, %v4534
    %4536 = vmatmul.bf16.gmra.mxu0 %v198
    %v4537 = vpop.f32.mrf.mxu0
    %v4538 = vadd.f32 0.0, %v4537
    %v4539 = vpop.f32.mrf.mxu0
    %v4540 = vadd.f32 0.0, %v4539
    %4541 = vdwg.mxu0
    %4542 = vmatpush.bf16.msra.mxu0 %v4464
    %4543 = vmatpush.bf16.msra.mxu0 %v4463
    %4544 = vmatpush.bf16.msra.mxu0 %v4462
    %4545 = vmatpush.bf16.msra.mxu0 %v4461
    %4546 = vmatpush.bf16.msra.mxu0 %v4460
    %4547 = vmatpush.bf16.msra.mxu0 %v4459
    %4548 = vmatpush.bf16.msra.mxu0 %v4458
    %4549 = vmatpush.bf16.msra.mxu0 %v4457
    %4550 = vmatmul.bf16.gmra.mxu0 %v187
    %v4551 = vpop.f32.mrf.mxu0
    %v4552 = vadd.f32 %v4523, %v4551
    %v4553 = vpop.f32.mrf.mxu0
    %v4554 = vadd.f32 %v4525, %v4553
    %4555 = vmatmul.bf16.gmra.mxu0 %v191
    %v4556 = vpop.f32.mrf.mxu0
    %v4557 = vadd.f32 %v4528, %v4556
    %v4558 = vpop.f32.mrf.mxu0
    %v4559 = vadd.f32 %v4530, %v4558
    %4560 = vmatmul.bf16.gmra.mxu0 %v195
    %v4561 = vpop.f32.mrf.mxu0
    %v4562 = vadd.f32 %v4533, %v4561
    %v4563 = vpop.f32.mrf.mxu0
    %v4564 = vadd.f32 %v4535, %v4563
    %4565 = vmatmul.bf16.gmra.mxu0 %v199
    %v4566 = vpop.f32.mrf.mxu0
    %v4567 = vadd.f32 %v4538, %v4566
    %v4568 = vpop.f32.mrf.mxu0
    %v4569 = vadd.f32 %v4540, %v4568
    %4570 = vdwg.mxu0
    %4571 = vmatpush.bf16.msra.mxu0 %v4472
    %4572 = vmatpush.bf16.msra.mxu0 %v4471
    %4573 = vmatpush.bf16.msra.mxu0 %v4470
    %4574 = vmatpush.bf16.msra.mxu0 %v4469
    %4575 = vmatpush.bf16.msra.mxu0 %v4468
    %4576 = vmatpush.bf16.msra.mxu0 %v4467
    %4577 = vmatpush.bf16.msra.mxu0 %v4466
    %4578 = vmatpush.bf16.msra.mxu0 %v4465
    %4579 = vmatmul.bf16.gmra.mxu0 %v188
    %v4580 = vpop.f32.mrf.mxu0
    %v4581 = vadd.f32 %v4552, %v4580
    %v4582 = vpop.f32.mrf.mxu0
    %v4583 = vadd.f32 %v4554, %v4582
    %4584 = vmatmul.bf16.gmra.mxu0 %v192
    %v4585 = vpop.f32.mrf.mxu0
    %v4586 = vadd.f32 %v4557, %v4585
    %v4587 = vpop.f32.mrf.mxu0
    %v4588 = vadd.f32 %v4559, %v4587
    %4589 = vmatmul.bf16.gmra.mxu0 %v196
    %v4590 = vpop.f32.mrf.mxu0
    %v4591 = vadd.f32 %v4562, %v4590
    %v4592 = vpop.f32.mrf.mxu0
    %v4593 = vadd.f32 %v4564, %v4592
    %4594 = vmatmul.bf16.gmra.mxu0 %v200
    %v4595 = vpop.f32.mrf.mxu0
    %v4596 = vadd.f32 %v4567, %v4595
    %v4597 = vpop.f32.mrf.mxu0
    %v4598 = vadd.f32 %v4569, %v4597
    %4599 = vdwg.mxu0
    %4600 = vmatpush.bf16.msra.mxu0 %v4480
    %4601 = vmatpush.bf16.msra.mxu0 %v4479
    %4602 = vmatpush.bf16.msra.mxu0 %v4478
    %4603 = vmatpush.bf16.msra.mxu0 %v4477
    %4604 = vmatpush.bf16.msra.mxu0 %v4476
    %4605 = vmatpush.bf16.msra.mxu0 %v4475
    %4606 = vmatpush.bf16.msra.mxu0 %v4474
    %4607 = vmatpush.bf16.msra.mxu0 %v4473
    %4608 = vmatmul.bf16.gmra.mxu0 %v189
    %v4609 = vpop.f32.mrf.mxu0
    %v4610 = vadd.f32 %v4581, %v4609
    %v4611 = vpop.f32.mrf.mxu0
    %v4612 = vadd.f32 %v4583, %v4611
    %4613 = vmatmul.bf16.gmra.mxu0 %v193
    %v4614 = vpop.f32.mrf.mxu0
    %v4615 = vadd.f32 %v4586, %v4614
    %v4616 = vpop.f32.mrf.mxu0
    %v4617 = vadd.f32 %v4588, %v4616
    %4618 = vmatmul.bf16.gmra.mxu0 %v197
    %v4619 = vpop.f32.mrf.mxu0
    %v4620 = vadd.f32 %v4591, %v4619
    %v4621 = vpop.f32.mrf.mxu0
    %v4622 = vadd.f32 %v4593, %v4621
    %4623 = vmatmul.bf16.gmra.mxu0 %v201
    %v4624 = vpop.f32.mrf.mxu0
    %v4625 = vadd.f32 %v4596, %v4624
    %v4626 = vpop.f32.mrf.mxu0
    %v4627 = vadd.f32 %v4598, %v4626
    %4628 = vdwg.mxu0
    %s4629 = scalar_lea.vmem %s0, 3072
    %v4630 = vld [vmem:[%s4629] sm:$0xf]
    %v4631 = vld [vmem:[%s4629 + $0x4] sm:$0xf]
    %v4632 = vld [vmem:[%s4629 + $0x8] sm:$0xf]
    %v4633 = vld [vmem:[%s4629 + $0xc] sm:$0xf]
    %v4634 = vld [vmem:[%s4629 + $0x10] sm:$0xf]
    %v4635 = vld [vmem:[%s4629 + $0x14] sm:$0xf]
    %v4636 = vld [vmem:[%s4629 + $0x18] sm:$0xf]
    %v4637 = vld [vmem:[%s4629 + $0x1c] sm:$0xf]
    %v4638 = vld [vmem:[%s4629 + $0x20] sm:$0xf]
    %v4639 = vld [vmem:[%s4629 + $0x24] sm:$0xf]
    %v4640 = vld [vmem:[%s4629 + $0x28] sm:$0xf]
    %v4641 = vld [vmem:[%s4629 + $0x2c] sm:$0xf]
    %v4642 = vld [vmem:[%s4629 + $0x30] sm:$0xf]
    %v4643 = vld [vmem:[%s4629 + $0x34] sm:$0xf]
    %v4644 = vld [vmem:[%s4629 + $0x38] sm:$0xf]
    %v4645 = vld [vmem:[%s4629 + $0x3c] sm:$0xf]
    %v4646 = vld [vmem:[%s4629 + $0x40] sm:$0xf]
    %v4647 = vld [vmem:[%s4629 + $0x44] sm:$0xf]
    %v4648 = vld [vmem:[%s4629 + $0x48] sm:$0xf]
    %v4649 = vld [vmem:[%s4629 + $0x4c] sm:$0xf]
    %v4650 = vld [vmem:[%s4629 + $0x50] sm:$0xf]
    %v4651 = vld [vmem:[%s4629 + $0x54] sm:$0xf]
    %v4652 = vld [vmem:[%s4629 + $0x58] sm:$0xf]
    %v4653 = vld [vmem:[%s4629 + $0x5c] sm:$0xf]
    %v4654 = vld [vmem:[%s4629 + $0x60] sm:$0xf]
    %v4655 = vld [vmem:[%s4629 + $0x64] sm:$0xf]
    %v4656 = vld [vmem:[%s4629 + $0x68] sm:$0xf]
    %v4657 = vld [vmem:[%s4629 + $0x6c] sm:$0xf]
    %v4658 = vld [vmem:[%s4629 + $0x70] sm:$0xf]
    %v4659 = vld [vmem:[%s4629 + $0x74] sm:$0xf]
    %v4660 = vld [vmem:[%s4629 + $0x78] sm:$0xf]
    %v4661 = vld [vmem:[%s4629 + $0x7c] sm:$0xf]
    %v4662 = vld [vmem:[%s4629 + $0x80] sm:$0xf]
    %v4663 = vld [vmem:[%s4629 + $0x84] sm:$0xf]
    %v4664 = vld [vmem:[%s4629 + $0x88] sm:$0xf]
    %v4665 = vld [vmem:[%s4629 + $0x8c] sm:$0xf]
    %v4666 = vld [vmem:[%s4629 + $0x90] sm:$0xf]
    %v4667 = vld [vmem:[%s4629 + $0x94] sm:$0xf]
    %v4668 = vld [vmem:[%s4629 + $0x98] sm:$0xf]
    %v4669 = vld [vmem:[%s4629 + $0x9c] sm:$0xf]
    %v4670 = vld [vmem:[%s4629 + $0xa0] sm:$0xf]
    %v4671 = vld [vmem:[%s4629 + $0xa4] sm:$0xf]
    %v4672 = vld [vmem:[%s4629 + $0xa8] sm:$0xf]
    %v4673 = vld [vmem:[%s4629 + $0xac] sm:$0xf]
    %v4674 = vld [vmem:[%s4629 + $0xb0] sm:$0xf]
    %v4675 = vld [vmem:[%s4629 + $0xb4] sm:$0xf]
    %v4676 = vld [vmem:[%s4629 + $0xb8] sm:$0xf]
    %v4677 = vld [vmem:[%s4629 + $0xbc] sm:$0xf]
    %v4678 = vld [vmem:[%s4629 + $0xc0] sm:$0xf]
    %v4679 = vld [vmem:[%s4629 + $0xc4] sm:$0xf]
    %v4680 = vld [vmem:[%s4629 + $0xc8] sm:$0xf]
    %v4681 = vld [vmem:[%s4629 + $0xcc] sm:$0xf]
    %v4682 = vld [vmem:[%s4629 + $0xd0] sm:$0xf]
    %v4683 = vld [vmem:[%s4629 + $0xd4] sm:$0xf]
    %v4684 = vld [vmem:[%s4629 + $0xd8] sm:$0xf]
    %v4685 = vld [vmem:[%s4629 + $0xdc] sm:$0xf]
    %v4686 = vld [vmem:[%s4629 + $0xe0] sm:$0xf]
    %v4687 = vld [vmem:[%s4629 + $0xe4] sm:$0xf]
    %v4688 = vld [vmem:[%s4629 + $0xe8] sm:$0xf]
    %v4689 = vld [vmem:[%s4629 + $0xec] sm:$0xf]
    %v4690 = vld [vmem:[%s4629 + $0xf0] sm:$0xf]
    %v4691 = vld [vmem:[%s4629 + $0xf4] sm:$0xf]
    %v4692 = vld [vmem:[%s4629 + $0xf8] sm:$0xf]
    %v4693 = vld [vmem:[%s4629 + $0xfc] sm:$0xf]
    %v4758 = vunpack.c.l.b16 %v4630
    %v4759 = vunpack.c.l.b16 %v4631
    %v4760 = vunpack.c.l.b16 %v4632
    %v4761 = vunpack.c.l.b16 %v4633
    %v4762 = vunpack.c.l.b16 %v4634
    %v4763 = vunpack.c.l.b16 %v4635
    %v4764 = vunpack.c.l.b16 %v4636
    %v4765 = vunpack.c.l.b16 %v4637
    %v4766 = vunpack.c.l.b16 %v4638
    %v4767 = vunpack.c.l.b16 %v4639
    %v4768 = vunpack.c.l.b16 %v4640
    %v4769 = vunpack.c.l.b16 %v4641
    %v4770 = vunpack.c.l.b16 %v4642
    %v4771 = vunpack.c.l.b16 %v4643
    %v4772 = vunpack.c.l.b16 %v4644
    %v4773 = vunpack.c.l.b16 %v4645
    %v4774 = vunpack.c.l.b16 %v4646
    %v4775 = vunpack.c.l.b16 %v4647
    %v4776 = vunpack.c.l.b16 %v4648
    %v4777 = vunpack.c.l.b16 %v4649
    %v4778 = vunpack.c.l.b16 %v4650
    %v4779 = vunpack.c.l.b16 %v4651
    %v4780 = vunpack.c.l.b16 %v4652
    %v4781 = vunpack.c.l.b16 %v4653
    %v4782 = vunpack.c.l.b16 %v4654
    %v4783 = vunpack.c.l.b16 %v4655
    %v4784 = vunpack.c.l.b16 %v4656
    %v4785 = vunpack.c.l.b16 %v4657
    %v4786 = vunpack.c.l.b16 %v4658
    %v4787 = vunpack.c.l.b16 %v4659
    %v4788 = vunpack.c.l.b16 %v4660
    %v4789 = vunpack.c.l.b16 %v4661
    %v4790 = vunpack.c.l.b16 %v4662
    %v4791 = vunpack.c.l.b16 %v4663
    %v4792 = vunpack.c.l.b16 %v4664
    %v4793 = vunpack.c.l.b16 %v4665
    %v4794 = vunpack.c.l.b16 %v4666
    %v4795 = vunpack.c.l.b16 %v4667
    %v4796 = vunpack.c.l.b16 %v4668
    %v4797 = vunpack.c.l.b16 %v4669
    %v4798 = vunpack.c.l.b16 %v4670
    %v4799 = vunpack.c.l.b16 %v4671
    %v4800 = vunpack.c.l.b16 %v4672
    %v4801 = vunpack.c.l.b16 %v4673
    %v4802 = vunpack.c.l.b16 %v4674
    %v4803 = vunpack.c.l.b16 %v4675
    %v4804 = vunpack.c.l.b16 %v4676
    %v4805 = vunpack.c.l.b16 %v4677
    %v4806 = vunpack.c.l.b16 %v4678
    %v4807 = vunpack.c.l.b16 %v4679
    %v4808 = vunpack.c.l.b16 %v4680
    %v4809 = vunpack.c.l.b16 %v4681
    %v4810 = vunpack.c.l.b16 %v4682
    %v4811 = vunpack.c.l.b16 %v4683
    %v4812 = vunpack.c.l.b16 %v4684
    %v4813 = vunpack.c.l.b16 %v4685
    %v4814 = vunpack.c.l.b16 %v4686
    %v4815 = vunpack.c.l.b16 %v4687
    %v4816 = vunpack.c.l.b16 %v4688
    %v4817 = vunpack.c.l.b16 %v4689
    %v4818 = vunpack.c.l.b16 %v4690
    %v4819 = vunpack.c.l.b16 %v4691
    %v4820 = vunpack.c.l.b16 %v4692
    %v4821 = vunpack.c.l.b16 %v4693
    %v4822 = vpack.c.b16 %v4759, %v4758
    %v4823 = vpack.c.b16 %v4761, %v4760
    %v4824 = vpack.c.b16 %v4763, %v4762
    %v4825 = vpack.c.b16 %v4765, %v4764
    %v4826 = vpack.c.b16 %v4767, %v4766
    %v4827 = vpack.c.b16 %v4769, %v4768
    %v4828 = vpack.c.b16 %v4771, %v4770
    %v4829 = vpack.c.b16 %v4773, %v4772
    %v4830 = vpack.c.b16 %v4775, %v4774
    %v4831 = vpack.c.b16 %v4777, %v4776
    %v4832 = vpack.c.b16 %v4779, %v4778
    %v4833 = vpack.c.b16 %v4781, %v4780
    %v4834 = vpack.c.b16 %v4783, %v4782
    %v4835 = vpack.c.b16 %v4785, %v4784
    %v4836 = vpack.c.b16 %v4787, %v4786
    %v4837 = vpack.c.b16 %v4789, %v4788
    %v4838 = vpack.c.b16 %v4791, %v4790
    %v4839 = vpack.c.b16 %v4793, %v4792
    %v4840 = vpack.c.b16 %v4795, %v4794
    %v4841 = vpack.c.b16 %v4797, %v4796
    %v4842 = vpack.c.b16 %v4799, %v4798
    %v4843 = vpack.c.b16 %v4801, %v4800
    %v4844 = vpack.c.b16 %v4803, %v4802
    %v4845 = vpack.c.b16 %v4805, %v4804
    %v4846 = vpack.c.b16 %v4807, %v4806
    %v4847 = vpack.c.b16 %v4809, %v4808
    %v4848 = vpack.c.b16 %v4811, %v4810
    %v4849 = vpack.c.b16 %v4813, %v4812
    %v4850 = vpack.c.b16 %v4815, %v4814
    %v4851 = vpack.c.b16 %v4817, %v4816
    %v4852 = vpack.c.b16 %v4819, %v4818
    %v4853 = vpack.c.b16 %v4821, %v4820
    %4886 = vmatpush.bf16.msra.mxu0 %v4829
    %4887 = vmatpush.bf16.msra.mxu0 %v4828
    %4888 = vmatpush.bf16.msra.mxu0 %v4827
    %4889 = vmatpush.bf16.msra.mxu0 %v4826
    %4890 = vmatpush.bf16.msra.mxu0 %v4825
    %4891 = vmatpush.bf16.msra.mxu0 %v4824
    %4892 = vmatpush.bf16.msra.mxu0 %v4823
    %4893 = vmatpush.bf16.msra.mxu0 %v4822
    %4894 = vmatmul.bf16.gmra.mxu0 %v186
    %v4895 = vpop.f32.mrf.mxu0
    %v4896 = vadd.f32 0.0, %v4895
    %v4897 = vpop.f32.mrf.mxu0
    %v4898 = vadd.f32 0.0, %v4897
    %4899 = vmatmul.bf16.gmra.mxu0 %v190
    %v4900 = vpop.f32.mrf.mxu0
    %v4901 = vadd.f32 0.0, %v4900
    %v4902 = vpop.f32.mrf.mxu0
    %v4903 = vadd.f32 0.0, %v4902
    %4904 = vmatmul.bf16.gmra.mxu0 %v194
    %v4905 = vpop.f32.mrf.mxu0
    %v4906 = vadd.f32 0.0, %v4905
    %v4907 = vpop.f32.mrf.mxu0
    %v4908 = vadd.f32 0.0, %v4907
    %4909 = vmatmul.bf16.gmra.mxu0 %v198
    %v4910 = vpop.f32.mrf.mxu0
    %v4911 = vadd.f32 0.0, %v4910
    %v4912 = vpop.f32.mrf.mxu0
    %v4913 = vadd.f32 0.0, %v4912
    %4914 = vdwg.mxu0
    %4915 = vmatpush.bf16.msra.mxu0 %v4837
    %4916 = vmatpush.bf16.msra.mxu0 %v4836
    %4917 = vmatpush.bf16.msra.mxu0 %v4835
    %4918 = vmatpush.bf16.msra.mxu0 %v4834
    %4919 = vmatpush.bf16.msra.mxu0 %v4833
    %4920 = vmatpush.bf16.msra.mxu0 %v4832
    %4921 = vmatpush.bf16.msra.mxu0 %v4831
    %4922 = vmatpush.bf16.msra.mxu0 %v4830
    %4923 = vmatmul.bf16.gmra.mxu0 %v187
    %v4924 = vpop.f32.mrf.mxu0
    %v4925 = vadd.f32 %v4896, %v4924
    %v4926 = vpop.f32.mrf.mxu0
    %v4927 = vadd.f32 %v4898, %v4926
    %4928 = vmatmul.bf16.gmra.mxu0 %v191
    %v4929 = vpop.f32.mrf.mxu0
    %v4930 = vadd.f32 %v4901, %v4929
    %v4931 = vpop.f32.mrf.mxu0
    %v4932 = vadd.f32 %v4903, %v4931
    %4933 = vmatmul.bf16.gmra.mxu0 %v195
    %v4934 = vpop.f32.mrf.mxu0
    %v4935 = vadd.f32 %v4906, %v4934
    %v4936 = vpop.f32.mrf.mxu0
    %v4937 = vadd.f32 %v4908, %v4936
    %4938 = vmatmul.bf16.gmra.mxu0 %v199
    %v4939 = vpop.f32.mrf.mxu0
    %v4940 = vadd.f32 %v4911, %v4939
    %v4941 = vpop.f32.mrf.mxu0
    %v4942 = vadd.f32 %v4913, %v4941
    %4943 = vdwg.mxu0
    %4944 = vmatpush.bf16.msra.mxu0 %v4845
    %4945 = vmatpush.bf16.msra.mxu0 %v4844
    %4946 = vmatpush.bf16.msra.mxu0 %v4843
    %4947 = vmatpush.bf16.msra.mxu0 %v4842
    %4948 = vmatpush.bf16.msra.mxu0 %v4841
    %4949 = vmatpush.bf16.msra.mxu0 %v4840
    %4950 = vmatpush.bf16.msra.mxu0 %v4839
    %4951 = vmatpush.bf16.msra.mxu0 %v4838
    %4952 = vmatmul.bf16.gmra.mxu0 %v188
    %v4953 = vpop.f32.mrf.mxu0
    %v4954 = vadd.f32 %v4925, %v4953
    %v4955 = vpop.f32.mrf.mxu0
    %v4956 = vadd.f32 %v4927, %v4955
    %4957 = vmatmul.bf16.gmra.mxu0 %v192
    %v4958 = vpop.f32.mrf.mxu0
    %v4959 = vadd.f32 %v4930, %v4958
    %v4960 = vpop.f32.mrf.mxu0
    %v4961 = vadd.f32 %v4932, %v4960
    %4962 = vmatmul.bf16.gmra.mxu0 %v196
    %v4963 = vpop.f32.mrf.mxu0
    %v4964 = vadd.f32 %v4935, %v4963
    %v4965 = vpop.f32.mrf.mxu0
    %v4966 = vadd.f32 %v4937, %v4965
    %4967 = vmatmul.bf16.gmra.mxu0 %v200
    %v4968 = vpop.f32.mrf.mxu0
    %v4969 = vadd.f32 %v4940, %v4968
    %v4970 = vpop.f32.mrf.mxu0
    %v4971 = vadd.f32 %v4942, %v4970
    %4972 = vdwg.mxu0
    %4973 = vmatpush.bf16.msra.mxu0 %v4853
    %4974 = vmatpush.bf16.msra.mxu0 %v4852
    %4975 = vmatpush.bf16.msra.mxu0 %v4851
    %4976 = vmatpush.bf16.msra.mxu0 %v4850
    %4977 = vmatpush.bf16.msra.mxu0 %v4849
    %4978 = vmatpush.bf16.msra.mxu0 %v4848
    %4979 = vmatpush.bf16.msra.mxu0 %v4847
    %4980 = vmatpush.bf16.msra.mxu0 %v4846
    %4981 = vmatmul.bf16.gmra.mxu0 %v189
    %v4982 = vpop.f32.mrf.mxu0
    %v4983 = vadd.f32 %v4954, %v4982
    %v4984 = vpop.f32.mrf.mxu0
    %v4985 = vadd.f32 %v4956, %v4984
    %4986 = vmatmul.bf16.gmra.mxu0 %v193
    %v4987 = vpop.f32.mrf.mxu0
    %v4988 = vadd.f32 %v4959, %v4987
    %v4989 = vpop.f32.mrf.mxu0
    %v4990 = vadd.f32 %v4961, %v4989
    %4991 = vmatmul.bf16.gmra.mxu0 %v197
    %v4992 = vpop.f32.mrf.mxu0
    %v4993 = vadd.f32 %v4964, %v4992
    %v4994 = vpop.f32.mrf.mxu0
    %v4995 = vadd.f32 %v4966, %v4994
    %4996 = vmatmul.bf16.gmra.mxu0 %v201
    %v4997 = vpop.f32.mrf.mxu0
    %v4998 = vadd.f32 %v4969, %v4997
    %v4999 = vpop.f32.mrf.mxu0
    %v5000 = vadd.f32 %v4971, %v4999
    %5001 = vdwg.mxu0
    %s5002 = scalar_lea.vmem %s0, 3328
    %v5003 = vld [vmem:[%s5002] sm:$0xf]
    %v5004 = vld [vmem:[%s5002 + $0x4] sm:$0xf]
    %v5005 = vld [vmem:[%s5002 + $0x8] sm:$0xf]
    %v5006 = vld [vmem:[%s5002 + $0xc] sm:$0xf]
    %v5007 = vld [vmem:[%s5002 + $0x10] sm:$0xf]
    %v5008 = vld [vmem:[%s5002 + $0x14] sm:$0xf]
    %v5009 = vld [vmem:[%s5002 + $0x18] sm:$0xf]
    %v5010 = vld [vmem:[%s5002 + $0x1c] sm:$0xf]
    %v5011 = vld [vmem:[%s5002 + $0x20] sm:$0xf]
    %v5012 = vld [vmem:[%s5002 + $0x24] sm:$0xf]
    %v5013 = vld [vmem:[%s5002 + $0x28] sm:$0xf]
    %v5014 = vld [vmem:[%s5002 + $0x2c] sm:$0xf]
    %v5015 = vld [vmem:[%s5002 + $0x30] sm:$0xf]
    %v5016 = vld [vmem:[%s5002 + $0x34] sm:$0xf]
    %v5017 = vld [vmem:[%s5002 + $0x38] sm:$0xf]
    %v5018 = vld [vmem:[%s5002 + $0x3c] sm:$0xf]
    %v5019 = vld [vmem:[%s5002 + $0x40] sm:$0xf]
    %v5020 = vld [vmem:[%s5002 + $0x44] sm:$0xf]
    %v5021 = vld [vmem:[%s5002 + $0x48] sm:$0xf]
    %v5022 = vld [vmem:[%s5002 + $0x4c] sm:$0xf]
    %v5023 = vld [vmem:[%s5002 + $0x50] sm:$0xf]
    %v5024 = vld [vmem:[%s5002 + $0x54] sm:$0xf]
    %v5025 = vld [vmem:[%s5002 + $0x58] sm:$0xf]
    %v5026 = vld [vmem:[%s5002 + $0x5c] sm:$0xf]
    %v5027 = vld [vmem:[%s5002 + $0x60] sm:$0xf]
    %v5028 = vld [vmem:[%s5002 + $0x64] sm:$0xf]
    %v5029 = vld [vmem:[%s5002 + $0x68] sm:$0xf]
    %v5030 = vld [vmem:[%s5002 + $0x6c] sm:$0xf]
    %v5031 = vld [vmem:[%s5002 + $0x70] sm:$0xf]
    %v5032 = vld [vmem:[%s5002 + $0x74] sm:$0xf]
    %v5033 = vld [vmem:[%s5002 + $0x78] sm:$0xf]
    %v5034 = vld [vmem:[%s5002 + $0x7c] sm:$0xf]
    %v5035 = vld [vmem:[%s5002 + $0x80] sm:$0xf]
    %v5036 = vld [vmem:[%s5002 + $0x84] sm:$0xf]
    %v5037 = vld [vmem:[%s5002 + $0x88] sm:$0xf]
    %v5038 = vld [vmem:[%s5002 + $0x8c] sm:$0xf]
    %v5039 = vld [vmem:[%s5002 + $0x90] sm:$0xf]
    %v5040 = vld [vmem:[%s5002 + $0x94] sm:$0xf]
    %v5041 = vld [vmem:[%s5002 + $0x98] sm:$0xf]
    %v5042 = vld [vmem:[%s5002 + $0x9c] sm:$0xf]
    %v5043 = vld [vmem:[%s5002 + $0xa0] sm:$0xf]
    %v5044 = vld [vmem:[%s5002 + $0xa4] sm:$0xf]
    %v5045 = vld [vmem:[%s5002 + $0xa8] sm:$0xf]
    %v5046 = vld [vmem:[%s5002 + $0xac] sm:$0xf]
    %v5047 = vld [vmem:[%s5002 + $0xb0] sm:$0xf]
    %v5048 = vld [vmem:[%s5002 + $0xb4] sm:$0xf]
    %v5049 = vld [vmem:[%s5002 + $0xb8] sm:$0xf]
    %v5050 = vld [vmem:[%s5002 + $0xbc] sm:$0xf]
    %v5051 = vld [vmem:[%s5002 + $0xc0] sm:$0xf]
    %v5052 = vld [vmem:[%s5002 + $0xc4] sm:$0xf]
    %v5053 = vld [vmem:[%s5002 + $0xc8] sm:$0xf]
    %v5054 = vld [vmem:[%s5002 + $0xcc] sm:$0xf]
    %v5055 = vld [vmem:[%s5002 + $0xd0] sm:$0xf]
    %v5056 = vld [vmem:[%s5002 + $0xd4] sm:$0xf]
    %v5057 = vld [vmem:[%s5002 + $0xd8] sm:$0xf]
    %v5058 = vld [vmem:[%s5002 + $0xdc] sm:$0xf]
    %v5059 = vld [vmem:[%s5002 + $0xe0] sm:$0xf]
    %v5060 = vld [vmem:[%s5002 + $0xe4] sm:$0xf]
    %v5061 = vld [vmem:[%s5002 + $0xe8] sm:$0xf]
    %v5062 = vld [vmem:[%s5002 + $0xec] sm:$0xf]
    %v5063 = vld [vmem:[%s5002 + $0xf0] sm:$0xf]
    %v5064 = vld [vmem:[%s5002 + $0xf4] sm:$0xf]
    %v5065 = vld [vmem:[%s5002 + $0xf8] sm:$0xf]
    %v5066 = vld [vmem:[%s5002 + $0xfc] sm:$0xf]
    %v5131 = vunpack.c.l.b16 %v5003
    %v5132 = vunpack.c.l.b16 %v5004
    %v5133 = vunpack.c.l.b16 %v5005
    %v5134 = vunpack.c.l.b16 %v5006
    %v5135 = vunpack.c.l.b16 %v5007
    %v5136 = vunpack.c.l.b16 %v5008
    %v5137 = vunpack.c.l.b16 %v5009
    %v5138 = vunpack.c.l.b16 %v5010
    %v5139 = vunpack.c.l.b16 %v5011
    %v5140 = vunpack.c.l.b16 %v5012
    %v5141 = vunpack.c.l.b16 %v5013
    %v5142 = vunpack.c.l.b16 %v5014
    %v5143 = vunpack.c.l.b16 %v5015
    %v5144 = vunpack.c.l.b16 %v5016
    %v5145 = vunpack.c.l.b16 %v5017
    %v5146 = vunpack.c.l.b16 %v5018
    %v5147 = vunpack.c.l.b16 %v5019
    %v5148 = vunpack.c.l.b16 %v5020
    %v5149 = vunpack.c.l.b16 %v5021
    %v5150 = vunpack.c.l.b16 %v5022
    %v5151 = vunpack.c.l.b16 %v5023
    %v5152 = vunpack.c.l.b16 %v5024
    %v5153 = vunpack.c.l.b16 %v5025
    %v5154 = vunpack.c.l.b16 %v5026
    %v5155 = vunpack.c.l.b16 %v5027
    %v5156 = vunpack.c.l.b16 %v5028
    %v5157 = vunpack.c.l.b16 %v5029
    %v5158 = vunpack.c.l.b16 %v5030
    %v5159 = vunpack.c.l.b16 %v5031
    %v5160 = vunpack.c.l.b16 %v5032
    %v5161 = vunpack.c.l.b16 %v5033
    %v5162 = vunpack.c.l.b16 %v5034
    %v5163 = vunpack.c.l.b16 %v5035
    %v5164 = vunpack.c.l.b16 %v5036
    %v5165 = vunpack.c.l.b16 %v5037
    %v5166 = vunpack.c.l.b16 %v5038
    %v5167 = vunpack.c.l.b16 %v5039
    %v5168 = vunpack.c.l.b16 %v5040
    %v5169 = vunpack.c.l.b16 %v5041
    %v5170 = vunpack.c.l.b16 %v5042
    %v5171 = vunpack.c.l.b16 %v5043
    %v5172 = vunpack.c.l.b16 %v5044
    %v5173 = vunpack.c.l.b16 %v5045
    %v5174 = vunpack.c.l.b16 %v5046
    %v5175 = vunpack.c.l.b16 %v5047
    %v5176 = vunpack.c.l.b16 %v5048
    %v5177 = vunpack.c.l.b16 %v5049
    %v5178 = vunpack.c.l.b16 %v5050
    %v5179 = vunpack.c.l.b16 %v5051
    %v5180 = vunpack.c.l.b16 %v5052
    %v5181 = vunpack.c.l.b16 %v5053
    %v5182 = vunpack.c.l.b16 %v5054
    %v5183 = vunpack.c.l.b16 %v5055
    %v5184 = vunpack.c.l.b16 %v5056
    %v5185 = vunpack.c.l.b16 %v5057
    %v5186 = vunpack.c.l.b16 %v5058
    %v5187 = vunpack.c.l.b16 %v5059
    %v5188 = vunpack.c.l.b16 %v5060
    %v5189 = vunpack.c.l.b16 %v5061
    %v5190 = vunpack.c.l.b16 %v5062
    %v5191 = vunpack.c.l.b16 %v5063
    %v5192 = vunpack.c.l.b16 %v5064
    %v5193 = vunpack.c.l.b16 %v5065
    %v5194 = vunpack.c.l.b16 %v5066
    %v5195 = vpack.c.b16 %v5132, %v5131
    %v5196 = vpack.c.b16 %v5134, %v5133
    %v5197 = vpack.c.b16 %v5136, %v5135
    %v5198 = vpack.c.b16 %v5138, %v5137
    %v5199 = vpack.c.b16 %v5140, %v5139
    %v5200 = vpack.c.b16 %v5142, %v5141
    %v5201 = vpack.c.b16 %v5144, %v5143
    %v5202 = vpack.c.b16 %v5146, %v5145
    %v5203 = vpack.c.b16 %v5148, %v5147
    %v5204 = vpack.c.b16 %v5150, %v5149
    %v5205 = vpack.c.b16 %v5152, %v5151
    %v5206 = vpack.c.b16 %v5154, %v5153
    %v5207 = vpack.c.b16 %v5156, %v5155
    %v5208 = vpack.c.b16 %v5158, %v5157
    %v5209 = vpack.c.b16 %v5160, %v5159
    %v5210 = vpack.c.b16 %v5162, %v5161
    %v5211 = vpack.c.b16 %v5164, %v5163
    %v5212 = vpack.c.b16 %v5166, %v5165
    %v5213 = vpack.c.b16 %v5168, %v5167
    %v5214 = vpack.c.b16 %v5170, %v5169
    %v5215 = vpack.c.b16 %v5172, %v5171
    %v5216 = vpack.c.b16 %v5174, %v5173
    %v5217 = vpack.c.b16 %v5176, %v5175
    %v5218 = vpack.c.b16 %v5178, %v5177
    %v5219 = vpack.c.b16 %v5180, %v5179
    %v5220 = vpack.c.b16 %v5182, %v5181
    %v5221 = vpack.c.b16 %v5184, %v5183
    %v5222 = vpack.c.b16 %v5186, %v5185
    %v5223 = vpack.c.b16 %v5188, %v5187
    %v5224 = vpack.c.b16 %v5190, %v5189
    %v5225 = vpack.c.b16 %v5192, %v5191
    %v5226 = vpack.c.b16 %v5194, %v5193
    %5259 = vmatpush.bf16.msra.mxu0 %v5202
    %5260 = vmatpush.bf16.msra.mxu0 %v5201
    %5261 = vmatpush.bf16.msra.mxu0 %v5200
    %5262 = vmatpush.bf16.msra.mxu0 %v5199
    %5263 = vmatpush.bf16.msra.mxu0 %v5198
    %5264 = vmatpush.bf16.msra.mxu0 %v5197
    %5265 = vmatpush.bf16.msra.mxu0 %v5196
    %5266 = vmatpush.bf16.msra.mxu0 %v5195
    %5267 = vmatmul.bf16.gmra.mxu0 %v186
    %v5268 = vpop.f32.mrf.mxu0
    %v5269 = vadd.f32 0.0, %v5268
    %v5270 = vpop.f32.mrf.mxu0
    %v5271 = vadd.f32 0.0, %v5270
    %5272 = vmatmul.bf16.gmra.mxu0 %v190
    %v5273 = vpop.f32.mrf.mxu0
    %v5274 = vadd.f32 0.0, %v5273
    %v5275 = vpop.f32.mrf.mxu0
    %v5276 = vadd.f32 0.0, %v5275
    %5277 = vmatmul.bf16.gmra.mxu0 %v194
    %v5278 = vpop.f32.mrf.mxu0
    %v5279 = vadd.f32 0.0, %v5278
    %v5280 = vpop.f32.mrf.mxu0
    %v5281 = vadd.f32 0.0, %v5280
    %5282 = vmatmul.bf16.gmra.mxu0 %v198
    %v5283 = vpop.f32.mrf.mxu0
    %v5284 = vadd.f32 0.0, %v5283
    %v5285 = vpop.f32.mrf.mxu0
    %v5286 = vadd.f32 0.0, %v5285
    %5287 = vdwg.mxu0
    %5288 = vmatpush.bf16.msra.mxu0 %v5210
    %5289 = vmatpush.bf16.msra.mxu0 %v5209
    %5290 = vmatpush.bf16.msra.mxu0 %v5208
    %5291 = vmatpush.bf16.msra.mxu0 %v5207
    %5292 = vmatpush.bf16.msra.mxu0 %v5206
    %5293 = vmatpush.bf16.msra.mxu0 %v5205
    %5294 = vmatpush.bf16.msra.mxu0 %v5204
    %5295 = vmatpush.bf16.msra.mxu0 %v5203
    %5296 = vmatmul.bf16.gmra.mxu0 %v187
    %v5297 = vpop.f32.mrf.mxu0
    %v5298 = vadd.f32 %v5269, %v5297
    %v5299 = vpop.f32.mrf.mxu0
    %v5300 = vadd.f32 %v5271, %v5299
    %5301 = vmatmul.bf16.gmra.mxu0 %v191
    %v5302 = vpop.f32.mrf.mxu0
    %v5303 = vadd.f32 %v5274, %v5302
    %v5304 = vpop.f32.mrf.mxu0
    %v5305 = vadd.f32 %v5276, %v5304
    %5306 = vmatmul.bf16.gmra.mxu0 %v195
    %v5307 = vpop.f32.mrf.mxu0
    %v5308 = vadd.f32 %v5279, %v5307
    %v5309 = vpop.f32.mrf.mxu0
    %v5310 = vadd.f32 %v5281, %v5309
    %5311 = vmatmul.bf16.gmra.mxu0 %v199
    %v5312 = vpop.f32.mrf.mxu0
    %v5313 = vadd.f32 %v5284, %v5312
    %v5314 = vpop.f32.mrf.mxu0
    %v5315 = vadd.f32 %v5286, %v5314
    %5316 = vdwg.mxu0
    %5317 = vmatpush.bf16.msra.mxu0 %v5218
    %5318 = vmatpush.bf16.msra.mxu0 %v5217
    %5319 = vmatpush.bf16.msra.mxu0 %v5216
    %5320 = vmatpush.bf16.msra.mxu0 %v5215
    %5321 = vmatpush.bf16.msra.mxu0 %v5214
    %5322 = vmatpush.bf16.msra.mxu0 %v5213
    %5323 = vmatpush.bf16.msra.mxu0 %v5212
    %5324 = vmatpush.bf16.msra.mxu0 %v5211
    %5325 = vmatmul.bf16.gmra.mxu0 %v188
    %v5326 = vpop.f32.mrf.mxu0
    %v5327 = vadd.f32 %v5298, %v5326
    %v5328 = vpop.f32.mrf.mxu0
    %v5329 = vadd.f32 %v5300, %v5328
    %5330 = vmatmul.bf16.gmra.mxu0 %v192
    %v5331 = vpop.f32.mrf.mxu0
    %v5332 = vadd.f32 %v5303, %v5331
    %v5333 = vpop.f32.mrf.mxu0
    %v5334 = vadd.f32 %v5305, %v5333
    %5335 = vmatmul.bf16.gmra.mxu0 %v196
    %v5336 = vpop.f32.mrf.mxu0
    %v5337 = vadd.f32 %v5308, %v5336
    %v5338 = vpop.f32.mrf.mxu0
    %v5339 = vadd.f32 %v5310, %v5338
    %5340 = vmatmul.bf16.gmra.mxu0 %v200
    %v5341 = vpop.f32.mrf.mxu0
    %v5342 = vadd.f32 %v5313, %v5341
    %v5343 = vpop.f32.mrf.mxu0
    %v5344 = vadd.f32 %v5315, %v5343
    %5345 = vdwg.mxu0
    %5346 = vmatpush.bf16.msra.mxu0 %v5226
    %5347 = vmatpush.bf16.msra.mxu0 %v5225
    %5348 = vmatpush.bf16.msra.mxu0 %v5224
    %5349 = vmatpush.bf16.msra.mxu0 %v5223
    %5350 = vmatpush.bf16.msra.mxu0 %v5222
    %5351 = vmatpush.bf16.msra.mxu0 %v5221
    %5352 = vmatpush.bf16.msra.mxu0 %v5220
    %5353 = vmatpush.bf16.msra.mxu0 %v5219
    %5354 = vmatmul.bf16.gmra.mxu0 %v189
    %v5355 = vpop.f32.mrf.mxu0
    %v5356 = vadd.f32 %v5327, %v5355
    %v5357 = vpop.f32.mrf.mxu0
    %v5358 = vadd.f32 %v5329, %v5357
    %5359 = vmatmul.bf16.gmra.mxu0 %v193
    %v5360 = vpop.f32.mrf.mxu0
    %v5361 = vadd.f32 %v5332, %v5360
    %v5362 = vpop.f32.mrf.mxu0
    %v5363 = vadd.f32 %v5334, %v5362
    %5364 = vmatmul.bf16.gmra.mxu0 %v197
    %v5365 = vpop.f32.mrf.mxu0
    %v5366 = vadd.f32 %v5337, %v5365
    %v5367 = vpop.f32.mrf.mxu0
    %v5368 = vadd.f32 %v5339, %v5367
    %5369 = vmatmul.bf16.gmra.mxu0 %v201
    %v5370 = vpop.f32.mrf.mxu0
    %v5371 = vadd.f32 %v5342, %v5370
    %v5372 = vpop.f32.mrf.mxu0
    %v5373 = vadd.f32 %v5344, %v5372
    %5374 = vdwg.mxu0
    %s5375 = scalar_lea.vmem %s0, 3584
    %v5376 = vld [vmem:[%s5375] sm:$0xf]
    %v5377 = vld [vmem:[%s5375 + $0x4] sm:$0xf]
    %v5378 = vld [vmem:[%s5375 + $0x8] sm:$0xf]
    %v5379 = vld [vmem:[%s5375 + $0xc] sm:$0xf]
    %v5380 = vld [vmem:[%s5375 + $0x10] sm:$0xf]
    %v5381 = vld [vmem:[%s5375 + $0x14] sm:$0xf]
    %v5382 = vld [vmem:[%s5375 + $0x18] sm:$0xf]
    %v5383 = vld [vmem:[%s5375 + $0x1c] sm:$0xf]
    %v5384 = vld [vmem:[%s5375 + $0x20] sm:$0xf]
    %v5385 = vld [vmem:[%s5375 + $0x24] sm:$0xf]
    %v5386 = vld [vmem:[%s5375 + $0x28] sm:$0xf]
    %v5387 = vld [vmem:[%s5375 + $0x2c] sm:$0xf]
    %v5388 = vld [vmem:[%s5375 + $0x30] sm:$0xf]
    %v5389 = vld [vmem:[%s5375 + $0x34] sm:$0xf]
    %v5390 = vld [vmem:[%s5375 + $0x38] sm:$0xf]
    %v5391 = vld [vmem:[%s5375 + $0x3c] sm:$0xf]
    %v5392 = vld [vmem:[%s5375 + $0x40] sm:$0xf]
    %v5393 = vld [vmem:[%s5375 + $0x44] sm:$0xf]
    %v5394 = vld [vmem:[%s5375 + $0x48] sm:$0xf]
    %v5395 = vld [vmem:[%s5375 + $0x4c] sm:$0xf]
    %v5396 = vld [vmem:[%s5375 + $0x50] sm:$0xf]
    %v5397 = vld [vmem:[%s5375 + $0x54] sm:$0xf]
    %v5398 = vld [vmem:[%s5375 + $0x58] sm:$0xf]
    %v5399 = vld [vmem:[%s5375 + $0x5c] sm:$0xf]
    %v5400 = vld [vmem:[%s5375 + $0x60] sm:$0xf]
    %v5401 = vld [vmem:[%s5375 + $0x64] sm:$0xf]
    %v5402 = vld [vmem:[%s5375 + $0x68] sm:$0xf]
    %v5403 = vld [vmem:[%s5375 + $0x6c] sm:$0xf]
    %v5404 = vld [vmem:[%s5375 + $0x70] sm:$0xf]
    %v5405 = vld [vmem:[%s5375 + $0x74] sm:$0xf]
    %v5406 = vld [vmem:[%s5375 + $0x78] sm:$0xf]
    %v5407 = vld [vmem:[%s5375 + $0x7c] sm:$0xf]
    %v5408 = vld [vmem:[%s5375 + $0x80] sm:$0xf]
    %v5409 = vld [vmem:[%s5375 + $0x84] sm:$0xf]
    %v5410 = vld [vmem:[%s5375 + $0x88] sm:$0xf]
    %v5411 = vld [vmem:[%s5375 + $0x8c] sm:$0xf]
    %v5412 = vld [vmem:[%s5375 + $0x90] sm:$0xf]
    %v5413 = vld [vmem:[%s5375 + $0x94] sm:$0xf]
    %v5414 = vld [vmem:[%s5375 + $0x98] sm:$0xf]
    %v5415 = vld [vmem:[%s5375 + $0x9c] sm:$0xf]
    %v5416 = vld [vmem:[%s5375 + $0xa0] sm:$0xf]
    %v5417 = vld [vmem:[%s5375 + $0xa4] sm:$0xf]
    %v5418 = vld [vmem:[%s5375 + $0xa8] sm:$0xf]
    %v5419 = vld [vmem:[%s5375 + $0xac] sm:$0xf]
    %v5420 = vld [vmem:[%s5375 + $0xb0] sm:$0xf]
    %v5421 = vld [vmem:[%s5375 + $0xb4] sm:$0xf]
    %v5422 = vld [vmem:[%s5375 + $0xb8] sm:$0xf]
    %v5423 = vld [vmem:[%s5375 + $0xbc] sm:$0xf]
    %v5424 = vld [vmem:[%s5375 + $0xc0] sm:$0xf]
    %v5425 = vld [vmem:[%s5375 + $0xc4] sm:$0xf]
    %v5426 = vld [vmem:[%s5375 + $0xc8] sm:$0xf]
    %v5427 = vld [vmem:[%s5375 + $0xcc] sm:$0xf]
    %v5428 = vld [vmem:[%s5375 + $0xd0] sm:$0xf]
    %v5429 = vld [vmem:[%s5375 + $0xd4] sm:$0xf]
    %v5430 = vld [vmem:[%s5375 + $0xd8] sm:$0xf]
    %v5431 = vld [vmem:[%s5375 + $0xdc] sm:$0xf]
    %v5432 = vld [vmem:[%s5375 + $0xe0] sm:$0xf]
    %v5433 = vld [vmem:[%s5375 + $0xe4] sm:$0xf]
    %v5434 = vld [vmem:[%s5375 + $0xe8] sm:$0xf]
    %v5435 = vld [vmem:[%s5375 + $0xec] sm:$0xf]
    %v5436 = vld [vmem:[%s5375 + $0xf0] sm:$0xf]
    %v5437 = vld [vmem:[%s5375 + $0xf4] sm:$0xf]
    %v5438 = vld [vmem:[%s5375 + $0xf8] sm:$0xf]
    %v5439 = vld [vmem:[%s5375 + $0xfc] sm:$0xf]
    %v5504 = vunpack.c.l.b16 %v5376
    %v5505 = vunpack.c.l.b16 %v5377
    %v5506 = vunpack.c.l.b16 %v5378
    %v5507 = vunpack.c.l.b16 %v5379
    %v5508 = vunpack.c.l.b16 %v5380
    %v5509 = vunpack.c.l.b16 %v5381
    %v5510 = vunpack.c.l.b16 %v5382
    %v5511 = vunpack.c.l.b16 %v5383
    %v5512 = vunpack.c.l.b16 %v5384
    %v5513 = vunpack.c.l.b16 %v5385
    %v5514 = vunpack.c.l.b16 %v5386
    %v5515 = vunpack.c.l.b16 %v5387
    %v5516 = vunpack.c.l.b16 %v5388
    %v5517 = vunpack.c.l.b16 %v5389
    %v5518 = vunpack.c.l.b16 %v5390
    %v5519 = vunpack.c.l.b16 %v5391
    %v5520 = vunpack.c.l.b16 %v5392
    %v5521 = vunpack.c.l.b16 %v5393
    %v5522 = vunpack.c.l.b16 %v5394
    %v5523 = vunpack.c.l.b16 %v5395
    %v5524 = vunpack.c.l.b16 %v5396
    %v5525 = vunpack.c.l.b16 %v5397
    %v5526 = vunpack.c.l.b16 %v5398
    %v5527 = vunpack.c.l.b16 %v5399
    %v5528 = vunpack.c.l.b16 %v5400
    %v5529 = vunpack.c.l.b16 %v5401
    %v5530 = vunpack.c.l.b16 %v5402
    %v5531 = vunpack.c.l.b16 %v5403
    %v5532 = vunpack.c.l.b16 %v5404
    %v5533 = vunpack.c.l.b16 %v5405
    %v5534 = vunpack.c.l.b16 %v5406
    %v5535 = vunpack.c.l.b16 %v5407
    %v5536 = vunpack.c.l.b16 %v5408
    %v5537 = vunpack.c.l.b16 %v5409
    %v5538 = vunpack.c.l.b16 %v5410
    %v5539 = vunpack.c.l.b16 %v5411
    %v5540 = vunpack.c.l.b16 %v5412
    %v5541 = vunpack.c.l.b16 %v5413
    %v5542 = vunpack.c.l.b16 %v5414
    %v5543 = vunpack.c.l.b16 %v5415
    %v5544 = vunpack.c.l.b16 %v5416
    %v5545 = vunpack.c.l.b16 %v5417
    %v5546 = vunpack.c.l.b16 %v5418
    %v5547 = vunpack.c.l.b16 %v5419
    %v5548 = vunpack.c.l.b16 %v5420
    %v5549 = vunpack.c.l.b16 %v5421
    %v5550 = vunpack.c.l.b16 %v5422
    %v5551 = vunpack.c.l.b16 %v5423
    %v5552 = vunpack.c.l.b16 %v5424
    %v5553 = vunpack.c.l.b16 %v5425
    %v5554 = vunpack.c.l.b16 %v5426
    %v5555 = vunpack.c.l.b16 %v5427
    %v5556 = vunpack.c.l.b16 %v5428
    %v5557 = vunpack.c.l.b16 %v5429
    %v5558 = vunpack.c.l.b16 %v5430
    %v5559 = vunpack.c.l.b16 %v5431
    %v5560 = vunpack.c.l.b16 %v5432
    %v5561 = vunpack.c.l.b16 %v5433
    %v5562 = vunpack.c.l.b16 %v5434
    %v5563 = vunpack.c.l.b16 %v5435
    %v5564 = vunpack.c.l.b16 %v5436
    %v5565 = vunpack.c.l.b16 %v5437
    %v5566 = vunpack.c.l.b16 %v5438
    %v5567 = vunpack.c.l.b16 %v5439
    %v5568 = vpack.c.b16 %v5505, %v5504
    %v5569 = vpack.c.b16 %v5507, %v5506
    %v5570 = vpack.c.b16 %v5509, %v5508
    %v5571 = vpack.c.b16 %v5511, %v5510
    %v5572 = vpack.c.b16 %v5513, %v5512
    %v5573 = vpack.c.b16 %v5515, %v5514
    %v5574 = vpack.c.b16 %v5517, %v5516
    %v5575 = vpack.c.b16 %v5519, %v5518
    %v5576 = vpack.c.b16 %v5521, %v5520
    %v5577 = vpack.c.b16 %v5523, %v5522
    %v5578 = vpack.c.b16 %v5525, %v5524
    %v5579 = vpack.c.b16 %v5527, %v5526
    %v5580 = vpack.c.b16 %v5529, %v5528
    %v5581 = vpack.c.b16 %v5531, %v5530
    %v5582 = vpack.c.b16 %v5533, %v5532
    %v5583 = vpack.c.b16 %v5535, %v5534
    %v5584 = vpack.c.b16 %v5537, %v5536
    %v5585 = vpack.c.b16 %v5539, %v5538
    %v5586 = vpack.c.b16 %v5541, %v5540
    %v5587 = vpack.c.b16 %v5543, %v5542
    %v5588 = vpack.c.b16 %v5545, %v5544
    %v5589 = vpack.c.b16 %v5547, %v5546
    %v5590 = vpack.c.b16 %v5549, %v5548
    %v5591 = vpack.c.b16 %v5551, %v5550
    %v5592 = vpack.c.b16 %v5553, %v5552
    %v5593 = vpack.c.b16 %v5555, %v5554
    %v5594 = vpack.c.b16 %v5557, %v5556
    %v5595 = vpack.c.b16 %v5559, %v5558
    %v5596 = vpack.c.b16 %v5561, %v5560
    %v5597 = vpack.c.b16 %v5563, %v5562
    %v5598 = vpack.c.b16 %v5565, %v5564
    %v5599 = vpack.c.b16 %v5567, %v5566
    %5632 = vmatpush.bf16.msra.mxu0 %v5575
    %5633 = vmatpush.bf16.msra.mxu0 %v5574
    %5634 = vmatpush.bf16.msra.mxu0 %v5573
    %5635 = vmatpush.bf16.msra.mxu0 %v5572
    %5636 = vmatpush.bf16.msra.mxu0 %v5571
    %5637 = vmatpush.bf16.msra.mxu0 %v5570
    %5638 = vmatpush.bf16.msra.mxu0 %v5569
    %5639 = vmatpush.bf16.msra.mxu0 %v5568
    %5640 = vmatmul.bf16.gmra.mxu0 %v186
    %v5641 = vpop.f32.mrf.mxu0
    %v5642 = vadd.f32 0.0, %v5641
    %v5643 = vpop.f32.mrf.mxu0
    %v5644 = vadd.f32 0.0, %v5643
    %5645 = vmatmul.bf16.gmra.mxu0 %v190
    %v5646 = vpop.f32.mrf.mxu0
    %v5647 = vadd.f32 0.0, %v5646
    %v5648 = vpop.f32.mrf.mxu0
    %v5649 = vadd.f32 0.0, %v5648
    %5650 = vmatmul.bf16.gmra.mxu0 %v194
    %v5651 = vpop.f32.mrf.mxu0
    %v5652 = vadd.f32 0.0, %v5651
    %v5653 = vpop.f32.mrf.mxu0
    %v5654 = vadd.f32 0.0, %v5653
    %5655 = vmatmul.bf16.gmra.mxu0 %v198
    %v5656 = vpop.f32.mrf.mxu0
    %v5657 = vadd.f32 0.0, %v5656
    %v5658 = vpop.f32.mrf.mxu0
    %v5659 = vadd.f32 0.0, %v5658
    %5660 = vdwg.mxu0
    %5661 = vmatpush.bf16.msra.mxu0 %v5583
    %5662 = vmatpush.bf16.msra.mxu0 %v5582
    %5663 = vmatpush.bf16.msra.mxu0 %v5581
    %5664 = vmatpush.bf16.msra.mxu0 %v5580
    %5665 = vmatpush.bf16.msra.mxu0 %v5579
    %5666 = vmatpush.bf16.msra.mxu0 %v5578
    %5667 = vmatpush.bf16.msra.mxu0 %v5577
    %5668 = vmatpush.bf16.msra.mxu0 %v5576
    %5669 = vmatmul.bf16.gmra.mxu0 %v187
    %v5670 = vpop.f32.mrf.mxu0
    %v5671 = vadd.f32 %v5642, %v5670
    %v5672 = vpop.f32.mrf.mxu0
    %v5673 = vadd.f32 %v5644, %v5672
    %5674 = vmatmul.bf16.gmra.mxu0 %v191
    %v5675 = vpop.f32.mrf.mxu0
    %v5676 = vadd.f32 %v5647, %v5675
    %v5677 = vpop.f32.mrf.mxu0
    %v5678 = vadd.f32 %v5649, %v5677
    %5679 = vmatmul.bf16.gmra.mxu0 %v195
    %v5680 = vpop.f32.mrf.mxu0
    %v5681 = vadd.f32 %v5652, %v5680
    %v5682 = vpop.f32.mrf.mxu0
    %v5683 = vadd.f32 %v5654, %v5682
    %5684 = vmatmul.bf16.gmra.mxu0 %v199
    %v5685 = vpop.f32.mrf.mxu0
    %v5686 = vadd.f32 %v5657, %v5685
    %v5687 = vpop.f32.mrf.mxu0
    %v5688 = vadd.f32 %v5659, %v5687
    %5689 = vdwg.mxu0
    %5690 = vmatpush.bf16.msra.mxu0 %v5591
    %5691 = vmatpush.bf16.msra.mxu0 %v5590
    %5692 = vmatpush.bf16.msra.mxu0 %v5589
    %5693 = vmatpush.bf16.msra.mxu0 %v5588
    %5694 = vmatpush.bf16.msra.mxu0 %v5587
    %5695 = vmatpush.bf16.msra.mxu0 %v5586
    %5696 = vmatpush.bf16.msra.mxu0 %v5585
    %5697 = vmatpush.bf16.msra.mxu0 %v5584
    %5698 = vmatmul.bf16.gmra.mxu0 %v188
    %v5699 = vpop.f32.mrf.mxu0
    %v5700 = vadd.f32 %v5671, %v5699
    %v5701 = vpop.f32.mrf.mxu0
    %v5702 = vadd.f32 %v5673, %v5701
    %5703 = vmatmul.bf16.gmra.mxu0 %v192
    %v5704 = vpop.f32.mrf.mxu0
    %v5705 = vadd.f32 %v5676, %v5704
    %v5706 = vpop.f32.mrf.mxu0
    %v5707 = vadd.f32 %v5678, %v5706
    %5708 = vmatmul.bf16.gmra.mxu0 %v196
    %v5709 = vpop.f32.mrf.mxu0
    %v5710 = vadd.f32 %v5681, %v5709
    %v5711 = vpop.f32.mrf.mxu0
    %v5712 = vadd.f32 %v5683, %v5711
    %5713 = vmatmul.bf16.gmra.mxu0 %v200
    %v5714 = vpop.f32.mrf.mxu0
    %v5715 = vadd.f32 %v5686, %v5714
    %v5716 = vpop.f32.mrf.mxu0
    %v5717 = vadd.f32 %v5688, %v5716
    %5718 = vdwg.mxu0
    %5719 = vmatpush.bf16.msra.mxu0 %v5599
    %5720 = vmatpush.bf16.msra.mxu0 %v5598
    %5721 = vmatpush.bf16.msra.mxu0 %v5597
    %5722 = vmatpush.bf16.msra.mxu0 %v5596
    %5723 = vmatpush.bf16.msra.mxu0 %v5595
    %5724 = vmatpush.bf16.msra.mxu0 %v5594
    %5725 = vmatpush.bf16.msra.mxu0 %v5593
    %5726 = vmatpush.bf16.msra.mxu0 %v5592
    %5727 = vmatmul.bf16.gmra.mxu0 %v189
    %v5728 = vpop.f32.mrf.mxu0
    %v5729 = vadd.f32 %v5700, %v5728
    %v5730 = vpop.f32.mrf.mxu0
    %v5731 = vadd.f32 %v5702, %v5730
    %5732 = vmatmul.bf16.gmra.mxu0 %v193
    %v5733 = vpop.f32.mrf.mxu0
    %v5734 = vadd.f32 %v5705, %v5733
    %v5735 = vpop.f32.mrf.mxu0
    %v5736 = vadd.f32 %v5707, %v5735
    %5737 = vmatmul.bf16.gmra.mxu0 %v197
    %v5738 = vpop.f32.mrf.mxu0
    %v5739 = vadd.f32 %v5710, %v5738
    %v5740 = vpop.f32.mrf.mxu0
    %v5741 = vadd.f32 %v5712, %v5740
    %5742 = vmatmul.bf16.gmra.mxu0 %v201
    %v5743 = vpop.f32.mrf.mxu0
    %v5744 = vadd.f32 %v5715, %v5743
    %v5745 = vpop.f32.mrf.mxu0
    %v5746 = vadd.f32 %v5717, %v5745
    %5747 = vdwg.mxu0
    %s5748 = scalar_lea.vmem %s0, 3840
    %v5749 = vld [vmem:[%s5748] sm:$0xf]
    %v5750 = vld [vmem:[%s5748 + $0x4] sm:$0xf]
    %v5751 = vld [vmem:[%s5748 + $0x8] sm:$0xf]
    %v5752 = vld [vmem:[%s5748 + $0xc] sm:$0xf]
    %v5753 = vld [vmem:[%s5748 + $0x10] sm:$0xf]
    %v5754 = vld [vmem:[%s5748 + $0x14] sm:$0xf]
    %v5755 = vld [vmem:[%s5748 + $0x18] sm:$0xf]
    %v5756 = vld [vmem:[%s5748 + $0x1c] sm:$0xf]
    %v5757 = vld [vmem:[%s5748 + $0x20] sm:$0xf]
    %v5758 = vld [vmem:[%s5748 + $0x24] sm:$0xf]
    %v5759 = vld [vmem:[%s5748 + $0x28] sm:$0xf]
    %v5760 = vld [vmem:[%s5748 + $0x2c] sm:$0xf]
    %v5761 = vld [vmem:[%s5748 + $0x30] sm:$0xf]
    %v5762 = vld [vmem:[%s5748 + $0x34] sm:$0xf]
    %v5763 = vld [vmem:[%s5748 + $0x38] sm:$0xf]
    %v5764 = vld [vmem:[%s5748 + $0x3c] sm:$0xf]
    %v5765 = vld [vmem:[%s5748 + $0x40] sm:$0xf]
    %v5766 = vld [vmem:[%s5748 + $0x44] sm:$0xf]
    %v5767 = vld [vmem:[%s5748 + $0x48] sm:$0xf]
    %v5768 = vld [vmem:[%s5748 + $0x4c] sm:$0xf]
    %v5769 = vld [vmem:[%s5748 + $0x50] sm:$0xf]
    %v5770 = vld [vmem:[%s5748 + $0x54] sm:$0xf]
    %v5771 = vld [vmem:[%s5748 + $0x58] sm:$0xf]
    %v5772 = vld [vmem:[%s5748 + $0x5c] sm:$0xf]
    %v5773 = vld [vmem:[%s5748 + $0x60] sm:$0xf]
    %v5774 = vld [vmem:[%s5748 + $0x64] sm:$0xf]
    %v5775 = vld [vmem:[%s5748 + $0x68] sm:$0xf]
    %v5776 = vld [vmem:[%s5748 + $0x6c] sm:$0xf]
    %v5777 = vld [vmem:[%s5748 + $0x70] sm:$0xf]
    %v5778 = vld [vmem:[%s5748 + $0x74] sm:$0xf]
    %v5779 = vld [vmem:[%s5748 + $0x78] sm:$0xf]
    %v5780 = vld [vmem:[%s5748 + $0x7c] sm:$0xf]
    %v5781 = vld [vmem:[%s5748 + $0x80] sm:$0xf]
    %v5782 = vld [vmem:[%s5748 + $0x84] sm:$0xf]
    %v5783 = vld [vmem:[%s5748 + $0x88] sm:$0xf]
    %v5784 = vld [vmem:[%s5748 + $0x8c] sm:$0xf]
    %v5785 = vld [vmem:[%s5748 + $0x90] sm:$0xf]
    %v5786 = vld [vmem:[%s5748 + $0x94] sm:$0xf]
    %v5787 = vld [vmem:[%s5748 + $0x98] sm:$0xf]
    %v5788 = vld [vmem:[%s5748 + $0x9c] sm:$0xf]
    %v5789 = vld [vmem:[%s5748 + $0xa0] sm:$0xf]
    %v5790 = vld [vmem:[%s5748 + $0xa4] sm:$0xf]
    %v5791 = vld [vmem:[%s5748 + $0xa8] sm:$0xf]
    %v5792 = vld [vmem:[%s5748 + $0xac] sm:$0xf]
    %v5793 = vld [vmem:[%s5748 + $0xb0] sm:$0xf]
    %v5794 = vld [vmem:[%s5748 + $0xb4] sm:$0xf]
    %v5795 = vld [vmem:[%s5748 + $0xb8] sm:$0xf]
    %v5796 = vld [vmem:[%s5748 + $0xbc] sm:$0xf]
    %v5797 = vld [vmem:[%s5748 + $0xc0] sm:$0xf]
    %v5798 = vld [vmem:[%s5748 + $0xc4] sm:$0xf]
    %v5799 = vld [vmem:[%s5748 + $0xc8] sm:$0xf]
    %v5800 = vld [vmem:[%s5748 + $0xcc] sm:$0xf]
    %v5801 = vld [vmem:[%s5748 + $0xd0] sm:$0xf]
    %v5802 = vld [vmem:[%s5748 + $0xd4] sm:$0xf]
    %v5803 = vld [vmem:[%s5748 + $0xd8] sm:$0xf]
    %v5804 = vld [vmem:[%s5748 + $0xdc] sm:$0xf]
    %v5805 = vld [vmem:[%s5748 + $0xe0] sm:$0xf]
    %v5806 = vld [vmem:[%s5748 + $0xe4] sm:$0xf]
    %v5807 = vld [vmem:[%s5748 + $0xe8] sm:$0xf]
    %v5808 = vld [vmem:[%s5748 + $0xec] sm:$0xf]
    %v5809 = vld [vmem:[%s5748 + $0xf0] sm:$0xf]
    %v5810 = vld [vmem:[%s5748 + $0xf4] sm:$0xf]
    %v5811 = vld [vmem:[%s5748 + $0xf8] sm:$0xf]
    %v5812 = vld [vmem:[%s5748 + $0xfc] sm:$0xf]
    %v5877 = vunpack.c.l.b16 %v5749
    %v5878 = vunpack.c.l.b16 %v5750
    %v5879 = vunpack.c.l.b16 %v5751
    %v5880 = vunpack.c.l.b16 %v5752
    %v5881 = vunpack.c.l.b16 %v5753
    %v5882 = vunpack.c.l.b16 %v5754
    %v5883 = vunpack.c.l.b16 %v5755
    %v5884 = vunpack.c.l.b16 %v5756
    %v5885 = vunpack.c.l.b16 %v5757
    %v5886 = vunpack.c.l.b16 %v5758
    %v5887 = vunpack.c.l.b16 %v5759
    %v5888 = vunpack.c.l.b16 %v5760
    %v5889 = vunpack.c.l.b16 %v5761
    %v5890 = vunpack.c.l.b16 %v5762
    %v5891 = vunpack.c.l.b16 %v5763
    %v5892 = vunpack.c.l.b16 %v5764
    %v5893 = vunpack.c.l.b16 %v5765
    %v5894 = vunpack.c.l.b16 %v5766
    %v5895 = vunpack.c.l.b16 %v5767
    %v5896 = vunpack.c.l.b16 %v5768
    %v5897 = vunpack.c.l.b16 %v5769
    %v5898 = vunpack.c.l.b16 %v5770
    %v5899 = vunpack.c.l.b16 %v5771
    %v5900 = vunpack.c.l.b16 %v5772
    %v5901 = vunpack.c.l.b16 %v5773
    %v5902 = vunpack.c.l.b16 %v5774
    %v5903 = vunpack.c.l.b16 %v5775
    %v5904 = vunpack.c.l.b16 %v5776
    %v5905 = vunpack.c.l.b16 %v5777
    %v5906 = vunpack.c.l.b16 %v5778
    %v5907 = vunpack.c.l.b16 %v5779
    %v5908 = vunpack.c.l.b16 %v5780
    %v5909 = vunpack.c.l.b16 %v5781
    %v5910 = vunpack.c.l.b16 %v5782
    %v5911 = vunpack.c.l.b16 %v5783
    %v5912 = vunpack.c.l.b16 %v5784
    %v5913 = vunpack.c.l.b16 %v5785
    %v5914 = vunpack.c.l.b16 %v5786
    %v5915 = vunpack.c.l.b16 %v5787
    %v5916 = vunpack.c.l.b16 %v5788
    %v5917 = vunpack.c.l.b16 %v5789
    %v5918 = vunpack.c.l.b16 %v5790
    %v5919 = vunpack.c.l.b16 %v5791
    %v5920 = vunpack.c.l.b16 %v5792
    %v5921 = vunpack.c.l.b16 %v5793
    %v5922 = vunpack.c.l.b16 %v5794
    %v5923 = vunpack.c.l.b16 %v5795
    %v5924 = vunpack.c.l.b16 %v5796
    %v5925 = vunpack.c.l.b16 %v5797
    %v5926 = vunpack.c.l.b16 %v5798
    %v5927 = vunpack.c.l.b16 %v5799
    %v5928 = vunpack.c.l.b16 %v5800
    %v5929 = vunpack.c.l.b16 %v5801
    %v5930 = vunpack.c.l.b16 %v5802
    %v5931 = vunpack.c.l.b16 %v5803
    %v5932 = vunpack.c.l.b16 %v5804
    %v5933 = vunpack.c.l.b16 %v5805
    %v5934 = vunpack.c.l.b16 %v5806
    %v5935 = vunpack.c.l.b16 %v5807
    %v5936 = vunpack.c.l.b16 %v5808
    %v5937 = vunpack.c.l.b16 %v5809
    %v5938 = vunpack.c.l.b16 %v5810
    %v5939 = vunpack.c.l.b16 %v5811
    %v5940 = vunpack.c.l.b16 %v5812
    %v5941 = vpack.c.b16 %v5878, %v5877
    %v5942 = vpack.c.b16 %v5880, %v5879
    %v5943 = vpack.c.b16 %v5882, %v5881
    %v5944 = vpack.c.b16 %v5884, %v5883
    %v5945 = vpack.c.b16 %v5886, %v5885
    %v5946 = vpack.c.b16 %v5888, %v5887
    %v5947 = vpack.c.b16 %v5890, %v5889
    %v5948 = vpack.c.b16 %v5892, %v5891
    %v5949 = vpack.c.b16 %v5894, %v5893
    %v5950 = vpack.c.b16 %v5896, %v5895
    %v5951 = vpack.c.b16 %v5898, %v5897
    %v5952 = vpack.c.b16 %v5900, %v5899
    %v5953 = vpack.c.b16 %v5902, %v5901
    %v5954 = vpack.c.b16 %v5904, %v5903
    %v5955 = vpack.c.b16 %v5906, %v5905
    %v5956 = vpack.c.b16 %v5908, %v5907
    %v5957 = vpack.c.b16 %v5910, %v5909
    %v5958 = vpack.c.b16 %v5912, %v5911
    %v5959 = vpack.c.b16 %v5914, %v5913
    %v5960 = vpack.c.b16 %v5916, %v5915
    %v5961 = vpack.c.b16 %v5918, %v5917
    %v5962 = vpack.c.b16 %v5920, %v5919
    %v5963 = vpack.c.b16 %v5922, %v5921
    %v5964 = vpack.c.b16 %v5924, %v5923
    %v5965 = vpack.c.b16 %v5926, %v5925
    %v5966 = vpack.c.b16 %v5928, %v5927
    %v5967 = vpack.c.b16 %v5930, %v5929
    %v5968 = vpack.c.b16 %v5932, %v5931
    %v5969 = vpack.c.b16 %v5934, %v5933
    %v5970 = vpack.c.b16 %v5936, %v5935
    %v5971 = vpack.c.b16 %v5938, %v5937
    %v5972 = vpack.c.b16 %v5940, %v5939
    %6005 = vmatpush.bf16.msra.mxu0 %v5948
    %6006 = vmatpush.bf16.msra.mxu0 %v5947
    %6007 = vmatpush.bf16.msra.mxu0 %v5946
    %6008 = vmatpush.bf16.msra.mxu0 %v5945
    %6009 = vmatpush.bf16.msra.mxu0 %v5944
    %6010 = vmatpush.bf16.msra.mxu0 %v5943
    %6011 = vmatpush.bf16.msra.mxu0 %v5942
    %6012 = vmatpush.bf16.msra.mxu0 %v5941
    %6013 = vmatmul.bf16.gmra.mxu0 %v186
    %v6014 = vpop.f32.mrf.mxu0
    %v6015 = vadd.f32 0.0, %v6014
    %v6016 = vpop.f32.mrf.mxu0
    %v6017 = vadd.f32 0.0, %v6016
    %6018 = vmatmul.bf16.gmra.mxu0 %v190
    %v6019 = vpop.f32.mrf.mxu0
    %v6020 = vadd.f32 0.0, %v6019
    %v6021 = vpop.f32.mrf.mxu0
    %v6022 = vadd.f32 0.0, %v6021
    %6023 = vmatmul.bf16.gmra.mxu0 %v194
    %v6024 = vpop.f32.mrf.mxu0
    %v6025 = vadd.f32 0.0, %v6024
    %v6026 = vpop.f32.mrf.mxu0
    %v6027 = vadd.f32 0.0, %v6026
    %6028 = vmatmul.bf16.gmra.mxu0 %v198
    %v6029 = vpop.f32.mrf.mxu0
    %v6030 = vadd.f32 0.0, %v6029
    %v6031 = vpop.f32.mrf.mxu0
    %v6032 = vadd.f32 0.0, %v6031
    %6033 = vdwg.mxu0
    %6034 = vmatpush.bf16.msra.mxu0 %v5956
    %6035 = vmatpush.bf16.msra.mxu0 %v5955
    %6036 = vmatpush.bf16.msra.mxu0 %v5954
    %6037 = vmatpush.bf16.msra.mxu0 %v5953
    %6038 = vmatpush.bf16.msra.mxu0 %v5952
    %6039 = vmatpush.bf16.msra.mxu0 %v5951
    %6040 = vmatpush.bf16.msra.mxu0 %v5950
    %6041 = vmatpush.bf16.msra.mxu0 %v5949
    %6042 = vmatmul.bf16.gmra.mxu0 %v187
    %v6043 = vpop.f32.mrf.mxu0
    %v6044 = vadd.f32 %v6015, %v6043
    %v6045 = vpop.f32.mrf.mxu0
    %v6046 = vadd.f32 %v6017, %v6045
    %6047 = vmatmul.bf16.gmra.mxu0 %v191
    %v6048 = vpop.f32.mrf.mxu0
    %v6049 = vadd.f32 %v6020, %v6048
    %v6050 = vpop.f32.mrf.mxu0
    %v6051 = vadd.f32 %v6022, %v6050
    %6052 = vmatmul.bf16.gmra.mxu0 %v195
    %v6053 = vpop.f32.mrf.mxu0
    %v6054 = vadd.f32 %v6025, %v6053
    %v6055 = vpop.f32.mrf.mxu0
    %v6056 = vadd.f32 %v6027, %v6055
    %6057 = vmatmul.bf16.gmra.mxu0 %v199
    %v6058 = vpop.f32.mrf.mxu0
    %v6059 = vadd.f32 %v6030, %v6058
    %v6060 = vpop.f32.mrf.mxu0
    %v6061 = vadd.f32 %v6032, %v6060
    %6062 = vdwg.mxu0
    %6063 = vmatpush.bf16.msra.mxu0 %v5964
    %6064 = vmatpush.bf16.msra.mxu0 %v5963
    %6065 = vmatpush.bf16.msra.mxu0 %v5962
    %6066 = vmatpush.bf16.msra.mxu0 %v5961
    %6067 = vmatpush.bf16.msra.mxu0 %v5960
    %6068 = vmatpush.bf16.msra.mxu0 %v5959
    %6069 = vmatpush.bf16.msra.mxu0 %v5958
    %6070 = vmatpush.bf16.msra.mxu0 %v5957
    %6071 = vmatmul.bf16.gmra.mxu0 %v188
    %v6072 = vpop.f32.mrf.mxu0
    %v6073 = vadd.f32 %v6044, %v6072
    %v6074 = vpop.f32.mrf.mxu0
    %v6075 = vadd.f32 %v6046, %v6074
    %6076 = vmatmul.bf16.gmra.mxu0 %v192
    %v6077 = vpop.f32.mrf.mxu0
    %v6078 = vadd.f32 %v6049, %v6077
    %v6079 = vpop.f32.mrf.mxu0
    %v6080 = vadd.f32 %v6051, %v6079
    %6081 = vmatmul.bf16.gmra.mxu0 %v196
    %v6082 = vpop.f32.mrf.mxu0
    %v6083 = vadd.f32 %v6054, %v6082
    %v6084 = vpop.f32.mrf.mxu0
    %v6085 = vadd.f32 %v6056, %v6084
    %6086 = vmatmul.bf16.gmra.mxu0 %v200
    %v6087 = vpop.f32.mrf.mxu0
    %v6088 = vadd.f32 %v6059, %v6087
    %v6089 = vpop.f32.mrf.mxu0
    %v6090 = vadd.f32 %v6061, %v6089
    %6091 = vdwg.mxu0
    %6092 = vmatpush.bf16.msra.mxu0 %v5972
    %6093 = vmatpush.bf16.msra.mxu0 %v5971
    %6094 = vmatpush.bf16.msra.mxu0 %v5970
    %6095 = vmatpush.bf16.msra.mxu0 %v5969
    %6096 = vmatpush.bf16.msra.mxu0 %v5968
    %6097 = vmatpush.bf16.msra.mxu0 %v5967
    %6098 = vmatpush.bf16.msra.mxu0 %v5966
    %6099 = vmatpush.bf16.msra.mxu0 %v5965
    %6100 = vmatmul.bf16.gmra.mxu0 %v189
    %v6101 = vpop.f32.mrf.mxu0
    %v6102 = vadd.f32 %v6073, %v6101
    %v6103 = vpop.f32.mrf.mxu0
    %v6104 = vadd.f32 %v6075, %v6103
    %6105 = vmatmul.bf16.gmra.mxu0 %v193
    %v6106 = vpop.f32.mrf.mxu0
    %v6107 = vadd.f32 %v6078, %v6106
    %v6108 = vpop.f32.mrf.mxu0
    %v6109 = vadd.f32 %v6080, %v6108
    %6110 = vmatmul.bf16.gmra.mxu0 %v197
    %v6111 = vpop.f32.mrf.mxu0
    %v6112 = vadd.f32 %v6083, %v6111
    %v6113 = vpop.f32.mrf.mxu0
    %v6114 = vadd.f32 %v6085, %v6113
    %6115 = vmatmul.bf16.gmra.mxu0 %v201
    %v6116 = vpop.f32.mrf.mxu0
    %v6117 = vadd.f32 %v6088, %v6116
    %v6118 = vpop.f32.mrf.mxu0
    %v6119 = vadd.f32 %v6090, %v6118
    %6120 = vdwg.mxu0
    %vm6121 = vcmask 15360
    %v6122 = vsel %vm6121, %v507, 0.0
    %6123 = vadd.xlane.f32.xlu0 %v6122
    %v6124 = vpop.xlane.xlu0 %6123
    %v6125 = vsel %vm6121, %v509, 0.0
    %6126 = vadd.xlane.f32.xlu0 %v6125
    %v6127 = vpop.xlane.xlu0 %6126
    %v6128 = vsel %vm6121, %v512, 0.0
    %6129 = vadd.xlane.f32.xlu0 %v6128
    %v6130 = vpop.xlane.xlu0 %6129
    %v6131 = vsel %vm6121, %v514, 0.0
    %6132 = vadd.xlane.f32.xlu0 %v6131
    %v6133 = vpop.xlane.xlu0 %6132
    %v6134 = vsel %vm6121, %v517, 0.0
    %6135 = vadd.xlane.f32.xlu0 %v6134
    %v6136 = vpop.xlane.xlu0 %6135
    %v6137 = vsel %vm6121, %v519, 0.0
    %6138 = vadd.xlane.f32.xlu0 %v6137
    %v6139 = vpop.xlane.xlu0 %6138
    %v6140 = vsel %vm6121, %v522, 0.0
    %6141 = vadd.xlane.f32.xlu0 %v6140
    %v6142 = vpop.xlane.xlu0 %6141
    %v6143 = vsel %vm6121, %v524, 0.0
    %6144 = vadd.xlane.f32.xlu0 %v6143
    %v6145 = vpop.xlane.xlu0 %6144
    %v6146 = vadd.f32 %v6124, 0.0
    %v6147 = vadd.f32 %v6127, 0.0
    %v6148 = vadd.f32 %v6130, 0.0
    %v6149 = vadd.f32 %v6133, 0.0
    %v6150 = vadd.f32 %v6136, 0.0
    %v6151 = vadd.f32 %v6139, 0.0
    %v6152 = vadd.f32 %v6142, 0.0
    %v6153 = vadd.f32 %v6145, 0.0
    %v6154 = vsel %vm6121, %v880, 0.0
    %6155 = vadd.xlane.f32.xlu0 %v6154
    %v6156 = vpop.xlane.xlu0 %6155
    %v6157 = vsel %vm6121, %v882, 0.0
    %6158 = vadd.xlane.f32.xlu0 %v6157
    %v6159 = vpop.xlane.xlu0 %6158
    %v6160 = vsel %vm6121, %v885, 0.0
    %6161 = vadd.xlane.f32.xlu0 %v6160
    %v6162 = vpop.xlane.xlu0 %6161
    %v6163 = vsel %vm6121, %v887, 0.0
    %6164 = vadd.xlane.f32.xlu0 %v6163
    %v6165 = vpop.xlane.xlu0 %6164
    %v6166 = vsel %vm6121, %v890, 0.0
    %6167 = vadd.xlane.f32.xlu0 %v6166
    %v6168 = vpop.xlane.xlu0 %6167
    %v6169 = vsel %vm6121, %v892, 0.0
    %6170 = vadd.xlane.f32.xlu0 %v6169
    %v6171 = vpop.xlane.xlu0 %6170
    %v6172 = vsel %vm6121, %v895, 0.0
    %6173 = vadd.xlane.f32.xlu0 %v6172
    %v6174 = vpop.xlane.xlu0 %6173
    %v6175 = vsel %vm6121, %v897, 0.0
    %6176 = vadd.xlane.f32.xlu0 %v6175
    %v6177 = vpop.xlane.xlu0 %6176
    %v6178 = vadd.f32 %v6146, %v6156
    %v6179 = vadd.f32 %v6147, %v6159
    %v6180 = vadd.f32 %v6148, %v6162
    %v6181 = vadd.f32 %v6149, %v6165
    %v6182 = vadd.f32 %v6150, %v6168
    %v6183 = vadd.f32 %v6151, %v6171
    %v6184 = vadd.f32 %v6152, %v6174
    %v6185 = vadd.f32 %v6153, %v6177
    %v6186 = vsel %vm6121, %v1253, 0.0
    %6187 = vadd.xlane.f32.xlu0 %v6186
    %v6188 = vpop.xlane.xlu0 %6187
    %v6189 = vsel %vm6121, %v1255, 0.0
    %6190 = vadd.xlane.f32.xlu0 %v6189
    %v6191 = vpop.xlane.xlu0 %6190
    %v6192 = vsel %vm6121, %v1258, 0.0
    %6193 = vadd.xlane.f32.xlu0 %v6192
    %v6194 = vpop.xlane.xlu0 %6193
    %v6195 = vsel %vm6121, %v1260, 0.0
    %6196 = vadd.xlane.f32.xlu0 %v6195
    %v6197 = vpop.xlane.xlu0 %6196
    %v6198 = vsel %vm6121, %v1263, 0.0
    %6199 = vadd.xlane.f32.xlu0 %v6198
    %v6200 = vpop.xlane.xlu0 %6199
    %v6201 = vsel %vm6121, %v1265, 0.0
    %6202 = vadd.xlane.f32.xlu0 %v6201
    %v6203 = vpop.xlane.xlu0 %6202
    %v6204 = vsel %vm6121, %v1268, 0.0
    %6205 = vadd.xlane.f32.xlu0 %v6204
    %v6206 = vpop.xlane.xlu0 %6205
    %v6207 = vsel %vm6121, %v1270, 0.0
    %6208 = vadd.xlane.f32.xlu0 %v6207
    %v6209 = vpop.xlane.xlu0 %6208
    %v6210 = vadd.f32 %v6178, %v6188
    %v6211 = vadd.f32 %v6179, %v6191
    %v6212 = vadd.f32 %v6180, %v6194
    %v6213 = vadd.f32 %v6181, %v6197
    %v6214 = vadd.f32 %v6182, %v6200
    %v6215 = vadd.f32 %v6183, %v6203
    %v6216 = vadd.f32 %v6184, %v6206
    %v6217 = vadd.f32 %v6185, %v6209
    %v6218 = vsel %vm6121, %v1626, 0.0
    %6219 = vadd.xlane.f32.xlu0 %v6218
    %v6220 = vpop.xlane.xlu0 %6219
    %v6221 = vsel %vm6121, %v1628, 0.0
    %6222 = vadd.xlane.f32.xlu0 %v6221
    %v6223 = vpop.xlane.xlu0 %6222
    %v6224 = vsel %vm6121, %v1631, 0.0
    %6225 = vadd.xlane.f32.xlu0 %v6224
    %v6226 = vpop.xlane.xlu0 %6225
    %v6227 = vsel %vm6121, %v1633, 0.0
    %6228 = vadd.xlane.f32.xlu0 %v6227
    %v6229 = vpop.xlane.xlu0 %6228
    %v6230 = vsel %vm6121, %v1636, 0.0
    %6231 = vadd.xlane.f32.xlu0 %v6230
    %v6232 = vpop.xlane.xlu0 %6231
    %v6233 = vsel %vm6121, %v1638, 0.0
    %6234 = vadd.xlane.f32.xlu0 %v6233
    %v6235 = vpop.xlane.xlu0 %6234
    %v6236 = vsel %vm6121, %v1641, 0.0
    %6237 = vadd.xlane.f32.xlu0 %v6236
    %v6238 = vpop.xlane.xlu0 %6237
    %v6239 = vsel %vm6121, %v1643, 0.0
    %6240 = vadd.xlane.f32.xlu0 %v6239
    %v6241 = vpop.xlane.xlu0 %6240
    %v6242 = vadd.f32 %v6210, %v6220
    %v6243 = vadd.f32 %v6211, %v6223
    %v6244 = vadd.f32 %v6212, %v6226
    %v6245 = vadd.f32 %v6213, %v6229
    %v6246 = vadd.f32 %v6214, %v6232
    %v6247 = vadd.f32 %v6215, %v6235
    %v6248 = vadd.f32 %v6216, %v6238
    %v6249 = vadd.f32 %v6217, %v6241
    %v6250 = vsel %vm6121, %v1999, 0.0
    %6251 = vadd.xlane.f32.xlu0 %v6250
    %v6252 = vpop.xlane.xlu0 %6251
    %v6253 = vsel %vm6121, %v2001, 0.0
    %6254 = vadd.xlane.f32.xlu0 %v6253
    %v6255 = vpop.xlane.xlu0 %6254
    %v6256 = vsel %vm6121, %v2004, 0.0
    %6257 = vadd.xlane.f32.xlu0 %v6256
    %v6258 = vpop.xlane.xlu0 %6257
    %v6259 = vsel %vm6121, %v2006, 0.0
    %6260 = vadd.xlane.f32.xlu0 %v6259
    %v6261 = vpop.xlane.xlu0 %6260
    %v6262 = vsel %vm6121, %v2009, 0.0
    %6263 = vadd.xlane.f32.xlu0 %v6262
    %v6264 = vpop.xlane.xlu0 %6263
    %v6265 = vsel %vm6121, %v2011, 0.0
    %6266 = vadd.xlane.f32.xlu0 %v6265
    %v6267 = vpop.xlane.xlu0 %6266
    %v6268 = vsel %vm6121, %v2014, 0.0
    %6269 = vadd.xlane.f32.xlu0 %v6268
    %v6270 = vpop.xlane.xlu0 %6269
    %v6271 = vsel %vm6121, %v2016, 0.0
    %6272 = vadd.xlane.f32.xlu0 %v6271
    %v6273 = vpop.xlane.xlu0 %6272
    %v6274 = vadd.f32 %v6242, %v6252
    %v6275 = vadd.f32 %v6243, %v6255
    %v6276 = vadd.f32 %v6244, %v6258
    %v6277 = vadd.f32 %v6245, %v6261
    %v6278 = vadd.f32 %v6246, %v6264
    %v6279 = vadd.f32 %v6247, %v6267
    %v6280 = vadd.f32 %v6248, %v6270
    %v6281 = vadd.f32 %v6249, %v6273
    %v6282 = vsel %vm6121, %v2372, 0.0
    %6283 = vadd.xlane.f32.xlu0 %v6282
    %v6284 = vpop.xlane.xlu0 %6283
    %v6285 = vsel %vm6121, %v2374, 0.0
    %6286 = vadd.xlane.f32.xlu0 %v6285
    %v6287 = vpop.xlane.xlu0 %6286
    %v6288 = vsel %vm6121, %v2377, 0.0
    %6289 = vadd.xlane.f32.xlu0 %v6288
    %v6290 = vpop.xlane.xlu0 %6289
    %v6291 = vsel %vm6121, %v2379, 0.0
    %6292 = vadd.xlane.f32.xlu0 %v6291
    %v6293 = vpop.xlane.xlu0 %6292
    %v6294 = vsel %vm6121, %v2382, 0.0
    %6295 = vadd.xlane.f32.xlu0 %v6294
    %v6296 = vpop.xlane.xlu0 %6295
    %v6297 = vsel %vm6121, %v2384, 0.0
    %6298 = vadd.xlane.f32.xlu0 %v6297
    %v6299 = vpop.xlane.xlu0 %6298
    %v6300 = vsel %vm6121, %v2387, 0.0
    %6301 = vadd.xlane.f32.xlu0 %v6300
    %v6302 = vpop.xlane.xlu0 %6301
    %v6303 = vsel %vm6121, %v2389, 0.0
    %6304 = vadd.xlane.f32.xlu0 %v6303
    %v6305 = vpop.xlane.xlu0 %6304
    %v6306 = vadd.f32 %v6274, %v6284
    %v6307 = vadd.f32 %v6275, %v6287
    %v6308 = vadd.f32 %v6276, %v6290
    %v6309 = vadd.f32 %v6277, %v6293
    %v6310 = vadd.f32 %v6278, %v6296
    %v6311 = vadd.f32 %v6279, %v6299
    %v6312 = vadd.f32 %v6280, %v6302
    %v6313 = vadd.f32 %v6281, %v6305
    %v6314 = vsel %vm6121, %v2745, 0.0
    %6315 = vadd.xlane.f32.xlu0 %v6314
    %v6316 = vpop.xlane.xlu0 %6315
    %v6317 = vsel %vm6121, %v2747, 0.0
    %6318 = vadd.xlane.f32.xlu0 %v6317
    %v6319 = vpop.xlane.xlu0 %6318
    %v6320 = vsel %vm6121, %v2750, 0.0
    %6321 = vadd.xlane.f32.xlu0 %v6320
    %v6322 = vpop.xlane.xlu0 %6321
    %v6323 = vsel %vm6121, %v2752, 0.0
    %6324 = vadd.xlane.f32.xlu0 %v6323
    %v6325 = vpop.xlane.xlu0 %6324
    %v6326 = vsel %vm6121, %v2755, 0.0
    %6327 = vadd.xlane.f32.xlu0 %v6326
    %v6328 = vpop.xlane.xlu0 %6327
    %v6329 = vsel %vm6121, %v2757, 0.0
    %6330 = vadd.xlane.f32.xlu0 %v6329
    %v6331 = vpop.xlane.xlu0 %6330
    %v6332 = vsel %vm6121, %v2760, 0.0
    %6333 = vadd.xlane.f32.xlu0 %v6332
    %v6334 = vpop.xlane.xlu0 %6333
    %v6335 = vsel %vm6121, %v2762, 0.0
    %6336 = vadd.xlane.f32.xlu0 %v6335
    %v6337 = vpop.xlane.xlu0 %6336
    %v6338 = vadd.f32 %v6306, %v6316
    %v6339 = vadd.f32 %v6307, %v6319
    %v6340 = vadd.f32 %v6308, %v6322
    %v6341 = vadd.f32 %v6309, %v6325
    %v6342 = vadd.f32 %v6310, %v6328
    %v6343 = vadd.f32 %v6311, %v6331
    %v6344 = vadd.f32 %v6312, %v6334
    %v6345 = vadd.f32 %v6313, %v6337
    %v6346 = vsel %vm6121, %v3118, 0.0
    %6347 = vadd.xlane.f32.xlu0 %v6346
    %v6348 = vpop.xlane.xlu0 %6347
    %v6349 = vsel %vm6121, %v3120, 0.0
    %6350 = vadd.xlane.f32.xlu0 %v6349
    %v6351 = vpop.xlane.xlu0 %6350
    %v6352 = vsel %vm6121, %v3123, 0.0
    %6353 = vadd.xlane.f32.xlu0 %v6352
    %v6354 = vpop.xlane.xlu0 %6353
    %v6355 = vsel %vm6121, %v3125, 0.0
    %6356 = vadd.xlane.f32.xlu0 %v6355
    %v6357 = vpop.xlane.xlu0 %6356
    %v6358 = vsel %vm6121, %v3128, 0.0
    %6359 = vadd.xlane.f32.xlu0 %v6358
    %v6360 = vpop.xlane.xlu0 %6359
    %v6361 = vsel %vm6121, %v3130, 0.0
    %6362 = vadd.xlane.f32.xlu0 %v6361
    %v6363 = vpop.xlane.xlu0 %6362
    %v6364 = vsel %vm6121, %v3133, 0.0
    %6365 = vadd.xlane.f32.xlu0 %v6364
    %v6366 = vpop.xlane.xlu0 %6365
    %v6367 = vsel %vm6121, %v3135, 0.0
    %6368 = vadd.xlane.f32.xlu0 %v6367
    %v6369 = vpop.xlane.xlu0 %6368
    %v6370 = vadd.f32 %v6338, %v6348
    %v6371 = vadd.f32 %v6339, %v6351
    %v6372 = vadd.f32 %v6340, %v6354
    %v6373 = vadd.f32 %v6341, %v6357
    %v6374 = vadd.f32 %v6342, %v6360
    %v6375 = vadd.f32 %v6343, %v6363
    %v6376 = vadd.f32 %v6344, %v6366
    %v6377 = vadd.f32 %v6345, %v6369
    %v6378 = vsel %vm6121, %v3491, 0.0
    %6379 = vadd.xlane.f32.xlu0 %v6378
    %v6380 = vpop.xlane.xlu0 %6379
    %v6381 = vsel %vm6121, %v3493, 0.0
    %6382 = vadd.xlane.f32.xlu0 %v6381
    %v6383 = vpop.xlane.xlu0 %6382
    %v6384 = vsel %vm6121, %v3496, 0.0
    %6385 = vadd.xlane.f32.xlu0 %v6384
    %v6386 = vpop.xlane.xlu0 %6385
    %v6387 = vsel %vm6121, %v3498, 0.0
    %6388 = vadd.xlane.f32.xlu0 %v6387
    %v6389 = vpop.xlane.xlu0 %6388
    %v6390 = vsel %vm6121, %v3501, 0.0
    %6391 = vadd.xlane.f32.xlu0 %v6390
    %v6392 = vpop.xlane.xlu0 %6391
    %v6393 = vsel %vm6121, %v3503, 0.0
    %6394 = vadd.xlane.f32.xlu0 %v6393
    %v6395 = vpop.xlane.xlu0 %6394
    %v6396 = vsel %vm6121, %v3506, 0.0
    %6397 = vadd.xlane.f32.xlu0 %v6396
    %v6398 = vpop.xlane.xlu0 %6397
    %v6399 = vsel %vm6121, %v3508, 0.0
    %6400 = vadd.xlane.f32.xlu0 %v6399
    %v6401 = vpop.xlane.xlu0 %6400
    %v6402 = vadd.f32 %v6370, %v6380
    %v6403 = vadd.f32 %v6371, %v6383
    %v6404 = vadd.f32 %v6372, %v6386
    %v6405 = vadd.f32 %v6373, %v6389
    %v6406 = vadd.f32 %v6374, %v6392
    %v6407 = vadd.f32 %v6375, %v6395
    %v6408 = vadd.f32 %v6376, %v6398
    %v6409 = vadd.f32 %v6377, %v6401
    %v6410 = vsel %vm6121, %v3864, 0.0
    %6411 = vadd.xlane.f32.xlu0 %v6410
    %v6412 = vpop.xlane.xlu0 %6411
    %v6413 = vsel %vm6121, %v3866, 0.0
    %6414 = vadd.xlane.f32.xlu0 %v6413
    %v6415 = vpop.xlane.xlu0 %6414
    %v6416 = vsel %vm6121, %v3869, 0.0
    %6417 = vadd.xlane.f32.xlu0 %v6416
    %v6418 = vpop.xlane.xlu0 %6417
    %v6419 = vsel %vm6121, %v3871, 0.0
    %6420 = vadd.xlane.f32.xlu0 %v6419
    %v6421 = vpop.xlane.xlu0 %6420
    %v6422 = vsel %vm6121, %v3874, 0.0
    %6423 = vadd.xlane.f32.xlu0 %v6422
    %v6424 = vpop.xlane.xlu0 %6423
    %v6425 = vsel %vm6121, %v3876, 0.0
    %6426 = vadd.xlane.f32.xlu0 %v6425
    %v6427 = vpop.xlane.xlu0 %6426
    %v6428 = vsel %vm6121, %v3879, 0.0
    %6429 = vadd.xlane.f32.xlu0 %v6428
    %v6430 = vpop.xlane.xlu0 %6429
    %v6431 = vsel %vm6121, %v3881, 0.0
    %6432 = vadd.xlane.f32.xlu0 %v6431
    %v6433 = vpop.xlane.xlu0 %6432
    %v6434 = vadd.f32 %v6402, %v6412
    %v6435 = vadd.f32 %v6403, %v6415
    %v6436 = vadd.f32 %v6404, %v6418
    %v6437 = vadd.f32 %v6405, %v6421
    %v6438 = vadd.f32 %v6406, %v6424
    %v6439 = vadd.f32 %v6407, %v6427
    %v6440 = vadd.f32 %v6408, %v6430
    %v6441 = vadd.f32 %v6409, %v6433
    %v6442 = vsel %vm6121, %v4237, 0.0
    %6443 = vadd.xlane.f32.xlu0 %v6442
    %v6444 = vpop.xlane.xlu0 %6443
    %v6445 = vsel %vm6121, %v4239, 0.0
    %6446 = vadd.xlane.f32.xlu0 %v6445
    %v6447 = vpop.xlane.xlu0 %6446
    %v6448 = vsel %vm6121, %v4242, 0.0
    %6449 = vadd.xlane.f32.xlu0 %v6448
    %v6450 = vpop.xlane.xlu0 %6449
    %v6451 = vsel %vm6121, %v4244, 0.0
    %6452 = vadd.xlane.f32.xlu0 %v6451
    %v6453 = vpop.xlane.xlu0 %6452
    %v6454 = vsel %vm6121, %v4247, 0.0
    %6455 = vadd.xlane.f32.xlu0 %v6454
    %v6456 = vpop.xlane.xlu0 %6455
    %v6457 = vsel %vm6121, %v4249, 0.0
    %6458 = vadd.xlane.f32.xlu0 %v6457
    %v6459 = vpop.xlane.xlu0 %6458
    %v6460 = vsel %vm6121, %v4252, 0.0
    %6461 = vadd.xlane.f32.xlu0 %v6460
    %v6462 = vpop.xlane.xlu0 %6461
    %v6463 = vsel %vm6121, %v4254, 0.0
    %6464 = vadd.xlane.f32.xlu0 %v6463
    %v6465 = vpop.xlane.xlu0 %6464
    %v6466 = vadd.f32 %v6434, %v6444
    %v6467 = vadd.f32 %v6435, %v6447
    %v6468 = vadd.f32 %v6436, %v6450
    %v6469 = vadd.f32 %v6437, %v6453
    %v6470 = vadd.f32 %v6438, %v6456
    %v6471 = vadd.f32 %v6439, %v6459
    %v6472 = vadd.f32 %v6440, %v6462
    %v6473 = vadd.f32 %v6441, %v6465
    %v6474 = vsel %vm6121, %v4610, 0.0
    %6475 = vadd.xlane.f32.xlu0 %v6474
    %v6476 = vpop.xlane.xlu0 %6475
    %v6477 = vsel %vm6121, %v4612, 0.0
    %6478 = vadd.xlane.f32.xlu0 %v6477
    %v6479 = vpop.xlane.xlu0 %6478
    %v6480 = vsel %vm6121, %v4615, 0.0
    %6481 = vadd.xlane.f32.xlu0 %v6480
    %v6482 = vpop.xlane.xlu0 %6481
    %v6483 = vsel %vm6121, %v4617, 0.0
    %6484 = vadd.xlane.f32.xlu0 %v6483
    %v6485 = vpop.xlane.xlu0 %6484
    %v6486 = vsel %vm6121, %v4620, 0.0
    %6487 = vadd.xlane.f32.xlu0 %v6486
    %v6488 = vpop.xlane.xlu0 %6487
    %v6489 = vsel %vm6121, %v4622, 0.0
    %6490 = vadd.xlane.f32.xlu0 %v6489
    %v6491 = vpop.xlane.xlu0 %6490
    %v6492 = vsel %vm6121, %v4625, 0.0
    %6493 = vadd.xlane.f32.xlu0 %v6492
    %v6494 = vpop.xlane.xlu0 %6493
    %v6495 = vsel %vm6121, %v4627, 0.0
    %6496 = vadd.xlane.f32.xlu0 %v6495
    %v6497 = vpop.xlane.xlu0 %6496
    %v6498 = vadd.f32 %v6466, %v6476
    %v6499 = vadd.f32 %v6467, %v6479
    %v6500 = vadd.f32 %v6468, %v6482
    %v6501 = vadd.f32 %v6469, %v6485
    %v6502 = vadd.f32 %v6470, %v6488
    %v6503 = vadd.f32 %v6471, %v6491
    %v6504 = vadd.f32 %v6472, %v6494
    %v6505 = vadd.f32 %v6473, %v6497
    %v6506 = vsel %vm6121, %v4983, 0.0
    %6507 = vadd.xlane.f32.xlu0 %v6506
    %v6508 = vpop.xlane.xlu0 %6507
    %v6509 = vsel %vm6121, %v4985, 0.0
    %6510 = vadd.xlane.f32.xlu0 %v6509
    %v6511 = vpop.xlane.xlu0 %6510
    %v6512 = vsel %vm6121, %v4988, 0.0
    %6513 = vadd.xlane.f32.xlu0 %v6512
    %v6514 = vpop.xlane.xlu0 %6513
    %v6515 = vsel %vm6121, %v4990, 0.0
    %6516 = vadd.xlane.f32.xlu0 %v6515
    %v6517 = vpop.xlane.xlu0 %6516
    %v6518 = vsel %vm6121, %v4993, 0.0
    %6519 = vadd.xlane.f32.xlu0 %v6518
    %v6520 = vpop.xlane.xlu0 %6519
    %v6521 = vsel %vm6121, %v4995, 0.0
    %6522 = vadd.xlane.f32.xlu0 %v6521
    %v6523 = vpop.xlane.xlu0 %6522
    %v6524 = vsel %vm6121, %v4998, 0.0
    %6525 = vadd.xlane.f32.xlu0 %v6524
    %v6526 = vpop.xlane.xlu0 %6525
    %v6527 = vsel %vm6121, %v5000, 0.0
    %6528 = vadd.xlane.f32.xlu0 %v6527
    %v6529 = vpop.xlane.xlu0 %6528
    %v6530 = vadd.f32 %v6498, %v6508
    %v6531 = vadd.f32 %v6499, %v6511
    %v6532 = vadd.f32 %v6500, %v6514
    %v6533 = vadd.f32 %v6501, %v6517
    %v6534 = vadd.f32 %v6502, %v6520
    %v6535 = vadd.f32 %v6503, %v6523
    %v6536 = vadd.f32 %v6504, %v6526
    %v6537 = vadd.f32 %v6505, %v6529
    %v6538 = vsel %vm6121, %v5356, 0.0
    %6539 = vadd.xlane.f32.xlu0 %v6538
    %v6540 = vpop.xlane.xlu0 %6539
    %v6541 = vsel %vm6121, %v5358, 0.0
    %6542 = vadd.xlane.f32.xlu0 %v6541
    %v6543 = vpop.xlane.xlu0 %6542
    %v6544 = vsel %vm6121, %v5361, 0.0
    %6545 = vadd.xlane.f32.xlu0 %v6544
    %v6546 = vpop.xlane.xlu0 %6545
    %v6547 = vsel %vm6121, %v5363, 0.0
    %6548 = vadd.xlane.f32.xlu0 %v6547
    %v6549 = vpop.xlane.xlu0 %6548
    %v6550 = vsel %vm6121, %v5366, 0.0
    %6551 = vadd.xlane.f32.xlu0 %v6550
    %v6552 = vpop.xlane.xlu0 %6551
    %v6553 = vsel %vm6121, %v5368, 0.0
    %6554 = vadd.xlane.f32.xlu0 %v6553
    %v6555 = vpop.xlane.xlu0 %6554
    %v6556 = vsel %vm6121, %v5371, 0.0
    %6557 = vadd.xlane.f32.xlu0 %v6556
    %v6558 = vpop.xlane.xlu0 %6557
    %v6559 = vsel %vm6121, %v5373, 0.0
    %6560 = vadd.xlane.f32.xlu0 %v6559
    %v6561 = vpop.xlane.xlu0 %6560
    %v6562 = vadd.f32 %v6530, %v6540
    %v6563 = vadd.f32 %v6531, %v6543
    %v6564 = vadd.f32 %v6532, %v6546
    %v6565 = vadd.f32 %v6533, %v6549
    %v6566 = vadd.f32 %v6534, %v6552
    %v6567 = vadd.f32 %v6535, %v6555
    %v6568 = vadd.f32 %v6536, %v6558
    %v6569 = vadd.f32 %v6537, %v6561
    %v6570 = vsel %vm6121, %v5729, 0.0
    %6571 = vadd.xlane.f32.xlu0 %v6570
    %v6572 = vpop.xlane.xlu0 %6571
    %v6573 = vsel %vm6121, %v5731, 0.0
    %6574 = vadd.xlane.f32.xlu0 %v6573
    %v6575 = vpop.xlane.xlu0 %6574
    %v6576 = vsel %vm6121, %v5734, 0.0
    %6577 = vadd.xlane.f32.xlu0 %v6576
    %v6578 = vpop.xlane.xlu0 %6577
    %v6579 = vsel %vm6121, %v5736, 0.0
    %6580 = vadd.xlane.f32.xlu0 %v6579
    %v6581 = vpop.xlane.xlu0 %6580
    %v6582 = vsel %vm6121, %v5739, 0.0
    %6583 = vadd.xlane.f32.xlu0 %v6582
    %v6584 = vpop.xlane.xlu0 %6583
    %v6585 = vsel %vm6121, %v5741, 0.0
    %6586 = vadd.xlane.f32.xlu0 %v6585
    %v6587 = vpop.xlane.xlu0 %6586
    %v6588 = vsel %vm6121, %v5744, 0.0
    %6589 = vadd.xlane.f32.xlu0 %v6588
    %v6590 = vpop.xlane.xlu0 %6589
    %v6591 = vsel %vm6121, %v5746, 0.0
    %6592 = vadd.xlane.f32.xlu0 %v6591
    %v6593 = vpop.xlane.xlu0 %6592
    %v6594 = vadd.f32 %v6562, %v6572
    %v6595 = vadd.f32 %v6563, %v6575
    %v6596 = vadd.f32 %v6564, %v6578
    %v6597 = vadd.f32 %v6565, %v6581
    %v6598 = vadd.f32 %v6566, %v6584
    %v6599 = vadd.f32 %v6567, %v6587
    %v6600 = vadd.f32 %v6568, %v6590
    %v6601 = vadd.f32 %v6569, %v6593
    %v6602 = vsel %vm6121, %v6102, 0.0
    %6603 = vadd.xlane.f32.xlu0 %v6602
    %v6604 = vpop.xlane.xlu0 %6603
    %v6605 = vsel %vm6121, %v6104, 0.0
    %6606 = vadd.xlane.f32.xlu0 %v6605
    %v6607 = vpop.xlane.xlu0 %6606
    %v6608 = vsel %vm6121, %v6107, 0.0
    %6609 = vadd.xlane.f32.xlu0 %v6608
    %v6610 = vpop.xlane.xlu0 %6609
    %v6611 = vsel %vm6121, %v6109, 0.0
    %6612 = vadd.xlane.f32.xlu0 %v6611
    %v6613 = vpop.xlane.xlu0 %6612
    %v6614 = vsel %vm6121, %v6112, 0.0
    %6615 = vadd.xlane.f32.xlu0 %v6614
    %v6616 = vpop.xlane.xlu0 %6615
    %v6617 = vsel %vm6121, %v6114, 0.0
    %6618 = vadd.xlane.f32.xlu0 %v6617
    %v6619 = vpop.xlane.xlu0 %6618
    %v6620 = vsel %vm6121, %v6117, 0.0
    %6621 = vadd.xlane.f32.xlu0 %v6620
    %v6622 = vpop.xlane.xlu0 %6621
    %v6623 = vsel %vm6121, %v6119, 0.0
    %6624 = vadd.xlane.f32.xlu0 %v6623
    %v6625 = vpop.xlane.xlu0 %6624
    %v6626 = vadd.f32 %v6594, %v6604
    %v6627 = vadd.f32 %v6595, %v6607
    %v6628 = vadd.f32 %v6596, %v6610
    %v6629 = vadd.f32 %v6597, %v6613
    %v6630 = vadd.f32 %v6598, %v6616
    %v6631 = vadd.f32 %v6599, %v6619
    %v6632 = vadd.f32 %v6600, %v6622
    %v6633 = vadd.f32 %v6601, %v6625
    %v6634 = vmul.f32 %v507, %v507
    %v6635 = vmul.f32 %v509, %v509
    %v6636 = vmul.f32 %v512, %v512
    %v6637 = vmul.f32 %v514, %v514
    %v6638 = vmul.f32 %v517, %v517
    %v6639 = vmul.f32 %v519, %v519
    %v6640 = vmul.f32 %v522, %v522
    %v6641 = vmul.f32 %v524, %v524
    %v6642 = vsel %vm6121, %v6634, 0.0
    %6643 = vadd.xlane.f32.xlu0 %v6642
    %v6644 = vpop.xlane.xlu0 %6643
    %v6645 = vsel %vm6121, %v6635, 0.0
    %6646 = vadd.xlane.f32.xlu0 %v6645
    %v6647 = vpop.xlane.xlu0 %6646
    %v6648 = vsel %vm6121, %v6636, 0.0
    %6649 = vadd.xlane.f32.xlu0 %v6648
    %v6650 = vpop.xlane.xlu0 %6649
    %v6651 = vsel %vm6121, %v6637, 0.0
    %6652 = vadd.xlane.f32.xlu0 %v6651
    %v6653 = vpop.xlane.xlu0 %6652
    %v6654 = vsel %vm6121, %v6638, 0.0
    %6655 = vadd.xlane.f32.xlu0 %v6654
    %v6656 = vpop.xlane.xlu0 %6655
    %v6657 = vsel %vm6121, %v6639, 0.0
    %6658 = vadd.xlane.f32.xlu0 %v6657
    %v6659 = vpop.xlane.xlu0 %6658
    %v6660 = vsel %vm6121, %v6640, 0.0
    %6661 = vadd.xlane.f32.xlu0 %v6660
    %v6662 = vpop.xlane.xlu0 %6661
    %v6663 = vsel %vm6121, %v6641, 0.0
    %6664 = vadd.xlane.f32.xlu0 %v6663
    %v6665 = vpop.xlane.xlu0 %6664
    %v6666 = vadd.f32 %v6644, 0.0
    %v6667 = vadd.f32 %v6647, 0.0
    %v6668 = vadd.f32 %v6650, 0.0
    %v6669 = vadd.f32 %v6653, 0.0
    %v6670 = vadd.f32 %v6656, 0.0
    %v6671 = vadd.f32 %v6659, 0.0
    %v6672 = vadd.f32 %v6662, 0.0
    %v6673 = vadd.f32 %v6665, 0.0
    %v6674 = vmul.f32 %v880, %v880
    %v6675 = vmul.f32 %v882, %v882
    %v6676 = vmul.f32 %v885, %v885
    %v6677 = vmul.f32 %v887, %v887
    %v6678 = vmul.f32 %v890, %v890
    %v6679 = vmul.f32 %v892, %v892
    %v6680 = vmul.f32 %v895, %v895
    %v6681 = vmul.f32 %v897, %v897
    %v6682 = vsel %vm6121, %v6674, 0.0
    %6683 = vadd.xlane.f32.xlu0 %v6682
    %v6684 = vpop.xlane.xlu0 %6683
    %v6685 = vsel %vm6121, %v6675, 0.0
    %6686 = vadd.xlane.f32.xlu0 %v6685
    %v6687 = vpop.xlane.xlu0 %6686
    %v6688 = vsel %vm6121, %v6676, 0.0
    %6689 = vadd.xlane.f32.xlu0 %v6688
    %v6690 = vpop.xlane.xlu0 %6689
    %v6691 = vsel %vm6121, %v6677, 0.0
    %6692 = vadd.xlane.f32.xlu0 %v6691
    %v6693 = vpop.xlane.xlu0 %6692
    %v6694 = vsel %vm6121, %v6678, 0.0
    %6695 = vadd.xlane.f32.xlu0 %v6694
    %v6696 = vpop.xlane.xlu0 %6695
    %v6697 = vsel %vm6121, %v6679, 0.0
    %6698 = vadd.xlane.f32.xlu0 %v6697
    %v6699 = vpop.xlane.xlu0 %6698
    %v6700 = vsel %vm6121, %v6680, 0.0
    %6701 = vadd.xlane.f32.xlu0 %v6700
    %v6702 = vpop.xlane.xlu0 %6701
    %v6703 = vsel %vm6121, %v6681, 0.0
    %6704 = vadd.xlane.f32.xlu0 %v6703
    %v6705 = vpop.xlane.xlu0 %6704
    %v6706 = vadd.f32 %v6666, %v6684
    %v6707 = vadd.f32 %v6667, %v6687
    %v6708 = vadd.f32 %v6668, %v6690
    %v6709 = vadd.f32 %v6669, %v6693
    %v6710 = vadd.f32 %v6670, %v6696
    %v6711 = vadd.f32 %v6671, %v6699
    %v6712 = vadd.f32 %v6672, %v6702
    %v6713 = vadd.f32 %v6673, %v6705
    %v6714 = vmul.f32 %v1253, %v1253
    %v6715 = vmul.f32 %v1255, %v1255
    %v6716 = vmul.f32 %v1258, %v1258
    %v6717 = vmul.f32 %v1260, %v1260
    %v6718 = vmul.f32 %v1263, %v1263
    %v6719 = vmul.f32 %v1265, %v1265
    %v6720 = vmul.f32 %v1268, %v1268
    %v6721 = vmul.f32 %v1270, %v1270
    %v6722 = vsel %vm6121, %v6714, 0.0
    %6723 = vadd.xlane.f32.xlu0 %v6722
    %v6724 = vpop.xlane.xlu0 %6723
    %v6725 = vsel %vm6121, %v6715, 0.0
    %6726 = vadd.xlane.f32.xlu0 %v6725
    %v6727 = vpop.xlane.xlu0 %6726
    %v6728 = vsel %vm6121, %v6716, 0.0
    %6729 = vadd.xlane.f32.xlu0 %v6728
    %v6730 = vpop.xlane.xlu0 %6729
    %v6731 = vsel %vm6121, %v6717, 0.0
    %6732 = vadd.xlane.f32.xlu0 %v6731
    %v6733 = vpop.xlane.xlu0 %6732
    %v6734 = vsel %vm6121, %v6718, 0.0
    %6735 = vadd.xlane.f32.xlu0 %v6734
    %v6736 = vpop.xlane.xlu0 %6735
    %v6737 = vsel %vm6121, %v6719, 0.0
    %6738 = vadd.xlane.f32.xlu0 %v6737
    %v6739 = vpop.xlane.xlu0 %6738
    %v6740 = vsel %vm6121, %v6720, 0.0
    %6741 = vadd.xlane.f32.xlu0 %v6740
    %v6742 = vpop.xlane.xlu0 %6741
    %v6743 = vsel %vm6121, %v6721, 0.0
    %6744 = vadd.xlane.f32.xlu0 %v6743
    %v6745 = vpop.xlane.xlu0 %6744
    %v6746 = vadd.f32 %v6706, %v6724
    %v6747 = vadd.f32 %v6707, %v6727
    %v6748 = vadd.f32 %v6708, %v6730
    %v6749 = vadd.f32 %v6709, %v6733
    %v6750 = vadd.f32 %v6710, %v6736
    %v6751 = vadd.f32 %v6711, %v6739
    %v6752 = vadd.f32 %v6712, %v6742
    %v6753 = vadd.f32 %v6713, %v6745
    %v6754 = vmul.f32 %v1626, %v1626
    %v6755 = vmul.f32 %v1628, %v1628
    %v6756 = vmul.f32 %v1631, %v1631
    %v6757 = vmul.f32 %v1633, %v1633
    %v6758 = vmul.f32 %v1636, %v1636
    %v6759 = vmul.f32 %v1638, %v1638
    %v6760 = vmul.f32 %v1641, %v1641
    %v6761 = vmul.f32 %v1643, %v1643
    %v6762 = vsel %vm6121, %v6754, 0.0
    %6763 = vadd.xlane.f32.xlu0 %v6762
    %v6764 = vpop.xlane.xlu0 %6763
    %v6765 = vsel %vm6121, %v6755, 0.0
    %6766 = vadd.xlane.f32.xlu0 %v6765
    %v6767 = vpop.xlane.xlu0 %6766
    %v6768 = vsel %vm6121, %v6756, 0.0
    %6769 = vadd.xlane.f32.xlu0 %v6768
    %v6770 = vpop.xlane.xlu0 %6769
    %v6771 = vsel %vm6121, %v6757, 0.0
    %6772 = vadd.xlane.f32.xlu0 %v6771
    %v6773 = vpop.xlane.xlu0 %6772
    %v6774 = vsel %vm6121, %v6758, 0.0
    %6775 = vadd.xlane.f32.xlu0 %v6774
    %v6776 = vpop.xlane.xlu0 %6775
    %v6777 = vsel %vm6121, %v6759, 0.0
    %6778 = vadd.xlane.f32.xlu0 %v6777
    %v6779 = vpop.xlane.xlu0 %6778
    %v6780 = vsel %vm6121, %v6760, 0.0
    %6781 = vadd.xlane.f32.xlu0 %v6780
    %v6782 = vpop.xlane.xlu0 %6781
    %v6783 = vsel %vm6121, %v6761, 0.0
    %6784 = vadd.xlane.f32.xlu0 %v6783
    %v6785 = vpop.xlane.xlu0 %6784
    %v6786 = vadd.f32 %v6746, %v6764
    %v6787 = vadd.f32 %v6747, %v6767
    %v6788 = vadd.f32 %v6748, %v6770
    %v6789 = vadd.f32 %v6749, %v6773
    %v6790 = vadd.f32 %v6750, %v6776
    %v6791 = vadd.f32 %v6751, %v6779
    %v6792 = vadd.f32 %v6752, %v6782
    %v6793 = vadd.f32 %v6753, %v6785
    %v6794 = vmul.f32 %v1999, %v1999
    %v6795 = vmul.f32 %v2001, %v2001
    %v6796 = vmul.f32 %v2004, %v2004
    %v6797 = vmul.f32 %v2006, %v2006
    %v6798 = vmul.f32 %v2009, %v2009
    %v6799 = vmul.f32 %v2011, %v2011
    %v6800 = vmul.f32 %v2014, %v2014
    %v6801 = vmul.f32 %v2016, %v2016
    %v6802 = vsel %vm6121, %v6794, 0.0
    %6803 = vadd.xlane.f32.xlu0 %v6802
    %v6804 = vpop.xlane.xlu0 %6803
    %v6805 = vsel %vm6121, %v6795, 0.0
    %6806 = vadd.xlane.f32.xlu0 %v6805
    %v6807 = vpop.xlane.xlu0 %6806
    %v6808 = vsel %vm6121, %v6796, 0.0
    %6809 = vadd.xlane.f32.xlu0 %v6808
    %v6810 = vpop.xlane.xlu0 %6809
    %v6811 = vsel %vm6121, %v6797, 0.0
    %6812 = vadd.xlane.f32.xlu0 %v6811
    %v6813 = vpop.xlane.xlu0 %6812
    %v6814 = vsel %vm6121, %v6798, 0.0
    %6815 = vadd.xlane.f32.xlu0 %v6814
    %v6816 = vpop.xlane.xlu0 %6815
    %v6817 = vsel %vm6121, %v6799, 0.0
    %6818 = vadd.xlane.f32.xlu0 %v6817
    %v6819 = vpop.xlane.xlu0 %6818
    %v6820 = vsel %vm6121, %v6800, 0.0
    %6821 = vadd.xlane.f32.xlu0 %v6820
    %v6822 = vpop.xlane.xlu0 %6821
    %v6823 = vsel %vm6121, %v6801, 0.0
    %6824 = vadd.xlane.f32.xlu0 %v6823
    %v6825 = vpop.xlane.xlu0 %6824
    %v6826 = vadd.f32 %v6786, %v6804
    %v6827 = vadd.f32 %v6787, %v6807
    %v6828 = vadd.f32 %v6788, %v6810
    %v6829 = vadd.f32 %v6789, %v6813
    %v6830 = vadd.f32 %v6790, %v6816
    %v6831 = vadd.f32 %v6791, %v6819
    %v6832 = vadd.f32 %v6792, %v6822
    %v6833 = vadd.f32 %v6793, %v6825
    %v6834 = vmul.f32 %v2372, %v2372
    %v6835 = vmul.f32 %v2374, %v2374
    %v6836 = vmul.f32 %v2377, %v2377
    %v6837 = vmul.f32 %v2379, %v2379
    %v6838 = vmul.f32 %v2382, %v2382
    %v6839 = vmul.f32 %v2384, %v2384
    %v6840 = vmul.f32 %v2387, %v2387
    %v6841 = vmul.f32 %v2389, %v2389
    %v6842 = vsel %vm6121, %v6834, 0.0
    %6843 = vadd.xlane.f32.xlu0 %v6842
    %v6844 = vpop.xlane.xlu0 %6843
    %v6845 = vsel %vm6121, %v6835, 0.0
    %6846 = vadd.xlane.f32.xlu0 %v6845
    %v6847 = vpop.xlane.xlu0 %6846
    %v6848 = vsel %vm6121, %v6836, 0.0
    %6849 = vadd.xlane.f32.xlu0 %v6848
    %v6850 = vpop.xlane.xlu0 %6849
    %v6851 = vsel %vm6121, %v6837, 0.0
    %6852 = vadd.xlane.f32.xlu0 %v6851
    %v6853 = vpop.xlane.xlu0 %6852
    %v6854 = vsel %vm6121, %v6838, 0.0
    %6855 = vadd.xlane.f32.xlu0 %v6854
    %v6856 = vpop.xlane.xlu0 %6855
    %v6857 = vsel %vm6121, %v6839, 0.0
    %6858 = vadd.xlane.f32.xlu0 %v6857
    %v6859 = vpop.xlane.xlu0 %6858
    %v6860 = vsel %vm6121, %v6840, 0.0
    %6861 = vadd.xlane.f32.xlu0 %v6860
    %v6862 = vpop.xlane.xlu0 %6861
    %v6863 = vsel %vm6121, %v6841, 0.0
    %6864 = vadd.xlane.f32.xlu0 %v6863
    %v6865 = vpop.xlane.xlu0 %6864
    %v6866 = vadd.f32 %v6826, %v6844
    %v6867 = vadd.f32 %v6827, %v6847
    %v6868 = vadd.f32 %v6828, %v6850
    %v6869 = vadd.f32 %v6829, %v6853
    %v6870 = vadd.f32 %v6830, %v6856
    %v6871 = vadd.f32 %v6831, %v6859
    %v6872 = vadd.f32 %v6832, %v6862
    %v6873 = vadd.f32 %v6833, %v6865
    %v6874 = vmul.f32 %v2745, %v2745
    %v6875 = vmul.f32 %v2747, %v2747
    %v6876 = vmul.f32 %v2750, %v2750
    %v6877 = vmul.f32 %v2752, %v2752
    %v6878 = vmul.f32 %v2755, %v2755
    %v6879 = vmul.f32 %v2757, %v2757
    %v6880 = vmul.f32 %v2760, %v2760
    %v6881 = vmul.f32 %v2762, %v2762
    %v6882 = vsel %vm6121, %v6874, 0.0
    %6883 = vadd.xlane.f32.xlu0 %v6882
    %v6884 = vpop.xlane.xlu0 %6883
    %v6885 = vsel %vm6121, %v6875, 0.0
    %6886 = vadd.xlane.f32.xlu0 %v6885
    %v6887 = vpop.xlane.xlu0 %6886
    %v6888 = vsel %vm6121, %v6876, 0.0
    %6889 = vadd.xlane.f32.xlu0 %v6888
    %v6890 = vpop.xlane.xlu0 %6889
    %v6891 = vsel %vm6121, %v6877, 0.0
    %6892 = vadd.xlane.f32.xlu0 %v6891
    %v6893 = vpop.xlane.xlu0 %6892
    %v6894 = vsel %vm6121, %v6878, 0.0
    %6895 = vadd.xlane.f32.xlu0 %v6894
    %v6896 = vpop.xlane.xlu0 %6895
    %v6897 = vsel %vm6121, %v6879, 0.0
    %6898 = vadd.xlane.f32.xlu0 %v6897
    %v6899 = vpop.xlane.xlu0 %6898
    %v6900 = vsel %vm6121, %v6880, 0.0
    %6901 = vadd.xlane.f32.xlu0 %v6900
    %v6902 = vpop.xlane.xlu0 %6901
    %v6903 = vsel %vm6121, %v6881, 0.0
    %6904 = vadd.xlane.f32.xlu0 %v6903
    %v6905 = vpop.xlane.xlu0 %6904
    %v6906 = vadd.f32 %v6866, %v6884
    %v6907 = vadd.f32 %v6867, %v6887
    %v6908 = vadd.f32 %v6868, %v6890
    %v6909 = vadd.f32 %v6869, %v6893
    %v6910 = vadd.f32 %v6870, %v6896
    %v6911 = vadd.f32 %v6871, %v6899
    %v6912 = vadd.f32 %v6872, %v6902
    %v6913 = vadd.f32 %v6873, %v6905
    %v6914 = vmul.f32 %v3118, %v3118
    %v6915 = vmul.f32 %v3120, %v3120
    %v6916 = vmul.f32 %v3123, %v3123
    %v6917 = vmul.f32 %v3125, %v3125
    %v6918 = vmul.f32 %v3128, %v3128
    %v6919 = vmul.f32 %v3130, %v3130
    %v6920 = vmul.f32 %v3133, %v3133
    %v6921 = vmul.f32 %v3135, %v3135
    %v6922 = vsel %vm6121, %v6914, 0.0
    %6923 = vadd.xlane.f32.xlu0 %v6922
    %v6924 = vpop.xlane.xlu0 %6923
    %v6925 = vsel %vm6121, %v6915, 0.0
    %6926 = vadd.xlane.f32.xlu0 %v6925
    %v6927 = vpop.xlane.xlu0 %6926
    %v6928 = vsel %vm6121, %v6916, 0.0
    %6929 = vadd.xlane.f32.xlu0 %v6928
    %v6930 = vpop.xlane.xlu0 %6929
    %v6931 = vsel %vm6121, %v6917, 0.0
    %6932 = vadd.xlane.f32.xlu0 %v6931
    %v6933 = vpop.xlane.xlu0 %6932
    %v6934 = vsel %vm6121, %v6918, 0.0
    %6935 = vadd.xlane.f32.xlu0 %v6934
    %v6936 = vpop.xlane.xlu0 %6935
    %v6937 = vsel %vm6121, %v6919, 0.0
    %6938 = vadd.xlane.f32.xlu0 %v6937
    %v6939 = vpop.xlane.xlu0 %6938
    %v6940 = vsel %vm6121, %v6920, 0.0
    %6941 = vadd.xlane.f32.xlu0 %v6940
    %v6942 = vpop.xlane.xlu0 %6941
    %v6943 = vsel %vm6121, %v6921, 0.0
    %6944 = vadd.xlane.f32.xlu0 %v6943
    %v6945 = vpop.xlane.xlu0 %6944
    %v6946 = vadd.f32 %v6906, %v6924
    %v6947 = vadd.f32 %v6907, %v6927
    %v6948 = vadd.f32 %v6908, %v6930
    %v6949 = vadd.f32 %v6909, %v6933
    %v6950 = vadd.f32 %v6910, %v6936
    %v6951 = vadd.f32 %v6911, %v6939
    %v6952 = vadd.f32 %v6912, %v6942
    %v6953 = vadd.f32 %v6913, %v6945
    %v6954 = vmul.f32 %v3491, %v3491
    %v6955 = vmul.f32 %v3493, %v3493
    %v6956 = vmul.f32 %v3496, %v3496
    %v6957 = vmul.f32 %v3498, %v3498
    %v6958 = vmul.f32 %v3501, %v3501
    %v6959 = vmul.f32 %v3503, %v3503
    %v6960 = vmul.f32 %v3506, %v3506
    %v6961 = vmul.f32 %v3508, %v3508
    %v6962 = vsel %vm6121, %v6954, 0.0
    %6963 = vadd.xlane.f32.xlu0 %v6962
    %v6964 = vpop.xlane.xlu0 %6963
    %v6965 = vsel %vm6121, %v6955, 0.0
    %6966 = vadd.xlane.f32.xlu0 %v6965
    %v6967 = vpop.xlane.xlu0 %6966
    %v6968 = vsel %vm6121, %v6956, 0.0
    %6969 = vadd.xlane.f32.xlu0 %v6968
    %v6970 = vpop.xlane.xlu0 %6969
    %v6971 = vsel %vm6121, %v6957, 0.0
    %6972 = vadd.xlane.f32.xlu0 %v6971
    %v6973 = vpop.xlane.xlu0 %6972
    %v6974 = vsel %vm6121, %v6958, 0.0
    %6975 = vadd.xlane.f32.xlu0 %v6974
    %v6976 = vpop.xlane.xlu0 %6975
    %v6977 = vsel %vm6121, %v6959, 0.0
    %6978 = vadd.xlane.f32.xlu0 %v6977
    %v6979 = vpop.xlane.xlu0 %6978
    %v6980 = vsel %vm6121, %v6960, 0.0
    %6981 = vadd.xlane.f32.xlu0 %v6980
    %v6982 = vpop.xlane.xlu0 %6981
    %v6983 = vsel %vm6121, %v6961, 0.0
    %6984 = vadd.xlane.f32.xlu0 %v6983
    %v6985 = vpop.xlane.xlu0 %6984
    %v6986 = vadd.f32 %v6946, %v6964
    %v6987 = vadd.f32 %v6947, %v6967
    %v6988 = vadd.f32 %v6948, %v6970
    %v6989 = vadd.f32 %v6949, %v6973
    %v6990 = vadd.f32 %v6950, %v6976
    %v6991 = vadd.f32 %v6951, %v6979
    %v6992 = vadd.f32 %v6952, %v6982
    %v6993 = vadd.f32 %v6953, %v6985
    %v6994 = vmul.f32 %v3864, %v3864
    %v6995 = vmul.f32 %v3866, %v3866
    %v6996 = vmul.f32 %v3869, %v3869
    %v6997 = vmul.f32 %v3871, %v3871
    %v6998 = vmul.f32 %v3874, %v3874
    %v6999 = vmul.f32 %v3876, %v3876
    %v7000 = vmul.f32 %v3879, %v3879
    %v7001 = vmul.f32 %v3881, %v3881
    %v7002 = vsel %vm6121, %v6994, 0.0
    %7003 = vadd.xlane.f32.xlu0 %v7002
    %v7004 = vpop.xlane.xlu0 %7003
    %v7005 = vsel %vm6121, %v6995, 0.0
    %7006 = vadd.xlane.f32.xlu0 %v7005
    %v7007 = vpop.xlane.xlu0 %7006
    %v7008 = vsel %vm6121, %v6996, 0.0
    %7009 = vadd.xlane.f32.xlu0 %v7008
    %v7010 = vpop.xlane.xlu0 %7009
    %v7011 = vsel %vm6121, %v6997, 0.0
    %7012 = vadd.xlane.f32.xlu0 %v7011
    %v7013 = vpop.xlane.xlu0 %7012
    %v7014 = vsel %vm6121, %v6998, 0.0
    %7015 = vadd.xlane.f32.xlu0 %v7014
    %v7016 = vpop.xlane.xlu0 %7015
    %v7017 = vsel %vm6121, %v6999, 0.0
    %7018 = vadd.xlane.f32.xlu0 %v7017
    %v7019 = vpop.xlane.xlu0 %7018
    %v7020 = vsel %vm6121, %v7000, 0.0
    %7021 = vadd.xlane.f32.xlu0 %v7020
    %v7022 = vpop.xlane.xlu0 %7021
    %v7023 = vsel %vm6121, %v7001, 0.0
    %7024 = vadd.xlane.f32.xlu0 %v7023
    %v7025 = vpop.xlane.xlu0 %7024
    %v7026 = vadd.f32 %v6986, %v7004
    %v7027 = vadd.f32 %v6987, %v7007
    %v7028 = vadd.f32 %v6988, %v7010
    %v7029 = vadd.f32 %v6989, %v7013
    %v7030 = vadd.f32 %v6990, %v7016
    %v7031 = vadd.f32 %v6991, %v7019
    %v7032 = vadd.f32 %v6992, %v7022
    %v7033 = vadd.f32 %v6993, %v7025
    %v7034 = vmul.f32 %v4237, %v4237
    %v7035 = vmul.f32 %v4239, %v4239
    %v7036 = vmul.f32 %v4242, %v4242
    %v7037 = vmul.f32 %v4244, %v4244
    %v7038 = vmul.f32 %v4247, %v4247
    %v7039 = vmul.f32 %v4249, %v4249
    %v7040 = vmul.f32 %v4252, %v4252
    %v7041 = vmul.f32 %v4254, %v4254
    %v7042 = vsel %vm6121, %v7034, 0.0
    %7043 = vadd.xlane.f32.xlu0 %v7042
    %v7044 = vpop.xlane.xlu0 %7043
    %v7045 = vsel %vm6121, %v7035, 0.0
    %7046 = vadd.xlane.f32.xlu0 %v7045
    %v7047 = vpop.xlane.xlu0 %7046
    %v7048 = vsel %vm6121, %v7036, 0.0
    %7049 = vadd.xlane.f32.xlu0 %v7048
    %v7050 = vpop.xlane.xlu0 %7049
    %v7051 = vsel %vm6121, %v7037, 0.0
    %7052 = vadd.xlane.f32.xlu0 %v7051
    %v7053 = vpop.xlane.xlu0 %7052
    %v7054 = vsel %vm6121, %v7038, 0.0
    %7055 = vadd.xlane.f32.xlu0 %v7054
    %v7056 = vpop.xlane.xlu0 %7055
    %v7057 = vsel %vm6121, %v7039, 0.0
    %7058 = vadd.xlane.f32.xlu0 %v7057
    %v7059 = vpop.xlane.xlu0 %7058
    %v7060 = vsel %vm6121, %v7040, 0.0
    %7061 = vadd.xlane.f32.xlu0 %v7060
    %v7062 = vpop.xlane.xlu0 %7061
    %v7063 = vsel %vm6121, %v7041, 0.0
    %7064 = vadd.xlane.f32.xlu0 %v7063
    %v7065 = vpop.xlane.xlu0 %7064
    %v7066 = vadd.f32 %v7026, %v7044
    %v7067 = vadd.f32 %v7027, %v7047
    %v7068 = vadd.f32 %v7028, %v7050
    %v7069 = vadd.f32 %v7029, %v7053
    %v7070 = vadd.f32 %v7030, %v7056
    %v7071 = vadd.f32 %v7031, %v7059
    %v7072 = vadd.f32 %v7032, %v7062
    %v7073 = vadd.f32 %v7033, %v7065
    %v7074 = vmul.f32 %v4610, %v4610
    %v7075 = vmul.f32 %v4612, %v4612
    %v7076 = vmul.f32 %v4615, %v4615
    %v7077 = vmul.f32 %v4617, %v4617
    %v7078 = vmul.f32 %v4620, %v4620
    %v7079 = vmul.f32 %v4622, %v4622
    %v7080 = vmul.f32 %v4625, %v4625
    %v7081 = vmul.f32 %v4627, %v4627
    %v7082 = vsel %vm6121, %v7074, 0.0
    %7083 = vadd.xlane.f32.xlu0 %v7082
    %v7084 = vpop.xlane.xlu0 %7083
    %v7085 = vsel %vm6121, %v7075, 0.0
    %7086 = vadd.xlane.f32.xlu0 %v7085
    %v7087 = vpop.xlane.xlu0 %7086
    %v7088 = vsel %vm6121, %v7076, 0.0
    %7089 = vadd.xlane.f32.xlu0 %v7088
    %v7090 = vpop.xlane.xlu0 %7089
    %v7091 = vsel %vm6121, %v7077, 0.0
    %7092 = vadd.xlane.f32.xlu0 %v7091
    %v7093 = vpop.xlane.xlu0 %7092
    %v7094 = vsel %vm6121, %v7078, 0.0
    %7095 = vadd.xlane.f32.xlu0 %v7094
    %v7096 = vpop.xlane.xlu0 %7095
    %v7097 = vsel %vm6121, %v7079, 0.0
    %7098 = vadd.xlane.f32.xlu0 %v7097
    %v7099 = vpop.xlane.xlu0 %7098
    %v7100 = vsel %vm6121, %v7080, 0.0
    %7101 = vadd.xlane.f32.xlu0 %v7100
    %v7102 = vpop.xlane.xlu0 %7101
    %v7103 = vsel %vm6121, %v7081, 0.0
    %7104 = vadd.xlane.f32.xlu0 %v7103
    %v7105 = vpop.xlane.xlu0 %7104
    %v7106 = vadd.f32 %v7066, %v7084
    %v7107 = vadd.f32 %v7067, %v7087
    %v7108 = vadd.f32 %v7068, %v7090
    %v7109 = vadd.f32 %v7069, %v7093
    %v7110 = vadd.f32 %v7070, %v7096
    %v7111 = vadd.f32 %v7071, %v7099
    %v7112 = vadd.f32 %v7072, %v7102
    %v7113 = vadd.f32 %v7073, %v7105
    %v7114 = vmul.f32 %v4983, %v4983
    %v7115 = vmul.f32 %v4985, %v4985
    %v7116 = vmul.f32 %v4988, %v4988
    %v7117 = vmul.f32 %v4990, %v4990
    %v7118 = vmul.f32 %v4993, %v4993
    %v7119 = vmul.f32 %v4995, %v4995
    %v7120 = vmul.f32 %v4998, %v4998
    %v7121 = vmul.f32 %v5000, %v5000
    %v7122 = vsel %vm6121, %v7114, 0.0
    %7123 = vadd.xlane.f32.xlu0 %v7122
    %v7124 = vpop.xlane.xlu0 %7123
    %v7125 = vsel %vm6121, %v7115, 0.0
    %7126 = vadd.xlane.f32.xlu0 %v7125
    %v7127 = vpop.xlane.xlu0 %7126
    %v7128 = vsel %vm6121, %v7116, 0.0
    %7129 = vadd.xlane.f32.xlu0 %v7128
    %v7130 = vpop.xlane.xlu0 %7129
    %v7131 = vsel %vm6121, %v7117, 0.0
    %7132 = vadd.xlane.f32.xlu0 %v7131
    %v7133 = vpop.xlane.xlu0 %7132
    %v7134 = vsel %vm6121, %v7118, 0.0
    %7135 = vadd.xlane.f32.xlu0 %v7134
    %v7136 = vpop.xlane.xlu0 %7135
    %v7137 = vsel %vm6121, %v7119, 0.0
    %7138 = vadd.xlane.f32.xlu0 %v7137
    %v7139 = vpop.xlane.xlu0 %7138
    %v7140 = vsel %vm6121, %v7120, 0.0
    %7141 = vadd.xlane.f32.xlu0 %v7140
    %v7142 = vpop.xlane.xlu0 %7141
    %v7143 = vsel %vm6121, %v7121, 0.0
    %7144 = vadd.xlane.f32.xlu0 %v7143
    %v7145 = vpop.xlane.xlu0 %7144
    %v7146 = vadd.f32 %v7106, %v7124
    %v7147 = vadd.f32 %v7107, %v7127
    %v7148 = vadd.f32 %v7108, %v7130
    %v7149 = vadd.f32 %v7109, %v7133
    %v7150 = vadd.f32 %v7110, %v7136
    %v7151 = vadd.f32 %v7111, %v7139
    %v7152 = vadd.f32 %v7112, %v7142
    %v7153 = vadd.f32 %v7113, %v7145
    %v7154 = vmul.f32 %v5356, %v5356
    %v7155 = vmul.f32 %v5358, %v5358
    %v7156 = vmul.f32 %v5361, %v5361
    %v7157 = vmul.f32 %v5363, %v5363
    %v7158 = vmul.f32 %v5366, %v5366
    %v7159 = vmul.f32 %v5368, %v5368
    %v7160 = vmul.f32 %v5371, %v5371
    %v7161 = vmul.f32 %v5373, %v5373
    %v7162 = vsel %vm6121, %v7154, 0.0
    %7163 = vadd.xlane.f32.xlu0 %v7162
    %v7164 = vpop.xlane.xlu0 %7163
    %v7165 = vsel %vm6121, %v7155, 0.0
    %7166 = vadd.xlane.f32.xlu0 %v7165
    %v7167 = vpop.xlane.xlu0 %7166
    %v7168 = vsel %vm6121, %v7156, 0.0
    %7169 = vadd.xlane.f32.xlu0 %v7168
    %v7170 = vpop.xlane.xlu0 %7169
    %v7171 = vsel %vm6121, %v7157, 0.0
    %7172 = vadd.xlane.f32.xlu0 %v7171
    %v7173 = vpop.xlane.xlu0 %7172
    %v7174 = vsel %vm6121, %v7158, 0.0
    %7175 = vadd.xlane.f32.xlu0 %v7174
    %v7176 = vpop.xlane.xlu0 %7175
    %v7177 = vsel %vm6121, %v7159, 0.0
    %7178 = vadd.xlane.f32.xlu0 %v7177
    %v7179 = vpop.xlane.xlu0 %7178
    %v7180 = vsel %vm6121, %v7160, 0.0
    %7181 = vadd.xlane.f32.xlu0 %v7180
    %v7182 = vpop.xlane.xlu0 %7181
    %v7183 = vsel %vm6121, %v7161, 0.0
    %7184 = vadd.xlane.f32.xlu0 %v7183
    %v7185 = vpop.xlane.xlu0 %7184
    %v7186 = vadd.f32 %v7146, %v7164
    %v7187 = vadd.f32 %v7147, %v7167
    %v7188 = vadd.f32 %v7148, %v7170
    %v7189 = vadd.f32 %v7149, %v7173
    %v7190 = vadd.f32 %v7150, %v7176
    %v7191 = vadd.f32 %v7151, %v7179
    %v7192 = vadd.f32 %v7152, %v7182
    %v7193 = vadd.f32 %v7153, %v7185
    %v7194 = vmul.f32 %v5729, %v5729
    %v7195 = vmul.f32 %v5731, %v5731
    %v7196 = vmul.f32 %v5734, %v5734
    %v7197 = vmul.f32 %v5736, %v5736
    %v7198 = vmul.f32 %v5739, %v5739
    %v7199 = vmul.f32 %v5741, %v5741
    %v7200 = vmul.f32 %v5744, %v5744
    %v7201 = vmul.f32 %v5746, %v5746
    %v7202 = vsel %vm6121, %v7194, 0.0
    %7203 = vadd.xlane.f32.xlu0 %v7202
    %v7204 = vpop.xlane.xlu0 %7203
    %v7205 = vsel %vm6121, %v7195, 0.0
    %7206 = vadd.xlane.f32.xlu0 %v7205
    %v7207 = vpop.xlane.xlu0 %7206
    %v7208 = vsel %vm6121, %v7196, 0.0
    %7209 = vadd.xlane.f32.xlu0 %v7208
    %v7210 = vpop.xlane.xlu0 %7209
    %v7211 = vsel %vm6121, %v7197, 0.0
    %7212 = vadd.xlane.f32.xlu0 %v7211
    %v7213 = vpop.xlane.xlu0 %7212
    %v7214 = vsel %vm6121, %v7198, 0.0
    %7215 = vadd.xlane.f32.xlu0 %v7214
    %v7216 = vpop.xlane.xlu0 %7215
    %v7217 = vsel %vm6121, %v7199, 0.0
    %7218 = vadd.xlane.f32.xlu0 %v7217
    %v7219 = vpop.xlane.xlu0 %7218
    %v7220 = vsel %vm6121, %v7200, 0.0
    %7221 = vadd.xlane.f32.xlu0 %v7220
    %v7222 = vpop.xlane.xlu0 %7221
    %v7223 = vsel %vm6121, %v7201, 0.0
    %7224 = vadd.xlane.f32.xlu0 %v7223
    %v7225 = vpop.xlane.xlu0 %7224
    %v7226 = vadd.f32 %v7186, %v7204
    %v7227 = vadd.f32 %v7187, %v7207
    %v7228 = vadd.f32 %v7188, %v7210
    %v7229 = vadd.f32 %v7189, %v7213
    %v7230 = vadd.f32 %v7190, %v7216
    %v7231 = vadd.f32 %v7191, %v7219
    %v7232 = vadd.f32 %v7192, %v7222
    %v7233 = vadd.f32 %v7193, %v7225
    %v7234 = vmul.f32 %v6102, %v6102
    %v7235 = vmul.f32 %v6104, %v6104
    %v7236 = vmul.f32 %v6107, %v6107
    %v7237 = vmul.f32 %v6109, %v6109
    %v7238 = vmul.f32 %v6112, %v6112
    %v7239 = vmul.f32 %v6114, %v6114
    %v7240 = vmul.f32 %v6117, %v6117
    %v7241 = vmul.f32 %v6119, %v6119
    %v7242 = vsel %vm6121, %v7234, 0.0
    %7243 = vadd.xlane.f32.xlu0 %v7242
    %v7244 = vpop.xlane.xlu0 %7243
    %v7245 = vsel %vm6121, %v7235, 0.0
    %7246 = vadd.xlane.f32.xlu0 %v7245
    %v7247 = vpop.xlane.xlu0 %7246
    %v7248 = vsel %vm6121, %v7236, 0.0
    %7249 = vadd.xlane.f32.xlu0 %v7248
    %v7250 = vpop.xlane.xlu0 %7249
    %v7251 = vsel %vm6121, %v7237, 0.0
    %7252 = vadd.xlane.f32.xlu0 %v7251
    %v7253 = vpop.xlane.xlu0 %7252
    %v7254 = vsel %vm6121, %v7238, 0.0
    %7255 = vadd.xlane.f32.xlu0 %v7254
    %v7256 = vpop.xlane.xlu0 %7255
    %v7257 = vsel %vm6121, %v7239, 0.0
    %7258 = vadd.xlane.f32.xlu0 %v7257
    %v7259 = vpop.xlane.xlu0 %7258
    %v7260 = vsel %vm6121, %v7240, 0.0
    %7261 = vadd.xlane.f32.xlu0 %v7260
    %v7262 = vpop.xlane.xlu0 %7261
    %v7263 = vsel %vm6121, %v7241, 0.0
    %7264 = vadd.xlane.f32.xlu0 %v7263
    %v7265 = vpop.xlane.xlu0 %7264
    %v7266 = vadd.f32 %v7226, %v7244
    %v7267 = vadd.f32 %v7227, %v7247
    %v7268 = vadd.f32 %v7228, %v7250
    %v7269 = vadd.f32 %v7229, %v7253
    %v7270 = vadd.f32 %v7230, %v7256
    %v7271 = vadd.f32 %v7231, %v7259
    %v7272 = vadd.f32 %v7232, %v7262
    %v7273 = vadd.f32 %v7233, %v7265
    %v7274 = vmul.f32 %v6626, 0.03125
    %v7275 = vmul.f32 %v6627, 0.03125
    %v7276 = vmul.f32 %v6628, 0.03125
    %v7277 = vmul.f32 %v6629, 0.03125
    %v7278 = vmul.f32 %v6630, 0.03125
    %v7279 = vmul.f32 %v6631, 0.03125
    %v7280 = vmul.f32 %v6632, 0.03125
    %v7281 = vmul.f32 %v6633, 0.03125
    %v7282 = vmul.f32 %v7266, 0.03125
    %v7283 = vmul.f32 %v7267, 0.03125
    %v7284 = vmul.f32 %v7268, 0.03125
    %v7285 = vmul.f32 %v7269, 0.03125
    %v7286 = vmul.f32 %v7270, 0.03125
    %v7287 = vmul.f32 %v7271, 0.03125
    %v7288 = vmul.f32 %v7272, 0.03125
    %v7289 = vmul.f32 %v7273, 0.03125
    %v7290 = vmul.f32 %v7274, %v7274
    %v7291 = vmul.f32 %v7275, %v7275
    %v7292 = vmul.f32 %v7276, %v7276
    %v7293 = vmul.f32 %v7277, %v7277
    %v7294 = vmul.f32 %v7278, %v7278
    %v7295 = vmul.f32 %v7279, %v7279
    %v7296 = vmul.f32 %v7280, %v7280
    %v7297 = vmul.f32 %v7281, %v7281
    %v7298 = vsub.f32 %v7282, %v7290
    %v7299 = vsub.f32 %v7283, %v7291
    %v7300 = vsub.f32 %v7284, %v7292
    %v7301 = vsub.f32 %v7285, %v7293
    %v7302 = vsub.f32 %v7286, %v7294
    %v7303 = vsub.f32 %v7287, %v7295
    %v7304 = vsub.f32 %v7288, %v7296
    %v7305 = vsub.f32 %v7289, %v7297
    %v7306 = vmax.f32 %v7298, 0.0
    %v7307 = vmax.f32 %v7299, 0.0
    %v7308 = vmax.f32 %v7300, 0.0
    %v7309 = vmax.f32 %v7301, 0.0
    %v7310 = vmax.f32 %v7302, 0.0
    %v7311 = vmax.f32 %v7303, 0.0
    %v7312 = vmax.f32 %v7304, 0.0
    %v7313 = vmax.f32 %v7305, 0.0
    %v7314 = vadd.f32 %v7306, 1e-05
    %v7315 = vadd.f32 %v7307, 1e-05
    %v7316 = vadd.f32 %v7308, 1e-05
    %v7317 = vadd.f32 %v7309, 1e-05
    %v7318 = vadd.f32 %v7310, 1e-05
    %v7319 = vadd.f32 %v7311, 1e-05
    %v7320 = vadd.f32 %v7312, 1e-05
    %v7321 = vadd.f32 %v7313, 1e-05
    %v7322 = vrsqrt.pop %v7314
    %v7323 = vmul.f32 %v7322, %v7314
    %v7324 = vmul.f32 %v7323, %v7322
    %v7325 = vmul.f32 0.5, %v7324
    %v7326 = vsub.f32 1.5, %v7325
    %v7327 = vmul.f32 %v7322, %v7326
    %vm7328 = vweird.f32 %v7314
    %vm7329 = vweird.f32 %v7322
    %vm7330 = vmor %vm7328, %vm7329
    %v7331 = vsel %vm7330, %v7322, %v7327
    %v7332 = vrsqrt.pop %v7315
    %v7333 = vmul.f32 %v7332, %v7315
    %v7334 = vmul.f32 %v7333, %v7332
    %v7335 = vmul.f32 0.5, %v7334
    %v7336 = vsub.f32 1.5, %v7335
    %v7337 = vmul.f32 %v7332, %v7336
    %vm7338 = vweird.f32 %v7315
    %vm7339 = vweird.f32 %v7332
    %vm7340 = vmor %vm7338, %vm7339
    %v7341 = vsel %vm7340, %v7332, %v7337
    %v7342 = vrsqrt.pop %v7316
    %v7343 = vmul.f32 %v7342, %v7316
    %v7344 = vmul.f32 %v7343, %v7342
    %v7345 = vmul.f32 0.5, %v7344
    %v7346 = vsub.f32 1.5, %v7345
    %v7347 = vmul.f32 %v7342, %v7346
    %vm7348 = vweird.f32 %v7316
    %vm7349 = vweird.f32 %v7342
    %vm7350 = vmor %vm7348, %vm7349
    %v7351 = vsel %vm7350, %v7342, %v7347
    %v7352 = vrsqrt.pop %v7317
    %v7353 = vmul.f32 %v7352, %v7317
    %v7354 = vmul.f32 %v7353, %v7352
    %v7355 = vmul.f32 0.5, %v7354
    %v7356 = vsub.f32 1.5, %v7355
    %v7357 = vmul.f32 %v7352, %v7356
    %vm7358 = vweird.f32 %v7317
    %vm7359 = vweird.f32 %v7352
    %vm7360 = vmor %vm7358, %vm7359
    %v7361 = vsel %vm7360, %v7352, %v7357
    %v7362 = vrsqrt.pop %v7318
    %v7363 = vmul.f32 %v7362, %v7318
    %v7364 = vmul.f32 %v7363, %v7362
    %v7365 = vmul.f32 0.5, %v7364
    %v7366 = vsub.f32 1.5, %v7365
    %v7367 = vmul.f32 %v7362, %v7366
    %vm7368 = vweird.f32 %v7318
    %vm7369 = vweird.f32 %v7362
    %vm7370 = vmor %vm7368, %vm7369
    %v7371 = vsel %vm7370, %v7362, %v7367
    %v7372 = vrsqrt.pop %v7319
    %v7373 = vmul.f32 %v7372, %v7319
    %v7374 = vmul.f32 %v7373, %v7372
    %v7375 = vmul.f32 0.5, %v7374
    %v7376 = vsub.f32 1.5, %v7375
    %v7377 = vmul.f32 %v7372, %v7376
    %vm7378 = vweird.f32 %v7319
    %vm7379 = vweird.f32 %v7372
    %vm7380 = vmor %vm7378, %vm7379
    %v7381 = vsel %vm7380, %v7372, %v7377
    %v7382 = vrsqrt.pop %v7320
    %v7383 = vmul.f32 %v7382, %v7320
    %v7384 = vmul.f32 %v7383, %v7382
    %v7385 = vmul.f32 0.5, %v7384
    %v7386 = vsub.f32 1.5, %v7385
    %v7387 = vmul.f32 %v7382, %v7386
    %vm7388 = vweird.f32 %v7320
    %vm7389 = vweird.f32 %v7382
    %vm7390 = vmor %vm7388, %vm7389
    %v7391 = vsel %vm7390, %v7382, %v7387
    %v7392 = vrsqrt.pop %v7321
    %v7393 = vmul.f32 %v7392, %v7321
    %v7394 = vmul.f32 %v7393, %v7392
    %v7395 = vmul.f32 0.5, %v7394
    %v7396 = vsub.f32 1.5, %v7395
    %v7397 = vmul.f32 %v7392, %v7396
    %vm7398 = vweird.f32 %v7321
    %vm7399 = vweird.f32 %v7392
    %vm7400 = vmor %vm7398, %vm7399
    %v7401 = vsel %vm7400, %v7392, %v7397
    %v7402 = vld [vmem:[%s2] sm:$0xff]
    %v7403 = vld [vmem:[%s2 + $0x8] sm:$0xff]
    %v7404 = vld [vmem:[%s2 + $0x10] sm:$0xff]
    %v7405 = vld [vmem:[%s2 + $0x18] sm:$0xff]
    %v7406 = vld [vmem:[%s2 + $0x20] sm:$0xff]
    %v7407 = vld [vmem:[%s2 + $0x28] sm:$0xff]
    %v7408 = vld [vmem:[%s2 + $0x30] sm:$0xff]
    %v7409 = vld [vmem:[%s2 + $0x38] sm:$0xff]
    %v7410 = vmul.f32 %v7331, %v7402
    %v7411 = vmul.f32 %v7341, %v7403
    %v7412 = vmul.f32 %v7351, %v7404
    %v7413 = vmul.f32 %v7361, %v7405
    %v7414 = vmul.f32 %v7371, %v7406
    %v7415 = vmul.f32 %v7381, %v7407
    %v7416 = vmul.f32 %v7391, %v7408
    %v7417 = vmul.f32 %v7401, %v7409
    %v7418 = vld [vmem:[%s3] sm:$0xff]
    %v7419 = vld [vmem:[%s3 + $0x8] sm:$0xff]
    %v7420 = vld [vmem:[%s3 + $0x10] sm:$0xff]
    %v7421 = vld [vmem:[%s3 + $0x18] sm:$0xff]
    %v7422 = vld [vmem:[%s3 + $0x20] sm:$0xff]
    %v7423 = vld [vmem:[%s3 + $0x28] sm:$0xff]
    %v7424 = vld [vmem:[%s3 + $0x30] sm:$0xff]
    %v7425 = vld [vmem:[%s3 + $0x38] sm:$0xff]
    %v7426 = vmul.f32 %v7274, %v7410
    %v7427 = vmul.f32 %v7275, %v7411
    %v7428 = vmul.f32 %v7276, %v7412
    %v7429 = vmul.f32 %v7277, %v7413
    %v7430 = vmul.f32 %v7278, %v7414
    %v7431 = vmul.f32 %v7279, %v7415
    %v7432 = vmul.f32 %v7280, %v7416
    %v7433 = vmul.f32 %v7281, %v7417
    %v7434 = vsub.f32 %v7418, %v7426
    %v7435 = vsub.f32 %v7419, %v7427
    %v7436 = vsub.f32 %v7420, %v7428
    %v7437 = vsub.f32 %v7421, %v7429
    %v7438 = vsub.f32 %v7422, %v7430
    %v7439 = vsub.f32 %v7423, %v7431
    %v7440 = vsub.f32 %v7424, %v7432
    %v7441 = vsub.f32 %v7425, %v7433
    %7443 = vset.pattern.permute.xlu0 0
    %7444 = vperm.xlu0 %7443, %v7410
    %v7445 = vpop.permute.xlu0 %7444
    %7448 = vset.pattern.permute.xlu0 0
    %7449 = vperm.xlu0 %7448, %v7411
    %v7450 = vpop.permute.xlu0 %7449
    %7453 = vset.pattern.permute.xlu0 0
    %7454 = vperm.xlu0 %7453, %v7412
    %v7455 = vpop.permute.xlu0 %7454
    %7458 = vset.pattern.permute.xlu0 0
    %7459 = vperm.xlu0 %7458, %v7413
    %v7460 = vpop.permute.xlu0 %7459
    %7463 = vset.pattern.permute.xlu0 0
    %7464 = vperm.xlu0 %7463, %v7414
    %v7465 = vpop.permute.xlu0 %7464
    %7468 = vset.pattern.permute.xlu0 0
    %7469 = vperm.xlu0 %7468, %v7415
    %v7470 = vpop.permute.xlu0 %7469
    %7473 = vset.pattern.permute.xlu0 0
    %7474 = vperm.xlu0 %7473, %v7416
    %v7475 = vpop.permute.xlu0 %7474
    %7478 = vset.pattern.permute.xlu0 0
    %7479 = vperm.xlu0 %7478, %v7417
    %v7480 = vpop.permute.xlu0 %7479
    %v7482 = vmul.f32 %v507, %v7445
    %v7483 = vmul.f32 %v509, %v7450
    %v7484 = vmul.f32 %v512, %v7455
    %v7485 = vmul.f32 %v514, %v7460
    %v7486 = vmul.f32 %v517, %v7465
    %v7487 = vmul.f32 %v519, %v7470
    %v7488 = vmul.f32 %v522, %v7475
    %v7489 = vmul.f32 %v524, %v7480
    %7491 = vset.pattern.permute.xlu0 0
    %7492 = vperm.xlu0 %7491, %v7434
    %v7493 = vpop.permute.xlu0 %7492
    %7496 = vset.pattern.permute.xlu0 0
    %7497 = vperm.xlu0 %7496, %v7435
    %v7498 = vpop.permute.xlu0 %7497
    %7501 = vset.pattern.permute.xlu0 0
    %7502 = vperm.xlu0 %7501, %v7436
    %v7503 = vpop.permute.xlu0 %7502
    %7506 = vset.pattern.permute.xlu0 0
    %7507 = vperm.xlu0 %7506, %v7437
    %v7508 = vpop.permute.xlu0 %7507
    %7511 = vset.pattern.permute.xlu0 0
    %7512 = vperm.xlu0 %7511, %v7438
    %v7513 = vpop.permute.xlu0 %7512
    %7516 = vset.pattern.permute.xlu0 0
    %7517 = vperm.xlu0 %7516, %v7439
    %v7518 = vpop.permute.xlu0 %7517
    %7521 = vset.pattern.permute.xlu0 0
    %7522 = vperm.xlu0 %7521, %v7440
    %v7523 = vpop.permute.xlu0 %7522
    %7526 = vset.pattern.permute.xlu0 0
    %7527 = vperm.xlu0 %7526, %v7441
    %v7528 = vpop.permute.xlu0 %7527
    %v7530 = vadd.f32 %v7482, %v7493
    %v7531 = vadd.f32 %v7483, %v7498
    %v7532 = vadd.f32 %v7484, %v7503
    %v7533 = vadd.f32 %v7485, %v7508
    %v7534 = vadd.f32 %v7486, %v7513
    %v7535 = vadd.f32 %v7487, %v7518
    %v7536 = vadd.f32 %v7488, %v7523
    %v7537 = vadd.f32 %v7489, %v7528
    %vm7538 = vcmp.gt.f32.partialorder %v7530, 0.0
    %vm7539 = vcmp.gt.f32.partialorder %v7531, 0.0
    %vm7540 = vcmp.gt.f32.partialorder %v7532, 0.0
    %vm7541 = vcmp.gt.f32.partialorder %v7533, 0.0
    %vm7542 = vcmp.gt.f32.partialorder %v7534, 0.0
    %vm7543 = vcmp.gt.f32.partialorder %v7535, 0.0
    %vm7544 = vcmp.gt.f32.partialorder %v7536, 0.0
    %vm7545 = vcmp.gt.f32.partialorder %v7537, 0.0
    %v7546 = vmul.f32 %v7530, 0.2
    %v7547 = vmul.f32 %v7531, 0.2
    %v7548 = vmul.f32 %v7532, 0.2
    %v7549 = vmul.f32 %v7533, 0.2
    %v7550 = vmul.f32 %v7534, 0.2
    %v7551 = vmul.f32 %v7535, 0.2
    %v7552 = vmul.f32 %v7536, 0.2
    %v7553 = vmul.f32 %v7537, 0.2
    %v7554 = vsel %vm7538, %v7530, %v7546
    %v7555 = vsel %vm7539, %v7531, %v7547
    %v7556 = vsel %vm7540, %v7532, %v7548
    %v7557 = vsel %vm7541, %v7533, %v7549
    %v7558 = vsel %vm7542, %v7534, %v7550
    %v7559 = vsel %vm7543, %v7535, %v7551
    %v7560 = vsel %vm7544, %v7536, %v7552
    %v7561 = vsel %vm7545, %v7537, %v7553
    %v7562 = vpack.c.bf16 %v7555, %v7554
    %v7563 = vpack.c.bf16 %v7557, %v7556
    %v7564 = vpack.c.bf16 %v7559, %v7558
    %v7565 = vpack.c.bf16 %v7561, %v7560
    %v7566 = vld [vmem:[%s4] sm:$0xf]
    %v7567 = vld [vmem:[%s4 + $0x4] sm:$0xf]
    %v7568 = vmul.f32 %v880, %v7445
    %v7569 = vmul.f32 %v882, %v7450
    %v7570 = vmul.f32 %v885, %v7455
    %v7571 = vmul.f32 %v887, %v7460
    %v7572 = vmul.f32 %v890, %v7465
    %v7573 = vmul.f32 %v892, %v7470
    %v7574 = vmul.f32 %v895, %v7475
    %v7575 = vmul.f32 %v897, %v7480
    %v7576 = vadd.f32 %v7568, %v7493
    %v7577 = vadd.f32 %v7569, %v7498
    %v7578 = vadd.f32 %v7570, %v7503
    %v7579 = vadd.f32 %v7571, %v7508
    %v7580 = vadd.f32 %v7572, %v7513
    %v7581 = vadd.f32 %v7573, %v7518
    %v7582 = vadd.f32 %v7574, %v7523
    %v7583 = vadd.f32 %v7575, %v7528
    %vm7584 = vcmp.gt.f32.partialorder %v7576, 0.0
    %vm7585 = vcmp.gt.f32.partialorder %v7577, 0.0
    %vm7586 = vcmp.gt.f32.partialorder %v7578, 0.0
    %vm7587 = vcmp.gt.f32.partialorder %v7579, 0.0
    %vm7588 = vcmp.gt.f32.partialorder %v7580, 0.0
    %vm7589 = vcmp.gt.f32.partialorder %v7581, 0.0
    %vm7590 = vcmp.gt.f32.partialorder %v7582, 0.0
    %vm7591 = vcmp.gt.f32.partialorder %v7583, 0.0
    %v7592 = vmul.f32 %v7576, 0.2
    %v7593 = vmul.f32 %v7577, 0.2
    %v7594 = vmul.f32 %v7578, 0.2
    %v7595 = vmul.f32 %v7579, 0.2
    %v7596 = vmul.f32 %v7580, 0.2
    %v7597 = vmul.f32 %v7581, 0.2
    %v7598 = vmul.f32 %v7582, 0.2
    %v7599 = vmul.f32 %v7583, 0.2
    %v7600 = vsel %vm7584, %v7576, %v7592
    %v7601 = vsel %vm7585, %v7577, %v7593
    %v7602 = vsel %vm7586, %v7578, %v7594
    %v7603 = vsel %vm7587, %v7579, %v7595
    %v7604 = vsel %vm7588, %v7580, %v7596
    %v7605 = vsel %vm7589, %v7581, %v7597
    %v7606 = vsel %vm7590, %v7582, %v7598
    %v7607 = vsel %vm7591, %v7583, %v7599
    %v7608 = vpack.c.bf16 %v7601, %v7600
    %v7609 = vpack.c.bf16 %v7603, %v7602
    %v7610 = vpack.c.bf16 %v7605, %v7604
    %v7611 = vpack.c.bf16 %v7607, %v7606
    %s7612 = scalar_lea.vmem %s4, 8
    %v7613 = vld [vmem:[%s7612] sm:$0xf]
    %v7614 = vld [vmem:[%s7612 + $0x4] sm:$0xf]
    %v7617 = vunpack.c.l.b16 %v7613
    %v7618 = vunpack.c.l.b16 %v7614
    %v7619 = vpack.c.b16 %v7618, %v7617
    %vm7620 = vcmask 523264
    %v7622 = vsel %vm7620, %v7619, 0
    %7624 = vmatpush.bf16.msra.mxu0 0
    %7625 = vmatpush.bf16.msra.mxu0 0
    %7626 = vmatpush.bf16.msra.mxu0 0
    %7627 = vmatpush.bf16.msra.mxu0 0
    %7628 = vmatpush.bf16.msra.mxu0 %v7611
    %7629 = vmatpush.bf16.msra.mxu0 %v7610
    %7630 = vmatpush.bf16.msra.mxu0 %v7609
    %7631 = vmatpush.bf16.msra.mxu0 %v7608
    %7632 = vmatmul.bf16.gmra.mxu0 %v7622
    %v7633 = vpop.f32.mrf.mxu0
    %v7634 = vadd.f32 0.0, %v7633
    %v7635 = vpop.f32.mrf.mxu0
    %v7636 = vadd.f32 0.0, %v7635
    %7637 = vdwg.mxu0
    %v7640 = vunpack.c.l.b16 %v7566
    %v7641 = vunpack.c.l.b16 %v7567
    %v7642 = vpack.c.b16 %v7641, %v7640
    %v7644 = vsel %vm7620, %v7642, 0
    %7646 = vmatpush.bf16.msra.mxu0 0
    %7647 = vmatpush.bf16.msra.mxu0 0
    %7648 = vmatpush.bf16.msra.mxu0 0
    %7649 = vmatpush.bf16.msra.mxu0 0
    %7650 = vmatpush.bf16.msra.mxu0 %v7565
    %7651 = vmatpush.bf16.msra.mxu0 %v7564
    %7652 = vmatpush.bf16.msra.mxu0 %v7563
    %7653 = vmatpush.bf16.msra.mxu0 %v7562
    %7654 = vmatmul.bf16.gmra.mxu0 %v7644
    %v7655 = vpop.f32.mrf.mxu0
    %v7656 = vadd.f32 %v7634, %v7655
    %v7657 = vpop.f32.mrf.mxu0
    %v7658 = vadd.f32 %v7636, %v7657
    %7659 = vdwg.mxu0
    %v7660 = vmul.f32 %v1253, %v7445
    %v7661 = vmul.f32 %v1255, %v7450
    %v7662 = vmul.f32 %v1258, %v7455
    %v7663 = vmul.f32 %v1260, %v7460
    %v7664 = vmul.f32 %v1263, %v7465
    %v7665 = vmul.f32 %v1265, %v7470
    %v7666 = vmul.f32 %v1268, %v7475
    %v7667 = vmul.f32 %v1270, %v7480
    %v7668 = vadd.f32 %v7660, %v7493
    %v7669 = vadd.f32 %v7661, %v7498
    %v7670 = vadd.f32 %v7662, %v7503
    %v7671 = vadd.f32 %v7663, %v7508
    %v7672 = vadd.f32 %v7664, %v7513
    %v7673 = vadd.f32 %v7665, %v7518
    %v7674 = vadd.f32 %v7666, %v7523
    %v7675 = vadd.f32 %v7667, %v7528
    %vm7676 = vcmp.gt.f32.partialorder %v7668, 0.0
    %vm7677 = vcmp.gt.f32.partialorder %v7669, 0.0
    %vm7678 = vcmp.gt.f32.partialorder %v7670, 0.0
    %vm7679 = vcmp.gt.f32.partialorder %v7671, 0.0
    %vm7680 = vcmp.gt.f32.partialorder %v7672, 0.0
    %vm7681 = vcmp.gt.f32.partialorder %v7673, 0.0
    %vm7682 = vcmp.gt.f32.partialorder %v7674, 0.0
    %vm7683 = vcmp.gt.f32.partialorder %v7675, 0.0
    %v7684 = vmul.f32 %v7668, 0.2
    %v7685 = vmul.f32 %v7669, 0.2
    %v7686 = vmul.f32 %v7670, 0.2
    %v7687 = vmul.f32 %v7671, 0.2
    %v7688 = vmul.f32 %v7672, 0.2
    %v7689 = vmul.f32 %v7673, 0.2
    %v7690 = vmul.f32 %v7674, 0.2
    %v7691 = vmul.f32 %v7675, 0.2
    %v7692 = vsel %vm7676, %v7668, %v7684
    %v7693 = vsel %vm7677, %v7669, %v7685
    %v7694 = vsel %vm7678, %v7670, %v7686
    %v7695 = vsel %vm7679, %v7671, %v7687
    %v7696 = vsel %vm7680, %v7672, %v7688
    %v7697 = vsel %vm7681, %v7673, %v7689
    %v7698 = vsel %vm7682, %v7674, %v7690
    %v7699 = vsel %vm7683, %v7675, %v7691
    %v7700 = vpack.c.bf16 %v7693, %v7692
    %v7701 = vpack.c.bf16 %v7695, %v7694
    %v7702 = vpack.c.bf16 %v7697, %v7696
    %v7703 = vpack.c.bf16 %v7699, %v7698
    %s7704 = scalar_lea.vmem %s4, 16
    %v7705 = vld [vmem:[%s7704] sm:$0xf]
    %v7706 = vld [vmem:[%s7704 + $0x4] sm:$0xf]
    %v7709 = vunpack.c.l.b16 %v7705
    %v7710 = vunpack.c.l.b16 %v7706
    %v7711 = vpack.c.b16 %v7710, %v7709
    %v7713 = vsel %vm7620, %v7711, 0
    %7715 = vmatpush.bf16.msra.mxu0 0
    %7716 = vmatpush.bf16.msra.mxu0 0
    %7717 = vmatpush.bf16.msra.mxu0 0
    %7718 = vmatpush.bf16.msra.mxu0 0
    %7719 = vmatpush.bf16.msra.mxu0 %v7703
    %7720 = vmatpush.bf16.msra.mxu0 %v7702
    %7721 = vmatpush.bf16.msra.mxu0 %v7701
    %7722 = vmatpush.bf16.msra.mxu0 %v7700
    %7723 = vmatmul.bf16.gmra.mxu0 %v7713
    %v7724 = vpop.f32.mrf.mxu0
    %v7725 = vadd.f32 0.0, %v7724
    %v7726 = vpop.f32.mrf.mxu0
    %v7727 = vadd.f32 0.0, %v7726
    %7728 = vdwg.mxu0
    %v7729 = vadd.f32 %v7656, %v7725
    %v7730 = vadd.f32 %v7658, %v7727
    %v7731 = vmul.f32 %v1626, %v7445
    %v7732 = vmul.f32 %v1628, %v7450
    %v7733 = vmul.f32 %v1631, %v7455
    %v7734 = vmul.f32 %v1633, %v7460
    %v7735 = vmul.f32 %v1636, %v7465
    %v7736 = vmul.f32 %v1638, %v7470
    %v7737 = vmul.f32 %v1641, %v7475
    %v7738 = vmul.f32 %v1643, %v7480
    %v7739 = vadd.f32 %v7731, %v7493
    %v7740 = vadd.f32 %v7732, %v7498
    %v7741 = vadd.f32 %v7733, %v7503
    %v7742 = vadd.f32 %v7734, %v7508
    %v7743 = vadd.f32 %v7735, %v7513
    %v7744 = vadd.f32 %v7736, %v7518
    %v7745 = vadd.f32 %v7737, %v7523
    %v7746 = vadd.f32 %v7738, %v7528
    %vm7747 = vcmp.gt.f32.partialorder %v7739, 0.0
    %vm7748 = vcmp.gt.f32.partialorder %v7740, 0.0
    %vm7749 = vcmp.gt.f32.partialorder %v7741, 0.0
    %vm7750 = vcmp.gt.f32.partialorder %v7742, 0.0
    %vm7751 = vcmp.gt.f32.partialorder %v7743, 0.0
    %vm7752 = vcmp.gt.f32.partialorder %v7744, 0.0
    %vm7753 = vcmp.gt.f32.partialorder %v7745, 0.0
    %vm7754 = vcmp.gt.f32.partialorder %v7746, 0.0
    %v7755 = vmul.f32 %v7739, 0.2
    %v7756 = vmul.f32 %v7740, 0.2
    %v7757 = vmul.f32 %v7741, 0.2
    %v7758 = vmul.f32 %v7742, 0.2
    %v7759 = vmul.f32 %v7743, 0.2
    %v7760 = vmul.f32 %v7744, 0.2
    %v7761 = vmul.f32 %v7745, 0.2
    %v7762 = vmul.f32 %v7746, 0.2
    %v7763 = vsel %vm7747, %v7739, %v7755
    %v7764 = vsel %vm7748, %v7740, %v7756
    %v7765 = vsel %vm7749, %v7741, %v7757
    %v7766 = vsel %vm7750, %v7742, %v7758
    %v7767 = vsel %vm7751, %v7743, %v7759
    %v7768 = vsel %vm7752, %v7744, %v7760
    %v7769 = vsel %vm7753, %v7745, %v7761
    %v7770 = vsel %vm7754, %v7746, %v7762
    %v7771 = vpack.c.bf16 %v7764, %v7763
    %v7772 = vpack.c.bf16 %v7766, %v7765
    %v7773 = vpack.c.bf16 %v7768, %v7767
    %v7774 = vpack.c.bf16 %v7770, %v7769
    %s7775 = scalar_lea.vmem %s4, 24
    %v7776 = vld [vmem:[%s7775] sm:$0xf]
    %v7777 = vld [vmem:[%s7775 + $0x4] sm:$0xf]
    %v7780 = vunpack.c.l.b16 %v7776
    %v7781 = vunpack.c.l.b16 %v7777
    %v7782 = vpack.c.b16 %v7781, %v7780
    %v7784 = vsel %vm7620, %v7782, 0
    %7786 = vmatpush.bf16.msra.mxu0 0
    %7787 = vmatpush.bf16.msra.mxu0 0
    %7788 = vmatpush.bf16.msra.mxu0 0
    %7789 = vmatpush.bf16.msra.mxu0 0
    %7790 = vmatpush.bf16.msra.mxu0 %v7774
    %7791 = vmatpush.bf16.msra.mxu0 %v7773
    %7792 = vmatpush.bf16.msra.mxu0 %v7772
    %7793 = vmatpush.bf16.msra.mxu0 %v7771
    %7794 = vmatmul.bf16.gmra.mxu0 %v7784
    %v7795 = vpop.f32.mrf.mxu0
    %v7796 = vadd.f32 0.0, %v7795
    %v7797 = vpop.f32.mrf.mxu0
    %v7798 = vadd.f32 0.0, %v7797
    %7799 = vdwg.mxu0
    %v7800 = vadd.f32 %v7729, %v7796
    %v7801 = vadd.f32 %v7730, %v7798
    %v7802 = vmul.f32 %v1999, %v7445
    %v7803 = vmul.f32 %v2001, %v7450
    %v7804 = vmul.f32 %v2004, %v7455
    %v7805 = vmul.f32 %v2006, %v7460
    %v7806 = vmul.f32 %v2009, %v7465
    %v7807 = vmul.f32 %v2011, %v7470
    %v7808 = vmul.f32 %v2014, %v7475
    %v7809 = vmul.f32 %v2016, %v7480
    %v7810 = vadd.f32 %v7802, %v7493
    %v7811 = vadd.f32 %v7803, %v7498
    %v7812 = vadd.f32 %v7804, %v7503
    %v7813 = vadd.f32 %v7805, %v7508
    %v7814 = vadd.f32 %v7806, %v7513
    %v7815 = vadd.f32 %v7807, %v7518
    %v7816 = vadd.f32 %v7808, %v7523
    %v7817 = vadd.f32 %v7809, %v7528
    %vm7818 = vcmp.gt.f32.partialorder %v7810, 0.0
    %vm7819 = vcmp.gt.f32.partialorder %v7811, 0.0
    %vm7820 = vcmp.gt.f32.partialorder %v7812, 0.0
    %vm7821 = vcmp.gt.f32.partialorder %v7813, 0.0
    %vm7822 = vcmp.gt.f32.partialorder %v7814, 0.0
    %vm7823 = vcmp.gt.f32.partialorder %v7815, 0.0
    %vm7824 = vcmp.gt.f32.partialorder %v7816, 0.0
    %vm7825 = vcmp.gt.f32.partialorder %v7817, 0.0
    %v7826 = vmul.f32 %v7810, 0.2
    %v7827 = vmul.f32 %v7811, 0.2
    %v7828 = vmul.f32 %v7812, 0.2
    %v7829 = vmul.f32 %v7813, 0.2
    %v7830 = vmul.f32 %v7814, 0.2
    %v7831 = vmul.f32 %v7815, 0.2
    %v7832 = vmul.f32 %v7816, 0.2
    %v7833 = vmul.f32 %v7817, 0.2
    %v7834 = vsel %vm7818, %v7810, %v7826
    %v7835 = vsel %vm7819, %v7811, %v7827
    %v7836 = vsel %vm7820, %v7812, %v7828
    %v7837 = vsel %vm7821, %v7813, %v7829
    %v7838 = vsel %vm7822, %v7814, %v7830
    %v7839 = vsel %vm7823, %v7815, %v7831
    %v7840 = vsel %vm7824, %v7816, %v7832
    %v7841 = vsel %vm7825, %v7817, %v7833
    %v7842 = vpack.c.bf16 %v7835, %v7834
    %v7843 = vpack.c.bf16 %v7837, %v7836
    %v7844 = vpack.c.bf16 %v7839, %v7838
    %v7845 = vpack.c.bf16 %v7841, %v7840
    %s7846 = scalar_lea.vmem %s4, 32
    %v7847 = vld [vmem:[%s7846] sm:$0xf]
    %v7848 = vld [vmem:[%s7846 + $0x4] sm:$0xf]
    %v7851 = vunpack.c.l.b16 %v7847
    %v7852 = vunpack.c.l.b16 %v7848
    %v7853 = vpack.c.b16 %v7852, %v7851
    %v7855 = vsel %vm7620, %v7853, 0
    %7857 = vmatpush.bf16.msra.mxu0 0
    %7858 = vmatpush.bf16.msra.mxu0 0
    %7859 = vmatpush.bf16.msra.mxu0 0
    %7860 = vmatpush.bf16.msra.mxu0 0
    %7861 = vmatpush.bf16.msra.mxu0 %v7845
    %7862 = vmatpush.bf16.msra.mxu0 %v7844
    %7863 = vmatpush.bf16.msra.mxu0 %v7843
    %7864 = vmatpush.bf16.msra.mxu0 %v7842
    %7865 = vmatmul.bf16.gmra.mxu0 %v7855
    %v7866 = vpop.f32.mrf.mxu0
    %v7867 = vadd.f32 0.0, %v7866
    %v7868 = vpop.f32.mrf.mxu0
    %v7869 = vadd.f32 0.0, %v7868
    %7870 = vdwg.mxu0
    %v7871 = vadd.f32 %v7800, %v7867
    %v7872 = vadd.f32 %v7801, %v7869
    %v7873 = vmul.f32 %v2372, %v7445
    %v7874 = vmul.f32 %v2374, %v7450
    %v7875 = vmul.f32 %v2377, %v7455
    %v7876 = vmul.f32 %v2379, %v7460
    %v7877 = vmul.f32 %v2382, %v7465
    %v7878 = vmul.f32 %v2384, %v7470
    %v7879 = vmul.f32 %v2387, %v7475
    %v7880 = vmul.f32 %v2389, %v7480
    %v7881 = vadd.f32 %v7873, %v7493
    %v7882 = vadd.f32 %v7874, %v7498
    %v7883 = vadd.f32 %v7875, %v7503
    %v7884 = vadd.f32 %v7876, %v7508
    %v7885 = vadd.f32 %v7877, %v7513
    %v7886 = vadd.f32 %v7878, %v7518
    %v7887 = vadd.f32 %v7879, %v7523
    %v7888 = vadd.f32 %v7880, %v7528
    %vm7889 = vcmp.gt.f32.partialorder %v7881, 0.0
    %vm7890 = vcmp.gt.f32.partialorder %v7882, 0.0
    %vm7891 = vcmp.gt.f32.partialorder %v7883, 0.0
    %vm7892 = vcmp.gt.f32.partialorder %v7884, 0.0
    %vm7893 = vcmp.gt.f32.partialorder %v7885, 0.0
    %vm7894 = vcmp.gt.f32.partialorder %v7886, 0.0
    %vm7895 = vcmp.gt.f32.partialorder %v7887, 0.0
    %vm7896 = vcmp.gt.f32.partialorder %v7888, 0.0
    %v7897 = vmul.f32 %v7881, 0.2
    %v7898 = vmul.f32 %v7882, 0.2
    %v7899 = vmul.f32 %v7883, 0.2
    %v7900 = vmul.f32 %v7884, 0.2
    %v7901 = vmul.f32 %v7885, 0.2
    %v7902 = vmul.f32 %v7886, 0.2
    %v7903 = vmul.f32 %v7887, 0.2
    %v7904 = vmul.f32 %v7888, 0.2
    %v7905 = vsel %vm7889, %v7881, %v7897
    %v7906 = vsel %vm7890, %v7882, %v7898
    %v7907 = vsel %vm7891, %v7883, %v7899
    %v7908 = vsel %vm7892, %v7884, %v7900
    %v7909 = vsel %vm7893, %v7885, %v7901
    %v7910 = vsel %vm7894, %v7886, %v7902
    %v7911 = vsel %vm7895, %v7887, %v7903
    %v7912 = vsel %vm7896, %v7888, %v7904
    %v7913 = vpack.c.bf16 %v7906, %v7905
    %v7914 = vpack.c.bf16 %v7908, %v7907
    %v7915 = vpack.c.bf16 %v7910, %v7909
    %v7916 = vpack.c.bf16 %v7912, %v7911
    %s7917 = scalar_lea.vmem %s4, 40
    %v7918 = vld [vmem:[%s7917] sm:$0xf]
    %v7919 = vld [vmem:[%s7917 + $0x4] sm:$0xf]
    %v7922 = vunpack.c.l.b16 %v7918
    %v7923 = vunpack.c.l.b16 %v7919
    %v7924 = vpack.c.b16 %v7923, %v7922
    %v7926 = vsel %vm7620, %v7924, 0
    %7928 = vmatpush.bf16.msra.mxu0 0
    %7929 = vmatpush.bf16.msra.mxu0 0
    %7930 = vmatpush.bf16.msra.mxu0 0
    %7931 = vmatpush.bf16.msra.mxu0 0
    %7932 = vmatpush.bf16.msra.mxu0 %v7916
    %7933 = vmatpush.bf16.msra.mxu0 %v7915
    %7934 = vmatpush.bf16.msra.mxu0 %v7914
    %7935 = vmatpush.bf16.msra.mxu0 %v7913
    %7936 = vmatmul.bf16.gmra.mxu0 %v7926
    %v7937 = vpop.f32.mrf.mxu0
    %v7938 = vadd.f32 0.0, %v7937
    %v7939 = vpop.f32.mrf.mxu0
    %v7940 = vadd.f32 0.0, %v7939
    %7941 = vdwg.mxu0
    %v7942 = vadd.f32 %v7871, %v7938
    %v7943 = vadd.f32 %v7872, %v7940
    %v7944 = vmul.f32 %v2745, %v7445
    %v7945 = vmul.f32 %v2747, %v7450
    %v7946 = vmul.f32 %v2750, %v7455
    %v7947 = vmul.f32 %v2752, %v7460
    %v7948 = vmul.f32 %v2755, %v7465
    %v7949 = vmul.f32 %v2757, %v7470
    %v7950 = vmul.f32 %v2760, %v7475
    %v7951 = vmul.f32 %v2762, %v7480
    %v7952 = vadd.f32 %v7944, %v7493
    %v7953 = vadd.f32 %v7945, %v7498
    %v7954 = vadd.f32 %v7946, %v7503
    %v7955 = vadd.f32 %v7947, %v7508
    %v7956 = vadd.f32 %v7948, %v7513
    %v7957 = vadd.f32 %v7949, %v7518
    %v7958 = vadd.f32 %v7950, %v7523
    %v7959 = vadd.f32 %v7951, %v7528
    %vm7960 = vcmp.gt.f32.partialorder %v7952, 0.0
    %vm7961 = vcmp.gt.f32.partialorder %v7953, 0.0
    %vm7962 = vcmp.gt.f32.partialorder %v7954, 0.0
    %vm7963 = vcmp.gt.f32.partialorder %v7955, 0.0
    %vm7964 = vcmp.gt.f32.partialorder %v7956, 0.0
    %vm7965 = vcmp.gt.f32.partialorder %v7957, 0.0
    %vm7966 = vcmp.gt.f32.partialorder %v7958, 0.0
    %vm7967 = vcmp.gt.f32.partialorder %v7959, 0.0
    %v7968 = vmul.f32 %v7952, 0.2
    %v7969 = vmul.f32 %v7953, 0.2
    %v7970 = vmul.f32 %v7954, 0.2
    %v7971 = vmul.f32 %v7955, 0.2
    %v7972 = vmul.f32 %v7956, 0.2
    %v7973 = vmul.f32 %v7957, 0.2
    %v7974 = vmul.f32 %v7958, 0.2
    %v7975 = vmul.f32 %v7959, 0.2
    %v7976 = vsel %vm7960, %v7952, %v7968
    %v7977 = vsel %vm7961, %v7953, %v7969
    %v7978 = vsel %vm7962, %v7954, %v7970
    %v7979 = vsel %vm7963, %v7955, %v7971
    %v7980 = vsel %vm7964, %v7956, %v7972
    %v7981 = vsel %vm7965, %v7957, %v7973
    %v7982 = vsel %vm7966, %v7958, %v7974
    %v7983 = vsel %vm7967, %v7959, %v7975
    %v7984 = vpack.c.bf16 %v7977, %v7976
    %v7985 = vpack.c.bf16 %v7979, %v7978
    %v7986 = vpack.c.bf16 %v7981, %v7980
    %v7987 = vpack.c.bf16 %v7983, %v7982
    %s7988 = scalar_lea.vmem %s4, 48
    %v7989 = vld [vmem:[%s7988] sm:$0xf]
    %v7990 = vld [vmem:[%s7988 + $0x4] sm:$0xf]
    %v7993 = vunpack.c.l.b16 %v7989
    %v7994 = vunpack.c.l.b16 %v7990
    %v7995 = vpack.c.b16 %v7994, %v7993
    %v7997 = vsel %vm7620, %v7995, 0
    %7999 = vmatpush.bf16.msra.mxu0 0
    %8000 = vmatpush.bf16.msra.mxu0 0
    %8001 = vmatpush.bf16.msra.mxu0 0
    %8002 = vmatpush.bf16.msra.mxu0 0
    %8003 = vmatpush.bf16.msra.mxu0 %v7987
    %8004 = vmatpush.bf16.msra.mxu0 %v7986
    %8005 = vmatpush.bf16.msra.mxu0 %v7985
    %8006 = vmatpush.bf16.msra.mxu0 %v7984
    %8007 = vmatmul.bf16.gmra.mxu0 %v7997
    %v8008 = vpop.f32.mrf.mxu0
    %v8009 = vadd.f32 0.0, %v8008
    %v8010 = vpop.f32.mrf.mxu0
    %v8011 = vadd.f32 0.0, %v8010
    %8012 = vdwg.mxu0
    %v8013 = vadd.f32 %v7942, %v8009
    %v8014 = vadd.f32 %v7943, %v8011
    %v8015 = vmul.f32 %v3118, %v7445
    %v8016 = vmul.f32 %v3120, %v7450
    %v8017 = vmul.f32 %v3123, %v7455
    %v8018 = vmul.f32 %v3125, %v7460
    %v8019 = vmul.f32 %v3128, %v7465
    %v8020 = vmul.f32 %v3130, %v7470
    %v8021 = vmul.f32 %v3133, %v7475
    %v8022 = vmul.f32 %v3135, %v7480
    %v8023 = vadd.f32 %v8015, %v7493
    %v8024 = vadd.f32 %v8016, %v7498
    %v8025 = vadd.f32 %v8017, %v7503
    %v8026 = vadd.f32 %v8018, %v7508
    %v8027 = vadd.f32 %v8019, %v7513
    %v8028 = vadd.f32 %v8020, %v7518
    %v8029 = vadd.f32 %v8021, %v7523
    %v8030 = vadd.f32 %v8022, %v7528
    %vm8031 = vcmp.gt.f32.partialorder %v8023, 0.0
    %vm8032 = vcmp.gt.f32.partialorder %v8024, 0.0
    %vm8033 = vcmp.gt.f32.partialorder %v8025, 0.0
    %vm8034 = vcmp.gt.f32.partialorder %v8026, 0.0
    %vm8035 = vcmp.gt.f32.partialorder %v8027, 0.0
    %vm8036 = vcmp.gt.f32.partialorder %v8028, 0.0
    %vm8037 = vcmp.gt.f32.partialorder %v8029, 0.0
    %vm8038 = vcmp.gt.f32.partialorder %v8030, 0.0
    %v8039 = vmul.f32 %v8023, 0.2
    %v8040 = vmul.f32 %v8024, 0.2
    %v8041 = vmul.f32 %v8025, 0.2
    %v8042 = vmul.f32 %v8026, 0.2
    %v8043 = vmul.f32 %v8027, 0.2
    %v8044 = vmul.f32 %v8028, 0.2
    %v8045 = vmul.f32 %v8029, 0.2
    %v8046 = vmul.f32 %v8030, 0.2
    %v8047 = vsel %vm8031, %v8023, %v8039
    %v8048 = vsel %vm8032, %v8024, %v8040
    %v8049 = vsel %vm8033, %v8025, %v8041
    %v8050 = vsel %vm8034, %v8026, %v8042
    %v8051 = vsel %vm8035, %v8027, %v8043
    %v8052 = vsel %vm8036, %v8028, %v8044
    %v8053 = vsel %vm8037, %v8029, %v8045
    %v8054 = vsel %vm8038, %v8030, %v8046
    %v8055 = vpack.c.bf16 %v8048, %v8047
    %v8056 = vpack.c.bf16 %v8050, %v8049
    %v8057 = vpack.c.bf16 %v8052, %v8051
    %v8058 = vpack.c.bf16 %v8054, %v8053
    %s8059 = scalar_lea.vmem %s4, 56
    %v8060 = vld [vmem:[%s8059] sm:$0xf]
    %v8061 = vld [vmem:[%s8059 + $0x4] sm:$0xf]
    %v8064 = vunpack.c.l.b16 %v8060
    %v8065 = vunpack.c.l.b16 %v8061
    %v8066 = vpack.c.b16 %v8065, %v8064
    %v8068 = vsel %vm7620, %v8066, 0
    %8070 = vmatpush.bf16.msra.mxu0 0
    %8071 = vmatpush.bf16.msra.mxu0 0
    %8072 = vmatpush.bf16.msra.mxu0 0
    %8073 = vmatpush.bf16.msra.mxu0 0
    %8074 = vmatpush.bf16.msra.mxu0 %v8058
    %8075 = vmatpush.bf16.msra.mxu0 %v8057
    %8076 = vmatpush.bf16.msra.mxu0 %v8056
    %8077 = vmatpush.bf16.msra.mxu0 %v8055
    %8078 = vmatmul.bf16.gmra.mxu0 %v8068
    %v8079 = vpop.f32.mrf.mxu0
    %v8080 = vadd.f32 0.0, %v8079
    %v8081 = vpop.f32.mrf.mxu0
    %v8082 = vadd.f32 0.0, %v8081
    %8083 = vdwg.mxu0
    %v8084 = vadd.f32 %v8013, %v8080
    %v8085 = vadd.f32 %v8014, %v8082
    %v8086 = vmul.f32 %v3491, %v7445
    %v8087 = vmul.f32 %v3493, %v7450
    %v8088 = vmul.f32 %v3496, %v7455
    %v8089 = vmul.f32 %v3498, %v7460
    %v8090 = vmul.f32 %v3501, %v7465
    %v8091 = vmul.f32 %v3503, %v7470
    %v8092 = vmul.f32 %v3506, %v7475
    %v8093 = vmul.f32 %v3508, %v7480
    %v8094 = vadd.f32 %v8086, %v7493
    %v8095 = vadd.f32 %v8087, %v7498
    %v8096 = vadd.f32 %v8088, %v7503
    %v8097 = vadd.f32 %v8089, %v7508
    %v8098 = vadd.f32 %v8090, %v7513
    %v8099 = vadd.f32 %v8091, %v7518
    %v8100 = vadd.f32 %v8092, %v7523
    %v8101 = vadd.f32 %v8093, %v7528
    %vm8102 = vcmp.gt.f32.partialorder %v8094, 0.0
    %vm8103 = vcmp.gt.f32.partialorder %v8095, 0.0
    %vm8104 = vcmp.gt.f32.partialorder %v8096, 0.0
    %vm8105 = vcmp.gt.f32.partialorder %v8097, 0.0
    %vm8106 = vcmp.gt.f32.partialorder %v8098, 0.0
    %vm8107 = vcmp.gt.f32.partialorder %v8099, 0.0
    %vm8108 = vcmp.gt.f32.partialorder %v8100, 0.0
    %vm8109 = vcmp.gt.f32.partialorder %v8101, 0.0
    %v8110 = vmul.f32 %v8094, 0.2
    %v8111 = vmul.f32 %v8095, 0.2
    %v8112 = vmul.f32 %v8096, 0.2
    %v8113 = vmul.f32 %v8097, 0.2
    %v8114 = vmul.f32 %v8098, 0.2
    %v8115 = vmul.f32 %v8099, 0.2
    %v8116 = vmul.f32 %v8100, 0.2
    %v8117 = vmul.f32 %v8101, 0.2
    %v8118 = vsel %vm8102, %v8094, %v8110
    %v8119 = vsel %vm8103, %v8095, %v8111
    %v8120 = vsel %vm8104, %v8096, %v8112
    %v8121 = vsel %vm8105, %v8097, %v8113
    %v8122 = vsel %vm8106, %v8098, %v8114
    %v8123 = vsel %vm8107, %v8099, %v8115
    %v8124 = vsel %vm8108, %v8100, %v8116
    %v8125 = vsel %vm8109, %v8101, %v8117
    %v8126 = vpack.c.bf16 %v8119, %v8118
    %v8127 = vpack.c.bf16 %v8121, %v8120
    %v8128 = vpack.c.bf16 %v8123, %v8122
    %v8129 = vpack.c.bf16 %v8125, %v8124
    %s8130 = scalar_lea.vmem %s4, 64
    %v8131 = vld [vmem:[%s8130] sm:$0xf]
    %v8132 = vld [vmem:[%s8130 + $0x4] sm:$0xf]
    %v8135 = vunpack.c.l.b16 %v8131
    %v8136 = vunpack.c.l.b16 %v8132
    %v8137 = vpack.c.b16 %v8136, %v8135
    %v8139 = vsel %vm7620, %v8137, 0
    %8141 = vmatpush.bf16.msra.mxu0 0
    %8142 = vmatpush.bf16.msra.mxu0 0
    %8143 = vmatpush.bf16.msra.mxu0 0
    %8144 = vmatpush.bf16.msra.mxu0 0
    %8145 = vmatpush.bf16.msra.mxu0 %v8129
    %8146 = vmatpush.bf16.msra.mxu0 %v8128
    %8147 = vmatpush.bf16.msra.mxu0 %v8127
    %8148 = vmatpush.bf16.msra.mxu0 %v8126
    %8149 = vmatmul.bf16.gmra.mxu0 %v8139
    %v8150 = vpop.f32.mrf.mxu0
    %v8151 = vadd.f32 0.0, %v8150
    %v8152 = vpop.f32.mrf.mxu0
    %v8153 = vadd.f32 0.0, %v8152
    %8154 = vdwg.mxu0
    %v8155 = vadd.f32 %v8084, %v8151
    %v8156 = vadd.f32 %v8085, %v8153
    %v8157 = vmul.f32 %v3864, %v7445
    %v8158 = vmul.f32 %v3866, %v7450
    %v8159 = vmul.f32 %v3869, %v7455
    %v8160 = vmul.f32 %v3871, %v7460
    %v8161 = vmul.f32 %v3874, %v7465
    %v8162 = vmul.f32 %v3876, %v7470
    %v8163 = vmul.f32 %v3879, %v7475
    %v8164 = vmul.f32 %v3881, %v7480
    %v8165 = vadd.f32 %v8157, %v7493
    %v8166 = vadd.f32 %v8158, %v7498
    %v8167 = vadd.f32 %v8159, %v7503
    %v8168 = vadd.f32 %v8160, %v7508
    %v8169 = vadd.f32 %v8161, %v7513
    %v8170 = vadd.f32 %v8162, %v7518
    %v8171 = vadd.f32 %v8163, %v7523
    %v8172 = vadd.f32 %v8164, %v7528
    %vm8173 = vcmp.gt.f32.partialorder %v8165, 0.0
    %vm8174 = vcmp.gt.f32.partialorder %v8166, 0.0
    %vm8175 = vcmp.gt.f32.partialorder %v8167, 0.0
    %vm8176 = vcmp.gt.f32.partialorder %v8168, 0.0
    %vm8177 = vcmp.gt.f32.partialorder %v8169, 0.0
    %vm8178 = vcmp.gt.f32.partialorder %v8170, 0.0
    %vm8179 = vcmp.gt.f32.partialorder %v8171, 0.0
    %vm8180 = vcmp.gt.f32.partialorder %v8172, 0.0
    %v8181 = vmul.f32 %v8165, 0.2
    %v8182 = vmul.f32 %v8166, 0.2
    %v8183 = vmul.f32 %v8167, 0.2
    %v8184 = vmul.f32 %v8168, 0.2
    %v8185 = vmul.f32 %v8169, 0.2
    %v8186 = vmul.f32 %v8170, 0.2
    %v8187 = vmul.f32 %v8171, 0.2
    %v8188 = vmul.f32 %v8172, 0.2
    %v8189 = vsel %vm8173, %v8165, %v8181
    %v8190 = vsel %vm8174, %v8166, %v8182
    %v8191 = vsel %vm8175, %v8167, %v8183
    %v8192 = vsel %vm8176, %v8168, %v8184
    %v8193 = vsel %vm8177, %v8169, %v8185
    %v8194 = vsel %vm8178, %v8170, %v8186
    %v8195 = vsel %vm8179, %v8171, %v8187
    %v8196 = vsel %vm8180, %v8172, %v8188
    %v8197 = vpack.c.bf16 %v8190, %v8189
    %v8198 = vpack.c.bf16 %v8192, %v8191
    %v8199 = vpack.c.bf16 %v8194, %v8193
    %v8200 = vpack.c.bf16 %v8196, %v8195
    %s8201 = scalar_lea.vmem %s4, 72
    %v8202 = vld [vmem:[%s8201] sm:$0xf]
    %v8203 = vld [vmem:[%s8201 + $0x4] sm:$0xf]
    %v8206 = vunpack.c.l.b16 %v8202
    %v8207 = vunpack.c.l.b16 %v8203
    %v8208 = vpack.c.b16 %v8207, %v8206
    %v8210 = vsel %vm7620, %v8208, 0
    %8212 = vmatpush.bf16.msra.mxu0 0
    %8213 = vmatpush.bf16.msra.mxu0 0
    %8214 = vmatpush.bf16.msra.mxu0 0
    %8215 = vmatpush.bf16.msra.mxu0 0
    %8216 = vmatpush.bf16.msra.mxu0 %v8200
    %8217 = vmatpush.bf16.msra.mxu0 %v8199
    %8218 = vmatpush.bf16.msra.mxu0 %v8198
    %8219 = vmatpush.bf16.msra.mxu0 %v8197
    %8220 = vmatmul.bf16.gmra.mxu0 %v8210
    %v8221 = vpop.f32.mrf.mxu0
    %v8222 = vadd.f32 0.0, %v8221
    %v8223 = vpop.f32.mrf.mxu0
    %v8224 = vadd.f32 0.0, %v8223
    %8225 = vdwg.mxu0
    %v8226 = vadd.f32 %v8155, %v8222
    %v8227 = vadd.f32 %v8156, %v8224
    %v8228 = vmul.f32 %v4237, %v7445
    %v8229 = vmul.f32 %v4239, %v7450
    %v8230 = vmul.f32 %v4242, %v7455
    %v8231 = vmul.f32 %v4244, %v7460
    %v8232 = vmul.f32 %v4247, %v7465
    %v8233 = vmul.f32 %v4249, %v7470
    %v8234 = vmul.f32 %v4252, %v7475
    %v8235 = vmul.f32 %v4254, %v7480
    %v8236 = vadd.f32 %v8228, %v7493
    %v8237 = vadd.f32 %v8229, %v7498
    %v8238 = vadd.f32 %v8230, %v7503
    %v8239 = vadd.f32 %v8231, %v7508
    %v8240 = vadd.f32 %v8232, %v7513
    %v8241 = vadd.f32 %v8233, %v7518
    %v8242 = vadd.f32 %v8234, %v7523
    %v8243 = vadd.f32 %v8235, %v7528
    %vm8244 = vcmp.gt.f32.partialorder %v8236, 0.0
    %vm8245 = vcmp.gt.f32.partialorder %v8237, 0.0
    %vm8246 = vcmp.gt.f32.partialorder %v8238, 0.0
    %vm8247 = vcmp.gt.f32.partialorder %v8239, 0.0
    %vm8248 = vcmp.gt.f32.partialorder %v8240, 0.0
    %vm8249 = vcmp.gt.f32.partialorder %v8241, 0.0
    %vm8250 = vcmp.gt.f32.partialorder %v8242, 0.0
    %vm8251 = vcmp.gt.f32.partialorder %v8243, 0.0
    %v8252 = vmul.f32 %v8236, 0.2
    %v8253 = vmul.f32 %v8237, 0.2
    %v8254 = vmul.f32 %v8238, 0.2
    %v8255 = vmul.f32 %v8239, 0.2
    %v8256 = vmul.f32 %v8240, 0.2
    %v8257 = vmul.f32 %v8241, 0.2
    %v8258 = vmul.f32 %v8242, 0.2
    %v8259 = vmul.f32 %v8243, 0.2
    %v8260 = vsel %vm8244, %v8236, %v8252
    %v8261 = vsel %vm8245, %v8237, %v8253
    %v8262 = vsel %vm8246, %v8238, %v8254
    %v8263 = vsel %vm8247, %v8239, %v8255
    %v8264 = vsel %vm8248, %v8240, %v8256
    %v8265 = vsel %vm8249, %v8241, %v8257
    %v8266 = vsel %vm8250, %v8242, %v8258
    %v8267 = vsel %vm8251, %v8243, %v8259
    %v8268 = vpack.c.bf16 %v8261, %v8260
    %v8269 = vpack.c.bf16 %v8263, %v8262
    %v8270 = vpack.c.bf16 %v8265, %v8264
    %v8271 = vpack.c.bf16 %v8267, %v8266
    %s8272 = scalar_lea.vmem %s4, 80
    %v8273 = vld [vmem:[%s8272] sm:$0xf]
    %v8274 = vld [vmem:[%s8272 + $0x4] sm:$0xf]
    %v8277 = vunpack.c.l.b16 %v8273
    %v8278 = vunpack.c.l.b16 %v8274
    %v8279 = vpack.c.b16 %v8278, %v8277
    %v8281 = vsel %vm7620, %v8279, 0
    %8283 = vmatpush.bf16.msra.mxu0 0
    %8284 = vmatpush.bf16.msra.mxu0 0
    %8285 = vmatpush.bf16.msra.mxu0 0
    %8286 = vmatpush.bf16.msra.mxu0 0
    %8287 = vmatpush.bf16.msra.mxu0 %v8271
    %8288 = vmatpush.bf16.msra.mxu0 %v8270
    %8289 = vmatpush.bf16.msra.mxu0 %v8269
    %8290 = vmatpush.bf16.msra.mxu0 %v8268
    %8291 = vmatmul.bf16.gmra.mxu0 %v8281
    %v8292 = vpop.f32.mrf.mxu0
    %v8293 = vadd.f32 0.0, %v8292
    %v8294 = vpop.f32.mrf.mxu0
    %v8295 = vadd.f32 0.0, %v8294
    %8296 = vdwg.mxu0
    %v8297 = vadd.f32 %v8226, %v8293
    %v8298 = vadd.f32 %v8227, %v8295
    %v8299 = vmul.f32 %v4610, %v7445
    %v8300 = vmul.f32 %v4612, %v7450
    %v8301 = vmul.f32 %v4615, %v7455
    %v8302 = vmul.f32 %v4617, %v7460
    %v8303 = vmul.f32 %v4620, %v7465
    %v8304 = vmul.f32 %v4622, %v7470
    %v8305 = vmul.f32 %v4625, %v7475
    %v8306 = vmul.f32 %v4627, %v7480
    %v8307 = vadd.f32 %v8299, %v7493
    %v8308 = vadd.f32 %v8300, %v7498
    %v8309 = vadd.f32 %v8301, %v7503
    %v8310 = vadd.f32 %v8302, %v7508
    %v8311 = vadd.f32 %v8303, %v7513
    %v8312 = vadd.f32 %v8304, %v7518
    %v8313 = vadd.f32 %v8305, %v7523
    %v8314 = vadd.f32 %v8306, %v7528
    %vm8315 = vcmp.gt.f32.partialorder %v8307, 0.0
    %vm8316 = vcmp.gt.f32.partialorder %v8308, 0.0
    %vm8317 = vcmp.gt.f32.partialorder %v8309, 0.0
    %vm8318 = vcmp.gt.f32.partialorder %v8310, 0.0
    %vm8319 = vcmp.gt.f32.partialorder %v8311, 0.0
    %vm8320 = vcmp.gt.f32.partialorder %v8312, 0.0
    %vm8321 = vcmp.gt.f32.partialorder %v8313, 0.0
    %vm8322 = vcmp.gt.f32.partialorder %v8314, 0.0
    %v8323 = vmul.f32 %v8307, 0.2
    %v8324 = vmul.f32 %v8308, 0.2
    %v8325 = vmul.f32 %v8309, 0.2
    %v8326 = vmul.f32 %v8310, 0.2
    %v8327 = vmul.f32 %v8311, 0.2
    %v8328 = vmul.f32 %v8312, 0.2
    %v8329 = vmul.f32 %v8313, 0.2
    %v8330 = vmul.f32 %v8314, 0.2
    %v8331 = vsel %vm8315, %v8307, %v8323
    %v8332 = vsel %vm8316, %v8308, %v8324
    %v8333 = vsel %vm8317, %v8309, %v8325
    %v8334 = vsel %vm8318, %v8310, %v8326
    %v8335 = vsel %vm8319, %v8311, %v8327
    %v8336 = vsel %vm8320, %v8312, %v8328
    %v8337 = vsel %vm8321, %v8313, %v8329
    %v8338 = vsel %vm8322, %v8314, %v8330
    %v8339 = vpack.c.bf16 %v8332, %v8331
    %v8340 = vpack.c.bf16 %v8334, %v8333
    %v8341 = vpack.c.bf16 %v8336, %v8335
    %v8342 = vpack.c.bf16 %v8338, %v8337
    %s8343 = scalar_lea.vmem %s4, 88
    %v8344 = vld [vmem:[%s8343] sm:$0xf]
    %v8345 = vld [vmem:[%s8343 + $0x4] sm:$0xf]
    %v8348 = vunpack.c.l.b16 %v8344
    %v8349 = vunpack.c.l.b16 %v8345
    %v8350 = vpack.c.b16 %v8349, %v8348
    %v8352 = vsel %vm7620, %v8350, 0
    %8354 = vmatpush.bf16.msra.mxu0 0
    %8355 = vmatpush.bf16.msra.mxu0 0
    %8356 = vmatpush.bf16.msra.mxu0 0
    %8357 = vmatpush.bf16.msra.mxu0 0
    %8358 = vmatpush.bf16.msra.mxu0 %v8342
    %8359 = vmatpush.bf16.msra.mxu0 %v8341
    %8360 = vmatpush.bf16.msra.mxu0 %v8340
    %8361 = vmatpush.bf16.msra.mxu0 %v8339
    %8362 = vmatmul.bf16.gmra.mxu0 %v8352
    %v8363 = vpop.f32.mrf.mxu0
    %v8364 = vadd.f32 0.0, %v8363
    %v8365 = vpop.f32.mrf.mxu0
    %v8366 = vadd.f32 0.0, %v8365
    %8367 = vdwg.mxu0
    %v8368 = vadd.f32 %v8297, %v8364
    %v8369 = vadd.f32 %v8298, %v8366
    %v8370 = vmul.f32 %v4983, %v7445
    %v8371 = vmul.f32 %v4985, %v7450
    %v8372 = vmul.f32 %v4988, %v7455
    %v8373 = vmul.f32 %v4990, %v7460
    %v8374 = vmul.f32 %v4993, %v7465
    %v8375 = vmul.f32 %v4995, %v7470
    %v8376 = vmul.f32 %v4998, %v7475
    %v8377 = vmul.f32 %v5000, %v7480
    %v8378 = vadd.f32 %v8370, %v7493
    %v8379 = vadd.f32 %v8371, %v7498
    %v8380 = vadd.f32 %v8372, %v7503
    %v8381 = vadd.f32 %v8373, %v7508
    %v8382 = vadd.f32 %v8374, %v7513
    %v8383 = vadd.f32 %v8375, %v7518
    %v8384 = vadd.f32 %v8376, %v7523
    %v8385 = vadd.f32 %v8377, %v7528
    %vm8386 = vcmp.gt.f32.partialorder %v8378, 0.0
    %vm8387 = vcmp.gt.f32.partialorder %v8379, 0.0
    %vm8388 = vcmp.gt.f32.partialorder %v8380, 0.0
    %vm8389 = vcmp.gt.f32.partialorder %v8381, 0.0
    %vm8390 = vcmp.gt.f32.partialorder %v8382, 0.0
    %vm8391 = vcmp.gt.f32.partialorder %v8383, 0.0
    %vm8392 = vcmp.gt.f32.partialorder %v8384, 0.0
    %vm8393 = vcmp.gt.f32.partialorder %v8385, 0.0
    %v8394 = vmul.f32 %v8378, 0.2
    %v8395 = vmul.f32 %v8379, 0.2
    %v8396 = vmul.f32 %v8380, 0.2
    %v8397 = vmul.f32 %v8381, 0.2
    %v8398 = vmul.f32 %v8382, 0.2
    %v8399 = vmul.f32 %v8383, 0.2
    %v8400 = vmul.f32 %v8384, 0.2
    %v8401 = vmul.f32 %v8385, 0.2
    %v8402 = vsel %vm8386, %v8378, %v8394
    %v8403 = vsel %vm8387, %v8379, %v8395
    %v8404 = vsel %vm8388, %v8380, %v8396
    %v8405 = vsel %vm8389, %v8381, %v8397
    %v8406 = vsel %vm8390, %v8382, %v8398
    %v8407 = vsel %vm8391, %v8383, %v8399
    %v8408 = vsel %vm8392, %v8384, %v8400
    %v8409 = vsel %vm8393, %v8385, %v8401
    %v8410 = vpack.c.bf16 %v8403, %v8402
    %v8411 = vpack.c.bf16 %v8405, %v8404
    %v8412 = vpack.c.bf16 %v8407, %v8406
    %v8413 = vpack.c.bf16 %v8409, %v8408
    %s8414 = scalar_lea.vmem %s4, 96
    %v8415 = vld [vmem:[%s8414] sm:$0xf]
    %v8416 = vld [vmem:[%s8414 + $0x4] sm:$0xf]
    %v8419 = vunpack.c.l.b16 %v8415
    %v8420 = vunpack.c.l.b16 %v8416
    %v8421 = vpack.c.b16 %v8420, %v8419
    %v8423 = vsel %vm7620, %v8421, 0
    %8425 = vmatpush.bf16.msra.mxu0 0
    %8426 = vmatpush.bf16.msra.mxu0 0
    %8427 = vmatpush.bf16.msra.mxu0 0
    %8428 = vmatpush.bf16.msra.mxu0 0
    %8429 = vmatpush.bf16.msra.mxu0 %v8413
    %8430 = vmatpush.bf16.msra.mxu0 %v8412
    %8431 = vmatpush.bf16.msra.mxu0 %v8411
    %8432 = vmatpush.bf16.msra.mxu0 %v8410
    %8433 = vmatmul.bf16.gmra.mxu0 %v8423
    %v8434 = vpop.f32.mrf.mxu0
    %v8435 = vadd.f32 0.0, %v8434
    %v8436 = vpop.f32.mrf.mxu0
    %v8437 = vadd.f32 0.0, %v8436
    %8438 = vdwg.mxu0
    %v8439 = vadd.f32 %v8368, %v8435
    %v8440 = vadd.f32 %v8369, %v8437
    %v8441 = vmul.f32 %v5356, %v7445
    %v8442 = vmul.f32 %v5358, %v7450
    %v8443 = vmul.f32 %v5361, %v7455
    %v8444 = vmul.f32 %v5363, %v7460
    %v8445 = vmul.f32 %v5366, %v7465
    %v8446 = vmul.f32 %v5368, %v7470
    %v8447 = vmul.f32 %v5371, %v7475
    %v8448 = vmul.f32 %v5373, %v7480
    %v8449 = vadd.f32 %v8441, %v7493
    %v8450 = vadd.f32 %v8442, %v7498
    %v8451 = vadd.f32 %v8443, %v7503
    %v8452 = vadd.f32 %v8444, %v7508
    %v8453 = vadd.f32 %v8445, %v7513
    %v8454 = vadd.f32 %v8446, %v7518
    %v8455 = vadd.f32 %v8447, %v7523
    %v8456 = vadd.f32 %v8448, %v7528
    %vm8457 = vcmp.gt.f32.partialorder %v8449, 0.0
    %vm8458 = vcmp.gt.f32.partialorder %v8450, 0.0
    %vm8459 = vcmp.gt.f32.partialorder %v8451, 0.0
    %vm8460 = vcmp.gt.f32.partialorder %v8452, 0.0
    %vm8461 = vcmp.gt.f32.partialorder %v8453, 0.0
    %vm8462 = vcmp.gt.f32.partialorder %v8454, 0.0
    %vm8463 = vcmp.gt.f32.partialorder %v8455, 0.0
    %vm8464 = vcmp.gt.f32.partialorder %v8456, 0.0
    %v8465 = vmul.f32 %v8449, 0.2
    %v8466 = vmul.f32 %v8450, 0.2
    %v8467 = vmul.f32 %v8451, 0.2
    %v8468 = vmul.f32 %v8452, 0.2
    %v8469 = vmul.f32 %v8453, 0.2
    %v8470 = vmul.f32 %v8454, 0.2
    %v8471 = vmul.f32 %v8455, 0.2
    %v8472 = vmul.f32 %v8456, 0.2
    %v8473 = vsel %vm8457, %v8449, %v8465
    %v8474 = vsel %vm8458, %v8450, %v8466
    %v8475 = vsel %vm8459, %v8451, %v8467
    %v8476 = vsel %vm8460, %v8452, %v8468
    %v8477 = vsel %vm8461, %v8453, %v8469
    %v8478 = vsel %vm8462, %v8454, %v8470
    %v8479 = vsel %vm8463, %v8455, %v8471
    %v8480 = vsel %vm8464, %v8456, %v8472
    %v8481 = vpack.c.bf16 %v8474, %v8473
    %v8482 = vpack.c.bf16 %v8476, %v8475
    %v8483 = vpack.c.bf16 %v8478, %v8477
    %v8484 = vpack.c.bf16 %v8480, %v8479
    %s8485 = scalar_lea.vmem %s4, 104
    %v8486 = vld [vmem:[%s8485] sm:$0xf]
    %v8487 = vld [vmem:[%s8485 + $0x4] sm:$0xf]
    %v8490 = vunpack.c.l.b16 %v8486
    %v8491 = vunpack.c.l.b16 %v8487
    %v8492 = vpack.c.b16 %v8491, %v8490
    %v8494 = vsel %vm7620, %v8492, 0
    %8496 = vmatpush.bf16.msra.mxu0 0
    %8497 = vmatpush.bf16.msra.mxu0 0
    %8498 = vmatpush.bf16.msra.mxu0 0
    %8499 = vmatpush.bf16.msra.mxu0 0
    %8500 = vmatpush.bf16.msra.mxu0 %v8484
    %8501 = vmatpush.bf16.msra.mxu0 %v8483
    %8502 = vmatpush.bf16.msra.mxu0 %v8482
    %8503 = vmatpush.bf16.msra.mxu0 %v8481
    %8504 = vmatmul.bf16.gmra.mxu0 %v8494
    %v8505 = vpop.f32.mrf.mxu0
    %v8506 = vadd.f32 0.0, %v8505
    %v8507 = vpop.f32.mrf.mxu0
    %v8508 = vadd.f32 0.0, %v8507
    %8509 = vdwg.mxu0
    %v8510 = vadd.f32 %v8439, %v8506
    %v8511 = vadd.f32 %v8440, %v8508
    %v8512 = vmul.f32 %v5729, %v7445
    %v8513 = vmul.f32 %v5731, %v7450
    %v8514 = vmul.f32 %v5734, %v7455
    %v8515 = vmul.f32 %v5736, %v7460
    %v8516 = vmul.f32 %v5739, %v7465
    %v8517 = vmul.f32 %v5741, %v7470
    %v8518 = vmul.f32 %v5744, %v7475
    %v8519 = vmul.f32 %v5746, %v7480
    %v8520 = vadd.f32 %v8512, %v7493
    %v8521 = vadd.f32 %v8513, %v7498
    %v8522 = vadd.f32 %v8514, %v7503
    %v8523 = vadd.f32 %v8515, %v7508
    %v8524 = vadd.f32 %v8516, %v7513
    %v8525 = vadd.f32 %v8517, %v7518
    %v8526 = vadd.f32 %v8518, %v7523
    %v8527 = vadd.f32 %v8519, %v7528
    %vm8528 = vcmp.gt.f32.partialorder %v8520, 0.0
    %vm8529 = vcmp.gt.f32.partialorder %v8521, 0.0
    %vm8530 = vcmp.gt.f32.partialorder %v8522, 0.0
    %vm8531 = vcmp.gt.f32.partialorder %v8523, 0.0
    %vm8532 = vcmp.gt.f32.partialorder %v8524, 0.0
    %vm8533 = vcmp.gt.f32.partialorder %v8525, 0.0
    %vm8534 = vcmp.gt.f32.partialorder %v8526, 0.0
    %vm8535 = vcmp.gt.f32.partialorder %v8527, 0.0
    %v8536 = vmul.f32 %v8520, 0.2
    %v8537 = vmul.f32 %v8521, 0.2
    %v8538 = vmul.f32 %v8522, 0.2
    %v8539 = vmul.f32 %v8523, 0.2
    %v8540 = vmul.f32 %v8524, 0.2
    %v8541 = vmul.f32 %v8525, 0.2
    %v8542 = vmul.f32 %v8526, 0.2
    %v8543 = vmul.f32 %v8527, 0.2
    %v8544 = vsel %vm8528, %v8520, %v8536
    %v8545 = vsel %vm8529, %v8521, %v8537
    %v8546 = vsel %vm8530, %v8522, %v8538
    %v8547 = vsel %vm8531, %v8523, %v8539
    %v8548 = vsel %vm8532, %v8524, %v8540
    %v8549 = vsel %vm8533, %v8525, %v8541
    %v8550 = vsel %vm8534, %v8526, %v8542
    %v8551 = vsel %vm8535, %v8527, %v8543
    %v8552 = vpack.c.bf16 %v8545, %v8544
    %v8553 = vpack.c.bf16 %v8547, %v8546
    %v8554 = vpack.c.bf16 %v8549, %v8548
    %v8555 = vpack.c.bf16 %v8551, %v8550
    %s8556 = scalar_lea.vmem %s4, 112
    %v8557 = vld [vmem:[%s8556] sm:$0xf]
    %v8558 = vld [vmem:[%s8556 + $0x4] sm:$0xf]
    %v8561 = vunpack.c.l.b16 %v8557
    %v8562 = vunpack.c.l.b16 %v8558
    %v8563 = vpack.c.b16 %v8562, %v8561
    %v8565 = vsel %vm7620, %v8563, 0
    %8567 = vmatpush.bf16.msra.mxu0 0
    %8568 = vmatpush.bf16.msra.mxu0 0
    %8569 = vmatpush.bf16.msra.mxu0 0
    %8570 = vmatpush.bf16.msra.mxu0 0
    %8571 = vmatpush.bf16.msra.mxu0 %v8555
    %8572 = vmatpush.bf16.msra.mxu0 %v8554
    %8573 = vmatpush.bf16.msra.mxu0 %v8553
    %8574 = vmatpush.bf16.msra.mxu0 %v8552
    %8575 = vmatmul.bf16.gmra.mxu0 %v8565
    %v8576 = vpop.f32.mrf.mxu0
    %v8577 = vadd.f32 0.0, %v8576
    %v8578 = vpop.f32.mrf.mxu0
    %v8579 = vadd.f32 0.0, %v8578
    %8580 = vdwg.mxu0
    %v8581 = vadd.f32 %v8510, %v8577
    %v8582 = vadd.f32 %v8511, %v8579
    %v8583 = vmul.f32 %v6102, %v7445
    %v8584 = vmul.f32 %v6104, %v7450
    %v8585 = vmul.f32 %v6107, %v7455
    %v8586 = vmul.f32 %v6109, %v7460
    %v8587 = vmul.f32 %v6112, %v7465
    %v8588 = vmul.f32 %v6114, %v7470
    %v8589 = vmul.f32 %v6117, %v7475
    %v8590 = vmul.f32 %v6119, %v7480
    %v8591 = vadd.f32 %v8583, %v7493
    %v8592 = vadd.f32 %v8584, %v7498
    %v8593 = vadd.f32 %v8585, %v7503
    %v8594 = vadd.f32 %v8586, %v7508
    %v8595 = vadd.f32 %v8587, %v7513
    %v8596 = vadd.f32 %v8588, %v7518
    %v8597 = vadd.f32 %v8589, %v7523
    %v8598 = vadd.f32 %v8590, %v7528
    %vm8599 = vcmp.gt.f32.partialorder %v8591, 0.0
    %vm8600 = vcmp.gt.f32.partialorder %v8592, 0.0
    %vm8601 = vcmp.gt.f32.partialorder %v8593, 0.0
    %vm8602 = vcmp.gt.f32.partialorder %v8594, 0.0
    %vm8603 = vcmp.gt.f32.partialorder %v8595, 0.0
    %vm8604 = vcmp.gt.f32.partialorder %v8596, 0.0
    %vm8605 = vcmp.gt.f32.partialorder %v8597, 0.0
    %vm8606 = vcmp.gt.f32.partialorder %v8598, 0.0
    %v8607 = vmul.f32 %v8591, 0.2
    %v8608 = vmul.f32 %v8592, 0.2
    %v8609 = vmul.f32 %v8593, 0.2
    %v8610 = vmul.f32 %v8594, 0.2
    %v8611 = vmul.f32 %v8595, 0.2
    %v8612 = vmul.f32 %v8596, 0.2
    %v8613 = vmul.f32 %v8597, 0.2
    %v8614 = vmul.f32 %v8598, 0.2
    %v8615 = vsel %vm8599, %v8591, %v8607
    %v8616 = vsel %vm8600, %v8592, %v8608
    %v8617 = vsel %vm8601, %v8593, %v8609
    %v8618 = vsel %vm8602, %v8594, %v8610
    %v8619 = vsel %vm8603, %v8595, %v8611
    %v8620 = vsel %vm8604, %v8596, %v8612
    %v8621 = vsel %vm8605, %v8597, %v8613
    %v8622 = vsel %vm8606, %v8598, %v8614
    %v8623 = vpack.c.bf16 %v8616, %v8615
    %v8624 = vpack.c.bf16 %v8618, %v8617
    %v8625 = vpack.c.bf16 %v8620, %v8619
    %v8626 = vpack.c.bf16 %v8622, %v8621
    %s8627 = scalar_lea.vmem %s4, 120
    %v8628 = vld [vmem:[%s8627] sm:$0xf]
    %v8629 = vld [vmem:[%s8627 + $0x4] sm:$0xf]
    %v8632 = vunpack.c.l.b16 %v8628
    %v8633 = vunpack.c.l.b16 %v8629
    %v8634 = vpack.c.b16 %v8633, %v8632
    %v8636 = vsel %vm7620, %v8634, 0
    %8638 = vmatpush.bf16.msra.mxu0 0
    %8639 = vmatpush.bf16.msra.mxu0 0
    %8640 = vmatpush.bf16.msra.mxu0 0
    %8641 = vmatpush.bf16.msra.mxu0 0
    %8642 = vmatpush.bf16.msra.mxu0 %v8626
    %8643 = vmatpush.bf16.msra.mxu0 %v8625
    %8644 = vmatpush.bf16.msra.mxu0 %v8624
    %8645 = vmatpush.bf16.msra.mxu0 %v8623
    %8646 = vmatmul.bf16.gmra.mxu0 %v8636
    %v8647 = vpop.f32.mrf.mxu0
    %v8648 = vadd.f32 0.0, %v8647
    %v8649 = vpop.f32.mrf.mxu0
    %v8650 = vadd.f32 0.0, %v8649
    %8651 = vdwg.mxu0
    %v8652 = vadd.f32 %v8581, %v8648
    %v8653 = vadd.f32 %v8582, %v8650
    %v8654 = vld [vmem:[%s5] sm:$0xff]
    %v8655 = vld [vmem:[%s5 + $0x8] sm:$0xff]
    %8657 = vset.pattern.permute.xlu0 0
    %8658 = vperm.xlu0 %8657, %v8654
    %v8659 = vpop.permute.xlu0 %8658
    %8662 = vset.pattern.permute.xlu0 0
    %8663 = vperm.xlu0 %8662, %v8655
    %v8664 = vpop.permute.xlu0 %8663
    %v8666 = vadd.f32 %v8652, %v8659
    %v8667 = vadd.f32 %v8653, %v8664
    %vm8668 = vcmp.gt.f32.partialorder %v8666, 0.0
    %vm8669 = vcmp.gt.f32.partialorder %v8667, 0.0
    %v8670 = vmul.f32 %v8666, 0.2
    %v8671 = vmul.f32 %v8667, 0.2
    %v8672 = vsel %vm8668, %v8666, %v8670
    %v8673 = vsel %vm8669, %v8667, %v8671
    %v8674 = vpack.c.bf16 %v8673, %v8672
    %v8675 = vld [vmem:[%s6] sm:$0xf]
    %v8676 = vld [vmem:[%s6 + $0x4] sm:$0xf]
    %v8677 = vld [vmem:[%s6 + $0x8] sm:$0xf]
    %v8678 = vld [vmem:[%s6 + $0xc] sm:$0xf]
    %v8679 = vld [vmem:[%s7] sm:$0xf]
    %v8680 = vld [vmem:[%s7 + $0x4] sm:$0xf]
    %v8681 = vld [vmem:[%s7 + $0x8] sm:$0xf]
    %v8682 = vld [vmem:[%s7 + $0xc] sm:$0xf]
    %v8683 = vld [vmem:[#allocation2] sm:$0xf]
    %v8684 = vld [vmem:[#allocation2 + $0x4] sm:$0xf]
    %v8689 = vunpack.c.l.b16 %v8679
    %v8690 = vunpack.c.l.b16 %v8680
    %v8691 = vunpack.c.l.b16 %v8681
    %v8692 = vunpack.c.l.b16 %v8682
    %v8693 = vpack.c.b16 %v8690, %v8689
    %v8694 = vpack.c.b16 %v8692, %v8691
    %v8697 = vunpack.c.l.b16 %v8683
    %v8698 = vunpack.c.l.b16 %v8684
    %v8699 = vpack.c.b16 %v8698, %v8697
    %vm8701 = vcmask 130048
    %v8703 = vsel %vm8701, %v8693, 0
    %v8706 = vsel %vm8701, %v8694, 0
    %8708 = vmatpush.bf16.msra.mxu0 0
    %8709 = vmatpush.bf16.msra.mxu0 0
    %8710 = vmatpush.bf16.msra.mxu0 0
    %8711 = vmatpush.bf16.msra.mxu0 0
    %8712 = vmatpush.bf16.msra.mxu0 0
    %8713 = vmatpush.bf16.msra.mxu0 0
    %8714 = vmatpush.bf16.msra.mxu0 0
    %8715 = vmatpush.bf16.msra.mxu0 %v8699
    %8716 = vmatmul.bf16.gmra.mxu0 %v8703
    %v8717 = vpop.f32.mrf.mxu0
    %v8718 = vadd.f32 0.0, %v8717
    %v8719 = vpop.f32.mrf.mxu0
    %v8720 = vadd.f32 0.0, %v8719
    %8721 = vmatmul.bf16.gmra.mxu0 %v8706
    %v8722 = vpop.f32.mrf.mxu0
    %v8723 = vadd.f32 0.0, %v8722
    %v8724 = vpop.f32.mrf.mxu0
    %v8725 = vadd.f32 0.0, %v8724
    %8726 = vdwg.mxu0
    %v8731 = vunpack.c.l.b16 %v8675
    %v8732 = vunpack.c.l.b16 %v8676
    %v8733 = vunpack.c.l.b16 %v8677
    %v8734 = vunpack.c.l.b16 %v8678
    %v8735 = vpack.c.b16 %v8732, %v8731
    %v8736 = vpack.c.b16 %v8734, %v8733
    %v8738 = vsel %vm8701, %v8735, 0
    %v8741 = vsel %vm8701, %v8736, 0
    %8743 = vmatpush.bf16.msra.mxu0 0
    %8744 = vmatpush.bf16.msra.mxu0 0
    %8745 = vmatpush.bf16.msra.mxu0 0
    %8746 = vmatpush.bf16.msra.mxu0 0
    %8747 = vmatpush.bf16.msra.mxu0 0
    %8748 = vmatpush.bf16.msra.mxu0 0
    %8749 = vmatpush.bf16.msra.mxu0 0
    %8750 = vmatpush.bf16.msra.mxu0 %v8674
    %8751 = vmatmul.bf16.gmra.mxu0 %v8738
    %v8752 = vpop.f32.mrf.mxu0
    %v8753 = vadd.f32 %v8718, %v8752
    %v8754 = vpop.f32.mrf.mxu0
    %v8755 = vadd.f32 %v8720, %v8754
    %8756 = vmatmul.bf16.gmra.mxu0 %v8741
    %v8757 = vpop.f32.mrf.mxu0
    %v8758 = vadd.f32 %v8723, %v8757
    %v8759 = vpop.f32.mrf.mxu0
    %v8760 = vadd.f32 %v8725, %v8759
    %8761 = vdwg.mxu0
    %v8762 = vld [vmem:[%s8] sm:$0xff]
    %v8763 = vld [vmem:[%s8 + $0x8] sm:$0xff]
    %v8764 = vld [vmem:[%s8 + $0x10] sm:$0xff]
    %v8765 = vld [vmem:[%s8 + $0x18] sm:$0xff]
    %8767 = vset.pattern.permute.xlu0 0
    %8768 = vperm.xlu0 %8767, %v8762
    %v8769 = vpop.permute.xlu0 %8768
    %8772 = vset.pattern.permute.xlu0 0
    %8773 = vperm.xlu0 %8772, %v8763
    %v8774 = vpop.permute.xlu0 %8773
    %8777 = vset.pattern.permute.xlu0 0
    %8778 = vperm.xlu0 %8777, %v8764
    %v8779 = vpop.permute.xlu0 %8778
    %8782 = vset.pattern.permute.xlu0 0
    %8783 = vperm.xlu0 %8782, %v8765
    %v8784 = vpop.permute.xlu0 %8783
    %v8786 = vadd.f32 %v8753, %v8769
    %v8787 = vadd.f32 %v8755, %v8774
    %v8788 = vadd.f32 %v8758, %v8779
    %v8789 = vadd.f32 %v8760, %v8784
    %v8790 = vmax.f32 %v8786, 0.0
    %v8791 = vmax.f32 %v8787, 0.0
    %v8792 = vmax.f32 %v8788, 0.0
    %v8793 = vmax.f32 %v8789, 0.0
    %v8794 = vpack.c.bf16 %v8791, %v8790
    %v8795 = vpack.c.bf16 %v8793, %v8792
    %v8796 = vld [vmem:[%s9] sm:$0x3]
    %v8797 = vld [vmem:[%s10] sm:$0xf]
    %8799 = vset.pattern.permute.xlu0 0
    %8800 = vperm.xlu0 %8799, %v8797
    %v8801 = vpop.permute.xlu0 %8800
    %vm8803 = vcmask 261120
    %v8805 = vsel %vm8803, %v8796, 0
    %8807 = vmatpush.bf16.msra.mxu0 0
    %8808 = vmatpush.bf16.msra.mxu0 0
    %8809 = vmatpush.bf16.msra.mxu0 0
    %8810 = vmatpush.bf16.msra.mxu0 0
    %8811 = vmatpush.bf16.msra.mxu0 0
    %8812 = vmatpush.bf16.msra.mxu0 0
    %8813 = vmatpush.bf16.msra.mxu0 %v8795
    %8814 = vmatpush.bf16.msra.mxu0 %v8794
    %8815 = vmatmul.bf16.gmra.mxu0 %v8805
    %v8816 = vpop.f32.mrf.mxu0
    %v8817 = vadd.f32 %v8801, %v8816
    %v8818 = vpop.f32.mrf.mxu0
    %8819 = vdwg.mxu0
    %vm8820 = vcmask 11264
    %8821 = vst.msk [vmem:[%s12] sm:$0xf] %vm8820, %v8817
    // Predicated region
    $region50: #{generator_critic_forward.8} parent=1 // pred_check
      _
    $region51: #{generator_critic_forward.8} parent=1 // pred_check_branch
      %8823 = sbr.rel (0) target = $region53
    $region52: #{generator_critic_forward.8} parent=1 // pred_region
      _
    $region53: #{generator_critic_forward.8} parent=1 // pred_fallthru
      _
    // Predicated region
    $region54: #{generator_critic_forward.8} parent=1 // pred_check
      _
    $region55: #{generator_critic_forward.8} parent=1 // pred_check_branch
      %8825 = sbr.rel (0) target = $region57
    $region56: #{generator_critic_forward.8} parent=1 // pred_region
      _
    $region57: #{generator_critic_forward.8} parent=1 // pred_fallthru
      _

</llo_original>
